<compile_context>
chip_gen: v7x
topology: tpu7x:2x2x1
jax: 0.10.0
libtpu: 0.0.40
codegen_flags: <defaults>
</compile_context>

<pallas_src>
import functools

import jax
import jax.numpy as jnp
from jax.experimental import pallas as pl
from jax.experimental.pallas import tpu as pltpu

_NH = 128  # lane-dense fused-head output width


# ----------------------------------------------------------------------------
# Kernel 1: fused 3x3 conv (+bias+ReLU), taps accumulated in-kernel (no im2col).
# ----------------------------------------------------------------------------
def _conv3x3_kernel(x_ref, w_ref, b_ref, o_ref, *, taps, ho, wo, act):
    cin = x_ref.shape[-1]
    cout = o_ref.shape[-1]
    xb = x_ref[0].astype(jnp.float32)          # (n_planes, Hp, Wp, Cin)
    acc = jnp.zeros((ho * wo, cout), jnp.float32)
    for t, (p, di, dj) in enumerate(taps):     # static unrolled 9-tap loop
        patch = xb[p, di:di + ho, dj:dj + wo, :].reshape(ho * wo, cin)
        acc = acc + jnp.dot(patch, w_ref[t], preferred_element_type=jnp.float32)
    acc = acc + b_ref[...]
    if act == "relu":
        acc = jnp.maximum(acc, 0.0)
    o_ref[0] = acc.astype(o_ref.dtype)


def conv3x3(x, w, b, *, stride, act="relu", out_dtype=jnp.bfloat16):
    """x: (N, H, W, Cin), w: (3, 3, Cin, Cout), b: (Cout,).  pad=1, k=3.

    Note: real PyTorch weights (Cout, Cin, kh, kw) must be permuted to
    (kh, kw, Cin, Cout) before being passed here.
    """
    n, h, wd, cin = x.shape
    cout = w.shape[-1]
    ho, wo = h // stride, wd // stride
    xp = jnp.pad(x, ((0, 0), (1, 1), (1, 1), (0, 0)))
    if stride == 1:
        planes = xp[:, None]                                    # (n, 1, H+2, W+2, Cin)
        taps = tuple((0, i, j) for i in range(3) for j in range(3))
    elif stride == 2:
        # parity (space-to-depth) split: all in-kernel slices become unstrided.
        planes = jnp.stack(
            [xp[:, a0::2, b0::2, :] for a0 in (0, 1) for b0 in (0, 1)], axis=1
        )                                                       # (n, 4, Ho+1, Wo+1, Cin)
        taps = tuple((2 * (i % 2) + (j % 2), i // 2, j // 2)
                     for i in range(3) for j in range(3))
    else:
        raise ValueError("stride must be 1 or 2")

    planes = planes.astype(jnp.bfloat16)                        # halve HBM traffic
    wt = w.reshape(9, cin, cout).astype(jnp.float32)
    bb = b.reshape(1, cout).astype(jnp.float32)

    out = pl.pallas_call(
        functools.partial(_conv3x3_kernel, taps=taps, ho=ho, wo=wo, act=act),
        out_shape=jax.ShapeDtypeStruct((n, ho * wo, cout), out_dtype),
        grid=(n,),
        in_specs=[
            pl.BlockSpec((1,) + planes.shape[1:], lambda i: (i, 0, 0, 0, 0)),
            pl.BlockSpec(wt.shape, lambda i: (0, 0, 0)),
            pl.BlockSpec((1, cout), lambda i: (0, 0)),
        ],
        out_specs=pl.BlockSpec((1, ho * wo, cout), lambda i: (i, 0, 0)),
        compiler_params=pltpu.CompilerParams(dimension_semantics=("parallel",)),
    )(planes, wt, bb)
    return out.reshape(n, ho, wo, cout)


# ----------------------------------------------------------------------------
# Kernel 2: fused per-scale 1x1 heads (cnt conv -> [pred | cor]) in one call.
# ----------------------------------------------------------------------------
def _heads23_kernel(y_ref, wc_ref, bc_ref, w2_ref, b2_ref, o_ref, *, sig_col):
    y = y_ref[...].astype(jnp.float32)
    z = jnp.dot(y, wc_ref[...], preferred_element_type=jnp.float32) + bc_ref[...]
    z = jnp.maximum(z, 0.0)                               # cntX (relu)
    hdr = jnp.dot(z, w2_ref[...], preferred_element_type=jnp.float32) + b2_ref[...]
    col = jax.lax.broadcasted_iota(jnp.int32, hdr.shape, 1)
    o_ref[...] = jnp.where(col == sig_col, jax.nn.sigmoid(hdr), hdr)


def _heads4_kernel(y_ref, wc_ref, bc_ref, wo_ref, bo_ref, wa_ref, ba_ref,
                   w2c_ref, w2g_ref, b2_ref, o_ref, *, sig_col):
    y = y_ref[...].astype(jnp.float32)
    cnt = jnp.maximum(
        jnp.dot(y, wc_ref[...], preferred_element_type=jnp.float32) + bc_ref[...], 0.0)
    outf = jnp.maximum(
        jnp.dot(y, wo_ref[...], preferred_element_type=jnp.float32) + bo_ref[...], 0.0)
    att = jax.nn.sigmoid(
        jnp.dot(y, wa_ref[...], preferred_element_type=jnp.float32) + ba_ref[...])
    gated = outf * att                                    # attention gate, fused
    hdr = (jnp.dot(cnt, w2c_ref[...], preferred_element_type=jnp.float32)
           + jnp.dot(gated, w2g_ref[...], preferred_element_type=jnp.float32)
           + b2_ref[...])
    col = jax.lax.broadcasted_iota(jnp.int32, hdr.shape, 1)
    o_ref[...] = jnp.where(col == sig_col, jax.nn.sigmoid(hdr), hdr)


def fused_heads_23(y, wc, bc, w2, b2, *, sig_col=1):
    M, C = y.shape
    tm = M if M <= 512 else 512
    return pl.pallas_call(
        functools.partial(_heads23_kernel, sig_col=sig_col),
        out_shape=jax.ShapeDtypeStruct((M, _NH), jnp.float32),
        grid=(pl.cdiv(M, tm),),
        in_specs=[
            pl.BlockSpec((tm, C), lambda i: (i, 0)),
            pl.BlockSpec((C, C), lambda i: (0, 0)),
            pl.BlockSpec((1, C), lambda i: (0, 0)),
            pl.BlockSpec((C, _NH), lambda i: (0, 0)),
            pl.BlockSpec((1, _NH), lambda i: (0, 0)),
        ],
        out_specs=pl.BlockSpec((tm, _NH), lambda i: (i, 0)),
        compiler_params=pltpu.CompilerParams(dimension_semantics=("parallel",)),
    )(y, wc, bc.reshape(1, C), w2, b2.reshape(1, _NH))


def fused_heads_4(y, wc, bc, wo, bo, wa, ba, w2c, w2g, b2, *, sig_col=2):
    M, C = y.shape
    tm = M if M <= 512 else 512
    return pl.pallas_call(
        functools.partial(_heads4_kernel, sig_col=sig_col),
        out_shape=jax.ShapeDtypeStruct((M, _NH), jnp.float32),
        grid=(pl.cdiv(M, tm),),
        in_specs=[
            pl.BlockSpec((tm, C), lambda i: (i, 0)),
            pl.BlockSpec((C, C), lambda i: (0, 0)),
            pl.BlockSpec((1, C), lambda i: (0, 0)),
            pl.BlockSpec((C, C), lambda i: (0, 0)),
            pl.BlockSpec((1, C), lambda i: (0, 0)),
            pl.BlockSpec((C, 1), lambda i: (0, 0)),
            pl.BlockSpec((1, 1), lambda i: (0, 0)),
            pl.BlockSpec((C, _NH), lambda i: (0, 0)),
            pl.BlockSpec((C, _NH), lambda i: (0, 0)),
            pl.BlockSpec((1, _NH), lambda i: (0, 0)),
        ],
        out_specs=pl.BlockSpec((tm, _NH), lambda i: (i, 0)),
        compiler_params=pltpu.CompilerParams(dimension_semantics=("parallel",)),
    )(y, wc, bc.reshape(1, C), wo, bo.reshape(1, C), wa, ba.reshape(1, 1),
      w2c, w2g, b2.reshape(1, _NH))


# ----------------------------------------------------------------------------
# Parameter setup (deterministic, synthetic)
# ----------------------------------------------------------------------------
def make_params(key):
    def w(k, shape, scale=0.1):
        return scale * jax.random.normal(k, shape, dtype=jnp.float32)

    ks = jax.random.split(key, 20)
    p = {}
    # encoder 3x3 convs, (kh, kw, Cin, Cout)
    p["conv1_w"] = w(ks[0], (3, 3, 3, 8));    p["conv1_b"] = jnp.zeros((8,), jnp.float32)
    p["conv2_w"] = w(ks[1], (3, 3, 8, 16));   p["conv2_b"] = jnp.zeros((16,), jnp.float32)
    p["conv3_w"] = w(ks[2], (3, 3, 16, 32));  p["conv3_b"] = jnp.zeros((32,), jnp.float32)
    p["conv4_w"] = w(ks[3], (3, 3, 32, 32));  p["conv4_b"] = jnp.zeros((32,), jnp.float32)

    # scale-2 fused head: cnt2 (16->16 relu) then columns [head2 | cor2(sigmoid)]
    p["s2_wc"] = w(ks[4], (16, 16)); p["s2_bc"] = jnp.zeros((16,), jnp.float32)
    w2 = jnp.zeros((16, _NH), jnp.float32)
    w2 = w2.at[:, 0].set(w(ks[5], (16,)))
    w2 = w2.at[:, 1].set(w(ks[6], (16,)))
    p["s2_w2"] = w2; p["s2_b2"] = jnp.zeros((_NH,), jnp.float32)

    # scale-3 fused head
    p["s3_wc"] = w(ks[7], (32, 32)); p["s3_bc"] = jnp.zeros((32,), jnp.float32)
    w3 = jnp.zeros((32, _NH), jnp.float32)
    w3 = w3.at[:, 0].set(w(ks[8], (32,)))
    w3 = w3.at[:, 1].set(w(ks[9], (32,)))
    p["s3_w2"] = w3; p["s3_b2"] = jnp.zeros((_NH,), jnp.float32)

    # scale-4 fused head: cnt4, out, att(+gate); columns [head5(gated)|head4|cor4(sig)]
    p["s4_wc"] = w(ks[10], (32, 32)); p["s4_bc"] = jnp.zeros((32,), jnp.float32)
    p["s4_wo"] = w(ks[11], (32, 32)); p["s4_bo"] = jnp.zeros((32,), jnp.float32)
    p["s4_wa"] = w(ks[12], (32, 1));  p["s4_ba"] = jnp.zeros((1,), jnp.float32)
    w4c = jnp.zeros((32, _NH), jnp.float32)
    w4c = w4c.at[:, 1].set(w(ks[13], (32,)))   # head4 (from cnt4)
    w4c = w4c.at[:, 2].set(w(ks[14], (32,)))   # cor4  (sigmoid col)
    w4g = jnp.zeros((32, _NH), jnp.float32)
    w4g = w4g.at[:, 0].set(w(ks[15], (32,)))   # head5 (from gated out*att)
    p["s4_w2c"] = w4c; p["s4_w2g"] = w4g
    p["s4_b2"] = jnp.zeros((_NH,), jnp.float32)
    return p


# ----------------------------------------------------------------------------
# Seg_Net forward
# ----------------------------------------------------------------------------
def seg_net_forward(params, x):
    """x: (b, t, c, h, w) (PyTorch NCHW per frame)."""
    b, t, c, h, w = x.shape
    if h % 8 or w % 8:
        raise ValueError("h, w must be divisible by 8")
    bt = b * t
    x = jnp.transpose(x.reshape(bt, c, h, w), (0, 2, 3, 1))  # -> NHWC
    p = params

    # ---- encoder: in-kernel 3x3 taps, bf16 feature maps ----
    x1 = conv3x3(x,  p["conv1_w"], p["conv1_b"], stride=1)   # (bt, h,   w,   8)
    x2 = conv3x3(x1, p["conv2_w"], p["conv2_b"], stride=2)   # (bt, h/2, w/2, 16)
    x3 = conv3x3(x2, p["conv3_w"], p["conv3_b"], stride=2)   # (bt, h/4, w/4, 32)
    x4 = conv3x3(x3, p["conv4_w"], p["conv4_b"], stride=2)   # (bt, h/8, w/8, 32)

    # ---- decoder: one fused lane-dense heads kernel per scale ----
    def flat(z):
        return z.reshape(-1, z.shape[-1])

    H2 = fused_heads_23(flat(x2), p["s2_wc"], p["s2_bc"], p["s2_w2"], p["s2_b2"])
    H3 = fused_heads_23(flat(x3), p["s3_wc"], p["s3_bc"], p["s3_w2"], p["s3_b2"])
    H4 = fused_heads_4(flat(x4), p["s4_wc"], p["s4_bc"], p["s4_wo"], p["s4_bo"],
                       p["s4_wa"], p["s4_ba"], p["s4_w2c"], p["s4_w2g"], p["s4_b2"])

    def assemble(col, hs, ws):
        # nearest-neighbour upsample via broadcast+reshape (no jnp.repeat)
        fh, fw = h // hs, w // ws
        y = col.reshape(bt, hs, ws)
        y = jnp.broadcast_to(y[:, :, None, :, None], (bt, hs, fh, ws, fw))
        return y.reshape(b, t, 1, h, w)

    h2, w2_ = x2.shape[1], x2.shape[2]
    h3, w3_ = x3.shape[1], x3.shape[2]
    h4, w4_ = x4.shape[1], x4.shape[2]

    out2 = assemble(H2[:, 0], h2, w2_); cor2 = assemble(H2[:, 1], h2, w2_)
    out3 = assemble(H3[:, 0], h3, w3_); cor3 = assemble(H3[:, 1], h3, w3_)
    out5 = assemble(H4[:, 0], h4, w4_)
    out4 = assemble(H4[:, 1], h4, w4_); cor4 = assemble(H4[:, 2], h4, w4_)

    return ([out2, out3, out4, out5], [cor2, cor3, cor4])


# ----------------------------------------------------------------------------
if __name__ == "__main__":
    key = jax.random.PRNGKey(0)
    pkey, xkey = jax.random.split(key)
    params = make_params(pkey)

    b, t, c, h, w = 2, 2, 3, 16, 16
    x = jax.random.normal(xkey, (b, t, c, h, w), dtype=jnp.float32)

    fwd = jax.jit(seg_net_forward)
    outs, cors = fwd(params, x)
    jax.block_until_ready(outs)
    jax.block_until_ready(cors)

    assert all(o.shape == (b, t, 1, h, w) for o in outs)
    assert all(cm.shape == (b, t, 1, h, w) for cm in cors)
    assert all(bool(jnp.all(jnp.isfinite(o))) for o in outs + cors)
    print("KERNEL_OK")
</pallas_src>

<mosaic_0001>
module attributes {stable_mosaic.version = 11 : i64} {
  func.func @_conv3x3_kernel(%arg0: i32, %arg1: memref<1x1x18x18x3xbf16, #tpu.memory_space<vmem>>, %arg2: memref<9x3x8xf32, #tpu.memory_space<vmem>>, %arg3: memref<1x8xf32, #tpu.memory_space<vmem>>, %arg4: memref<1x256x8xbf16, #tpu.memory_space<vmem>>) attributes {dimension_semantics = [#tpu.dimension_semantics<parallel>], iteration_bounds = array<i64: 4>, scalar_prefetch = 0 : i64, scratch_operands = 0 : i64, tpu.core_type = #tpu.core_type<tc>, window_params = [{transform_indices = @transform_0, window_bounds = array<i64: 1, 1, 18, 18, 3>}, {pipeline_mode = #tpu.pipeline_mode<synchronous>, transform_indices = @transform_1, window_bounds = array<i64: 9, 3, 8>}, {pipeline_mode = #tpu.pipeline_mode<synchronous>, transform_indices = @transform_2, window_bounds = array<i64: 1, 8>}, {transform_indices = @transform_3, window_bounds = array<i64: 1, 256, 8>}]} {
    %c0 = arith.constant 0 : index
    %c0_0 = arith.constant 0 : index
    %c0_1 = arith.constant 0 : index
    %c0_2 = arith.constant 0 : index
    %c0_3 = arith.constant 0 : index
    %0 = vector.load %arg1[%c0, %c0_0, %c0_1, %c0_2, %c0_3] : memref<1x1x18x18x3xbf16, #tpu.memory_space<vmem>>, vector<1x1x18x18x3xbf16>
    %1 = vector.shape_cast %0 : vector<1x1x18x18x3xbf16> to vector<1x18x18x3xbf16>
    %2 = arith.extf %1 : vector<1x18x18x3xbf16> to vector<1x18x18x3xf32>
    %cst = arith.constant 0.000000e+00 : f32
    %3 = vector.broadcast %cst : f32 to vector<256x8xf32>
    %4 = vector.extract_strided_slice %2 {offsets = [0, 0, 0, 0], sizes = [1, 16, 16, 3], strides = [1, 1, 1, 1]} : vector<1x18x18x3xf32> to vector<1x16x16x3xf32>
    %5 = vector.shape_cast %4 : vector<1x16x16x3xf32> to vector<16x16x3xf32>
    %6 = vector.shape_cast %5 : vector<16x16x3xf32> to vector<256x3xf32>
    %c0_4 = arith.constant 0 : index
    %c0_5 = arith.constant 0 : index
    %c0_6 = arith.constant 0 : index
    %7 = vector.load %arg2[%c0_4, %c0_5, %c0_6] : memref<9x3x8xf32, #tpu.memory_space<vmem>>, vector<1x3x8xf32>
    %8 = vector.shape_cast %7 : vector<1x3x8xf32> to vector<3x8xf32>
    %cst_7 = arith.constant dense<0.000000e+00> : vector<256x8xf32>
    %9 = tpu.matmul %6, %8, %cst_7 {dimension_numbers = #tpu.dot_dimension_numbers<[1], [0], [0], [1], [0, 0, 1, 1], [], []>} : vector<256x3xf32>, vector<3x8xf32>, vector<256x8xf32> -> vector<256x8xf32>
    %10 = arith.addf %3, %9 : vector<256x8xf32>
    %11 = vector.extract_strided_slice %2 {offsets = [0, 0, 1, 0], sizes = [1, 16, 16, 3], strides = [1, 1, 1, 1]} : vector<1x18x18x3xf32> to vector<1x16x16x3xf32>
    %12 = vector.shape_cast %11 : vector<1x16x16x3xf32> to vector<16x16x3xf32>
    %13 = vector.shape_cast %12 : vector<16x16x3xf32> to vector<256x3xf32>
    %c1 = arith.constant 1 : index
    %c0_8 = arith.constant 0 : index
    %c0_9 = arith.constant 0 : index
    %14 = vector.load %arg2[%c1, %c0_8, %c0_9] : memref<9x3x8xf32, #tpu.memory_space<vmem>>, vector<1x3x8xf32>
    %15 = vector.shape_cast %14 : vector<1x3x8xf32> to vector<3x8xf32>
    %cst_10 = arith.constant dense<0.000000e+00> : vector<256x8xf32>
    %16 = tpu.matmul %13, %15, %cst_10 {dimension_numbers = #tpu.dot_dimension_numbers<[1], [0], [0], [1], [0, 0, 1, 1], [], []>} : vector<256x3xf32>, vector<3x8xf32>, vector<256x8xf32> -> vector<256x8xf32>
    %17 = arith.addf %10, %16 : vector<256x8xf32>
    %18 = vector.extract_strided_slice %2 {offsets = [0, 0, 2, 0], sizes = [1, 16, 16, 3], strides = [1, 1, 1, 1]} : vector<1x18x18x3xf32> to vector<1x16x16x3xf32>
    %19 = vector.shape_cast %18 : vector<1x16x16x3xf32> to vector<16x16x3xf32>
    %20 = vector.shape_cast %19 : vector<16x16x3xf32> to vector<256x3xf32>
    %c2 = arith.constant 2 : index
    %c0_11 = arith.constant 0 : index
    %c0_12 = arith.constant 0 : index
    %21 = vector.load %arg2[%c2, %c0_11, %c0_12] : memref<9x3x8xf32, #tpu.memory_space<vmem>>, vector<1x3x8xf32>
    %22 = vector.shape_cast %21 : vector<1x3x8xf32> to vector<3x8xf32>
    %cst_13 = arith.constant dense<0.000000e+00> : vector<256x8xf32>
    %23 = tpu.matmul %20, %22, %cst_13 {dimension_numbers = #tpu.dot_dimension_numbers<[1], [0], [0], [1], [0, 0, 1, 1], [], []>} : vector<256x3xf32>, vector<3x8xf32>, vector<256x8xf32> -> vector<256x8xf32>
    %24 = arith.addf %17, %23 : vector<256x8xf32>
    %25 = vector.extract_strided_slice %2 {offsets = [0, 1, 0, 0], sizes = [1, 16, 16, 3], strides = [1, 1, 1, 1]} : vector<1x18x18x3xf32> to vector<1x16x16x3xf32>
    %26 = vector.shape_cast %25 : vector<1x16x16x3xf32> to vector<16x16x3xf32>
    %27 = vector.shape_cast %26 : vector<16x16x3xf32> to vector<256x3xf32>
    %c3 = arith.constant 3 : index
    %c0_14 = arith.constant 0 : index
    %c0_15 = arith.constant 0 : index
    %28 = vector.load %arg2[%c3, %c0_14, %c0_15] : memref<9x3x8xf32, #tpu.memory_space<vmem>>, vector<1x3x8xf32>
    %29 = vector.shape_cast %28 : vector<1x3x8xf32> to vector<3x8xf32>
    %cst_16 = arith.constant dense<0.000000e+00> : vector<256x8xf32>
    %30 = tpu.matmul %27, %29, %cst_16 {dimension_numbers = #tpu.dot_dimension_numbers<[1], [0], [0], [1], [0, 0, 1, 1], [], []>} : vector<256x3xf32>, vector<3x8xf32>, vector<256x8xf32> -> vector<256x8xf32>
    %31 = arith.addf %24, %30 : vector<256x8xf32>
    %32 = vector.extract_strided_slice %2 {offsets = [0, 1, 1, 0], sizes = [1, 16, 16, 3], strides = [1, 1, 1, 1]} : vector<1x18x18x3xf32> to vector<1x16x16x3xf32>
    %33 = vector.shape_cast %32 : vector<1x16x16x3xf32> to vector<16x16x3xf32>
    %34 = vector.shape_cast %33 : vector<16x16x3xf32> to vector<256x3xf32>
    %c4 = arith.constant 4 : index
    %c0_17 = arith.constant 0 : index
    %c0_18 = arith.constant 0 : index
    %35 = vector.load %arg2[%c4, %c0_17, %c0_18] : memref<9x3x8xf32, #tpu.memory_space<vmem>>, vector<1x3x8xf32>
    %36 = vector.shape_cast %35 : vector<1x3x8xf32> to vector<3x8xf32>
    %cst_19 = arith.constant dense<0.000000e+00> : vector<256x8xf32>
    %37 = tpu.matmul %34, %36, %cst_19 {dimension_numbers = #tpu.dot_dimension_numbers<[1], [0], [0], [1], [0, 0, 1, 1], [], []>} : vector<256x3xf32>, vector<3x8xf32>, vector<256x8xf32> -> vector<256x8xf32>
    %38 = arith.addf %31, %37 : vector<256x8xf32>
    %39 = vector.extract_strided_slice %2 {offsets = [0, 1, 2, 0], sizes = [1, 16, 16, 3], strides = [1, 1, 1, 1]} : vector<1x18x18x3xf32> to vector<1x16x16x3xf32>
    %40 = vector.shape_cast %39 : vector<1x16x16x3xf32> to vector<16x16x3xf32>
    %41 = vector.shape_cast %40 : vector<16x16x3xf32> to vector<256x3xf32>
    %c5 = arith.constant 5 : index
    %c0_20 = arith.constant 0 : index
    %c0_21 = arith.constant 0 : index
    %42 = vector.load %arg2[%c5, %c0_20, %c0_21] : memref<9x3x8xf32, #tpu.memory_space<vmem>>, vector<1x3x8xf32>
    %43 = vector.shape_cast %42 : vector<1x3x8xf32> to vector<3x8xf32>
    %cst_22 = arith.constant dense<0.000000e+00> : vector<256x8xf32>
    %44 = tpu.matmul %41, %43, %cst_22 {dimension_numbers = #tpu.dot_dimension_numbers<[1], [0], [0], [1], [0, 0, 1, 1], [], []>} : vector<256x3xf32>, vector<3x8xf32>, vector<256x8xf32> -> vector<256x8xf32>
    %45 = arith.addf %38, %44 : vector<256x8xf32>
    %46 = vector.extract_strided_slice %2 {offsets = [0, 2, 0, 0], sizes = [1, 16, 16, 3], strides = [1, 1, 1, 1]} : vector<1x18x18x3xf32> to vector<1x16x16x3xf32>
    %47 = vector.shape_cast %46 : vector<1x16x16x3xf32> to vector<16x16x3xf32>
    %48 = vector.shape_cast %47 : vector<16x16x3xf32> to vector<256x3xf32>
    %c6 = arith.constant 6 : index
    %c0_23 = arith.constant 0 : index
    %c0_24 = arith.constant 0 : index
    %49 = vector.load %arg2[%c6, %c0_23, %c0_24] : memref<9x3x8xf32, #tpu.memory_space<vmem>>, vector<1x3x8xf32>
    %50 = vector.shape_cast %49 : vector<1x3x8xf32> to vector<3x8xf32>
    %cst_25 = arith.constant dense<0.000000e+00> : vector<256x8xf32>
    %51 = tpu.matmul %48, %50, %cst_25 {dimension_numbers = #tpu.dot_dimension_numbers<[1], [0], [0], [1], [0, 0, 1, 1], [], []>} : vector<256x3xf32>, vector<3x8xf32>, vector<256x8xf32> -> vector<256x8xf32>
    %52 = arith.addf %45, %51 : vector<256x8xf32>
    %53 = vector.extract_strided_slice %2 {offsets = [0, 2, 1, 0], sizes = [1, 16, 16, 3], strides = [1, 1, 1, 1]} : vector<1x18x18x3xf32> to vector<1x16x16x3xf32>
    %54 = vector.shape_cast %53 : vector<1x16x16x3xf32> to vector<16x16x3xf32>
    %55 = vector.shape_cast %54 : vector<16x16x3xf32> to vector<256x3xf32>
    %c7 = arith.constant 7 : index
    %c0_26 = arith.constant 0 : index
    %c0_27 = arith.constant 0 : index
    %56 = vector.load %arg2[%c7, %c0_26, %c0_27] : memref<9x3x8xf32, #tpu.memory_space<vmem>>, vector<1x3x8xf32>
    %57 = vector.shape_cast %56 : vector<1x3x8xf32> to vector<3x8xf32>
    %cst_28 = arith.constant dense<0.000000e+00> : vector<256x8xf32>
    %58 = tpu.matmul %55, %57, %cst_28 {dimension_numbers = #tpu.dot_dimension_numbers<[1], [0], [0], [1], [0, 0, 1, 1], [], []>} : vector<256x3xf32>, vector<3x8xf32>, vector<256x8xf32> -> vector<256x8xf32>
    %59 = arith.addf %52, %58 : vector<256x8xf32>
    %60 = vector.extract_strided_slice %2 {offsets = [0, 2, 2, 0], sizes = [1, 16, 16, 3], strides = [1, 1, 1, 1]} : vector<1x18x18x3xf32> to vector<1x16x16x3xf32>
    %61 = vector.shape_cast %60 : vector<1x16x16x3xf32> to vector<16x16x3xf32>
    %62 = vector.shape_cast %61 : vector<16x16x3xf32> to vector<256x3xf32>
    %c8 = arith.constant 8 : index
    %c0_29 = arith.constant 0 : index
    %c0_30 = arith.constant 0 : index
    %63 = vector.load %arg2[%c8, %c0_29, %c0_30] : memref<9x3x8xf32, #tpu.memory_space<vmem>>, vector<1x3x8xf32>
    %64 = vector.shape_cast %63 : vector<1x3x8xf32> to vector<3x8xf32>
    %cst_31 = arith.constant dense<0.000000e+00> : vector<256x8xf32>
    %65 = tpu.matmul %62, %64, %cst_31 {dimension_numbers = #tpu.dot_dimension_numbers<[1], [0], [0], [1], [0, 0, 1, 1], [], []>} : vector<256x3xf32>, vector<3x8xf32>, vector<256x8xf32> -> vector<256x8xf32>
    %66 = arith.addf %59, %65 : vector<256x8xf32>
    %c0_32 = arith.constant 0 : index
    %c0_33 = arith.constant 0 : index
    %67 = vector.load %arg3[%c0_32, %c0_33] : memref<1x8xf32, #tpu.memory_space<vmem>>, vector<1x8xf32>
    %68 = vector.broadcast %67 : vector<1x8xf32> to vector<256x8xf32>
    %69 = arith.addf %66, %68 : vector<256x8xf32>
    %cst_34 = arith.constant 0.000000e+00 : f32
    %70 = vector.broadcast %cst_34 : f32 to vector<256x8xf32>
    %71 = arith.maximumf %69, %70 : vector<256x8xf32>
    %72 = arith.truncf %71 : vector<256x8xf32> to vector<256x8xbf16>
    %c0_35 = arith.constant 0 : index
    %c0_36 = arith.constant 0 : index
    %c0_37 = arith.constant 0 : index
    %73 = vector.load %arg4[%c0_35, %c0_36, %c0_37] : memref<1x256x8xbf16, #tpu.memory_space<vmem>>, vector<1x256x8xbf16>
    %74 = vector.shape_cast %73 : vector<1x256x8xbf16> to vector<256x8xbf16>
    %75 = vector.shape_cast %72 : vector<256x8xbf16> to vector<1x256x8xbf16>
    tpu.vector_store %arg4[%c0_35, %c0_36, %c0_37], %75 {strides = array<i32>} : memref<1x256x8xbf16, #tpu.memory_space<vmem>>, vector<1x256x8xbf16>,
    return
  }
  func.func @transform_0(%arg0: i32) -> (i32, i32, i32, i32, i32) {
    %c0_i32 = arith.constant 0 : i32
    %c0_i32_0 = arith.constant 0 : i32
    %c0_i32_1 = arith.constant 0 : i32
    %c0_i32_2 = arith.constant 0 : i32
    %c0_i32_3 = arith.constant 0 : i32
    return %arg0, %c0_i32, %c0_i32_0, %c0_i32_1, %c0_i32_2 : i32, i32, i32, i32, i32
  }
  func.func @transform_1(%arg0: i32) -> (i32, i32, i32) {
    %c0_i32 = arith.constant 0 : i32
    %c0_i32_0 = arith.constant 0 : i32
    %c0_i32_1 = arith.constant 0 : i32
    %c0_i32_2 = arith.constant 0 : i32
    return %c0_i32, %c0_i32_0, %c0_i32_1 : i32, i32, i32
  }
  func.func @transform_2(%arg0: i32) -> (i32, i32) {
    %c0_i32 = arith.constant 0 : i32
    %c0_i32_0 = arith.constant 0 : i32
    %c0_i32_1 = arith.constant 0 : i32
    return %c0_i32, %c0_i32_0 : i32, i32
  }
  func.func @transform_3(%arg0: i32) -> (i32, i32, i32) {
    %c0_i32 = arith.constant 0 : i32
    %c0_i32_0 = arith.constant 0 : i32
    %c0_i32_1 = arith.constant 0 : i32
    return %arg0, %c0_i32, %c0_i32_0 : i32, i32, i32
  }
}

module attributes {stable_mosaic.version = 11 : i64} {
  func.func @_conv3x3_kernel(%arg0: i32, %arg1: memref<1x4x9x9x8xbf16, #tpu.memory_space<vmem>>, %arg2: memref<9x8x16xf32, #tpu.memory_space<vmem>>, %arg3: memref<1x16xf32, #tpu.memory_space<vmem>>, %arg4: memref<1x64x16xbf16, #tpu.memory_space<vmem>>) attributes {dimension_semantics = [#tpu.dimension_semantics<parallel>], iteration_bounds = array<i64: 4>, scalar_prefetch = 0 : i64, scratch_operands = 0 : i64, tpu.core_type = #tpu.core_type<tc>, window_params = [{transform_indices = @transform_0, window_bounds = array<i64: 1, 4, 9, 9, 8>}, {pipeline_mode = #tpu.pipeline_mode<synchronous>, transform_indices = @transform_1, window_bounds = array<i64: 9, 8, 16>}, {pipeline_mode = #tpu.pipeline_mode<synchronous>, transform_indices = @transform_2, window_bounds = array<i64: 1, 16>}, {transform_indices = @transform_3, window_bounds = array<i64: 1, 64, 16>}]} {
    %c0 = arith.constant 0 : index
    %c0_0 = arith.constant 0 : index
    %c0_1 = arith.constant 0 : index
    %c0_2 = arith.constant 0 : index
    %c0_3 = arith.constant 0 : index
    %0 = vector.load %arg1[%c0, %c0_0, %c0_1, %c0_2, %c0_3] : memref<1x4x9x9x8xbf16, #tpu.memory_space<vmem>>, vector<1x4x9x9x8xbf16>
    %1 = vector.shape_cast %0 : vector<1x4x9x9x8xbf16> to vector<4x9x9x8xbf16>
    %2 = arith.extf %1 : vector<4x9x9x8xbf16> to vector<4x9x9x8xf32>
    %cst = arith.constant 0.000000e+00 : f32
    %3 = vector.broadcast %cst : f32 to vector<64x16xf32>
    %4 = vector.extract_strided_slice %2 {offsets = [0, 0, 0, 0], sizes = [1, 8, 8, 8], strides = [1, 1, 1, 1]} : vector<4x9x9x8xf32> to vector<1x8x8x8xf32>
    %5 = vector.shape_cast %4 : vector<1x8x8x8xf32> to vector<8x8x8xf32>
    %6 = vector.shape_cast %5 : vector<8x8x8xf32> to vector<64x8xf32>
    %c0_4 = arith.constant 0 : index
    %c0_5 = arith.constant 0 : index
    %c0_6 = arith.constant 0 : index
    %7 = vector.load %arg2[%c0_4, %c0_5, %c0_6] : memref<9x8x16xf32, #tpu.memory_space<vmem>>, vector<1x8x16xf32>
    %8 = vector.shape_cast %7 : vector<1x8x16xf32> to vector<8x16xf32>
    %cst_7 = arith.constant dense<0.000000e+00> : vector<64x16xf32>
    %9 = tpu.matmul %6, %8, %cst_7 {dimension_numbers = #tpu.dot_dimension_numbers<[1], [0], [0], [1], [0, 0, 1, 1], [], []>} : vector<64x8xf32>, vector<8x16xf32>, vector<64x16xf32> -> vector<64x16xf32>
    %10 = arith.addf %3, %9 : vector<64x16xf32>
    %11 = vector.extract_strided_slice %2 {offsets = [1, 0, 0, 0], sizes = [1, 8, 8, 8], strides = [1, 1, 1, 1]} : vector<4x9x9x8xf32> to vector<1x8x8x8xf32>
    %12 = vector.shape_cast %11 : vector<1x8x8x8xf32> to vector<8x8x8xf32>
    %13 = vector.shape_cast %12 : vector<8x8x8xf32> to vector<64x8xf32>
    %c1 = arith.constant 1 : index
    %c0_8 = arith.constant 0 : index
    %c0_9 = arith.constant 0 : index
    %14 = vector.load %arg2[%c1, %c0_8, %c0_9] : memref<9x8x16xf32, #tpu.memory_space<vmem>>, vector<1x8x16xf32>
    %15 = vector.shape_cast %14 : vector<1x8x16xf32> to vector<8x16xf32>
    %cst_10 = arith.constant dense<0.000000e+00> : vector<64x16xf32>
    %16 = tpu.matmul %13, %15, %cst_10 {dimension_numbers = #tpu.dot_dimension_numbers<[1], [0], [0], [1], [0, 0, 1, 1], [], []>} : vector<64x8xf32>, vector<8x16xf32>, vector<64x16xf32> -> vector<64x16xf32>
    %17 = arith.addf %10, %16 : vector<64x16xf32>
    %18 = vector.extract_strided_slice %2 {offsets = [0, 0, 1, 0], sizes = [1, 8, 8, 8], strides = [1, 1, 1, 1]} : vector<4x9x9x8xf32> to vector<1x8x8x8xf32>
    %19 = vector.shape_cast %18 : vector<1x8x8x8xf32> to vector<8x8x8xf32>
    %20 = vector.shape_cast %19 : vector<8x8x8xf32> to vector<64x8xf32>
    %c2 = arith.constant 2 : index
    %c0_11 = arith.constant 0 : index
    %c0_12 = arith.constant 0 : index
    %21 = vector.load %arg2[%c2, %c0_11, %c0_12] : memref<9x8x16xf32, #tpu.memory_space<vmem>>, vector<1x8x16xf32>
    %22 = vector.shape_cast %21 : vector<1x8x16xf32> to vector<8x16xf32>
    %cst_13 = arith.constant dense<0.000000e+00> : vector<64x16xf32>
    %23 = tpu.matmul %20, %22, %cst_13 {dimension_numbers = #tpu.dot_dimension_numbers<[1], [0], [0], [1], [0, 0, 1, 1], [], []>} : vector<64x8xf32>, vector<8x16xf32>, vector<64x16xf32> -> vector<64x16xf32>
    %24 = arith.addf %17, %23 : vector<64x16xf32>
    %25 = vector.extract_strided_slice %2 {offsets = [2, 0, 0, 0], sizes = [1, 8, 8, 8], strides = [1, 1, 1, 1]} : vector<4x9x9x8xf32> to vector<1x8x8x8xf32>
    %26 = vector.shape_cast %25 : vector<1x8x8x8xf32> to vector<8x8x8xf32>
    %27 = vector.shape_cast %26 : vector<8x8x8xf32> to vector<64x8xf32>
    %c3 = arith.constant 3 : index
    %c0_14 = arith.constant 0 : index
    %c0_15 = arith.constant 0 : index
    %28 = vector.load %arg2[%c3, %c0_14, %c0_15] : memref<9x8x16xf32, #tpu.memory_space<vmem>>, vector<1x8x16xf32>
    %29 = vector.shape_cast %28 : vector<1x8x16xf32> to vector<8x16xf32>
    %cst_16 = arith.constant dense<0.000000e+00> : vector<64x16xf32>
    %30 = tpu.matmul %27, %29, %cst_16 {dimension_numbers = #tpu.dot_dimension_numbers<[1], [0], [0], [1], [0, 0, 1, 1], [], []>} : vector<64x8xf32>, vector<8x16xf32>, vector<64x16xf32> -> vector<64x16xf32>
    %31 = arith.addf %24, %30 : vector<64x16xf32>
    %32 = vector.extract_strided_slice %2 {offsets = [3, 0, 0, 0], sizes = [1, 8, 8, 8], strides = [1, 1, 1, 1]} : vector<4x9x9x8xf32> to vector<1x8x8x8xf32>
    %33 = vector.shape_cast %32 : vector<1x8x8x8xf32> to vector<8x8x8xf32>
    %34 = vector.shape_cast %33 : vector<8x8x8xf32> to vector<64x8xf32>
    %c4 = arith.constant 4 : index
    %c0_17 = arith.constant 0 : index
    %c0_18 = arith.constant 0 : index
    %35 = vector.load %arg2[%c4, %c0_17, %c0_18] : memref<9x8x16xf32, #tpu.memory_space<vmem>>, vector<1x8x16xf32>
    %36 = vector.shape_cast %35 : vector<1x8x16xf32> to vector<8x16xf32>
    %cst_19 = arith.constant dense<0.000000e+00> : vector<64x16xf32>
    %37 = tpu.matmul %34, %36, %cst_19 {dimension_numbers = #tpu.dot_dimension_numbers<[1], [0], [0], [1], [0, 0, 1, 1], [], []>} : vector<64x8xf32>, vector<8x16xf32>, vector<64x16xf32> -> vector<64x16xf32>
    %38 = arith.addf %31, %37 : vector<64x16xf32>
    %39 = vector.extract_strided_slice %2 {offsets = [2, 0, 1, 0], sizes = [1, 8, 8, 8], strides = [1, 1, 1, 1]} : vector<4x9x9x8xf32> to vector<1x8x8x8xf32>
    %40 = vector.shape_cast %39 : vector<1x8x8x8xf32> to vector<8x8x8xf32>
    %41 = vector.shape_cast %40 : vector<8x8x8xf32> to vector<64x8xf32>
    %c5 = arith.constant 5 : index
    %c0_20 = arith.constant 0 : index
    %c0_21 = arith.constant 0 : index
    %42 = vector.load %arg2[%c5, %c0_20, %c0_21] : memref<9x8x16xf32, #tpu.memory_space<vmem>>, vector<1x8x16xf32>
    %43 = vector.shape_cast %42 : vector<1x8x16xf32> to vector<8x16xf32>
    %cst_22 = arith.constant dense<0.000000e+00> : vector<64x16xf32>
    %44 = tpu.matmul %41, %43, %cst_22 {dimension_numbers = #tpu.dot_dimension_numbers<[1], [0], [0], [1], [0, 0, 1, 1], [], []>} : vector<64x8xf32>, vector<8x16xf32>, vector<64x16xf32> -> vector<64x16xf32>
    %45 = arith.addf %38, %44 : vector<64x16xf32>
    %46 = vector.extract_strided_slice %2 {offsets = [0, 1, 0, 0], sizes = [1, 8, 8, 8], strides = [1, 1, 1, 1]} : vector<4x9x9x8xf32> to vector<1x8x8x8xf32>
    %47 = vector.shape_cast %46 : vector<1x8x8x8xf32> to vector<8x8x8xf32>
    %48 = vector.shape_cast %47 : vector<8x8x8xf32> to vector<64x8xf32>
    %c6 = arith.constant 6 : index
    %c0_23 = arith.constant 0 : index
    %c0_24 = arith.constant 0 : index
    %49 = vector.load %arg2[%c6, %c0_23, %c0_24] : memref<9x8x16xf32, #tpu.memory_space<vmem>>, vector<1x8x16xf32>
    %50 = vector.shape_cast %49 : vector<1x8x16xf32> to vector<8x16xf32>
    %cst_25 = arith.constant dense<0.000000e+00> : vector<64x16xf32>
    %51 = tpu.matmul %48, %50, %cst_25 {dimension_numbers = #tpu.dot_dimension_numbers<[1], [0], [0], [1], [0, 0, 1, 1], [], []>} : vector<64x8xf32>, vector<8x16xf32>, vector<64x16xf32> -> vector<64x16xf32>
    %52 = arith.addf %45, %51 : vector<64x16xf32>
    %53 = vector.extract_strided_slice %2 {offsets = [1, 1, 0, 0], sizes = [1, 8, 8, 8], strides = [1, 1, 1, 1]} : vector<4x9x9x8xf32> to vector<1x8x8x8xf32>
    %54 = vector.shape_cast %53 : vector<1x8x8x8xf32> to vector<8x8x8xf32>
    %55 = vector.shape_cast %54 : vector<8x8x8xf32> to vector<64x8xf32>
    %c7 = arith.constant 7 : index
    %c0_26 = arith.constant 0 : index
    %c0_27 = arith.constant 0 : index
    %56 = vector.load %arg2[%c7, %c0_26, %c0_27] : memref<9x8x16xf32, #tpu.memory_space<vmem>>, vector<1x8x16xf32>
    %57 = vector.shape_cast %56 : vector<1x8x16xf32> to vector<8x16xf32>
    %cst_28 = arith.constant dense<0.000000e+00> : vector<64x16xf32>
    %58 = tpu.matmul %55, %57, %cst_28 {dimension_numbers = #tpu.dot_dimension_numbers<[1], [0], [0], [1], [0, 0, 1, 1], [], []>} : vector<64x8xf32>, vector<8x16xf32>, vector<64x16xf32> -> vector<64x16xf32>
    %59 = arith.addf %52, %58 : vector<64x16xf32>
    %60 = vector.extract_strided_slice %2 {offsets = [0, 1, 1, 0], sizes = [1, 8, 8, 8], strides = [1, 1, 1, 1]} : vector<4x9x9x8xf32> to vector<1x8x8x8xf32>
    %61 = vector.shape_cast %60 : vector<1x8x8x8xf32> to vector<8x8x8xf32>
    %62 = vector.shape_cast %61 : vector<8x8x8xf32> to vector<64x8xf32>
    %c8 = arith.constant 8 : index
    %c0_29 = arith.constant 0 : index
    %c0_30 = arith.constant 0 : index
    %63 = vector.load %arg2[%c8, %c0_29, %c0_30] : memref<9x8x16xf32, #tpu.memory_space<vmem>>, vector<1x8x16xf32>
    %64 = vector.shape_cast %63 : vector<1x8x16xf32> to vector<8x16xf32>
    %cst_31 = arith.constant dense<0.000000e+00> : vector<64x16xf32>
    %65 = tpu.matmul %62, %64, %cst_31 {dimension_numbers = #tpu.dot_dimension_numbers<[1], [0], [0], [1], [0, 0, 1, 1], [], []>} : vector<64x8xf32>, vector<8x16xf32>, vector<64x16xf32> -> vector<64x16xf32>
    %66 = arith.addf %59, %65 : vector<64x16xf32>
    %c0_32 = arith.constant 0 : index
    %c0_33 = arith.constant 0 : index
    %67 = vector.load %arg3[%c0_32, %c0_33] : memref<1x16xf32, #tpu.memory_space<vmem>>, vector<1x16xf32>
    %68 = vector.broadcast %67 : vector<1x16xf32> to vector<64x16xf32>
    %69 = arith.addf %66, %68 : vector<64x16xf32>
    %cst_34 = arith.constant 0.000000e+00 : f32
    %70 = vector.broadcast %cst_34 : f32 to vector<64x16xf32>
    %71 = arith.maximumf %69, %70 : vector<64x16xf32>
    %72 = arith.truncf %71 : vector<64x16xf32> to vector<64x16xbf16>
    %c0_35 = arith.constant 0 : index
    %c0_36 = arith.constant 0 : index
    %c0_37 = arith.constant 0 : index
    %73 = vector.load %arg4[%c0_35, %c0_36, %c0_37] : memref<1x64x16xbf16, #tpu.memory_space<vmem>>, vector<1x64x16xbf16>
    %74 = vector.shape_cast %73 : vector<1x64x16xbf16> to vector<64x16xbf16>
    %75 = vector.shape_cast %72 : vector<64x16xbf16> to vector<1x64x16xbf16>
    tpu.vector_store %arg4[%c0_35, %c0_36, %c0_37], %75 {strides = array<i32>} : memref<1x64x16xbf16, #tpu.memory_space<vmem>>, vector<1x64x16xbf16>,
    return
  }
  func.func @transform_0(%arg0: i32) -> (i32, i32, i32, i32, i32) {
    %c0_i32 = arith.constant 0 : i32
    %c0_i32_0 = arith.constant 0 : i32
    %c0_i32_1 = arith.constant 0 : i32
    %c0_i32_2 = arith.constant 0 : i32
    %c0_i32_3 = arith.constant 0 : i32
    return %arg0, %c0_i32, %c0_i32_0, %c0_i32_1, %c0_i32_2 : i32, i32, i32, i32, i32
  }
  func.func @transform_1(%arg0: i32) -> (i32, i32, i32) {
    %c0_i32 = arith.constant 0 : i32
    %c0_i32_0 = arith.constant 0 : i32
    %c0_i32_1 = arith.constant 0 : i32
    %c0_i32_2 = arith.constant 0 : i32
    return %c0_i32, %c0_i32_0, %c0_i32_1 : i32, i32, i32
  }
  func.func @transform_2(%arg0: i32) -> (i32, i32) {
    %c0_i32 = arith.constant 0 : i32
    %c0_i32_0 = arith.constant 0 : i32
    %c0_i32_1 = arith.constant 0 : i32
    return %c0_i32, %c0_i32_0 : i32, i32
  }
  func.func @transform_3(%arg0: i32) -> (i32, i32, i32) {
    %c0_i32 = arith.constant 0 : i32
    %c0_i32_0 = arith.constant 0 : i32
    %c0_i32_1 = arith.constant 0 : i32
    return %arg0, %c0_i32, %c0_i32_0 : i32, i32, i32
  }
}

module attributes {stable_mosaic.version = 11 : i64} {
  func.func @_conv3x3_kernel(%arg0: i32, %arg1: memref<1x4x5x5x16xbf16, #tpu.memory_space<vmem>>, %arg2: memref<9x16x32xf32, #tpu.memory_space<vmem>>, %arg3: memref<1x32xf32, #tpu.memory_space<vmem>>, %arg4: memref<1x16x32xbf16, #tpu.memory_space<vmem>>) attributes {dimension_semantics = [#tpu.dimension_semantics<parallel>], iteration_bounds = array<i64: 4>, scalar_prefetch = 0 : i64, scratch_operands = 0 : i64, tpu.core_type = #tpu.core_type<tc>, window_params = [{transform_indices = @transform_0, window_bounds = array<i64: 1, 4, 5, 5, 16>}, {pipeline_mode = #tpu.pipeline_mode<synchronous>, transform_indices = @transform_1, window_bounds = array<i64: 9, 16, 32>}, {pipeline_mode = #tpu.pipeline_mode<synchronous>, transform_indices = @transform_2, window_bounds = array<i64: 1, 32>}, {transform_indices = @transform_3, window_bounds = array<i64: 1, 16, 32>}]} {
    %c0 = arith.constant 0 : index
    %c0_0 = arith.constant 0 : index
    %c0_1 = arith.constant 0 : index
    %c0_2 = arith.constant 0 : index
    %c0_3 = arith.constant 0 : index
    %0 = vector.load %arg1[%c0, %c0_0, %c0_1, %c0_2, %c0_3] : memref<1x4x5x5x16xbf16, #tpu.memory_space<vmem>>, vector<1x4x5x5x16xbf16>
    %1 = vector.shape_cast %0 : vector<1x4x5x5x16xbf16> to vector<4x5x5x16xbf16>
    %2 = arith.extf %1 : vector<4x5x5x16xbf16> to vector<4x5x5x16xf32>
    %cst = arith.constant 0.000000e+00 : f32
    %3 = vector.broadcast %cst : f32 to vector<16x32xf32>
    %4 = vector.extract_strided_slice %2 {offsets = [0, 0, 0, 0], sizes = [1, 4, 4, 16], strides = [1, 1, 1, 1]} : vector<4x5x5x16xf32> to vector<1x4x4x16xf32>
    %5 = vector.shape_cast %4 : vector<1x4x4x16xf32> to vector<4x4x16xf32>
    %6 = vector.shape_cast %5 : vector<4x4x16xf32> to vector<16x16xf32>
    %c0_4 = arith.constant 0 : index
    %c0_5 = arith.constant 0 : index
    %c0_6 = arith.constant 0 : index
    %7 = vector.load %arg2[%c0_4, %c0_5, %c0_6] : memref<9x16x32xf32, #tpu.memory_space<vmem>>, vector<1x16x32xf32>
    %8 = vector.shape_cast %7 : vector<1x16x32xf32> to vector<16x32xf32>
    %cst_7 = arith.constant dense<0.000000e+00> : vector<16x32xf32>
    %9 = tpu.matmul %6, %8, %cst_7 {dimension_numbers = #tpu.dot_dimension_numbers<[1], [0], [0], [1], [0, 0, 1, 1], [], []>} : vector<16x16xf32>, vector<16x32xf32>, vector<16x32xf32> -> vector<16x32xf32>
    %10 = arith.addf %3, %9 : vector<16x32xf32>
    %11 = vector.extract_strided_slice %2 {offsets = [1, 0, 0, 0], sizes = [1, 4, 4, 16], strides = [1, 1, 1, 1]} : vector<4x5x5x16xf32> to vector<1x4x4x16xf32>
    %12 = vector.shape_cast %11 : vector<1x4x4x16xf32> to vector<4x4x16xf32>
    %13 = vector.shape_cast %12 : vector<4x4x16xf32> to vector<16x16xf32>
    %c1 = arith.constant 1 : index
    %c0_8 = arith.constant 0 : index
    %c0_9 = arith.constant 0 : index
    %14 = vector.load %arg2[%c1, %c0_8, %c0_9] : memref<9x16x32xf32, #tpu.memory_space<vmem>>, vector<1x16x32xf32>
    %15 = vector.shape_cast %14 : vector<1x16x32xf32> to vector<16x32xf32>
    %cst_10 = arith.constant dense<0.000000e+00> : vector<16x32xf32>
    %16 = tpu.matmul %13, %15, %cst_10 {dimension_numbers = #tpu.dot_dimension_numbers<[1], [0], [0], [1], [0, 0, 1, 1], [], []>} : vector<16x16xf32>, vector<16x32xf32>, vector<16x32xf32> -> vector<16x32xf32>
    %17 = arith.addf %10, %16 : vector<16x32xf32>
    %18 = vector.extract_strided_slice %2 {offsets = [0, 0, 1, 0], sizes = [1, 4, 4, 16], strides = [1, 1, 1, 1]} : vector<4x5x5x16xf32> to vector<1x4x4x16xf32>
    %19 = vector.shape_cast %18 : vector<1x4x4x16xf32> to vector<4x4x16xf32>
    %20 = vector.shape_cast %19 : vector<4x4x16xf32> to vector<16x16xf32>
    %c2 = arith.constant 2 : index
    %c0_11 = arith.constant 0 : index
    %c0_12 = arith.constant 0 : index
    %21 = vector.load %arg2[%c2, %c0_11, %c0_12] : memref<9x16x32xf32, #tpu.memory_space<vmem>>, vector<1x16x32xf32>
    %22 = vector.shape_cast %21 : vector<1x16x32xf32> to vector<16x32xf32>
    %cst_13 = arith.constant dense<0.000000e+00> : vector<16x32xf32>
    %23 = tpu.matmul %20, %22, %cst_13 {dimension_numbers = #tpu.dot_dimension_numbers<[1], [0], [0], [1], [0, 0, 1, 1], [], []>} : vector<16x16xf32>, vector<16x32xf32>, vector<16x32xf32> -> vector<16x32xf32>
    %24 = arith.addf %17, %23 : vector<16x32xf32>
    %25 = vector.extract_strided_slice %2 {offsets = [2, 0, 0, 0], sizes = [1, 4, 4, 16], strides = [1, 1, 1, 1]} : vector<4x5x5x16xf32> to vector<1x4x4x16xf32>
    %26 = vector.shape_cast %25 : vector<1x4x4x16xf32> to vector<4x4x16xf32>
    %27 = vector.shape_cast %26 : vector<4x4x16xf32> to vector<16x16xf32>
    %c3 = arith.constant 3 : index
    %c0_14 = arith.constant 0 : index
    %c0_15 = arith.constant 0 : index
    %28 = vector.load %arg2[%c3, %c0_14, %c0_15] : memref<9x16x32xf32, #tpu.memory_space<vmem>>, vector<1x16x32xf32>
    %29 = vector.shape_cast %28 : vector<1x16x32xf32> to vector<16x32xf32>
    %cst_16 = arith.constant dense<0.000000e+00> : vector<16x32xf32>
    %30 = tpu.matmul %27, %29, %cst_16 {dimension_numbers = #tpu.dot_dimension_numbers<[1], [0], [0], [1], [0, 0, 1, 1], [], []>} : vector<16x16xf32>, vector<16x32xf32>, vector<16x32xf32> -> vector<16x32xf32>
    %31 = arith.addf %24, %30 : vector<16x32xf32>
    %32 = vector.extract_strided_slice %2 {offsets = [3, 0, 0, 0], sizes = [1, 4, 4, 16], strides = [1, 1, 1, 1]} : vector<4x5x5x16xf32> to vector<1x4x4x16xf32>
    %33 = vector.shape_cast %32 : vector<1x4x4x16xf32> to vector<4x4x16xf32>
    %34 = vector.shape_cast %33 : vector<4x4x16xf32> to vector<16x16xf32>
    %c4 = arith.constant 4 : index
    %c0_17 = arith.constant 0 : index
    %c0_18 = arith.constant 0 : index
    %35 = vector.load %arg2[%c4, %c0_17, %c0_18] : memref<9x16x32xf32, #tpu.memory_space<vmem>>, vector<1x16x32xf32>
    %36 = vector.shape_cast %35 : vector<1x16x32xf32> to vector<16x32xf32>
    %cst_19 = arith.constant dense<0.000000e+00> : vector<16x32xf32>
    %37 = tpu.matmul %34, %36, %cst_19 {dimension_numbers = #tpu.dot_dimension_numbers<[1], [0], [0], [1], [0, 0, 1, 1], [], []>} : vector<16x16xf32>, vector<16x32xf32>, vector<16x32xf32> -> vector<16x32xf32>
    %38 = arith.addf %31, %37 : vector<16x32xf32>
    %39 = vector.extract_strided_slice %2 {offsets = [2, 0, 1, 0], sizes = [1, 4, 4, 16], strides = [1, 1, 1, 1]} : vector<4x5x5x16xf32> to vector<1x4x4x16xf32>
    %40 = vector.shape_cast %39 : vector<1x4x4x16xf32> to vector<4x4x16xf32>
    %41 = vector.shape_cast %40 : vector<4x4x16xf32> to vector<16x16xf32>
    %c5 = arith.constant 5 : index
    %c0_20 = arith.constant 0 : index
    %c0_21 = arith.constant 0 : index
    %42 = vector.load %arg2[%c5, %c0_20, %c0_21] : memref<9x16x32xf32, #tpu.memory_space<vmem>>, vector<1x16x32xf32>
    %43 = vector.shape_cast %42 : vector<1x16x32xf32> to vector<16x32xf32>
    %cst_22 = arith.constant dense<0.000000e+00> : vector<16x32xf32>
    %44 = tpu.matmul %41, %43, %cst_22 {dimension_numbers = #tpu.dot_dimension_numbers<[1], [0], [0], [1], [0, 0, 1, 1], [], []>} : vector<16x16xf32>, vector<16x32xf32>, vector<16x32xf32> -> vector<16x32xf32>
    %45 = arith.addf %38, %44 : vector<16x32xf32>
    %46 = vector.extract_strided_slice %2 {offsets = [0, 1, 0, 0], sizes = [1, 4, 4, 16], strides = [1, 1, 1, 1]} : vector<4x5x5x16xf32> to vector<1x4x4x16xf32>
    %47 = vector.shape_cast %46 : vector<1x4x4x16xf32> to vector<4x4x16xf32>
    %48 = vector.shape_cast %47 : vector<4x4x16xf32> to vector<16x16xf32>
    %c6 = arith.constant 6 : index
    %c0_23 = arith.constant 0 : index
    %c0_24 = arith.constant 0 : index
    %49 = vector.load %arg2[%c6, %c0_23, %c0_24] : memref<9x16x32xf32, #tpu.memory_space<vmem>>, vector<1x16x32xf32>
    %50 = vector.shape_cast %49 : vector<1x16x32xf32> to vector<16x32xf32>
    %cst_25 = arith.constant dense<0.000000e+00> : vector<16x32xf32>
    %51 = tpu.matmul %48, %50, %cst_25 {dimension_numbers = #tpu.dot_dimension_numbers<[1], [0], [0], [1], [0, 0, 1, 1], [], []>} : vector<16x16xf32>, vector<16x32xf32>, vector<16x32xf32> -> vector<16x32xf32>
    %52 = arith.addf %45, %51 : vector<16x32xf32>
    %53 = vector.extract_strided_slice %2 {offsets = [1, 1, 0, 0], sizes = [1, 4, 4, 16], strides = [1, 1, 1, 1]} : vector<4x5x5x16xf32> to vector<1x4x4x16xf32>
    %54 = vector.shape_cast %53 : vector<1x4x4x16xf32> to vector<4x4x16xf32>
    %55 = vector.shape_cast %54 : vector<4x4x16xf32> to vector<16x16xf32>
    %c7 = arith.constant 7 : index
    %c0_26 = arith.constant 0 : index
    %c0_27 = arith.constant 0 : index
    %56 = vector.load %arg2[%c7, %c0_26, %c0_27] : memref<9x16x32xf32, #tpu.memory_space<vmem>>, vector<1x16x32xf32>
    %57 = vector.shape_cast %56 : vector<1x16x32xf32> to vector<16x32xf32>
    %cst_28 = arith.constant dense<0.000000e+00> : vector<16x32xf32>
    %58 = tpu.matmul %55, %57, %cst_28 {dimension_numbers = #tpu.dot_dimension_numbers<[1], [0], [0], [1], [0, 0, 1, 1], [], []>} : vector<16x16xf32>, vector<16x32xf32>, vector<16x32xf32> -> vector<16x32xf32>
    %59 = arith.addf %52, %58 : vector<16x32xf32>
    %60 = vector.extract_strided_slice %2 {offsets = [0, 1, 1, 0], sizes = [1, 4, 4, 16], strides = [1, 1, 1, 1]} : vector<4x5x5x16xf32> to vector<1x4x4x16xf32>
    %61 = vector.shape_cast %60 : vector<1x4x4x16xf32> to vector<4x4x16xf32>
    %62 = vector.shape_cast %61 : vector<4x4x16xf32> to vector<16x16xf32>
    %c8 = arith.constant 8 : index
    %c0_29 = arith.constant 0 : index
    %c0_30 = arith.constant 0 : index
    %63 = vector.load %arg2[%c8, %c0_29, %c0_30] : memref<9x16x32xf32, #tpu.memory_space<vmem>>, vector<1x16x32xf32>
    %64 = vector.shape_cast %63 : vector<1x16x32xf32> to vector<16x32xf32>
    %cst_31 = arith.constant dense<0.000000e+00> : vector<16x32xf32>
    %65 = tpu.matmul %62, %64, %cst_31 {dimension_numbers = #tpu.dot_dimension_numbers<[1], [0], [0], [1], [0, 0, 1, 1], [], []>} : vector<16x16xf32>, vector<16x32xf32>, vector<16x32xf32> -> vector<16x32xf32>
    %66 = arith.addf %59, %65 : vector<16x32xf32>
    %c0_32 = arith.constant 0 : index
    %c0_33 = arith.constant 0 : index
    %67 = vector.load %arg3[%c0_32, %c0_33] : memref<1x32xf32, #tpu.memory_space<vmem>>, vector<1x32xf32>
    %68 = vector.broadcast %67 : vector<1x32xf32> to vector<16x32xf32>
    %69 = arith.addf %66, %68 : vector<16x32xf32>
    %cst_34 = arith.constant 0.000000e+00 : f32
    %70 = vector.broadcast %cst_34 : f32 to vector<16x32xf32>
    %71 = arith.maximumf %69, %70 : vector<16x32xf32>
    %72 = arith.truncf %71 : vector<16x32xf32> to vector<16x32xbf16>
    %c0_35 = arith.constant 0 : index
    %c0_36 = arith.constant 0 : index
    %c0_37 = arith.constant 0 : index
    %73 = vector.load %arg4[%c0_35, %c0_36, %c0_37] : memref<1x16x32xbf16, #tpu.memory_space<vmem>>, vector<1x16x32xbf16>
    %74 = vector.shape_cast %73 : vector<1x16x32xbf16> to vector<16x32xbf16>
    %75 = vector.shape_cast %72 : vector<16x32xbf16> to vector<1x16x32xbf16>
    tpu.vector_store %arg4[%c0_35, %c0_36, %c0_37], %75 {strides = array<i32>} : memref<1x16x32xbf16, #tpu.memory_space<vmem>>, vector<1x16x32xbf16>,
    return
  }
  func.func @transform_0(%arg0: i32) -> (i32, i32, i32, i32, i32) {
    %c0_i32 = arith.constant 0 : i32
    %c0_i32_0 = arith.constant 0 : i32
    %c0_i32_1 = arith.constant 0 : i32
    %c0_i32_2 = arith.constant 0 : i32
    %c0_i32_3 = arith.constant 0 : i32
    return %arg0, %c0_i32, %c0_i32_0, %c0_i32_1, %c0_i32_2 : i32, i32, i32, i32, i32
  }
  func.func @transform_1(%arg0: i32) -> (i32, i32, i32) {
    %c0_i32 = arith.constant 0 : i32
    %c0_i32_0 = arith.constant 0 : i32
    %c0_i32_1 = arith.constant 0 : i32
    %c0_i32_2 = arith.constant 0 : i32
    return %c0_i32, %c0_i32_0, %c0_i32_1 : i32, i32, i32
  }
  func.func @transform_2(%arg0: i32) -> (i32, i32) {
    %c0_i32 = arith.constant 0 : i32
    %c0_i32_0 = arith.constant 0 : i32
    %c0_i32_1 = arith.constant 0 : i32
    return %c0_i32, %c0_i32_0 : i32, i32
  }
  func.func @transform_3(%arg0: i32) -> (i32, i32, i32) {
    %c0_i32 = arith.constant 0 : i32
    %c0_i32_0 = arith.constant 0 : i32
    %c0_i32_1 = arith.constant 0 : i32
    return %arg0, %c0_i32, %c0_i32_0 : i32, i32, i32
  }
}

module attributes {stable_mosaic.version = 11 : i64} {
  func.func @_conv3x3_kernel(%arg0: i32, %arg1: memref<1x4x3x3x32xbf16, #tpu.memory_space<vmem>>, %arg2: memref<9x32x32xf32, #tpu.memory_space<vmem>>, %arg3: memref<1x32xf32, #tpu.memory_space<vmem>>, %arg4: memref<1x4x32xbf16, #tpu.memory_space<vmem>>) attributes {dimension_semantics = [#tpu.dimension_semantics<parallel>], iteration_bounds = array<i64: 4>, scalar_prefetch = 0 : i64, scratch_operands = 0 : i64, tpu.core_type = #tpu.core_type<tc>, window_params = [{transform_indices = @transform_0, window_bounds = array<i64: 1, 4, 3, 3, 32>}, {pipeline_mode = #tpu.pipeline_mode<synchronous>, transform_indices = @transform_1, window_bounds = array<i64: 9, 32, 32>}, {pipeline_mode = #tpu.pipeline_mode<synchronous>, transform_indices = @transform_2, window_bounds = array<i64: 1, 32>}, {transform_indices = @transform_3, window_bounds = array<i64: 1, 4, 32>}]} {
    %c0 = arith.constant 0 : index
    %c0_0 = arith.constant 0 : index
    %c0_1 = arith.constant 0 : index
    %c0_2 = arith.constant 0 : index
    %c0_3 = arith.constant 0 : index
    %0 = vector.load %arg1[%c0, %c0_0, %c0_1, %c0_2, %c0_3] : memref<1x4x3x3x32xbf16, #tpu.memory_space<vmem>>, vector<1x4x3x3x32xbf16>
    %1 = vector.shape_cast %0 : vector<1x4x3x3x32xbf16> to vector<4x3x3x32xbf16>
    %2 = arith.extf %1 : vector<4x3x3x32xbf16> to vector<4x3x3x32xf32>
    %cst = arith.constant 0.000000e+00 : f32
    %3 = vector.broadcast %cst : f32 to vector<4x32xf32>
    %4 = vector.extract_strided_slice %2 {offsets = [0, 0, 0, 0], sizes = [1, 2, 2, 32], strides = [1, 1, 1, 1]} : vector<4x3x3x32xf32> to vector<1x2x2x32xf32>
    %5 = vector.shape_cast %4 : vector<1x2x2x32xf32> to vector<2x2x32xf32>
    %6 = vector.shape_cast %5 : vector<2x2x32xf32> to vector<4x32xf32>
    %c0_4 = arith.constant 0 : index
    %c0_5 = arith.constant 0 : index
    %c0_6 = arith.constant 0 : index
    %7 = vector.load %arg2[%c0_4, %c0_5, %c0_6] : memref<9x32x32xf32, #tpu.memory_space<vmem>>, vector<1x32x32xf32>
    %8 = vector.shape_cast %7 : vector<1x32x32xf32> to vector<32x32xf32>
    %cst_7 = arith.constant dense<0.000000e+00> : vector<4x32xf32>
    %9 = tpu.matmul %6, %8, %cst_7 {dimension_numbers = #tpu.dot_dimension_numbers<[1], [0], [0], [1], [0, 0, 1, 1], [], []>} : vector<4x32xf32>, vector<32x32xf32>, vector<4x32xf32> -> vector<4x32xf32>
    %10 = arith.addf %3, %9 : vector<4x32xf32>
    %11 = vector.extract_strided_slice %2 {offsets = [1, 0, 0, 0], sizes = [1, 2, 2, 32], strides = [1, 1, 1, 1]} : vector<4x3x3x32xf32> to vector<1x2x2x32xf32>
    %12 = vector.shape_cast %11 : vector<1x2x2x32xf32> to vector<2x2x32xf32>
    %13 = vector.shape_cast %12 : vector<2x2x32xf32> to vector<4x32xf32>
    %c1 = arith.constant 1 : index
    %c0_8 = arith.constant 0 : index
    %c0_9 = arith.constant 0 : index
    %14 = vector.load %arg2[%c1, %c0_8, %c0_9] : memref<9x32x32xf32, #tpu.memory_space<vmem>>, vector<1x32x32xf32>
    %15 = vector.shape_cast %14 : vector<1x32x32xf32> to vector<32x32xf32>
    %cst_10 = arith.constant dense<0.000000e+00> : vector<4x32xf32>
    %16 = tpu.matmul %13, %15, %cst_10 {dimension_numbers = #tpu.dot_dimension_numbers<[1], [0], [0], [1], [0, 0, 1, 1], [], []>} : vector<4x32xf32>, vector<32x32xf32>, vector<4x32xf32> -> vector<4x32xf32>
    %17 = arith.addf %10, %16 : vector<4x32xf32>
    %18 = vector.extract_strided_slice %2 {offsets = [0, 0, 1, 0], sizes = [1, 2, 2, 32], strides = [1, 1, 1, 1]} : vector<4x3x3x32xf32> to vector<1x2x2x32xf32>
    %19 = vector.shape_cast %18 : vector<1x2x2x32xf32> to vector<2x2x32xf32>
    %20 = vector.shape_cast %19 : vector<2x2x32xf32> to vector<4x32xf32>
    %c2 = arith.constant 2 : index
    %c0_11 = arith.constant 0 : index
    %c0_12 = arith.constant 0 : index
    %21 = vector.load %arg2[%c2, %c0_11, %c0_12] : memref<9x32x32xf32, #tpu.memory_space<vmem>>, vector<1x32x32xf32>
    %22 = vector.shape_cast %21 : vector<1x32x32xf32> to vector<32x32xf32>
    %cst_13 = arith.constant dense<0.000000e+00> : vector<4x32xf32>
    %23 = tpu.matmul %20, %22, %cst_13 {dimension_numbers = #tpu.dot_dimension_numbers<[1], [0], [0], [1], [0, 0, 1, 1], [], []>} : vector<4x32xf32>, vector<32x32xf32>, vector<4x32xf32> -> vector<4x32xf32>
    %24 = arith.addf %17, %23 : vector<4x32xf32>
    %25 = vector.extract_strided_slice %2 {offsets = [2, 0, 0, 0], sizes = [1, 2, 2, 32], strides = [1, 1, 1, 1]} : vector<4x3x3x32xf32> to vector<1x2x2x32xf32>
    %26 = vector.shape_cast %25 : vector<1x2x2x32xf32> to vector<2x2x32xf32>
    %27 = vector.shape_cast %26 : vector<2x2x32xf32> to vector<4x32xf32>
    %c3 = arith.constant 3 : index
    %c0_14 = arith.constant 0 : index
    %c0_15 = arith.constant 0 : index
    %28 = vector.load %arg2[%c3, %c0_14, %c0_15] : memref<9x32x32xf32, #tpu.memory_space<vmem>>, vector<1x32x32xf32>
    %29 = vector.shape_cast %28 : vector<1x32x32xf32> to vector<32x32xf32>
    %cst_16 = arith.constant dense<0.000000e+00> : vector<4x32xf32>
    %30 = tpu.matmul %27, %29, %cst_16 {dimension_numbers = #tpu.dot_dimension_numbers<[1], [0], [0], [1], [0, 0, 1, 1], [], []>} : vector<4x32xf32>, vector<32x32xf32>, vector<4x32xf32> -> vector<4x32xf32>
    %31 = arith.addf %24, %30 : vector<4x32xf32>
    %32 = vector.extract_strided_slice %2 {offsets = [3, 0, 0, 0], sizes = [1, 2, 2, 32], strides = [1, 1, 1, 1]} : vector<4x3x3x32xf32> to vector<1x2x2x32xf32>
    %33 = vector.shape_cast %32 : vector<1x2x2x32xf32> to vector<2x2x32xf32>
    %34 = vector.shape_cast %33 : vector<2x2x32xf32> to vector<4x32xf32>
    %c4 = arith.constant 4 : index
    %c0_17 = arith.constant 0 : index
    %c0_18 = arith.constant 0 : index
    %35 = vector.load %arg2[%c4, %c0_17, %c0_18] : memref<9x32x32xf32, #tpu.memory_space<vmem>>, vector<1x32x32xf32>
    %36 = vector.shape_cast %35 : vector<1x32x32xf32> to vector<32x32xf32>
    %cst_19 = arith.constant dense<0.000000e+00> : vector<4x32xf32>
    %37 = tpu.matmul %34, %36, %cst_19 {dimension_numbers = #tpu.dot_dimension_numbers<[1], [0], [0], [1], [0, 0, 1, 1], [], []>} : vector<4x32xf32>, vector<32x32xf32>, vector<4x32xf32> -> vector<4x32xf32>
    %38 = arith.addf %31, %37 : vector<4x32xf32>
    %39 = vector.extract_strided_slice %2 {offsets = [2, 0, 1, 0], sizes = [1, 2, 2, 32], strides = [1, 1, 1, 1]} : vector<4x3x3x32xf32> to vector<1x2x2x32xf32>
    %40 = vector.shape_cast %39 : vector<1x2x2x32xf32> to vector<2x2x32xf32>
    %41 = vector.shape_cast %40 : vector<2x2x32xf32> to vector<4x32xf32>
    %c5 = arith.constant 5 : index
    %c0_20 = arith.constant 0 : index
    %c0_21 = arith.constant 0 : index
    %42 = vector.load %arg2[%c5, %c0_20, %c0_21] : memref<9x32x32xf32, #tpu.memory_space<vmem>>, vector<1x32x32xf32>
    %43 = vector.shape_cast %42 : vector<1x32x32xf32> to vector<32x32xf32>
    %cst_22 = arith.constant dense<0.000000e+00> : vector<4x32xf32>
    %44 = tpu.matmul %41, %43, %cst_22 {dimension_numbers = #tpu.dot_dimension_numbers<[1], [0], [0], [1], [0, 0, 1, 1], [], []>} : vector<4x32xf32>, vector<32x32xf32>, vector<4x32xf32> -> vector<4x32xf32>
    %45 = arith.addf %38, %44 : vector<4x32xf32>
    %46 = vector.extract_strided_slice %2 {offsets = [0, 1, 0, 0], sizes = [1, 2, 2, 32], strides = [1, 1, 1, 1]} : vector<4x3x3x32xf32> to vector<1x2x2x32xf32>
    %47 = vector.shape_cast %46 : vector<1x2x2x32xf32> to vector<2x2x32xf32>
    %48 = vector.shape_cast %47 : vector<2x2x32xf32> to vector<4x32xf32>
    %c6 = arith.constant 6 : index
    %c0_23 = arith.constant 0 : index
    %c0_24 = arith.constant 0 : index
    %49 = vector.load %arg2[%c6, %c0_23, %c0_24] : memref<9x32x32xf32, #tpu.memory_space<vmem>>, vector<1x32x32xf32>
    %50 = vector.shape_cast %49 : vector<1x32x32xf32> to vector<32x32xf32>
    %cst_25 = arith.constant dense<0.000000e+00> : vector<4x32xf32>
    %51 = tpu.matmul %48, %50, %cst_25 {dimension_numbers = #tpu.dot_dimension_numbers<[1], [0], [0], [1], [0, 0, 1, 1], [], []>} : vector<4x32xf32>, vector<32x32xf32>, vector<4x32xf32> -> vector<4x32xf32>
    %52 = arith.addf %45, %51 : vector<4x32xf32>
    %53 = vector.extract_strided_slice %2 {offsets = [1, 1, 0, 0], sizes = [1, 2, 2, 32], strides = [1, 1, 1, 1]} : vector<4x3x3x32xf32> to vector<1x2x2x32xf32>
    %54 = vector.shape_cast %53 : vector<1x2x2x32xf32> to vector<2x2x32xf32>
    %55 = vector.shape_cast %54 : vector<2x2x32xf32> to vector<4x32xf32>
    %c7 = arith.constant 7 : index
    %c0_26 = arith.constant 0 : index
    %c0_27 = arith.constant 0 : index
    %56 = vector.load %arg2[%c7, %c0_26, %c0_27] : memref<9x32x32xf32, #tpu.memory_space<vmem>>, vector<1x32x32xf32>
    %57 = vector.shape_cast %56 : vector<1x32x32xf32> to vector<32x32xf32>
    %cst_28 = arith.constant dense<0.000000e+00> : vector<4x32xf32>
    %58 = tpu.matmul %55, %57, %cst_28 {dimension_numbers = #tpu.dot_dimension_numbers<[1], [0], [0], [1], [0, 0, 1, 1], [], []>} : vector<4x32xf32>, vector<32x32xf32>, vector<4x32xf32> -> vector<4x32xf32>
    %59 = arith.addf %52, %58 : vector<4x32xf32>
    %60 = vector.extract_strided_slice %2 {offsets = [0, 1, 1, 0], sizes = [1, 2, 2, 32], strides = [1, 1, 1, 1]} : vector<4x3x3x32xf32> to vector<1x2x2x32xf32>
    %61 = vector.shape_cast %60 : vector<1x2x2x32xf32> to vector<2x2x32xf32>
    %62 = vector.shape_cast %61 : vector<2x2x32xf32> to vector<4x32xf32>
    %c8 = arith.constant 8 : index
    %c0_29 = arith.constant 0 : index
    %c0_30 = arith.constant 0 : index
    %63 = vector.load %arg2[%c8, %c0_29, %c0_30] : memref<9x32x32xf32, #tpu.memory_space<vmem>>, vector<1x32x32xf32>
    %64 = vector.shape_cast %63 : vector<1x32x32xf32> to vector<32x32xf32>
    %cst_31 = arith.constant dense<0.000000e+00> : vector<4x32xf32>
    %65 = tpu.matmul %62, %64, %cst_31 {dimension_numbers = #tpu.dot_dimension_numbers<[1], [0], [0], [1], [0, 0, 1, 1], [], []>} : vector<4x32xf32>, vector<32x32xf32>, vector<4x32xf32> -> vector<4x32xf32>
    %66 = arith.addf %59, %65 : vector<4x32xf32>
    %c0_32 = arith.constant 0 : index
    %c0_33 = arith.constant 0 : index
    %67 = vector.load %arg3[%c0_32, %c0_33] : memref<1x32xf32, #tpu.memory_space<vmem>>, vector<1x32xf32>
    %68 = vector.broadcast %67 : vector<1x32xf32> to vector<4x32xf32>
    %69 = arith.addf %66, %68 : vector<4x32xf32>
    %cst_34 = arith.constant 0.000000e+00 : f32
    %70 = vector.broadcast %cst_34 : f32 to vector<4x32xf32>
    %71 = arith.maximumf %69, %70 : vector<4x32xf32>
    %72 = arith.truncf %71 : vector<4x32xf32> to vector<4x32xbf16>
    %c0_35 = arith.constant 0 : index
    %c0_36 = arith.constant 0 : index
    %c0_37 = arith.constant 0 : index
    %73 = vector.load %arg4[%c0_35, %c0_36, %c0_37] : memref<1x4x32xbf16, #tpu.memory_space<vmem>>, vector<1x4x32xbf16>
    %74 = vector.shape_cast %73 : vector<1x4x32xbf16> to vector<4x32xbf16>
    %75 = vector.shape_cast %72 : vector<4x32xbf16> to vector<1x4x32xbf16>
    tpu.vector_store %arg4[%c0_35, %c0_36, %c0_37], %75 {strides = array<i32>} : memref<1x4x32xbf16, #tpu.memory_space<vmem>>, vector<1x4x32xbf16>,
    return
  }
  func.func @transform_0(%arg0: i32) -> (i32, i32, i32, i32, i32) {
    %c0_i32 = arith.constant 0 : i32
    %c0_i32_0 = arith.constant 0 : i32
    %c0_i32_1 = arith.constant 0 : i32
    %c0_i32_2 = arith.constant 0 : i32
    %c0_i32_3 = arith.constant 0 : i32
    return %arg0, %c0_i32, %c0_i32_0, %c0_i32_1, %c0_i32_2 : i32, i32, i32, i32, i32
  }
  func.func @transform_1(%arg0: i32) -> (i32, i32, i32) {
    %c0_i32 = arith.constant 0 : i32
    %c0_i32_0 = arith.constant 0 : i32
    %c0_i32_1 = arith.constant 0 : i32
    %c0_i32_2 = arith.constant 0 : i32
    return %c0_i32, %c0_i32_0, %c0_i32_1 : i32, i32, i32
  }
  func.func @transform_2(%arg0: i32) -> (i32, i32) {
    %c0_i32 = arith.constant 0 : i32
    %c0_i32_0 = arith.constant 0 : i32
    %c0_i32_1 = arith.constant 0 : i32
    return %c0_i32, %c0_i32_0 : i32, i32
  }
  func.func @transform_3(%arg0: i32) -> (i32, i32, i32) {
    %c0_i32 = arith.constant 0 : i32
    %c0_i32_0 = arith.constant 0 : i32
    %c0_i32_1 = arith.constant 0 : i32
    return %arg0, %c0_i32, %c0_i32_0 : i32, i32, i32
  }
}

module attributes {stable_mosaic.version = 11 : i64} {
  func.func @_heads4_kernel(%arg0: i32, %arg1: memref<16x32xbf16, #tpu.memory_space<vmem>>, %arg2: memref<32x32xf32, #tpu.memory_space<vmem>>, %arg3: memref<1x32xf32, #tpu.memory_space<vmem>>, %arg4: memref<32x32xf32, #tpu.memory_space<vmem>>, %arg5: memref<1x32xf32, #tpu.memory_space<vmem>>, %arg6: memref<32x1xf32, #tpu.memory_space<vmem>>, %arg7: memref<1x1xf32, #tpu.memory_space<vmem>>, %arg8: memref<32x128xf32, #tpu.memory_space<vmem>>, %arg9: memref<32x128xf32, #tpu.memory_space<vmem>>, %arg10: memref<1x128xf32, #tpu.memory_space<vmem>>, %arg11: memref<16x128xf32, #tpu.memory_space<vmem>>) attributes {dimension_semantics = [#tpu.dimension_semantics<parallel>], iteration_bounds = array<i64: 1>, scalar_prefetch = 0 : i64, scratch_operands = 0 : i64, tpu.core_type = #tpu.core_type<tc>, window_params = [{transform_indices = @transform_0, window_bounds = array<i64: 16, 32>}, {pipeline_mode = #tpu.pipeline_mode<synchronous>, transform_indices = @transform_1, window_bounds = array<i64: 32, 32>}, {pipeline_mode = #tpu.pipeline_mode<synchronous>, transform_indices = @transform_2, window_bounds = array<i64: 1, 32>}, {pipeline_mode = #tpu.pipeline_mode<synchronous>, transform_indices = @transform_3, window_bounds = array<i64: 32, 32>}, {pipeline_mode = #tpu.pipeline_mode<synchronous>, transform_indices = @transform_4, window_bounds = array<i64: 1, 32>}, {pipeline_mode = #tpu.pipeline_mode<synchronous>, transform_indices = @transform_5, window_bounds = array<i64: 32, 1>}, {pipeline_mode = #tpu.pipeline_mode<synchronous>, transform_indices = @transform_6, window_bounds = array<i64: 1, 1>}, {pipeline_mode = #tpu.pipeline_mode<synchronous>, transform_indices = @transform_7, window_bounds = array<i64: 32, 128>}, {pipeline_mode = #tpu.pipeline_mode<synchronous>, transform_indices = @transform_8, window_bounds = array<i64: 32, 128>}, {pipeline_mode = #tpu.pipeline_mode<synchronous>, transform_indices = @transform_9, window_bounds = array<i64: 1, 128>}, {transform_indices = @transform_10, window_bounds = array<i64: 16, 128>}]} {
    %c0 = arith.constant 0 : index
    %c0_0 = arith.constant 0 : index
    %0 = vector.load %arg1[%c0, %c0_0] : memref<16x32xbf16, #tpu.memory_space<vmem>>, vector<16x32xbf16>
    %1 = arith.extf %0 : vector<16x32xbf16> to vector<16x32xf32>
    %c0_1 = arith.constant 0 : index
    %c0_2 = arith.constant 0 : index
    %2 = vector.load %arg2[%c0_1, %c0_2] : memref<32x32xf32, #tpu.memory_space<vmem>>, vector<32x32xf32>
    %cst = arith.constant dense<0.000000e+00> : vector<16x32xf32>
    %3 = tpu.matmul %1, %2, %cst {dimension_numbers = #tpu.dot_dimension_numbers<[1], [0], [0], [1], [0, 0, 1, 1], [], []>} : vector<16x32xf32>, vector<32x32xf32>, vector<16x32xf32> -> vector<16x32xf32>
    %c0_3 = arith.constant 0 : index
    %c0_4 = arith.constant 0 : index
    %4 = vector.load %arg3[%c0_3, %c0_4] : memref<1x32xf32, #tpu.memory_space<vmem>>, vector<1x32xf32>
    %5 = vector.broadcast %4 : vector<1x32xf32> to vector<16x32xf32>
    %6 = arith.addf %3, %5 : vector<16x32xf32>
    %cst_5 = arith.constant 0.000000e+00 : f32
    %7 = vector.broadcast %cst_5 : f32 to vector<16x32xf32>
    %8 = arith.maximumf %6, %7 : vector<16x32xf32>
    %c0_6 = arith.constant 0 : index
    %c0_7 = arith.constant 0 : index
    %9 = vector.load %arg4[%c0_6, %c0_7] : memref<32x32xf32, #tpu.memory_space<vmem>>, vector<32x32xf32>
    %cst_8 = arith.constant dense<0.000000e+00> : vector<16x32xf32>
    %10 = tpu.matmul %1, %9, %cst_8 {dimension_numbers = #tpu.dot_dimension_numbers<[1], [0], [0], [1], [0, 0, 1, 1], [], []>} : vector<16x32xf32>, vector<32x32xf32>, vector<16x32xf32> -> vector<16x32xf32>
    %c0_9 = arith.constant 0 : index
    %c0_10 = arith.constant 0 : index
    %11 = vector.load %arg5[%c0_9, %c0_10] : memref<1x32xf32, #tpu.memory_space<vmem>>, vector<1x32xf32>
    %12 = vector.broadcast %11 : vector<1x32xf32> to vector<16x32xf32>
    %13 = arith.addf %10, %12 : vector<16x32xf32>
    %cst_11 = arith.constant 0.000000e+00 : f32
    %14 = vector.broadcast %cst_11 : f32 to vector<16x32xf32>
    %15 = arith.maximumf %13, %14 : vector<16x32xf32>
    %c0_12 = arith.constant 0 : index
    %c0_13 = arith.constant 0 : index
    %16 = vector.load %arg6[%c0_12, %c0_13] : memref<32x1xf32, #tpu.memory_space<vmem>>, vector<32x1xf32>
    %cst_14 = arith.constant dense<0.000000e+00> : vector<16x1xf32>
    %17 = tpu.matmul %1, %16, %cst_14 {dimension_numbers = #tpu.dot_dimension_numbers<[1], [0], [0], [1], [0, 0, 1, 1], [], []>} : vector<16x32xf32>, vector<32x1xf32>, vector<16x1xf32> -> vector<16x1xf32>
    %c0_15 = arith.constant 0 : index
    %c0_16 = arith.constant 0 : index
    %18 = vector.load %arg7[%c0_15, %c0_16] : memref<1x1xf32, #tpu.memory_space<vmem>>, vector<1x1xf32>
    %19 = vector.broadcast %18 : vector<1x1xf32> to vector<16x1xf32>
    %20 = arith.addf %17, %19 : vector<16x1xf32>
    %21 = arith.negf %20 : vector<16x1xf32>
    %22 = math.exp %21 : vector<16x1xf32>
    %cst_17 = arith.constant 1.000000e+00 : f32
    %23 = vector.broadcast %cst_17 : f32 to vector<16x1xf32>
    %24 = arith.addf %23, %22 : vector<16x1xf32>
    %25 = arith.divf %23, %24 : vector<16x1xf32>
    %26 = vector.broadcast %25 : vector<16x1xf32> to vector<16x32xf32>
    %27 = arith.mulf %15, %26 : vector<16x32xf32>
    %c0_18 = arith.constant 0 : index
    %c0_19 = arith.constant 0 : index
    %28 = vector.load %arg8[%c0_18, %c0_19] : memref<32x128xf32, #tpu.memory_space<vmem>>, vector<32x128xf32>
    %cst_20 = arith.constant dense<0.000000e+00> : vector<16x128xf32>
    %29 = tpu.matmul %8, %28, %cst_20 {dimension_numbers = #tpu.dot_dimension_numbers<[1], [0], [0], [1], [0, 0, 1, 1], [], []>} : vector<16x32xf32>, vector<32x128xf32>, vector<16x128xf32> -> vector<16x128xf32>
    %c0_21 = arith.constant 0 : index
    %c0_22 = arith.constant 0 : index
    %30 = vector.load %arg9[%c0_21, %c0_22] : memref<32x128xf32, #tpu.memory_space<vmem>>, vector<32x128xf32>
    %cst_23 = arith.constant dense<0.000000e+00> : vector<16x128xf32>
    %31 = tpu.matmul %27, %30, %cst_23 {dimension_numbers = #tpu.dot_dimension_numbers<[1], [0], [0], [1], [0, 0, 1, 1], [], []>} : vector<16x32xf32>, vector<32x128xf32>, vector<16x128xf32> -> vector<16x128xf32>
    %32 = arith.addf %29, %31 : vector<16x128xf32>
    %c0_24 = arith.constant 0 : index
    %c0_25 = arith.constant 0 : index
    %33 = vector.load %arg10[%c0_24, %c0_25] : memref<1x128xf32, #tpu.memory_space<vmem>>, vector<1x128xf32>
    %34 = vector.broadcast %33 : vector<1x128xf32> to vector<16x128xf32>
    %35 = arith.addf %32, %34 : vector<16x128xf32>
    %36 = tpu.iota {dimensions = array<i32: 1>} : vector<16x128xi32>
    %c2_i32 = arith.constant 2 : i32
    %37 = vector.broadcast %c2_i32 : i32 to vector<16x128xi32>
    %38 = arith.cmpi eq, %36, %37 : vector<16x128xi32>
    %39 = arith.negf %35 : vector<16x128xf32>
    %40 = math.exp %39 : vector<16x128xf32>
    %cst_26 = arith.constant 1.000000e+00 : f32
    %41 = vector.broadcast %cst_26 : f32 to vector<16x128xf32>
    %42 = arith.addf %41, %40 : vector<16x128xf32>
    %43 = arith.divf %41, %42 : vector<16x128xf32>
    %44 = arith.select %38, %43, %35 : vector<16x128xi1>, vector<16x128xf32>
    %c0_27 = arith.constant 0 : index
    %c0_28 = arith.constant 0 : index
    %45 = vector.load %arg11[%c0_27, %c0_28] : memref<16x128xf32, #tpu.memory_space<vmem>>, vector<16x128xf32>
    tpu.vector_store %arg11[%c0_27, %c0_28], %44 {strides = array<i32>} : memref<16x128xf32, #tpu.memory_space<vmem>>, vector<16x128xf32>,
    return
  }
  func.func @transform_0(%arg0: i32) -> (i32, i32) {
    %c0_i32 = arith.constant 0 : i32
    %c0_i32_0 = arith.constant 0 : i32
    return %arg0, %c0_i32 : i32, i32
  }
  func.func @transform_1(%arg0: i32) -> (i32, i32) {
    %c0_i32 = arith.constant 0 : i32
    %c0_i32_0 = arith.constant 0 : i32
    %c0_i32_1 = arith.constant 0 : i32
    return %c0_i32, %c0_i32_0 : i32, i32
  }
  func.func @transform_2(%arg0: i32) -> (i32, i32) {
    %c0_i32 = arith.constant 0 : i32
    %c0_i32_0 = arith.constant 0 : i32
    %c0_i32_1 = arith.constant 0 : i32
    return %c0_i32, %c0_i32_0 : i32, i32
  }
  func.func @transform_3(%arg0: i32) -> (i32, i32) {
    %c0_i32 = arith.constant 0 : i32
    %c0_i32_0 = arith.constant 0 : i32
    %c0_i32_1 = arith.constant 0 : i32
    return %c0_i32, %c0_i32_0 : i32, i32
  }
  func.func @transform_4(%arg0: i32) -> (i32, i32) {
    %c0_i32 = arith.constant 0 : i32
    %c0_i32_0 = arith.constant 0 : i32
    %c0_i32_1 = arith.constant 0 : i32
    return %c0_i32, %c0_i32_0 : i32, i32
  }
  func.func @transform_5(%arg0: i32) -> (i32, i32) {
    %c0_i32 = arith.constant 0 : i32
    %c0_i32_0 = arith.constant 0 : i32
    %c0_i32_1 = arith.constant 0 : i32
    return %c0_i32, %c0_i32_0 : i32, i32
  }
  func.func @transform_6(%arg0: i32) -> (i32, i32) {
    %c0_i32 = arith.constant 0 : i32
    %c0_i32_0 = arith.constant 0 : i32
    %c0_i32_1 = arith.constant 0 : i32
    return %c0_i32, %c0_i32_0 : i32, i32
  }
  func.func @transform_7(%arg0: i32) -> (i32, i32) {
    %c0_i32 = arith.constant 0 : i32
    %c0_i32_0 = arith.constant 0 : i32
    %c0_i32_1 = arith.constant 0 : i32
    return %c0_i32, %c0_i32_0 : i32, i32
  }
  func.func @transform_8(%arg0: i32) -> (i32, i32) {
    %c0_i32 = arith.constant 0 : i32
    %c0_i32_0 = arith.constant 0 : i32
    %c0_i32_1 = arith.constant 0 : i32
    return %c0_i32, %c0_i32_0 : i32, i32
  }
  func.func @transform_9(%arg0: i32) -> (i32, i32) {
    %c0_i32 = arith.constant 0 : i32
    %c0_i32_0 = arith.constant 0 : i32
    %c0_i32_1 = arith.constant 0 : i32
    return %c0_i32, %c0_i32_0 : i32, i32
  }
  func.func @transform_10(%arg0: i32) -> (i32, i32) {
    %c0_i32 = arith.constant 0 : i32
    %c0_i32_0 = arith.constant 0 : i32
    return %arg0, %c0_i32 : i32, i32
  }
}

module attributes {stable_mosaic.version = 11 : i64} {
  func.func @_heads23_kernel(%arg0: i32, %arg1: memref<64x32xbf16, #tpu.memory_space<vmem>>, %arg2: memref<32x32xf32, #tpu.memory_space<vmem>>, %arg3: memref<1x32xf32, #tpu.memory_space<vmem>>, %arg4: memref<32x128xf32, #tpu.memory_space<vmem>>, %arg5: memref<1x128xf32, #tpu.memory_space<vmem>>, %arg6: memref<64x128xf32, #tpu.memory_space<vmem>>) attributes {dimension_semantics = [#tpu.dimension_semantics<parallel>], iteration_bounds = array<i64: 1>, scalar_prefetch = 0 : i64, scratch_operands = 0 : i64, tpu.core_type = #tpu.core_type<tc>, window_params = [{transform_indices = @transform_0, window_bounds = array<i64: 64, 32>}, {pipeline_mode = #tpu.pipeline_mode<synchronous>, transform_indices = @transform_1, window_bounds = array<i64: 32, 32>}, {pipeline_mode = #tpu.pipeline_mode<synchronous>, transform_indices = @transform_2, window_bounds = array<i64: 1, 32>}, {pipeline_mode = #tpu.pipeline_mode<synchronous>, transform_indices = @transform_3, window_bounds = array<i64: 32, 128>}, {pipeline_mode = #tpu.pipeline_mode<synchronous>, transform_indices = @transform_4, window_bounds = array<i64: 1, 128>}, {transform_indices = @transform_5, window_bounds = array<i64: 64, 128>}]} {
    %c0 = arith.constant 0 : index
    %c0_0 = arith.constant 0 : index
    %0 = vector.load %arg1[%c0, %c0_0] : memref<64x32xbf16, #tpu.memory_space<vmem>>, vector<64x32xbf16>
    %1 = arith.extf %0 : vector<64x32xbf16> to vector<64x32xf32>
    %c0_1 = arith.constant 0 : index
    %c0_2 = arith.constant 0 : index
    %2 = vector.load %arg2[%c0_1, %c0_2] : memref<32x32xf32, #tpu.memory_space<vmem>>, vector<32x32xf32>
    %cst = arith.constant dense<0.000000e+00> : vector<64x32xf32>
    %3 = tpu.matmul %1, %2, %cst {dimension_numbers = #tpu.dot_dimension_numbers<[1], [0], [0], [1], [0, 0, 1, 1], [], []>} : vector<64x32xf32>, vector<32x32xf32>, vector<64x32xf32> -> vector<64x32xf32>
    %c0_3 = arith.constant 0 : index
    %c0_4 = arith.constant 0 : index
    %4 = vector.load %arg3[%c0_3, %c0_4] : memref<1x32xf32, #tpu.memory_space<vmem>>, vector<1x32xf32>
    %5 = vector.broadcast %4 : vector<1x32xf32> to vector<64x32xf32>
    %6 = arith.addf %3, %5 : vector<64x32xf32>
    %cst_5 = arith.constant 0.000000e+00 : f32
    %7 = vector.broadcast %cst_5 : f32 to vector<64x32xf32>
    %8 = arith.maximumf %6, %7 : vector<64x32xf32>
    %c0_6 = arith.constant 0 : index
    %c0_7 = arith.constant 0 : index
    %9 = vector.load %arg4[%c0_6, %c0_7] : memref<32x128xf32, #tpu.memory_space<vmem>>, vector<32x128xf32>
    %cst_8 = arith.constant dense<0.000000e+00> : vector<64x128xf32>
    %10 = tpu.matmul %8, %9, %cst_8 {dimension_numbers = #tpu.dot_dimension_numbers<[1], [0], [0], [1], [0, 0, 1, 1], [], []>} : vector<64x32xf32>, vector<32x128xf32>, vector<64x128xf32> -> vector<64x128xf32>
    %c0_9 = arith.constant 0 : index
    %c0_10 = arith.constant 0 : index
    %11 = vector.load %arg5[%c0_9, %c0_10] : memref<1x128xf32, #tpu.memory_space<vmem>>, vector<1x128xf32>
    %12 = vector.broadcast %11 : vector<1x128xf32> to vector<64x128xf32>
    %13 = arith.addf %10, %12 : vector<64x128xf32>
    %14 = tpu.iota {dimensions = array<i32: 1>} : vector<64x128xi32>
    %c1_i32 = arith.constant 1 : i32
    %15 = vector.broadcast %c1_i32 : i32 to vector<64x128xi32>
    %16 = arith.cmpi eq, %14, %15 : vector<64x128xi32>
    %17 = arith.negf %13 : vector<64x128xf32>
    %18 = math.exp %17 : vector<64x128xf32>
    %cst_11 = arith.constant 1.000000e+00 : f32
    %19 = vector.broadcast %cst_11 : f32 to vector<64x128xf32>
    %20 = arith.addf %19, %18 : vector<64x128xf32>
    %21 = arith.divf %19, %20 : vector<64x128xf32>
    %22 = arith.select %16, %21, %13 : vector<64x128xi1>, vector<64x128xf32>
    %c0_12 = arith.constant 0 : index
    %c0_13 = arith.constant 0 : index
    %23 = vector.load %arg6[%c0_12, %c0_13] : memref<64x128xf32, #tpu.memory_space<vmem>>, vector<64x128xf32>
    tpu.vector_store %arg6[%c0_12, %c0_13], %22 {strides = array<i32>} : memref<64x128xf32, #tpu.memory_space<vmem>>, vector<64x128xf32>,
    return
  }
  func.func @transform_0(%arg0: i32) -> (i32, i32) {
    %c0_i32 = arith.constant 0 : i32
    %c0_i32_0 = arith.constant 0 : i32
    return %arg0, %c0_i32 : i32, i32
  }
  func.func @transform_1(%arg0: i32) -> (i32, i32) {
    %c0_i32 = arith.constant 0 : i32
    %c0_i32_0 = arith.constant 0 : i32
    %c0_i32_1 = arith.constant 0 : i32
    return %c0_i32, %c0_i32_0 : i32, i32
  }
  func.func @transform_2(%arg0: i32) -> (i32, i32) {
    %c0_i32 = arith.constant 0 : i32
    %c0_i32_0 = arith.constant 0 : i32
    %c0_i32_1 = arith.constant 0 : i32
    return %c0_i32, %c0_i32_0 : i32, i32
  }
  func.func @transform_3(%arg0: i32) -> (i32, i32) {
    %c0_i32 = arith.constant 0 : i32
    %c0_i32_0 = arith.constant 0 : i32
    %c0_i32_1 = arith.constant 0 : i32
    return %c0_i32, %c0_i32_0 : i32, i32
  }
  func.func @transform_4(%arg0: i32) -> (i32, i32) {
    %c0_i32 = arith.constant 0 : i32
    %c0_i32_0 = arith.constant 0 : i32
    %c0_i32_1 = arith.constant 0 : i32
    return %c0_i32, %c0_i32_0 : i32, i32
  }
  func.func @transform_5(%arg0: i32) -> (i32, i32) {
    %c0_i32 = arith.constant 0 : i32
    %c0_i32_0 = arith.constant 0 : i32
    return %arg0, %c0_i32 : i32, i32
  }
}

module attributes {stable_mosaic.version = 11 : i64} {
  func.func @_heads23_kernel(%arg0: i32, %arg1: memref<256x16xbf16, #tpu.memory_space<vmem>>, %arg2: memref<16x16xf32, #tpu.memory_space<vmem>>, %arg3: memref<1x16xf32, #tpu.memory_space<vmem>>, %arg4: memref<16x128xf32, #tpu.memory_space<vmem>>, %arg5: memref<1x128xf32, #tpu.memory_space<vmem>>, %arg6: memref<256x128xf32, #tpu.memory_space<vmem>>) attributes {dimension_semantics = [#tpu.dimension_semantics<parallel>], iteration_bounds = array<i64: 1>, scalar_prefetch = 0 : i64, scratch_operands = 0 : i64, tpu.core_type = #tpu.core_type<tc>, window_params = [{transform_indices = @transform_0, window_bounds = array<i64: 256, 16>}, {pipeline_mode = #tpu.pipeline_mode<synchronous>, transform_indices = @transform_1, window_bounds = array<i64: 16, 16>}, {pipeline_mode = #tpu.pipeline_mode<synchronous>, transform_indices = @transform_2, window_bounds = array<i64: 1, 16>}, {pipeline_mode = #tpu.pipeline_mode<synchronous>, transform_indices = @transform_3, window_bounds = array<i64: 16, 128>}, {pipeline_mode = #tpu.pipeline_mode<synchronous>, transform_indices = @transform_4, window_bounds = array<i64: 1, 128>}, {transform_indices = @transform_5, window_bounds = array<i64: 256, 128>}]} {
    %c0 = arith.constant 0 : index
    %c0_0 = arith.constant 0 : index
    %0 = vector.load %arg1[%c0, %c0_0] : memref<256x16xbf16, #tpu.memory_space<vmem>>, vector<256x16xbf16>
    %1 = arith.extf %0 : vector<256x16xbf16> to vector<256x16xf32>
    %c0_1 = arith.constant 0 : index
    %c0_2 = arith.constant 0 : index
    %2 = vector.load %arg2[%c0_1, %c0_2] : memref<16x16xf32, #tpu.memory_space<vmem>>, vector<16x16xf32>
    %cst = arith.constant dense<0.000000e+00> : vector<256x16xf32>
    %3 = tpu.matmul %1, %2, %cst {dimension_numbers = #tpu.dot_dimension_numbers<[1], [0], [0], [1], [0, 0, 1, 1], [], []>} : vector<256x16xf32>, vector<16x16xf32>, vector<256x16xf32> -> vector<256x16xf32>
    %c0_3 = arith.constant 0 : index
    %c0_4 = arith.constant 0 : index
    %4 = vector.load %arg3[%c0_3, %c0_4] : memref<1x16xf32, #tpu.memory_space<vmem>>, vector<1x16xf32>
    %5 = vector.broadcast %4 : vector<1x16xf32> to vector<256x16xf32>
    %6 = arith.addf %3, %5 : vector<256x16xf32>
    %cst_5 = arith.constant 0.000000e+00 : f32
    %7 = vector.broadcast %cst_5 : f32 to vector<256x16xf32>
    %8 = arith.maximumf %6, %7 : vector<256x16xf32>
    %c0_6 = arith.constant 0 : index
    %c0_7 = arith.constant 0 : index
    %9 = vector.load %arg4[%c0_6, %c0_7] : memref<16x128xf32, #tpu.memory_space<vmem>>, vector<16x128xf32>
    %cst_8 = arith.constant dense<0.000000e+00> : vector<256x128xf32>
    %10 = tpu.matmul %8, %9, %cst_8 {dimension_numbers = #tpu.dot_dimension_numbers<[1], [0], [0], [1], [0, 0, 1, 1], [], []>} : vector<256x16xf32>, vector<16x128xf32>, vector<256x128xf32> -> vector<256x128xf32>
    %c0_9 = arith.constant 0 : index
    %c0_10 = arith.constant 0 : index
    %11 = vector.load %arg5[%c0_9, %c0_10] : memref<1x128xf32, #tpu.memory_space<vmem>>, vector<1x128xf32>
    %12 = vector.broadcast %11 : vector<1x128xf32> to vector<256x128xf32>
    %13 = arith.addf %10, %12 : vector<256x128xf32>
    %14 = tpu.iota {dimensions = array<i32: 1>} : vector<256x128xi32>
    %c1_i32 = arith.constant 1 : i32
    %15 = vector.broadcast %c1_i32 : i32 to vector<256x128xi32>
    %16 = arith.cmpi eq, %14, %15 : vector<256x128xi32>
    %17 = arith.negf %13 : vector<256x128xf32>
    %18 = math.exp %17 : vector<256x128xf32>
    %cst_11 = arith.constant 1.000000e+00 : f32
    %19 = vector.broadcast %cst_11 : f32 to vector<256x128xf32>
    %20 = arith.addf %19, %18 : vector<256x128xf32>
    %21 = arith.divf %19, %20 : vector<256x128xf32>
    %22 = arith.select %16, %21, %13 : vector<256x128xi1>, vector<256x128xf32>
    %c0_12 = arith.constant 0 : index
    %c0_13 = arith.constant 0 : index
    %23 = vector.load %arg6[%c0_12, %c0_13] : memref<256x128xf32, #tpu.memory_space<vmem>>, vector<256x128xf32>
    tpu.vector_store %arg6[%c0_12, %c0_13], %22 {strides = array<i32>} : memref<256x128xf32, #tpu.memory_space<vmem>>, vector<256x128xf32>,
    return
  }
  func.func @transform_0(%arg0: i32) -> (i32, i32) {
    %c0_i32 = arith.constant 0 : i32
    %c0_i32_0 = arith.constant 0 : i32
    return %arg0, %c0_i32 : i32, i32
  }
  func.func @transform_1(%arg0: i32) -> (i32, i32) {
    %c0_i32 = arith.constant 0 : i32
    %c0_i32_0 = arith.constant 0 : i32
    %c0_i32_1 = arith.constant 0 : i32
    return %c0_i32, %c0_i32_0 : i32, i32
  }
  func.func @transform_2(%arg0: i32) -> (i32, i32) {
    %c0_i32 = arith.constant 0 : i32
    %c0_i32_0 = arith.constant 0 : i32
    %c0_i32_1 = arith.constant 0 : i32
    return %c0_i32, %c0_i32_0 : i32, i32
  }
  func.func @transform_3(%arg0: i32) -> (i32, i32) {
    %c0_i32 = arith.constant 0 : i32
    %c0_i32_0 = arith.constant 0 : i32
    %c0_i32_1 = arith.constant 0 : i32
    return %c0_i32, %c0_i32_0 : i32, i32
  }
  func.func @transform_4(%arg0: i32) -> (i32, i32) {
    %c0_i32 = arith.constant 0 : i32
    %c0_i32_0 = arith.constant 0 : i32
    %c0_i32_1 = arith.constant 0 : i32
    return %c0_i32, %c0_i32_0 : i32, i32
  }
  func.func @transform_5(%arg0: i32) -> (i32, i32) {
    %c0_i32 = arith.constant 0 : i32
    %c0_i32_0 = arith.constant 0 : i32
    return %arg0, %c0_i32 : i32, i32
  }
}

</mosaic_0001>

<llo_original>
// kernel: seg_net_forward.8
$region0: #{seg_net_forward.8}
  #allocation0 [shape = 'u32[]', space=smem, size = 0x4, offset = 0x4, fixed_abs, tag = 'smem constant byte address 0x4 - core index']
  #allocation1 [shape = 'u32[144,128]{1,0:T(1,128)}', space=vmem, size = 0x12000, scoped, tag = 'internal scratch']
  %s0 = inlined_call_operand.vmem [shape: bf16[4,4,9,9,8], index: 0, kind: input, shape index: {}]
  %s1 = inlined_call_operand.vmem [shape: f32[9,8,16], index: 1, kind: input, shape index: {}]
  %s2 = inlined_call_operand.vmem [shape: f32[1,16], index: 2, kind: input, shape index: {}]
  %s3 = inlined_call_operand.vmem [shape: bf16[4,64,16], index: 3, kind: output, shape index: {}]
  %s4 = sld [smem:[#allocation0]]
  $region45: #{seg_net_forward.8} parent=0
    _
  %s6 = ssub.s32 1, %s4
  %s7 = scalar_select 0, %s6, %s4
  loop: start=0, step=1, limit=6
  $region2: #{seg_net_forward.8} parent=0 // loop_pre_header
    _
  $region3: #{seg_net_forward.8} parent=0 // loop_header
    %s9 = sphi 0, %s13
    %p10 = scmp.ge.s32.totalorder %s9, 6
    %s19 = sphi 0, %s21
    %s22 = sphi 0, %s19
    %s23 = sphi 0, %s22
    %s39 = sphi 0, %s23
    %s43 = sphi 0, %s43
    %s45 = sphi 0, %s43
    %s46 = sphi 0, %s45
    %s60 = sphi 0, %s46
    %s64 = sphi 0, %s64
    %s66 = sphi 0, %s64
    %s67 = sphi 0, %s66
    %s81 = sphi 0, %s67
    %s87 = sphi 0, %s89
    %s90 = sphi 0, %s87
    %s91 = sphi 0, %s90
    %s107 = sphi 0, %s91
  $region4: #{seg_net_forward.8} parent=0 // loop_header_branch
    %12 = sbr.rel (%p10) target = $region8
  $region5: #{seg_net_forward.8} parent=0 // loop_body
    %s14 = ssub.s32 %s9, 1
    %s15 = ssub.s32 %s9, 2
    %s16 = sadd.s32 %s9, 1
    %s17 = ssub.s32 %s9, %s16
    %p18 = scmp.eq.s32.totalorder %s17, 0
    %s20 = sadd.s32 %s19, 1
    %s21 = scalar_select %p18, %s19, %s20
    %p24 = pneg %p18
    %p25 = scmp.eq.s32.totalorder %s9, 3
    %p26 = por %p24, %p25
    %p27 = scmp.ne.s32.totalorder %s19, %s22
    %p28 = scmp.eq.s32.totalorder %s9, 0
    %p29 = por %p27, %p28
    %p30 = scmp.ne.s32.totalorder %s19, %s22
    %p31 = scmp.eq.s32.totalorder %s14, 3
    %p32 = por %p30, %p31
    %p33 = scmp.ne.s32.totalorder %s22, %s23
    %p34 = scmp.eq.s32.totalorder %s14, 0
    %p35 = por %p33, %p34
    %p36 = scmp.ne.s32.totalorder %s22, %s23
    %p37 = scmp.eq.s32.totalorder %s15, 3
    %p38 = por %p36, %p37
    %p40 = scmp.ne.s32.totalorder %s23, %s39
    %p41 = scmp.eq.s32.totalorder %s15, 0
    %p42 = por %p40, %p41
    %s44 = sadd.s32 %s43, 1
    %p47 = scmp.eq.s32.totalorder %s9, 3
    %p48 = scmp.ne.s32.totalorder %s43, %s45
    %p49 = scmp.eq.s32.totalorder %s9, 0
    %p50 = por %p48, %p49
    %p51 = scmp.ne.s32.totalorder %s43, %s45
    %p52 = scmp.eq.s32.totalorder %s14, 3
    %p53 = por %p51, %p52
    %p54 = scmp.ne.s32.totalorder %s45, %s46
    %p55 = scmp.eq.s32.totalorder %s14, 0
    %p56 = por %p54, %p55
    %p57 = scmp.ne.s32.totalorder %s45, %s46
    %p58 = scmp.eq.s32.totalorder %s15, 3
    %p59 = por %p57, %p58
    %p61 = scmp.ne.s32.totalorder %s46, %s60
    %p62 = scmp.eq.s32.totalorder %s15, 0
    %p63 = por %p61, %p62
    %s65 = sadd.s32 %s64, 1
    %p68 = scmp.eq.s32.totalorder %s9, 3
    %p69 = scmp.ne.s32.totalorder %s64, %s66
    %p70 = scmp.eq.s32.totalorder %s9, 0
    %p71 = por %p69, %p70
    %p72 = scmp.ne.s32.totalorder %s64, %s66
    %p73 = scmp.eq.s32.totalorder %s14, 3
    %p74 = por %p72, %p73
    %p75 = scmp.ne.s32.totalorder %s66, %s67
    %p76 = scmp.eq.s32.totalorder %s14, 0
    %p77 = por %p75, %p76
    %p78 = scmp.ne.s32.totalorder %s66, %s67
    %p79 = scmp.eq.s32.totalorder %s15, 3
    %p80 = por %p78, %p79
    %p82 = scmp.ne.s32.totalorder %s67, %s81
    %p83 = scmp.eq.s32.totalorder %s15, 0
    %p84 = por %p82, %p83
    %s85 = ssub.s32 %s9, %s16
    %p86 = scmp.eq.s32.totalorder %s85, 0
    %s88 = sadd.s32 %s87, 1
    %s89 = scalar_select %p86, %s87, %s88
    %p92 = pneg %p86
    %p93 = scmp.eq.s32.totalorder %s9, 3
    %p94 = por %p92, %p93
    %p95 = scmp.ne.s32.totalorder %s87, %s90
    %p96 = scmp.eq.s32.totalorder %s9, 0
    %p97 = por %p95, %p96
    %p98 = scmp.ne.s32.totalorder %s87, %s90
    %p99 = scmp.eq.s32.totalorder %s14, 3
    %p100 = por %p98, %p99
    %p101 = scmp.ne.s32.totalorder %s90, %s91
    %p102 = scmp.eq.s32.totalorder %s14, 0
    %p103 = por %p101, %p102
    %p104 = scmp.ne.s32.totalorder %s90, %s91
    %p105 = scmp.eq.s32.totalorder %s15, 3
    %p106 = por %p104, %p105
    %p108 = scmp.ne.s32.totalorder %s91, %s107
    %p109 = scmp.eq.s32.totalorder %s15, 0
    %p110 = por %p108, %p109
    %p111 = scmp.le.s32.totalorder 1, %s9
    %p112 = scmp.lt.s32.totalorder %s9, 5
    %p113 = pnand %p111, %p112
    %p114 = pneg %p113
    // Predicated region
    $region9: #{seg_net_forward.8} parent=5 // pred_check
      _
    $region10: #{seg_net_forward.8} parent=5 // pred_check_branch
      %116 = sbr.rel (%p113) target = $region12
    $region11: #{seg_net_forward.8} parent=5 // pred_region
      %s117 = ssub.s32 %s9, 1
      // Predicated region
      $region13: #{seg_net_forward.8} parent=11 // pred_check
        %p118 = pneg %p56
      $region14: #{seg_net_forward.8} parent=11 // pred_check_branch
        %120 = sbr.rel (%p118) target = $region16
      $region15: #{seg_net_forward.8} parent=11 // pred_region
        _
      $region16: #{seg_net_forward.8} parent=11 // pred_fallthru
        _
      // Predicated region
      $region17: #{seg_net_forward.8} parent=11 // pred_check
        %p121 = pneg %p77
      $region18: #{seg_net_forward.8} parent=11 // pred_check_branch
        %123 = sbr.rel (%p121) target = $region20
      $region19: #{seg_net_forward.8} parent=11 // pred_region
        _
      $region20: #{seg_net_forward.8} parent=11 // pred_fallthru
        _
    $region12: #{seg_net_forward.8} parent=5 // pred_fallthru
      _
    %p124 = scmp.lt.s32.totalorder %s9, 4
    // Predicated region
    $region21: #{seg_net_forward.8} parent=5 // pred_check
      %p125 = pneg %p124
    $region22: #{seg_net_forward.8} parent=5 // pred_check_branch
      %127 = sbr.rel (%p125) target = $region24
    $region23: #{seg_net_forward.8} parent=5 // pred_region
      // Predicated region
      $region25: #{seg_net_forward.8} parent=23 // pred_check
        %p128 = pneg %p29
      $region26: #{seg_net_forward.8} parent=23 // pred_check_branch
        %130 = sbr.rel (%p128) target = $region28
      $region27: #{seg_net_forward.8} parent=23 // pred_region
        %p131 = scmp.lt.s32.totalorder %s9, 3
        %s132 = scalar_select %p131, %s9, 3
        %s133 = smul.addr %s132, 72
        %s134 = smul.addr %s133, 4
        %s135 = scalar_lea.vmem %s0, %s134
      $region28: #{seg_net_forward.8} parent=23 // pred_fallthru
        _
    $region24: #{seg_net_forward.8} parent=5 // pred_fallthru
      _
    %p136 = scmp.le.s32.totalorder 1, %s9
    %p137 = scmp.lt.s32.totalorder %s9, 5
    %p138 = pnand %p136, %p137
    %p139 = pneg %p138
    // Predicated region
    $region29: #{seg_net_forward.8} parent=5 // pred_check
      _
    $region30: #{seg_net_forward.8} parent=5 // pred_check_branch
      %141 = sbr.rel (%p138) target = $region32
    $region31: #{seg_net_forward.8} parent=5 // pred_region
      %s142 = ssub.s32 %s9, 1
      %p143 = scmp.lt.s32.totalorder %s14, 3
      %s144 = scalar_select %p143, %s14, 3
      %s145 = smul.addr %s144, 72
      %s146 = smul.addr %s145, 4
      %s147 = scalar_lea.vmem %s0, %s146
      %p148 = pneg %p35
      %p149 = pneg %p32
      %p150 = pneg %p56
      %p151 = pneg %p53
      %p152 = pneg %p77
      %p153 = pneg %p74
      %p154 = pneg %p103
      %p155 = pneg %p100
      %p156 = scmp.lt.s32.totalorder %s14, 3
      %s157 = scalar_select %p156, %s14, 3
      %s158 = smul.addr %s157, 8
      %s159 = smul.addr %s158, 4
      %s160 = scalar_lea.vmem %s3, %s159
      %p161 = scmp.lt.s32.totalorder %s14, 3
      %s162 = scalar_select %p161, %s14, 3
      %s163 = smul.addr %s162, 72
      %s164 = smul.addr %s163, 4
      %s165 = scalar_lea.vmem %s0, %s164
      %p166 = scmp.lt.s32.totalorder %s14, 3
      %s167 = scalar_select %p166, %s14, 3
      %s168 = smul.addr %s167, 8
      %s169 = smul.addr %s168, 4
      %s170 = scalar_lea.vmem %s3, %s169
      %v171 = vld [vmem:[%s165] sm:$0xf]
      %v172 = vld [vmem:[%s165 + $0x4] sm:$0x1]
      %v173 = vld [vmem:[%s165 + $0x8] sm:$0xf]
      %v174 = vld [vmem:[%s165 + $0xc] sm:$0x1]
      %v175 = vld [vmem:[%s165 + $0x10] sm:$0xf]
      %v176 = vld [vmem:[%s165 + $0x14] sm:$0x1]
      %v177 = vld [vmem:[%s165 + $0x18] sm:$0xf]
      %v178 = vld [vmem:[%s165 + $0x1c] sm:$0x1]
      %v179 = vld [vmem:[%s165 + $0x20] sm:$0xf]
      %v180 = vld [vmem:[%s165 + $0x24] sm:$0x1]
      %v181 = vld [vmem:[%s165 + $0x28] sm:$0xf]
      %v182 = vld [vmem:[%s165 + $0x2c] sm:$0x1]
      %v183 = vld [vmem:[%s165 + $0x30] sm:$0xf]
      %v184 = vld [vmem:[%s165 + $0x34] sm:$0x1]
      %v185 = vld [vmem:[%s165 + $0x38] sm:$0xf]
      %v186 = vld [vmem:[%s165 + $0x3c] sm:$0x1]
      %v187 = vld [vmem:[%s165 + $0x40] sm:$0xf]
      %v188 = vld [vmem:[%s165 + $0x44] sm:$0x1]
      %v189 = vld [vmem:[%s165 + $0x48] sm:$0xf]
      %v190 = vld [vmem:[%s165 + $0x50] sm:$0xf]
      %v191 = vld [vmem:[%s165 + $0x58] sm:$0xf]
      %v192 = vld [vmem:[%s165 + $0x60] sm:$0xf]
      %v193 = vld [vmem:[%s165 + $0x68] sm:$0xf]
      %v194 = vld [vmem:[%s165 + $0x70] sm:$0xf]
      %v195 = vld [vmem:[%s165 + $0x78] sm:$0xf]
      %v196 = vld [vmem:[%s165 + $0x80] sm:$0xf]
      %v197 = vld [vmem:[%s165 + $0x88] sm:$0xf]
      %v198 = vld [vmem:[%s165 + $0x90] sm:$0xf]
      %v199 = vld [vmem:[%s165 + $0x94] sm:$0x1]
      %v200 = vld [vmem:[%s165 + $0x98] sm:$0xf]
      %v201 = vld [vmem:[%s165 + $0x9c] sm:$0x1]
      %v202 = vld [vmem:[%s165 + $0xa0] sm:$0xf]
      %v203 = vld [vmem:[%s165 + $0xa4] sm:$0x1]
      %v204 = vld [vmem:[%s165 + $0xa8] sm:$0xf]
      %v205 = vld [vmem:[%s165 + $0xac] sm:$0x1]
      %v206 = vld [vmem:[%s165 + $0xb0] sm:$0xf]
      %v207 = vld [vmem:[%s165 + $0xb4] sm:$0x1]
      %v208 = vld [vmem:[%s165 + $0xb8] sm:$0xf]
      %v209 = vld [vmem:[%s165 + $0xbc] sm:$0x1]
      %v210 = vld [vmem:[%s165 + $0xc0] sm:$0xf]
      %v211 = vld [vmem:[%s165 + $0xc4] sm:$0x1]
      %v212 = vld [vmem:[%s165 + $0xc8] sm:$0xf]
      %v213 = vld [vmem:[%s165 + $0xcc] sm:$0x1]
      %v214 = vld [vmem:[%s165 + $0xd8] sm:$0xf]
      %v215 = vld [vmem:[%s165 + $0xe0] sm:$0xf]
      %v216 = vld [vmem:[%s165 + $0xe8] sm:$0xf]
      %v217 = vld [vmem:[%s165 + $0xf0] sm:$0xf]
      %v218 = vld [vmem:[%s165 + $0xf8] sm:$0xf]
      %v219 = vld [vmem:[%s165 + $0x100] sm:$0xf]
      %v220 = vld [vmem:[%s165 + $0x108] sm:$0xf]
      %v221 = vld [vmem:[%s165 + $0x110] sm:$0xf]
      %v222 = vunpack.c.l.bf16 %v171
      %v223 = vunpack.c.l.bf16 %v172
      %v224 = vunpack.c.l.bf16 %v173
      %v225 = vunpack.c.l.bf16 %v174
      %v226 = vunpack.c.l.bf16 %v175
      %v227 = vunpack.c.l.bf16 %v176
      %v228 = vunpack.c.l.bf16 %v177
      %v229 = vunpack.c.l.bf16 %v178
      %v230 = vunpack.c.l.bf16 %v179
      %v231 = vunpack.c.l.bf16 %v180
      %v232 = vunpack.c.l.bf16 %v181
      %v233 = vunpack.c.l.bf16 %v182
      %v234 = vunpack.c.l.bf16 %v183
      %v235 = vunpack.c.l.bf16 %v184
      %v236 = vunpack.c.l.bf16 %v185
      %v237 = vunpack.c.l.bf16 %v186
      %v238 = vunpack.c.l.bf16 %v187
      %v239 = vunpack.c.l.bf16 %v188
      %v240 = vunpack.c.l.bf16 %v189
      %v241 = vunpack.c.l.bf16 %v190
      %v242 = vunpack.c.l.bf16 %v191
      %v243 = vunpack.c.l.bf16 %v192
      %v244 = vunpack.c.l.bf16 %v193
      %v245 = vunpack.c.l.bf16 %v194
      %v246 = vunpack.c.l.bf16 %v195
      %v247 = vunpack.c.l.bf16 %v196
      %v248 = vunpack.c.l.bf16 %v197
      %v249 = vunpack.c.l.bf16 %v198
      %v250 = vunpack.c.l.bf16 %v199
      %v251 = vunpack.c.l.bf16 %v200
      %v252 = vunpack.c.l.bf16 %v201
      %v253 = vunpack.c.l.bf16 %v202
      %v254 = vunpack.c.l.bf16 %v203
      %v255 = vunpack.c.l.bf16 %v204
      %v256 = vunpack.c.l.bf16 %v205
      %v257 = vunpack.c.l.bf16 %v206
      %v258 = vunpack.c.l.bf16 %v207
      %v259 = vunpack.c.l.bf16 %v208
      %v260 = vunpack.c.l.bf16 %v209
      %v261 = vunpack.c.l.bf16 %v210
      %v262 = vunpack.c.l.bf16 %v211
      %v263 = vunpack.c.l.bf16 %v212
      %v264 = vunpack.c.l.bf16 %v213
      %v265 = vunpack.c.l.bf16 %v214
      %v266 = vunpack.c.l.bf16 %v215
      %v267 = vunpack.c.l.bf16 %v216
      %v268 = vunpack.c.l.bf16 %v217
      %v269 = vunpack.c.l.bf16 %v218
      %v270 = vunpack.c.l.bf16 %v219
      %v271 = vunpack.c.l.bf16 %v220
      %v272 = vunpack.c.l.bf16 %v221
      %v273 = vld [vmem:[%s1] sm:$0xff]
      %s274 = scalar_lea.vmem %s1, 8
      %v275 = vld [vmem:[%s274] sm:$0xff]
      %vm276 = vcmask 64512
      %v278 = vsel %vm276, %v240, 0
      %v281 = vsel %vm276, %v241, 0
      %v284 = vsel %vm276, %v242, 0
      %v287 = vsel %vm276, %v243, 0
      %v290 = vsel %vm276, %v244, 0
      %v293 = vsel %vm276, %v245, 0
      %v296 = vsel %vm276, %v246, 0
      %v299 = vsel %vm276, %v247, 0
      %301 = vmatprep.subr.mxu0 0.0
      %302 = vmatpush1.msra.mxu0 %v275
      %303 = vmatprep.subr.mxu0 0.0
      %304 = vmatpush1.msra.mxu0 0.0
      %305 = vmatprep.subr.mxu0 0.0
      %306 = vmatpush1.msra.mxu0 0.0
      %307 = vmatprep.subr.mxu0 0.0
      %308 = vmatpush1.msra.mxu0 0.0
      %309 = vmatprep.subr.mxu0 0.0
      %310 = vmatpush1.msra.mxu0 0.0
      %311 = vmatprep.subr.mxu0 0.0
      %312 = vmatpush1.msra.mxu0 0.0
      %313 = vmatprep.subr.mxu0 0.0
      %314 = vmatpush1.msra.mxu0 0.0
      %315 = vmatprep.subr.mxu0 0.0
      %316 = vmatpush1.msra.mxu0 0.0
      %317 = vmatprep.subr.mxu0 0.0
      %318 = vmatpush1.msra.mxu0 0.0
      %319 = vmatprep.subr.mxu0 0.0
      %320 = vmatpush1.msra.mxu0 0.0
      %321 = vmatprep.subr.mxu0 0.0
      %322 = vmatpush1.msra.mxu0 0.0
      %323 = vmatprep.subr.mxu0 0.0
      %324 = vmatpush1.msra.mxu0 0.0
      %325 = vmatprep.subr.mxu0 0.0
      %326 = vmatpush1.msra.mxu0 0.0
      %327 = vmatprep.subr.mxu0 0.0
      %328 = vmatpush1.msra.mxu0 0.0
      %329 = vmatprep.subr.mxu0 0.0
      %330 = vmatpush1.msra.mxu0 0.0
      %331 = vmatprep.subr.mxu0 0.0
      %332 = vmatpush1.msra.mxu0 0.0
      %333 = vmatprep.subr.mxu0 0.0
      %334 = vmatpush1.msra.mxu0 0.0
      %335 = vmatprep.subr.mxu0 0.0
      %336 = vmatpush1.msra.mxu0 0.0
      %337 = vmatprep.subr.mxu0 0.0
      %338 = vmatpush1.msra.mxu0 0.0
      %339 = vmatprep.subr.mxu0 0.0
      %340 = vmatpush1.msra.mxu0 0.0
      %341 = vmatprep.subr.mxu0 0.0
      %342 = vmatpush1.msra.mxu0 0.0
      %343 = vmatprep.subr.mxu0 0.0
      %344 = vmatpush1.msra.mxu0 0.0
      %345 = vmatprep.subr.mxu0 0.0
      %346 = vmatpush1.msra.mxu0 0.0
      %347 = vmatprep.subr.mxu0 0.0
      %348 = vmatpush1.msra.mxu0 0.0
      %349 = vmatprep.subr.mxu0 0.0
      %350 = vmatpush1.msra.mxu0 0.0
      %351 = vmatprep.subr.mxu0 0.0
      %352 = vmatpush1.msra.mxu0 0.0
      %353 = vmatprep.subr.mxu0 0.0
      %354 = vmatpush1.msra.mxu0 0.0
      %355 = vmatprep.subr.mxu0 0.0
      %356 = vmatpush1.msra.mxu0 0.0
      %357 = vmatprep.subr.mxu0 0.0
      %358 = vmatpush1.msra.mxu0 0.0
      %359 = vmatprep.subr.mxu0 0.0
      %360 = vmatpush1.msra.mxu0 0.0
      %361 = vmatprep.subr.mxu0 0.0
      %362 = vmatpush1.msra.mxu0 0.0
      %363 = vmatprep.subr.mxu0 0.0
      %364 = vmatpush1.msra.mxu0 0.0
      %365 = vmatprep.mubr.f32.mxu0 0.0
      %366 = vmatmul.mubr.f32.gmra.mrb[0].mxu0 %v278
      %v367 = vpop.f32.mrb[0].mxu0
      %v368 = vadd.f32 0.0, %v367
      %v369 = vpop.f32.mrb[0].mxu0
      %370 = vmatprep.mubr.f32.mxu0 0.0
      %371 = vmatmul.mubr.f32.gmra.mrb[0].mxu0 %v281
      %v372 = vpop.f32.mrb[0].mxu0
      %v373 = vadd.f32 0.0, %v372
      %v374 = vpop.f32.mrb[0].mxu0
      %375 = vmatprep.mubr.f32.mxu0 0.0
      %376 = vmatmul.mubr.f32.gmra.mrb[0].mxu0 %v284
      %v377 = vpop.f32.mrb[0].mxu0
      %v378 = vadd.f32 0.0, %v377
      %v379 = vpop.f32.mrb[0].mxu0
      %380 = vmatprep.mubr.f32.mxu0 0.0
      %381 = vmatmul.mubr.f32.gmra.mrb[0].mxu0 %v287
      %v382 = vpop.f32.mrb[0].mxu0
      %v383 = vadd.f32 0.0, %v382
      %v384 = vpop.f32.mrb[0].mxu0
      %385 = vmatprep.mubr.f32.mxu0 0.0
      %386 = vmatmul.mubr.f32.gmra.mrb[0].mxu0 %v290
      %v387 = vpop.f32.mrb[0].mxu0
      %v388 = vadd.f32 0.0, %v387
      %v389 = vpop.f32.mrb[0].mxu0
      %390 = vmatprep.mubr.f32.mxu0 0.0
      %391 = vmatmul.mubr.f32.gmra.mrb[0].mxu0 %v293
      %v392 = vpop.f32.mrb[0].mxu0
      %v393 = vadd.f32 0.0, %v392
      %v394 = vpop.f32.mrb[0].mxu0
      %395 = vmatprep.mubr.f32.mxu0 0.0
      %396 = vmatmul.mubr.f32.gmra.mrb[0].mxu0 %v296
      %v397 = vpop.f32.mrb[0].mxu0
      %v398 = vadd.f32 0.0, %v397
      %v399 = vpop.f32.mrb[0].mxu0
      %400 = vmatprep.mubr.f32.mxu0 0.0
      %401 = vmatmul.mubr.f32.gmra.mrb[0].mxu0 %v299
      %v402 = vpop.f32.mrb[0].mxu0
      %v403 = vadd.f32 0.0, %v402
      %v404 = vpop.f32.mrb[0].mxu0
      %405 = vdwg.mxu0
      %v407 = vsel %vm276, %v222, 0
      %v410 = vsel %vm276, %v224, 0
      %v413 = vsel %vm276, %v226, 0
      %v416 = vsel %vm276, %v228, 0
      %v419 = vsel %vm276, %v230, 0
      %v422 = vsel %vm276, %v232, 0
      %v425 = vsel %vm276, %v234, 0
      %v428 = vsel %vm276, %v236, 0
      %430 = vmatprep.subr.mxu0 0.0
      %431 = vmatpush1.msra.mxu0 %v273
      %432 = vmatprep.subr.mxu0 0.0
      %433 = vmatpush1.msra.mxu0 0.0
      %434 = vmatprep.subr.mxu0 0.0
      %435 = vmatpush1.msra.mxu0 0.0
      %436 = vmatprep.subr.mxu0 0.0
      %437 = vmatpush1.msra.mxu0 0.0
      %438 = vmatprep.subr.mxu0 0.0
      %439 = vmatpush1.msra.mxu0 0.0
      %440 = vmatprep.subr.mxu0 0.0
      %441 = vmatpush1.msra.mxu0 0.0
      %442 = vmatprep.subr.mxu0 0.0
      %443 = vmatpush1.msra.mxu0 0.0
      %444 = vmatprep.subr.mxu0 0.0
      %445 = vmatpush1.msra.mxu0 0.0
      %446 = vmatprep.subr.mxu0 0.0
      %447 = vmatpush1.msra.mxu0 0.0
      %448 = vmatprep.subr.mxu0 0.0
      %449 = vmatpush1.msra.mxu0 0.0
      %450 = vmatprep.subr.mxu0 0.0
      %451 = vmatpush1.msra.mxu0 0.0
      %452 = vmatprep.subr.mxu0 0.0
      %453 = vmatpush1.msra.mxu0 0.0
      %454 = vmatprep.subr.mxu0 0.0
      %455 = vmatpush1.msra.mxu0 0.0
      %456 = vmatprep.subr.mxu0 0.0
      %457 = vmatpush1.msra.mxu0 0.0
      %458 = vmatprep.subr.mxu0 0.0
      %459 = vmatpush1.msra.mxu0 0.0
      %460 = vmatprep.subr.mxu0 0.0
      %461 = vmatpush1.msra.mxu0 0.0
      %462 = vmatprep.subr.mxu0 0.0
      %463 = vmatpush1.msra.mxu0 0.0
      %464 = vmatprep.subr.mxu0 0.0
      %465 = vmatpush1.msra.mxu0 0.0
      %466 = vmatprep.subr.mxu0 0.0
      %467 = vmatpush1.msra.mxu0 0.0
      %468 = vmatprep.subr.mxu0 0.0
      %469 = vmatpush1.msra.mxu0 0.0
      %470 = vmatprep.subr.mxu0 0.0
      %471 = vmatpush1.msra.mxu0 0.0
      %472 = vmatprep.subr.mxu0 0.0
      %473 = vmatpush1.msra.mxu0 0.0
      %474 = vmatprep.subr.mxu0 0.0
      %475 = vmatpush1.msra.mxu0 0.0
      %476 = vmatprep.subr.mxu0 0.0
      %477 = vmatpush1.msra.mxu0 0.0
      %478 = vmatprep.subr.mxu0 0.0
      %479 = vmatpush1.msra.mxu0 0.0
      %480 = vmatprep.subr.mxu0 0.0
      %481 = vmatpush1.msra.mxu0 0.0
      %482 = vmatprep.subr.mxu0 0.0
      %483 = vmatpush1.msra.mxu0 0.0
      %484 = vmatprep.subr.mxu0 0.0
      %485 = vmatpush1.msra.mxu0 0.0
      %486 = vmatprep.subr.mxu0 0.0
      %487 = vmatpush1.msra.mxu0 0.0
      %488 = vmatprep.subr.mxu0 0.0
      %489 = vmatpush1.msra.mxu0 0.0
      %490 = vmatprep.subr.mxu0 0.0
      %491 = vmatpush1.msra.mxu0 0.0
      %492 = vmatprep.subr.mxu0 0.0
      %493 = vmatpush1.msra.mxu0 0.0
      %494 = vmatprep.mubr.f32.mxu0 0.0
      %495 = vmatmul.mubr.f32.gmra.mrb[0].mxu0 %v407
      %v496 = vpop.f32.mrb[0].mxu0
      %v497 = vadd.f32 %v368, %v496
      %v498 = vpop.f32.mrb[0].mxu0
      %499 = vmatprep.mubr.f32.mxu0 0.0
      %500 = vmatmul.mubr.f32.gmra.mrb[0].mxu0 %v410
      %v501 = vpop.f32.mrb[0].mxu0
      %v502 = vadd.f32 %v373, %v501
      %v503 = vpop.f32.mrb[0].mxu0
      %504 = vmatprep.mubr.f32.mxu0 0.0
      %505 = vmatmul.mubr.f32.gmra.mrb[0].mxu0 %v413
      %v506 = vpop.f32.mrb[0].mxu0
      %v507 = vadd.f32 %v378, %v506
      %v508 = vpop.f32.mrb[0].mxu0
      %509 = vmatprep.mubr.f32.mxu0 0.0
      %510 = vmatmul.mubr.f32.gmra.mrb[0].mxu0 %v416
      %v511 = vpop.f32.mrb[0].mxu0
      %v512 = vadd.f32 %v383, %v511
      %v513 = vpop.f32.mrb[0].mxu0
      %514 = vmatprep.mubr.f32.mxu0 0.0
      %515 = vmatmul.mubr.f32.gmra.mrb[0].mxu0 %v419
      %v516 = vpop.f32.mrb[0].mxu0
      %v517 = vadd.f32 %v388, %v516
      %v518 = vpop.f32.mrb[0].mxu0
      %519 = vmatprep.mubr.f32.mxu0 0.0
      %520 = vmatmul.mubr.f32.gmra.mrb[0].mxu0 %v422
      %v521 = vpop.f32.mrb[0].mxu0
      %v522 = vadd.f32 %v393, %v521
      %v523 = vpop.f32.mrb[0].mxu0
      %524 = vmatprep.mubr.f32.mxu0 0.0
      %525 = vmatmul.mubr.f32.gmra.mrb[0].mxu0 %v425
      %v526 = vpop.f32.mrb[0].mxu0
      %v527 = vadd.f32 %v398, %v526
      %v528 = vpop.f32.mrb[0].mxu0
      %529 = vmatprep.mubr.f32.mxu0 0.0
      %530 = vmatmul.mubr.f32.gmra.mrb[0].mxu0 %v428
      %v531 = vpop.f32.mrb[0].mxu0
      %v532 = vadd.f32 %v403, %v531
      %v533 = vpop.f32.mrb[0].mxu0
      %534 = vdwg.mxu0
      %vm543 = vcmask 1046528
      %v544 = vrot.slane %v222, 1
      %v545 = vrot.slane %v223, 1
      %v546 = vsel %vm543, %v544, %v545
      %v547 = vrot.slane %v224, 1
      %v548 = vrot.slane %v225, 1
      %v549 = vsel %vm543, %v547, %v548
      %v550 = vrot.slane %v226, 1
      %v551 = vrot.slane %v227, 1
      %v552 = vsel %vm543, %v550, %v551
      %v553 = vrot.slane %v228, 1
      %v554 = vrot.slane %v229, 1
      %v555 = vsel %vm543, %v553, %v554
      %v556 = vrot.slane %v230, 1
      %v557 = vrot.slane %v231, 1
      %v558 = vsel %vm543, %v556, %v557
      %v559 = vrot.slane %v232, 1
      %v560 = vrot.slane %v233, 1
      %v561 = vsel %vm543, %v559, %v560
      %v562 = vrot.slane %v234, 1
      %v563 = vrot.slane %v235, 1
      %v564 = vsel %vm543, %v562, %v563
      %v565 = vrot.slane %v236, 1
      %v566 = vrot.slane %v237, 1
      %v567 = vsel %vm543, %v565, %v566
      %s568 = scalar_lea.vmem %s1, 16
      %v569 = vld [vmem:[%s568] sm:$0xff]
      %v570 = vsel %vm276, %v546, 0
      %v572 = vsel %vm276, %v549, 0
      %v574 = vsel %vm276, %v552, 0
      %v576 = vsel %vm276, %v555, 0
      %v578 = vsel %vm276, %v558, 0
      %v580 = vsel %vm276, %v561, 0
      %v582 = vsel %vm276, %v564, 0
      %v584 = vsel %vm276, %v567, 0
      %586 = vmatprep.subr.mxu0 0.0
      %587 = vmatpush1.msra.mxu0 %v569
      %588 = vmatprep.subr.mxu0 0.0
      %589 = vmatpush1.msra.mxu0 0.0
      %590 = vmatprep.subr.mxu0 0.0
      %591 = vmatpush1.msra.mxu0 0.0
      %592 = vmatprep.subr.mxu0 0.0
      %593 = vmatpush1.msra.mxu0 0.0
      %594 = vmatprep.subr.mxu0 0.0
      %595 = vmatpush1.msra.mxu0 0.0
      %596 = vmatprep.subr.mxu0 0.0
      %597 = vmatpush1.msra.mxu0 0.0
      %598 = vmatprep.subr.mxu0 0.0
      %599 = vmatpush1.msra.mxu0 0.0
      %600 = vmatprep.subr.mxu0 0.0
      %601 = vmatpush1.msra.mxu0 0.0
      %602 = vmatprep.subr.mxu0 0.0
      %603 = vmatpush1.msra.mxu0 0.0
      %604 = vmatprep.subr.mxu0 0.0
      %605 = vmatpush1.msra.mxu0 0.0
      %606 = vmatprep.subr.mxu0 0.0
      %607 = vmatpush1.msra.mxu0 0.0
      %608 = vmatprep.subr.mxu0 0.0
      %609 = vmatpush1.msra.mxu0 0.0
      %610 = vmatprep.subr.mxu0 0.0
      %611 = vmatpush1.msra.mxu0 0.0
      %612 = vmatprep.subr.mxu0 0.0
      %613 = vmatpush1.msra.mxu0 0.0
      %614 = vmatprep.subr.mxu0 0.0
      %615 = vmatpush1.msra.mxu0 0.0
      %616 = vmatprep.subr.mxu0 0.0
      %617 = vmatpush1.msra.mxu0 0.0
      %618 = vmatprep.subr.mxu0 0.0
      %619 = vmatpush1.msra.mxu0 0.0
      %620 = vmatprep.subr.mxu0 0.0
      %621 = vmatpush1.msra.mxu0 0.0
      %622 = vmatprep.subr.mxu0 0.0
      %623 = vmatpush1.msra.mxu0 0.0
      %624 = vmatprep.subr.mxu0 0.0
      %625 = vmatpush1.msra.mxu0 0.0
      %626 = vmatprep.subr.mxu0 0.0
      %627 = vmatpush1.msra.mxu0 0.0
      %628 = vmatprep.subr.mxu0 0.0
      %629 = vmatpush1.msra.mxu0 0.0
      %630 = vmatprep.subr.mxu0 0.0
      %631 = vmatpush1.msra.mxu0 0.0
      %632 = vmatprep.subr.mxu0 0.0
      %633 = vmatpush1.msra.mxu0 0.0
      %634 = vmatprep.subr.mxu0 0.0
      %635 = vmatpush1.msra.mxu0 0.0
      %636 = vmatprep.subr.mxu0 0.0
      %637 = vmatpush1.msra.mxu0 0.0
      %638 = vmatprep.subr.mxu0 0.0
      %639 = vmatpush1.msra.mxu0 0.0
      %640 = vmatprep.subr.mxu0 0.0
      %641 = vmatpush1.msra.mxu0 0.0
      %642 = vmatprep.subr.mxu0 0.0
      %643 = vmatpush1.msra.mxu0 0.0
      %644 = vmatprep.subr.mxu0 0.0
      %645 = vmatpush1.msra.mxu0 0.0
      %646 = vmatprep.subr.mxu0 0.0
      %647 = vmatpush1.msra.mxu0 0.0
      %648 = vmatprep.subr.mxu0 0.0
      %649 = vmatpush1.msra.mxu0 0.0
      %650 = vmatprep.mubr.f32.mxu0 0.0
      %651 = vmatmul.mubr.f32.gmra.mrb[0].mxu0 %v570
      %v652 = vpop.f32.mrb[0].mxu0
      %v653 = vadd.f32 0.0, %v652
      %v654 = vpop.f32.mrb[0].mxu0
      %655 = vmatprep.mubr.f32.mxu0 0.0
      %656 = vmatmul.mubr.f32.gmra.mrb[0].mxu0 %v572
      %v657 = vpop.f32.mrb[0].mxu0
      %v658 = vadd.f32 0.0, %v657
      %v659 = vpop.f32.mrb[0].mxu0
      %660 = vmatprep.mubr.f32.mxu0 0.0
      %661 = vmatmul.mubr.f32.gmra.mrb[0].mxu0 %v574
      %v662 = vpop.f32.mrb[0].mxu0
      %v663 = vadd.f32 0.0, %v662
      %v664 = vpop.f32.mrb[0].mxu0
      %665 = vmatprep.mubr.f32.mxu0 0.0
      %666 = vmatmul.mubr.f32.gmra.mrb[0].mxu0 %v576
      %v667 = vpop.f32.mrb[0].mxu0
      %v668 = vadd.f32 0.0, %v667
      %v669 = vpop.f32.mrb[0].mxu0
      %670 = vmatprep.mubr.f32.mxu0 0.0
      %671 = vmatmul.mubr.f32.gmra.mrb[0].mxu0 %v578
      %v672 = vpop.f32.mrb[0].mxu0
      %v673 = vadd.f32 0.0, %v672
      %v674 = vpop.f32.mrb[0].mxu0
      %675 = vmatprep.mubr.f32.mxu0 0.0
      %676 = vmatmul.mubr.f32.gmra.mrb[0].mxu0 %v580
      %v677 = vpop.f32.mrb[0].mxu0
      %v678 = vadd.f32 0.0, %v677
      %v679 = vpop.f32.mrb[0].mxu0
      %680 = vmatprep.mubr.f32.mxu0 0.0
      %681 = vmatmul.mubr.f32.gmra.mrb[0].mxu0 %v582
      %v682 = vpop.f32.mrb[0].mxu0
      %v683 = vadd.f32 0.0, %v682
      %v684 = vpop.f32.mrb[0].mxu0
      %685 = vmatprep.mubr.f32.mxu0 0.0
      %686 = vmatmul.mubr.f32.gmra.mrb[0].mxu0 %v584
      %v687 = vpop.f32.mrb[0].mxu0
      %v688 = vadd.f32 0.0, %v687
      %v689 = vpop.f32.mrb[0].mxu0
      %690 = vdwg.mxu0
      %v691 = vadd.f32 %v497, %v653
      %v692 = vadd.f32 %v502, %v658
      %v693 = vadd.f32 %v507, %v663
      %v694 = vadd.f32 %v512, %v668
      %v695 = vadd.f32 %v517, %v673
      %v696 = vadd.f32 %v522, %v678
      %v697 = vadd.f32 %v527, %v683
      %v698 = vadd.f32 %v532, %v688
      %s699 = scalar_lea.vmem %s1, 24
      %v700 = vld [vmem:[%s699] sm:$0xff]
      %v702 = vsel %vm276, %v249, 0
      %v705 = vsel %vm276, %v251, 0
      %v708 = vsel %vm276, %v253, 0
      %v711 = vsel %vm276, %v255, 0
      %v714 = vsel %vm276, %v257, 0
      %v717 = vsel %vm276, %v259, 0
      %v720 = vsel %vm276, %v261, 0
      %v723 = vsel %vm276, %v263, 0
      %725 = vmatprep.subr.mxu0 0.0
      %726 = vmatpush1.msra.mxu0 %v700
      %727 = vmatprep.subr.mxu0 0.0
      %728 = vmatpush1.msra.mxu0 0.0
      %729 = vmatprep.subr.mxu0 0.0
      %730 = vmatpush1.msra.mxu0 0.0
      %731 = vmatprep.subr.mxu0 0.0
      %732 = vmatpush1.msra.mxu0 0.0
      %733 = vmatprep.subr.mxu0 0.0
      %734 = vmatpush1.msra.mxu0 0.0
      %735 = vmatprep.subr.mxu0 0.0
      %736 = vmatpush1.msra.mxu0 0.0
      %737 = vmatprep.subr.mxu0 0.0
      %738 = vmatpush1.msra.mxu0 0.0
      %739 = vmatprep.subr.mxu0 0.0
      %740 = vmatpush1.msra.mxu0 0.0
      %741 = vmatprep.subr.mxu0 0.0
      %742 = vmatpush1.msra.mxu0 0.0
      %743 = vmatprep.subr.mxu0 0.0
      %744 = vmatpush1.msra.mxu0 0.0
      %745 = vmatprep.subr.mxu0 0.0
      %746 = vmatpush1.msra.mxu0 0.0
      %747 = vmatprep.subr.mxu0 0.0
      %748 = vmatpush1.msra.mxu0 0.0
      %749 = vmatprep.subr.mxu0 0.0
      %750 = vmatpush1.msra.mxu0 0.0
      %751 = vmatprep.subr.mxu0 0.0
      %752 = vmatpush1.msra.mxu0 0.0
      %753 = vmatprep.subr.mxu0 0.0
      %754 = vmatpush1.msra.mxu0 0.0
      %755 = vmatprep.subr.mxu0 0.0
      %756 = vmatpush1.msra.mxu0 0.0
      %757 = vmatprep.subr.mxu0 0.0
      %758 = vmatpush1.msra.mxu0 0.0
      %759 = vmatprep.subr.mxu0 0.0
      %760 = vmatpush1.msra.mxu0 0.0
      %761 = vmatprep.subr.mxu0 0.0
      %762 = vmatpush1.msra.mxu0 0.0
      %763 = vmatprep.subr.mxu0 0.0
      %764 = vmatpush1.msra.mxu0 0.0
      %765 = vmatprep.subr.mxu0 0.0
      %766 = vmatpush1.msra.mxu0 0.0
      %767 = vmatprep.subr.mxu0 0.0
      %768 = vmatpush1.msra.mxu0 0.0
      %769 = vmatprep.subr.mxu0 0.0
      %770 = vmatpush1.msra.mxu0 0.0
      %771 = vmatprep.subr.mxu0 0.0
      %772 = vmatpush1.msra.mxu0 0.0
      %773 = vmatprep.subr.mxu0 0.0
      %774 = vmatpush1.msra.mxu0 0.0
      %775 = vmatprep.subr.mxu0 0.0
      %776 = vmatpush1.msra.mxu0 0.0
      %777 = vmatprep.subr.mxu0 0.0
      %778 = vmatpush1.msra.mxu0 0.0
      %779 = vmatprep.subr.mxu0 0.0
      %780 = vmatpush1.msra.mxu0 0.0
      %781 = vmatprep.subr.mxu0 0.0
      %782 = vmatpush1.msra.mxu0 0.0
      %783 = vmatprep.subr.mxu0 0.0
      %784 = vmatpush1.msra.mxu0 0.0
      %785 = vmatprep.subr.mxu0 0.0
      %786 = vmatpush1.msra.mxu0 0.0
      %787 = vmatprep.subr.mxu0 0.0
      %788 = vmatpush1.msra.mxu0 0.0
      %789 = vmatprep.mubr.f32.mxu0 0.0
      %790 = vmatmul.mubr.f32.gmra.mrb[0].mxu0 %v702
      %v791 = vpop.f32.mrb[0].mxu0
      %v792 = vadd.f32 0.0, %v791
      %v793 = vpop.f32.mrb[0].mxu0
      %794 = vmatprep.mubr.f32.mxu0 0.0
      %795 = vmatmul.mubr.f32.gmra.mrb[0].mxu0 %v705
      %v796 = vpop.f32.mrb[0].mxu0
      %v797 = vadd.f32 0.0, %v796
      %v798 = vpop.f32.mrb[0].mxu0
      %799 = vmatprep.mubr.f32.mxu0 0.0
      %800 = vmatmul.mubr.f32.gmra.mrb[0].mxu0 %v708
      %v801 = vpop.f32.mrb[0].mxu0
      %v802 = vadd.f32 0.0, %v801
      %v803 = vpop.f32.mrb[0].mxu0
      %804 = vmatprep.mubr.f32.mxu0 0.0
      %805 = vmatmul.mubr.f32.gmra.mrb[0].mxu0 %v711
      %v806 = vpop.f32.mrb[0].mxu0
      %v807 = vadd.f32 0.0, %v806
      %v808 = vpop.f32.mrb[0].mxu0
      %809 = vmatprep.mubr.f32.mxu0 0.0
      %810 = vmatmul.mubr.f32.gmra.mrb[0].mxu0 %v714
      %v811 = vpop.f32.mrb[0].mxu0
      %v812 = vadd.f32 0.0, %v811
      %v813 = vpop.f32.mrb[0].mxu0
      %814 = vmatprep.mubr.f32.mxu0 0.0
      %815 = vmatmul.mubr.f32.gmra.mrb[0].mxu0 %v717
      %v816 = vpop.f32.mrb[0].mxu0
      %v817 = vadd.f32 0.0, %v816
      %v818 = vpop.f32.mrb[0].mxu0
      %819 = vmatprep.mubr.f32.mxu0 0.0
      %820 = vmatmul.mubr.f32.gmra.mrb[0].mxu0 %v720
      %v821 = vpop.f32.mrb[0].mxu0
      %v822 = vadd.f32 0.0, %v821
      %v823 = vpop.f32.mrb[0].mxu0
      %824 = vmatprep.mubr.f32.mxu0 0.0
      %825 = vmatmul.mubr.f32.gmra.mrb[0].mxu0 %v723
      %v826 = vpop.f32.mrb[0].mxu0
      %v827 = vadd.f32 0.0, %v826
      %v828 = vpop.f32.mrb[0].mxu0
      %829 = vdwg.mxu0
      %v830 = vadd.f32 %v691, %v792
      %v831 = vadd.f32 %v692, %v797
      %v832 = vadd.f32 %v693, %v802
      %v833 = vadd.f32 %v694, %v807
      %v834 = vadd.f32 %v695, %v812
      %v835 = vadd.f32 %v696, %v817
      %v836 = vadd.f32 %v697, %v822
      %v837 = vadd.f32 %v698, %v827
      %s838 = scalar_lea.vmem %s1, 32
      %v839 = vld [vmem:[%s838] sm:$0xff]
      %v841 = vsel %vm276, %v265, 0
      %v844 = vsel %vm276, %v266, 0
      %v847 = vsel %vm276, %v267, 0
      %v850 = vsel %vm276, %v268, 0
      %v853 = vsel %vm276, %v269, 0
      %v856 = vsel %vm276, %v270, 0
      %v859 = vsel %vm276, %v271, 0
      %v862 = vsel %vm276, %v272, 0
      %864 = vmatprep.subr.mxu0 0.0
      %865 = vmatpush1.msra.mxu0 %v839
      %866 = vmatprep.subr.mxu0 0.0
      %867 = vmatpush1.msra.mxu0 0.0
      %868 = vmatprep.subr.mxu0 0.0
      %869 = vmatpush1.msra.mxu0 0.0
      %870 = vmatprep.subr.mxu0 0.0
      %871 = vmatpush1.msra.mxu0 0.0
      %872 = vmatprep.subr.mxu0 0.0
      %873 = vmatpush1.msra.mxu0 0.0
      %874 = vmatprep.subr.mxu0 0.0
      %875 = vmatpush1.msra.mxu0 0.0
      %876 = vmatprep.subr.mxu0 0.0
      %877 = vmatpush1.msra.mxu0 0.0
      %878 = vmatprep.subr.mxu0 0.0
      %879 = vmatpush1.msra.mxu0 0.0
      %880 = vmatprep.subr.mxu0 0.0
      %881 = vmatpush1.msra.mxu0 0.0
      %882 = vmatprep.subr.mxu0 0.0
      %883 = vmatpush1.msra.mxu0 0.0
      %884 = vmatprep.subr.mxu0 0.0
      %885 = vmatpush1.msra.mxu0 0.0
      %886 = vmatprep.subr.mxu0 0.0
      %887 = vmatpush1.msra.mxu0 0.0
      %888 = vmatprep.subr.mxu0 0.0
      %889 = vmatpush1.msra.mxu0 0.0
      %890 = vmatprep.subr.mxu0 0.0
      %891 = vmatpush1.msra.mxu0 0.0
      %892 = vmatprep.subr.mxu0 0.0
      %893 = vmatpush1.msra.mxu0 0.0
      %894 = vmatprep.subr.mxu0 0.0
      %895 = vmatpush1.msra.mxu0 0.0
      %896 = vmatprep.subr.mxu0 0.0
      %897 = vmatpush1.msra.mxu0 0.0
      %898 = vmatprep.subr.mxu0 0.0
      %899 = vmatpush1.msra.mxu0 0.0
      %900 = vmatprep.subr.mxu0 0.0
      %901 = vmatpush1.msra.mxu0 0.0
      %902 = vmatprep.subr.mxu0 0.0
      %903 = vmatpush1.msra.mxu0 0.0
      %904 = vmatprep.subr.mxu0 0.0
      %905 = vmatpush1.msra.mxu0 0.0
      %906 = vmatprep.subr.mxu0 0.0
      %907 = vmatpush1.msra.mxu0 0.0
      %908 = vmatprep.subr.mxu0 0.0
      %909 = vmatpush1.msra.mxu0 0.0
      %910 = vmatprep.subr.mxu0 0.0
      %911 = vmatpush1.msra.mxu0 0.0
      %912 = vmatprep.subr.mxu0 0.0
      %913 = vmatpush1.msra.mxu0 0.0
      %914 = vmatprep.subr.mxu0 0.0
      %915 = vmatpush1.msra.mxu0 0.0
      %916 = vmatprep.subr.mxu0 0.0
      %917 = vmatpush1.msra.mxu0 0.0
      %918 = vmatprep.subr.mxu0 0.0
      %919 = vmatpush1.msra.mxu0 0.0
      %920 = vmatprep.subr.mxu0 0.0
      %921 = vmatpush1.msra.mxu0 0.0
      %922 = vmatprep.subr.mxu0 0.0
      %923 = vmatpush1.msra.mxu0 0.0
      %924 = vmatprep.subr.mxu0 0.0
      %925 = vmatpush1.msra.mxu0 0.0
      %926 = vmatprep.subr.mxu0 0.0
      %927 = vmatpush1.msra.mxu0 0.0
      %928 = vmatprep.mubr.f32.mxu0 0.0
      %929 = vmatmul.mubr.f32.gmra.mrb[0].mxu0 %v841
      %v930 = vpop.f32.mrb[0].mxu0
      %v931 = vadd.f32 0.0, %v930
      %v932 = vpop.f32.mrb[0].mxu0
      %933 = vmatprep.mubr.f32.mxu0 0.0
      %934 = vmatmul.mubr.f32.gmra.mrb[0].mxu0 %v844
      %v935 = vpop.f32.mrb[0].mxu0
      %v936 = vadd.f32 0.0, %v935
      %v937 = vpop.f32.mrb[0].mxu0
      %938 = vmatprep.mubr.f32.mxu0 0.0
      %939 = vmatmul.mubr.f32.gmra.mrb[0].mxu0 %v847
      %v940 = vpop.f32.mrb[0].mxu0
      %v941 = vadd.f32 0.0, %v940
      %v942 = vpop.f32.mrb[0].mxu0
      %943 = vmatprep.mubr.f32.mxu0 0.0
      %944 = vmatmul.mubr.f32.gmra.mrb[0].mxu0 %v850
      %v945 = vpop.f32.mrb[0].mxu0
      %v946 = vadd.f32 0.0, %v945
      %v947 = vpop.f32.mrb[0].mxu0
      %948 = vmatprep.mubr.f32.mxu0 0.0
      %949 = vmatmul.mubr.f32.gmra.mrb[0].mxu0 %v853
      %v950 = vpop.f32.mrb[0].mxu0
      %v951 = vadd.f32 0.0, %v950
      %v952 = vpop.f32.mrb[0].mxu0
      %953 = vmatprep.mubr.f32.mxu0 0.0
      %954 = vmatmul.mubr.f32.gmra.mrb[0].mxu0 %v856
      %v955 = vpop.f32.mrb[0].mxu0
      %v956 = vadd.f32 0.0, %v955
      %v957 = vpop.f32.mrb[0].mxu0
      %958 = vmatprep.mubr.f32.mxu0 0.0
      %959 = vmatmul.mubr.f32.gmra.mrb[0].mxu0 %v859
      %v960 = vpop.f32.mrb[0].mxu0
      %v961 = vadd.f32 0.0, %v960
      %v962 = vpop.f32.mrb[0].mxu0
      %963 = vmatprep.mubr.f32.mxu0 0.0
      %964 = vmatmul.mubr.f32.gmra.mrb[0].mxu0 %v862
      %v965 = vpop.f32.mrb[0].mxu0
      %v966 = vadd.f32 0.0, %v965
      %v967 = vpop.f32.mrb[0].mxu0
      %968 = vdwg.mxu0
      %v969 = vadd.f32 %v830, %v931
      %v970 = vadd.f32 %v831, %v936
      %v971 = vadd.f32 %v832, %v941
      %v972 = vadd.f32 %v833, %v946
      %v973 = vadd.f32 %v834, %v951
      %v974 = vadd.f32 %v835, %v956
      %v975 = vadd.f32 %v836, %v961
      %v976 = vadd.f32 %v837, %v966
      %v985 = vrot.slane %v249, 1
      %v986 = vrot.slane %v250, 1
      %v987 = vsel %vm543, %v985, %v986
      %v988 = vrot.slane %v251, 1
      %v989 = vrot.slane %v252, 1
      %v990 = vsel %vm543, %v988, %v989
      %v991 = vrot.slane %v253, 1
      %v992 = vrot.slane %v254, 1
      %v993 = vsel %vm543, %v991, %v992
      %v994 = vrot.slane %v255, 1
      %v995 = vrot.slane %v256, 1
      %v996 = vsel %vm543, %v994, %v995
      %v997 = vrot.slane %v257, 1
      %v998 = vrot.slane %v258, 1
      %v999 = vsel %vm543, %v997, %v998
      %v1000 = vrot.slane %v259, 1
      %v1001 = vrot.slane %v260, 1
      %v1002 = vsel %vm543, %v1000, %v1001
      %v1003 = vrot.slane %v261, 1
      %v1004 = vrot.slane %v262, 1
      %v1005 = vsel %vm543, %v1003, %v1004
      %v1006 = vrot.slane %v263, 1
      %v1007 = vrot.slane %v264, 1
      %v1008 = vsel %vm543, %v1006, %v1007
      %s1009 = scalar_lea.vmem %s1, 40
      %v1010 = vld [vmem:[%s1009] sm:$0xff]
      %v1011 = vsel %vm276, %v987, 0
      %v1013 = vsel %vm276, %v990, 0
      %v1015 = vsel %vm276, %v993, 0
      %v1017 = vsel %vm276, %v996, 0
      %v1019 = vsel %vm276, %v999, 0
      %v1021 = vsel %vm276, %v1002, 0
      %v1023 = vsel %vm276, %v1005, 0
      %v1025 = vsel %vm276, %v1008, 0
      %1027 = vmatprep.subr.mxu0 0.0
      %1028 = vmatpush1.msra.mxu0 %v1010
      %1029 = vmatprep.subr.mxu0 0.0
      %1030 = vmatpush1.msra.mxu0 0.0
      %1031 = vmatprep.subr.mxu0 0.0
      %1032 = vmatpush1.msra.mxu0 0.0
      %1033 = vmatprep.subr.mxu0 0.0
      %1034 = vmatpush1.msra.mxu0 0.0
      %1035 = vmatprep.subr.mxu0 0.0
      %1036 = vmatpush1.msra.mxu0 0.0
      %1037 = vmatprep.subr.mxu0 0.0
      %1038 = vmatpush1.msra.mxu0 0.0
      %1039 = vmatprep.subr.mxu0 0.0
      %1040 = vmatpush1.msra.mxu0 0.0
      %1041 = vmatprep.subr.mxu0 0.0
      %1042 = vmatpush1.msra.mxu0 0.0
      %1043 = vmatprep.subr.mxu0 0.0
      %1044 = vmatpush1.msra.mxu0 0.0
      %1045 = vmatprep.subr.mxu0 0.0
      %1046 = vmatpush1.msra.mxu0 0.0
      %1047 = vmatprep.subr.mxu0 0.0
      %1048 = vmatpush1.msra.mxu0 0.0
      %1049 = vmatprep.subr.mxu0 0.0
      %1050 = vmatpush1.msra.mxu0 0.0
      %1051 = vmatprep.subr.mxu0 0.0
      %1052 = vmatpush1.msra.mxu0 0.0
      %1053 = vmatprep.subr.mxu0 0.0
      %1054 = vmatpush1.msra.mxu0 0.0
      %1055 = vmatprep.subr.mxu0 0.0
      %1056 = vmatpush1.msra.mxu0 0.0
      %1057 = vmatprep.subr.mxu0 0.0
      %1058 = vmatpush1.msra.mxu0 0.0
      %1059 = vmatprep.subr.mxu0 0.0
      %1060 = vmatpush1.msra.mxu0 0.0
      %1061 = vmatprep.subr.mxu0 0.0
      %1062 = vmatpush1.msra.mxu0 0.0
      %1063 = vmatprep.subr.mxu0 0.0
      %1064 = vmatpush1.msra.mxu0 0.0
      %1065 = vmatprep.subr.mxu0 0.0
      %1066 = vmatpush1.msra.mxu0 0.0
      %1067 = vmatprep.subr.mxu0 0.0
      %1068 = vmatpush1.msra.mxu0 0.0
      %1069 = vmatprep.subr.mxu0 0.0
      %1070 = vmatpush1.msra.mxu0 0.0
      %1071 = vmatprep.subr.mxu0 0.0
      %1072 = vmatpush1.msra.mxu0 0.0
      %1073 = vmatprep.subr.mxu0 0.0
      %1074 = vmatpush1.msra.mxu0 0.0
      %1075 = vmatprep.subr.mxu0 0.0
      %1076 = vmatpush1.msra.mxu0 0.0
      %1077 = vmatprep.subr.mxu0 0.0
      %1078 = vmatpush1.msra.mxu0 0.0
      %1079 = vmatprep.subr.mxu0 0.0
      %1080 = vmatpush1.msra.mxu0 0.0
      %1081 = vmatprep.subr.mxu0 0.0
      %1082 = vmatpush1.msra.mxu0 0.0
      %1083 = vmatprep.subr.mxu0 0.0
      %1084 = vmatpush1.msra.mxu0 0.0
      %1085 = vmatprep.subr.mxu0 0.0
      %1086 = vmatpush1.msra.mxu0 0.0
      %1087 = vmatprep.subr.mxu0 0.0
      %1088 = vmatpush1.msra.mxu0 0.0
      %1089 = vmatprep.subr.mxu0 0.0
      %1090 = vmatpush1.msra.mxu0 0.0
      %1091 = vmatprep.mubr.f32.mxu0 0.0
      %1092 = vmatmul.mubr.f32.gmra.mrb[0].mxu0 %v1011
      %v1093 = vpop.f32.mrb[0].mxu0
      %v1094 = vadd.f32 0.0, %v1093
      %v1095 = vpop.f32.mrb[0].mxu0
      %1096 = vmatprep.mubr.f32.mxu0 0.0
      %1097 = vmatmul.mubr.f32.gmra.mrb[0].mxu0 %v1013
      %v1098 = vpop.f32.mrb[0].mxu0
      %v1099 = vadd.f32 0.0, %v1098
      %v1100 = vpop.f32.mrb[0].mxu0
      %1101 = vmatprep.mubr.f32.mxu0 0.0
      %1102 = vmatmul.mubr.f32.gmra.mrb[0].mxu0 %v1015
      %v1103 = vpop.f32.mrb[0].mxu0
      %v1104 = vadd.f32 0.0, %v1103
      %v1105 = vpop.f32.mrb[0].mxu0
      %1106 = vmatprep.mubr.f32.mxu0 0.0
      %1107 = vmatmul.mubr.f32.gmra.mrb[0].mxu0 %v1017
      %v1108 = vpop.f32.mrb[0].mxu0
      %v1109 = vadd.f32 0.0, %v1108
      %v1110 = vpop.f32.mrb[0].mxu0
      %1111 = vmatprep.mubr.f32.mxu0 0.0
      %1112 = vmatmul.mubr.f32.gmra.mrb[0].mxu0 %v1019
      %v1113 = vpop.f32.mrb[0].mxu0
      %v1114 = vadd.f32 0.0, %v1113
      %v1115 = vpop.f32.mrb[0].mxu0
      %1116 = vmatprep.mubr.f32.mxu0 0.0
      %1117 = vmatmul.mubr.f32.gmra.mrb[0].mxu0 %v1021
      %v1118 = vpop.f32.mrb[0].mxu0
      %v1119 = vadd.f32 0.0, %v1118
      %v1120 = vpop.f32.mrb[0].mxu0
      %1121 = vmatprep.mubr.f32.mxu0 0.0
      %1122 = vmatmul.mubr.f32.gmra.mrb[0].mxu0 %v1023
      %v1123 = vpop.f32.mrb[0].mxu0
      %v1124 = vadd.f32 0.0, %v1123
      %v1125 = vpop.f32.mrb[0].mxu0
      %1126 = vmatprep.mubr.f32.mxu0 0.0
      %1127 = vmatmul.mubr.f32.gmra.mrb[0].mxu0 %v1025
      %v1128 = vpop.f32.mrb[0].mxu0
      %v1129 = vadd.f32 0.0, %v1128
      %v1130 = vpop.f32.mrb[0].mxu0
      %1131 = vdwg.mxu0
      %v1132 = vadd.f32 %v969, %v1094
      %v1133 = vadd.f32 %v970, %v1099
      %v1134 = vadd.f32 %v971, %v1104
      %v1135 = vadd.f32 %v972, %v1109
      %v1136 = vadd.f32 %v973, %v1114
      %v1137 = vadd.f32 %v974, %v1119
      %v1138 = vadd.f32 %v975, %v1124
      %v1139 = vadd.f32 %v976, %v1129
      %s1140 = scalar_lea.vmem %s1, 48
      %v1141 = vld [vmem:[%s1140] sm:$0xff]
      %v1143 = vsel %vm276, %v238, 0
      %1145 = vmatprep.subr.mxu0 0.0
      %1146 = vmatpush1.msra.mxu0 %v1141
      %1147 = vmatprep.subr.mxu0 0.0
      %1148 = vmatpush1.msra.mxu0 0.0
      %1149 = vmatprep.subr.mxu0 0.0
      %1150 = vmatpush1.msra.mxu0 0.0
      %1151 = vmatprep.subr.mxu0 0.0
      %1152 = vmatpush1.msra.mxu0 0.0
      %1153 = vmatprep.subr.mxu0 0.0
      %1154 = vmatpush1.msra.mxu0 0.0
      %1155 = vmatprep.subr.mxu0 0.0
      %1156 = vmatpush1.msra.mxu0 0.0
      %1157 = vmatprep.subr.mxu0 0.0
      %1158 = vmatpush1.msra.mxu0 0.0
      %1159 = vmatprep.subr.mxu0 0.0
      %1160 = vmatpush1.msra.mxu0 0.0
      %1161 = vmatprep.subr.mxu0 0.0
      %1162 = vmatpush1.msra.mxu0 0.0
      %1163 = vmatprep.subr.mxu0 0.0
      %1164 = vmatpush1.msra.mxu0 0.0
      %1165 = vmatprep.subr.mxu0 0.0
      %1166 = vmatpush1.msra.mxu0 0.0
      %1167 = vmatprep.subr.mxu0 0.0
      %1168 = vmatpush1.msra.mxu0 0.0
      %1169 = vmatprep.subr.mxu0 0.0
      %1170 = vmatpush1.msra.mxu0 0.0
      %1171 = vmatprep.subr.mxu0 0.0
      %1172 = vmatpush1.msra.mxu0 0.0
      %1173 = vmatprep.subr.mxu0 0.0
      %1174 = vmatpush1.msra.mxu0 0.0
      %1175 = vmatprep.subr.mxu0 0.0
      %1176 = vmatpush1.msra.mxu0 0.0
      %1177 = vmatprep.subr.mxu0 0.0
      %1178 = vmatpush1.msra.mxu0 0.0
      %1179 = vmatprep.subr.mxu0 0.0
      %1180 = vmatpush1.msra.mxu0 0.0
      %1181 = vmatprep.subr.mxu0 0.0
      %1182 = vmatpush1.msra.mxu0 0.0
      %1183 = vmatprep.subr.mxu0 0.0
      %1184 = vmatpush1.msra.mxu0 0.0
      %1185 = vmatprep.subr.mxu0 0.0
      %1186 = vmatpush1.msra.mxu0 0.0
      %1187 = vmatprep.subr.mxu0 0.0
      %1188 = vmatpush1.msra.mxu0 0.0
      %1189 = vmatprep.subr.mxu0 0.0
      %1190 = vmatpush1.msra.mxu0 0.0
      %1191 = vmatprep.subr.mxu0 0.0
      %1192 = vmatpush1.msra.mxu0 0.0
      %1193 = vmatprep.subr.mxu0 0.0
      %1194 = vmatpush1.msra.mxu0 0.0
      %1195 = vmatprep.subr.mxu0 0.0
      %1196 = vmatpush1.msra.mxu0 0.0
      %1197 = vmatprep.subr.mxu0 0.0
      %1198 = vmatpush1.msra.mxu0 0.0
      %1199 = vmatprep.subr.mxu0 0.0
      %1200 = vmatpush1.msra.mxu0 0.0
      %1201 = vmatprep.subr.mxu0 0.0
      %1202 = vmatpush1.msra.mxu0 0.0
      %1203 = vmatprep.subr.mxu0 0.0
      %1204 = vmatpush1.msra.mxu0 0.0
      %1205 = vmatprep.subr.mxu0 0.0
      %1206 = vmatpush1.msra.mxu0 0.0
      %1207 = vmatprep.subr.mxu0 0.0
      %1208 = vmatpush1.msra.mxu0 0.0
      %1209 = vmatprep.mubr.f32.mxu0 0.0
      %1210 = vmatmul.mubr.f32.gmra.mrb[0].mxu0 %v410
      %v1211 = vpop.f32.mrb[0].mxu0
      %v1212 = vadd.f32 0.0, %v1211
      %v1213 = vpop.f32.mrb[0].mxu0
      %1214 = vmatprep.mubr.f32.mxu0 0.0
      %1215 = vmatmul.mubr.f32.gmra.mrb[0].mxu0 %v413
      %v1216 = vpop.f32.mrb[0].mxu0
      %v1217 = vadd.f32 0.0, %v1216
      %v1218 = vpop.f32.mrb[0].mxu0
      %1219 = vmatprep.mubr.f32.mxu0 0.0
      %1220 = vmatmul.mubr.f32.gmra.mrb[0].mxu0 %v416
      %v1221 = vpop.f32.mrb[0].mxu0
      %v1222 = vadd.f32 0.0, %v1221
      %v1223 = vpop.f32.mrb[0].mxu0
      %1224 = vmatprep.mubr.f32.mxu0 0.0
      %1225 = vmatmul.mubr.f32.gmra.mrb[0].mxu0 %v419
      %v1226 = vpop.f32.mrb[0].mxu0
      %v1227 = vadd.f32 0.0, %v1226
      %v1228 = vpop.f32.mrb[0].mxu0
      %1229 = vmatprep.mubr.f32.mxu0 0.0
      %1230 = vmatmul.mubr.f32.gmra.mrb[0].mxu0 %v422
      %v1231 = vpop.f32.mrb[0].mxu0
      %v1232 = vadd.f32 0.0, %v1231
      %v1233 = vpop.f32.mrb[0].mxu0
      %1234 = vmatprep.mubr.f32.mxu0 0.0
      %1235 = vmatmul.mubr.f32.gmra.mrb[0].mxu0 %v425
      %v1236 = vpop.f32.mrb[0].mxu0
      %v1237 = vadd.f32 0.0, %v1236
      %v1238 = vpop.f32.mrb[0].mxu0
      %1239 = vmatprep.mubr.f32.mxu0 0.0
      %1240 = vmatmul.mubr.f32.gmra.mrb[0].mxu0 %v428
      %v1241 = vpop.f32.mrb[0].mxu0
      %v1242 = vadd.f32 0.0, %v1241
      %v1243 = vpop.f32.mrb[0].mxu0
      %1244 = vmatprep.mubr.f32.mxu0 0.0
      %1245 = vmatmul.mubr.f32.gmra.mrb[0].mxu0 %v1143
      %v1246 = vpop.f32.mrb[0].mxu0
      %v1247 = vadd.f32 0.0, %v1246
      %v1248 = vpop.f32.mrb[0].mxu0
      %1249 = vdwg.mxu0
      %v1250 = vadd.f32 %v1132, %v1212
      %v1251 = vadd.f32 %v1133, %v1217
      %v1252 = vadd.f32 %v1134, %v1222
      %v1253 = vadd.f32 %v1135, %v1227
      %v1254 = vadd.f32 %v1136, %v1232
      %v1255 = vadd.f32 %v1137, %v1237
      %v1256 = vadd.f32 %v1138, %v1242
      %v1257 = vadd.f32 %v1139, %v1247
      %s1258 = scalar_lea.vmem %s1, 56
      %v1259 = vld [vmem:[%s1258] sm:$0xff]
      %v1261 = vsel %vm276, %v248, 0
      %1263 = vmatprep.subr.mxu0 0.0
      %1264 = vmatpush1.msra.mxu0 %v1259
      %1265 = vmatprep.subr.mxu0 0.0
      %1266 = vmatpush1.msra.mxu0 0.0
      %1267 = vmatprep.subr.mxu0 0.0
      %1268 = vmatpush1.msra.mxu0 0.0
      %1269 = vmatprep.subr.mxu0 0.0
      %1270 = vmatpush1.msra.mxu0 0.0
      %1271 = vmatprep.subr.mxu0 0.0
      %1272 = vmatpush1.msra.mxu0 0.0
      %1273 = vmatprep.subr.mxu0 0.0
      %1274 = vmatpush1.msra.mxu0 0.0
      %1275 = vmatprep.subr.mxu0 0.0
      %1276 = vmatpush1.msra.mxu0 0.0
      %1277 = vmatprep.subr.mxu0 0.0
      %1278 = vmatpush1.msra.mxu0 0.0
      %1279 = vmatprep.subr.mxu0 0.0
      %1280 = vmatpush1.msra.mxu0 0.0
      %1281 = vmatprep.subr.mxu0 0.0
      %1282 = vmatpush1.msra.mxu0 0.0
      %1283 = vmatprep.subr.mxu0 0.0
      %1284 = vmatpush1.msra.mxu0 0.0
      %1285 = vmatprep.subr.mxu0 0.0
      %1286 = vmatpush1.msra.mxu0 0.0
      %1287 = vmatprep.subr.mxu0 0.0
      %1288 = vmatpush1.msra.mxu0 0.0
      %1289 = vmatprep.subr.mxu0 0.0
      %1290 = vmatpush1.msra.mxu0 0.0
      %1291 = vmatprep.subr.mxu0 0.0
      %1292 = vmatpush1.msra.mxu0 0.0
      %1293 = vmatprep.subr.mxu0 0.0
      %1294 = vmatpush1.msra.mxu0 0.0
      %1295 = vmatprep.subr.mxu0 0.0
      %1296 = vmatpush1.msra.mxu0 0.0
      %1297 = vmatprep.subr.mxu0 0.0
      %1298 = vmatpush1.msra.mxu0 0.0
      %1299 = vmatprep.subr.mxu0 0.0
      %1300 = vmatpush1.msra.mxu0 0.0
      %1301 = vmatprep.subr.mxu0 0.0
      %1302 = vmatpush1.msra.mxu0 0.0
      %1303 = vmatprep.subr.mxu0 0.0
      %1304 = vmatpush1.msra.mxu0 0.0
      %1305 = vmatprep.subr.mxu0 0.0
      %1306 = vmatpush1.msra.mxu0 0.0
      %1307 = vmatprep.subr.mxu0 0.0
      %1308 = vmatpush1.msra.mxu0 0.0
      %1309 = vmatprep.subr.mxu0 0.0
      %1310 = vmatpush1.msra.mxu0 0.0
      %1311 = vmatprep.subr.mxu0 0.0
      %1312 = vmatpush1.msra.mxu0 0.0
      %1313 = vmatprep.subr.mxu0 0.0
      %1314 = vmatpush1.msra.mxu0 0.0
      %1315 = vmatprep.subr.mxu0 0.0
      %1316 = vmatpush1.msra.mxu0 0.0
      %1317 = vmatprep.subr.mxu0 0.0
      %1318 = vmatpush1.msra.mxu0 0.0
      %1319 = vmatprep.subr.mxu0 0.0
      %1320 = vmatpush1.msra.mxu0 0.0
      %1321 = vmatprep.subr.mxu0 0.0
      %1322 = vmatpush1.msra.mxu0 0.0
      %1323 = vmatprep.subr.mxu0 0.0
      %1324 = vmatpush1.msra.mxu0 0.0
      %1325 = vmatprep.subr.mxu0 0.0
      %1326 = vmatpush1.msra.mxu0 0.0
      %1327 = vmatprep.mubr.f32.mxu0 0.0
      %1328 = vmatmul.mubr.f32.gmra.mrb[0].mxu0 %v281
      %v1329 = vpop.f32.mrb[0].mxu0
      %v1330 = vadd.f32 0.0, %v1329
      %v1331 = vpop.f32.mrb[0].mxu0
      %1332 = vmatprep.mubr.f32.mxu0 0.0
      %1333 = vmatmul.mubr.f32.gmra.mrb[0].mxu0 %v284
      %v1334 = vpop.f32.mrb[0].mxu0
      %v1335 = vadd.f32 0.0, %v1334
      %v1336 = vpop.f32.mrb[0].mxu0
      %1337 = vmatprep.mubr.f32.mxu0 0.0
      %1338 = vmatmul.mubr.f32.gmra.mrb[0].mxu0 %v287
      %v1339 = vpop.f32.mrb[0].mxu0
      %v1340 = vadd.f32 0.0, %v1339
      %v1341 = vpop.f32.mrb[0].mxu0
      %1342 = vmatprep.mubr.f32.mxu0 0.0
      %1343 = vmatmul.mubr.f32.gmra.mrb[0].mxu0 %v290
      %v1344 = vpop.f32.mrb[0].mxu0
      %v1345 = vadd.f32 0.0, %v1344
      %v1346 = vpop.f32.mrb[0].mxu0
      %1347 = vmatprep.mubr.f32.mxu0 0.0
      %1348 = vmatmul.mubr.f32.gmra.mrb[0].mxu0 %v293
      %v1349 = vpop.f32.mrb[0].mxu0
      %v1350 = vadd.f32 0.0, %v1349
      %v1351 = vpop.f32.mrb[0].mxu0
      %1352 = vmatprep.mubr.f32.mxu0 0.0
      %1353 = vmatmul.mubr.f32.gmra.mrb[0].mxu0 %v296
      %v1354 = vpop.f32.mrb[0].mxu0
      %v1355 = vadd.f32 0.0, %v1354
      %v1356 = vpop.f32.mrb[0].mxu0
      %1357 = vmatprep.mubr.f32.mxu0 0.0
      %1358 = vmatmul.mubr.f32.gmra.mrb[0].mxu0 %v299
      %v1359 = vpop.f32.mrb[0].mxu0
      %v1360 = vadd.f32 0.0, %v1359
      %v1361 = vpop.f32.mrb[0].mxu0
      %1362 = vmatprep.mubr.f32.mxu0 0.0
      %1363 = vmatmul.mubr.f32.gmra.mrb[0].mxu0 %v1261
      %v1364 = vpop.f32.mrb[0].mxu0
      %v1365 = vadd.f32 0.0, %v1364
      %v1366 = vpop.f32.mrb[0].mxu0
      %1367 = vdwg.mxu0
      %v1368 = vadd.f32 %v1250, %v1330
      %v1369 = vadd.f32 %v1251, %v1335
      %v1370 = vadd.f32 %v1252, %v1340
      %v1371 = vadd.f32 %v1253, %v1345
      %v1372 = vadd.f32 %v1254, %v1350
      %v1373 = vadd.f32 %v1255, %v1355
      %v1374 = vadd.f32 %v1256, %v1360
      %v1375 = vadd.f32 %v1257, %v1365
      %v1377 = vrot.slane %v238, 1
      %v1378 = vrot.slane %v239, 1
      %v1379 = vsel %vm543, %v1377, %v1378
      %s1380 = scalar_lea.vmem %s1, 64
      %v1381 = vld [vmem:[%s1380] sm:$0xff]
      %v1382 = vsel %vm276, %v1379, 0
      %1384 = vmatprep.subr.mxu0 0.0
      %1385 = vmatpush1.msra.mxu0 %v1381
      %1386 = vmatprep.subr.mxu0 0.0
      %1387 = vmatpush1.msra.mxu0 0.0
      %1388 = vmatprep.subr.mxu0 0.0
      %1389 = vmatpush1.msra.mxu0 0.0
      %1390 = vmatprep.subr.mxu0 0.0
      %1391 = vmatpush1.msra.mxu0 0.0
      %1392 = vmatprep.subr.mxu0 0.0
      %1393 = vmatpush1.msra.mxu0 0.0
      %1394 = vmatprep.subr.mxu0 0.0
      %1395 = vmatpush1.msra.mxu0 0.0
      %1396 = vmatprep.subr.mxu0 0.0
      %1397 = vmatpush1.msra.mxu0 0.0
      %1398 = vmatprep.subr.mxu0 0.0
      %1399 = vmatpush1.msra.mxu0 0.0
      %1400 = vmatprep.subr.mxu0 0.0
      %1401 = vmatpush1.msra.mxu0 0.0
      %1402 = vmatprep.subr.mxu0 0.0
      %1403 = vmatpush1.msra.mxu0 0.0
      %1404 = vmatprep.subr.mxu0 0.0
      %1405 = vmatpush1.msra.mxu0 0.0
      %1406 = vmatprep.subr.mxu0 0.0
      %1407 = vmatpush1.msra.mxu0 0.0
      %1408 = vmatprep.subr.mxu0 0.0
      %1409 = vmatpush1.msra.mxu0 0.0
      %1410 = vmatprep.subr.mxu0 0.0
      %1411 = vmatpush1.msra.mxu0 0.0
      %1412 = vmatprep.subr.mxu0 0.0
      %1413 = vmatpush1.msra.mxu0 0.0
      %1414 = vmatprep.subr.mxu0 0.0
      %1415 = vmatpush1.msra.mxu0 0.0
      %1416 = vmatprep.subr.mxu0 0.0
      %1417 = vmatpush1.msra.mxu0 0.0
      %1418 = vmatprep.subr.mxu0 0.0
      %1419 = vmatpush1.msra.mxu0 0.0
      %1420 = vmatprep.subr.mxu0 0.0
      %1421 = vmatpush1.msra.mxu0 0.0
      %1422 = vmatprep.subr.mxu0 0.0
      %1423 = vmatpush1.msra.mxu0 0.0
      %1424 = vmatprep.subr.mxu0 0.0
      %1425 = vmatpush1.msra.mxu0 0.0
      %1426 = vmatprep.subr.mxu0 0.0
      %1427 = vmatpush1.msra.mxu0 0.0
      %1428 = vmatprep.subr.mxu0 0.0
      %1429 = vmatpush1.msra.mxu0 0.0
      %1430 = vmatprep.subr.mxu0 0.0
      %1431 = vmatpush1.msra.mxu0 0.0
      %1432 = vmatprep.subr.mxu0 0.0
      %1433 = vmatpush1.msra.mxu0 0.0
      %1434 = vmatprep.subr.mxu0 0.0
      %1435 = vmatpush1.msra.mxu0 0.0
      %1436 = vmatprep.subr.mxu0 0.0
      %1437 = vmatpush1.msra.mxu0 0.0
      %1438 = vmatprep.subr.mxu0 0.0
      %1439 = vmatpush1.msra.mxu0 0.0
      %1440 = vmatprep.subr.mxu0 0.0
      %1441 = vmatpush1.msra.mxu0 0.0
      %1442 = vmatprep.subr.mxu0 0.0
      %1443 = vmatpush1.msra.mxu0 0.0
      %1444 = vmatprep.subr.mxu0 0.0
      %1445 = vmatpush1.msra.mxu0 0.0
      %1446 = vmatprep.subr.mxu0 0.0
      %1447 = vmatpush1.msra.mxu0 0.0
      %1448 = vmatprep.mubr.f32.mxu0 0.0
      %1449 = vmatmul.mubr.f32.gmra.mrb[0].mxu0 %v572
      %v1450 = vpop.f32.mrb[0].mxu0
      %v1451 = vadd.f32 0.0, %v1450
      %v1452 = vpop.f32.mrb[0].mxu0
      %1453 = vmatprep.mubr.f32.mxu0 0.0
      %1454 = vmatmul.mubr.f32.gmra.mrb[0].mxu0 %v574
      %v1455 = vpop.f32.mrb[0].mxu0
      %v1456 = vadd.f32 0.0, %v1455
      %v1457 = vpop.f32.mrb[0].mxu0
      %1458 = vmatprep.mubr.f32.mxu0 0.0
      %1459 = vmatmul.mubr.f32.gmra.mrb[0].mxu0 %v576
      %v1460 = vpop.f32.mrb[0].mxu0
      %v1461 = vadd.f32 0.0, %v1460
      %v1462 = vpop.f32.mrb[0].mxu0
      %1463 = vmatprep.mubr.f32.mxu0 0.0
      %1464 = vmatmul.mubr.f32.gmra.mrb[0].mxu0 %v578
      %v1465 = vpop.f32.mrb[0].mxu0
      %v1466 = vadd.f32 0.0, %v1465
      %v1467 = vpop.f32.mrb[0].mxu0
      %1468 = vmatprep.mubr.f32.mxu0 0.0
      %1469 = vmatmul.mubr.f32.gmra.mrb[0].mxu0 %v580
      %v1470 = vpop.f32.mrb[0].mxu0
      %v1471 = vadd.f32 0.0, %v1470
      %v1472 = vpop.f32.mrb[0].mxu0
      %1473 = vmatprep.mubr.f32.mxu0 0.0
      %1474 = vmatmul.mubr.f32.gmra.mrb[0].mxu0 %v582
      %v1475 = vpop.f32.mrb[0].mxu0
      %v1476 = vadd.f32 0.0, %v1475
      %v1477 = vpop.f32.mrb[0].mxu0
      %1478 = vmatprep.mubr.f32.mxu0 0.0
      %1479 = vmatmul.mubr.f32.gmra.mrb[0].mxu0 %v584
      %v1480 = vpop.f32.mrb[0].mxu0
      %v1481 = vadd.f32 0.0, %v1480
      %v1482 = vpop.f32.mrb[0].mxu0
      %1483 = vmatprep.mubr.f32.mxu0 0.0
      %1484 = vmatmul.mubr.f32.gmra.mrb[0].mxu0 %v1382
      %v1485 = vpop.f32.mrb[0].mxu0
      %v1486 = vadd.f32 0.0, %v1485
      %v1487 = vpop.f32.mrb[0].mxu0
      %1488 = vdwg.mxu0
      %v1489 = vadd.f32 %v1368, %v1451
      %v1490 = vadd.f32 %v1369, %v1456
      %v1491 = vadd.f32 %v1370, %v1461
      %v1492 = vadd.f32 %v1371, %v1466
      %v1493 = vadd.f32 %v1372, %v1471
      %v1494 = vadd.f32 %v1373, %v1476
      %v1495 = vadd.f32 %v1374, %v1481
      %v1496 = vadd.f32 %v1375, %v1486
      %v1497 = vld [vmem:[%s2] sm:$0x1]
      %v1499 = vlaneseq
      %v1500 = vshrl.u32 %v1499, 7
      %v1501 = vsub.s32 0, %v1500
      %v1502 = vrot.slane %v1497, %v1501
      %v1504 = vadd.f32 %v1489, %v1502
      %v1505 = vadd.f32 %v1490, %v1502
      %v1506 = vadd.f32 %v1491, %v1502
      %v1507 = vadd.f32 %v1492, %v1502
      %v1508 = vadd.f32 %v1493, %v1502
      %v1509 = vadd.f32 %v1494, %v1502
      %v1510 = vadd.f32 %v1495, %v1502
      %v1511 = vadd.f32 %v1496, %v1502
      %v1512 = vmax.f32 %v1504, 0.0
      %v1513 = vmax.f32 %v1505, 0.0
      %v1514 = vmax.f32 %v1506, 0.0
      %v1515 = vmax.f32 %v1507, 0.0
      %v1516 = vmax.f32 %v1508, 0.0
      %v1517 = vmax.f32 %v1509, 0.0
      %v1518 = vmax.f32 %v1510, 0.0
      %v1519 = vmax.f32 %v1511, 0.0
      %v1520 = vpack.c.bf16 %v1513, %v1512
      %v1521 = vpack.c.bf16 %v1515, %v1514
      %v1522 = vpack.c.bf16 %v1517, %v1516
      %v1523 = vpack.c.bf16 %v1519, %v1518
      %v1528 = vunpack.c.l.b16 %v1520
      %v1529 = vunpack.c.h.b16 %v1520
      %v1530 = vunpack.c.l.b16 %v1521
      %v1531 = vunpack.c.h.b16 %v1521
      %v1532 = vunpack.c.l.b16 %v1522
      %v1533 = vunpack.c.h.b16 %v1522
      %v1534 = vunpack.c.l.b16 %v1523
      %v1535 = vunpack.c.h.b16 %v1523
      %v1536 = vpack.c.b16 %v1528, %v1528
      %v1537 = vpack.c.b16 %v1529, %v1529
      %v1538 = vpack.c.b16 %v1530, %v1530
      %v1539 = vpack.c.b16 %v1531, %v1531
      %v1540 = vpack.c.b16 %v1532, %v1532
      %v1541 = vpack.c.b16 %v1533, %v1533
      %v1542 = vpack.c.b16 %v1534, %v1534
      %v1543 = vpack.c.b16 %v1535, %v1535
      %vm1552 = vcmask 125952
      %1553 = vst.msk [vmem:[%s170] sm:$0xf] %vm1552, %v1536
      %1554 = vst.msk [vmem:[%s170 + $0x4] sm:$0xf] %vm1552, %v1537
      %1555 = vst.msk [vmem:[%s170 + $0x8] sm:$0xf] %vm1552, %v1538
      %1556 = vst.msk [vmem:[%s170 + $0xc] sm:$0xf] %vm1552, %v1539
      %1557 = vst.msk [vmem:[%s170 + $0x10] sm:$0xf] %vm1552, %v1540
      %1558 = vst.msk [vmem:[%s170 + $0x14] sm:$0xf] %vm1552, %v1541
      %1559 = vst.msk [vmem:[%s170 + $0x18] sm:$0xf] %vm1552, %v1542
      %1560 = vst.msk [vmem:[%s170 + $0x1c] sm:$0xf] %vm1552, %v1543
      %p1561 = scmp.lt.s32.totalorder %s14, 3
      %s1562 = scalar_select %p1561, %s14, 3
      %s1563 = smul.addr %s1562, 8
      %s1564 = smul.addr %s1563, 4
      %s1565 = scalar_lea.vmem %s3, %s1564
      // Predicated region
      $region33: #{seg_net_forward.8} parent=31 // pred_check
        %p1566 = pneg %p100
      $region34: #{seg_net_forward.8} parent=31 // pred_check_branch
        %1568 = sbr.rel (%p1566) target = $region36
      $region35: #{seg_net_forward.8} parent=31 // pred_region
        _
      $region36: #{seg_net_forward.8} parent=31 // pred_fallthru
        _
    $region32: #{seg_net_forward.8} parent=5 // pred_fallthru
      _
    %p1569 = scmp.le.s32.totalorder 2, %s9
    // Predicated region
    $region37: #{seg_net_forward.8} parent=5 // pred_check
      %p1570 = pneg %p1569
    $region38: #{seg_net_forward.8} parent=5 // pred_check_branch
      %1572 = sbr.rel (%p1570) target = $region40
    $region39: #{seg_net_forward.8} parent=5 // pred_region
      %s1573 = ssub.s32 %s9, 2
      // Predicated region
      $region41: #{seg_net_forward.8} parent=39 // pred_check
        %p1574 = pneg %p106
      $region42: #{seg_net_forward.8} parent=39 // pred_check_branch
        %1576 = sbr.rel (%p1574) target = $region44
      $region43: #{seg_net_forward.8} parent=39 // pred_region
        %p1577 = scmp.lt.s32.totalorder %s15, 3
        %s1578 = scalar_select %p1577, %s15, 3
        %s1579 = smul.addr %s1578, 8
        %s1580 = smul.addr %s1579, 4
        %s1581 = scalar_lea.vmem %s3, %s1580
      $region44: #{seg_net_forward.8} parent=39 // pred_fallthru
        _
    $region40: #{seg_net_forward.8} parent=5 // pred_fallthru
      _
  $region6: #{seg_net_forward.8} parent=0 // loop_footer
    %s13 = sadd.s32 1, %s9
  $region7: #{seg_net_forward.8} parent=0 // loop_footer_branch
    %8 = sbr.rel target = $region3
  $region8: #{seg_net_forward.8} parent=0 // loop_exit
    _

// kernel: seg_net_forward.7
$region0: #{seg_net_forward.7}
  #allocation0 [shape = 'u32[]', space=smem, size = 0x4, offset = 0x4, fixed_abs, tag = 'smem constant byte address 0x4 - core index']
  #allocation1 [shape = 'u32[144,128]{1,0:T(1,128)}', space=vmem, size = 0x12000, scoped, tag = 'internal scratch']
  %s0 = inlined_call_operand.vmem [shape: bf16[4,1,18,18,3], index: 0, kind: input, shape index: {}]
  %s1 = inlined_call_operand.vmem [shape: f32[9,3,8], index: 1, kind: input, shape index: {}]
  %s2 = inlined_call_operand.vmem [shape: f32[1,8], index: 2, kind: input, shape index: {}]
  %s3 = inlined_call_operand.vmem [shape: bf16[4,256,8], index: 3, kind: output, shape index: {}]
  %s4 = sld [smem:[#allocation0]]
  $region45: #{seg_net_forward.7} parent=0
    _
  %s6 = ssub.s32 1, %s4
  %s7 = scalar_select 0, %s6, %s4
  loop: start=0, step=1, limit=6
  $region2: #{seg_net_forward.7} parent=0 // loop_pre_header
    _
  $region3: #{seg_net_forward.7} parent=0 // loop_header
    %s9 = sphi 0, %s13
    %p10 = scmp.ge.s32.totalorder %s9, 6
    %s19 = sphi 0, %s21
    %s22 = sphi 0, %s19
    %s23 = sphi 0, %s22
    %s39 = sphi 0, %s23
    %s43 = sphi 0, %s43
    %s45 = sphi 0, %s43
    %s46 = sphi 0, %s45
    %s60 = sphi 0, %s46
    %s64 = sphi 0, %s64
    %s66 = sphi 0, %s64
    %s67 = sphi 0, %s66
    %s81 = sphi 0, %s67
    %s87 = sphi 0, %s89
    %s90 = sphi 0, %s87
    %s91 = sphi 0, %s90
    %s107 = sphi 0, %s91
  $region4: #{seg_net_forward.7} parent=0 // loop_header_branch
    %12 = sbr.rel (%p10) target = $region8
  $region5: #{seg_net_forward.7} parent=0 // loop_body
    %s14 = ssub.s32 %s9, 1
    %s15 = ssub.s32 %s9, 2
    %s16 = sadd.s32 %s9, 1
    %s17 = ssub.s32 %s9, %s16
    %p18 = scmp.eq.s32.totalorder %s17, 0
    %s20 = sadd.s32 %s19, 1
    %s21 = scalar_select %p18, %s19, %s20
    %p24 = pneg %p18
    %p25 = scmp.eq.s32.totalorder %s9, 3
    %p26 = por %p24, %p25
    %p27 = scmp.ne.s32.totalorder %s19, %s22
    %p28 = scmp.eq.s32.totalorder %s9, 0
    %p29 = por %p27, %p28
    %p30 = scmp.ne.s32.totalorder %s19, %s22
    %p31 = scmp.eq.s32.totalorder %s14, 3
    %p32 = por %p30, %p31
    %p33 = scmp.ne.s32.totalorder %s22, %s23
    %p34 = scmp.eq.s32.totalorder %s14, 0
    %p35 = por %p33, %p34
    %p36 = scmp.ne.s32.totalorder %s22, %s23
    %p37 = scmp.eq.s32.totalorder %s15, 3
    %p38 = por %p36, %p37
    %p40 = scmp.ne.s32.totalorder %s23, %s39
    %p41 = scmp.eq.s32.totalorder %s15, 0
    %p42 = por %p40, %p41
    %s44 = sadd.s32 %s43, 1
    %p47 = scmp.eq.s32.totalorder %s9, 3
    %p48 = scmp.ne.s32.totalorder %s43, %s45
    %p49 = scmp.eq.s32.totalorder %s9, 0
    %p50 = por %p48, %p49
    %p51 = scmp.ne.s32.totalorder %s43, %s45
    %p52 = scmp.eq.s32.totalorder %s14, 3
    %p53 = por %p51, %p52
    %p54 = scmp.ne.s32.totalorder %s45, %s46
    %p55 = scmp.eq.s32.totalorder %s14, 0
    %p56 = por %p54, %p55
    %p57 = scmp.ne.s32.totalorder %s45, %s46
    %p58 = scmp.eq.s32.totalorder %s15, 3
    %p59 = por %p57, %p58
    %p61 = scmp.ne.s32.totalorder %s46, %s60
    %p62 = scmp.eq.s32.totalorder %s15, 0
    %p63 = por %p61, %p62
    %s65 = sadd.s32 %s64, 1
    %p68 = scmp.eq.s32.totalorder %s9, 3
    %p69 = scmp.ne.s32.totalorder %s64, %s66
    %p70 = scmp.eq.s32.totalorder %s9, 0
    %p71 = por %p69, %p70
    %p72 = scmp.ne.s32.totalorder %s64, %s66
    %p73 = scmp.eq.s32.totalorder %s14, 3
    %p74 = por %p72, %p73
    %p75 = scmp.ne.s32.totalorder %s66, %s67
    %p76 = scmp.eq.s32.totalorder %s14, 0
    %p77 = por %p75, %p76
    %p78 = scmp.ne.s32.totalorder %s66, %s67
    %p79 = scmp.eq.s32.totalorder %s15, 3
    %p80 = por %p78, %p79
    %p82 = scmp.ne.s32.totalorder %s67, %s81
    %p83 = scmp.eq.s32.totalorder %s15, 0
    %p84 = por %p82, %p83
    %s85 = ssub.s32 %s9, %s16
    %p86 = scmp.eq.s32.totalorder %s85, 0
    %s88 = sadd.s32 %s87, 1
    %s89 = scalar_select %p86, %s87, %s88
    %p92 = pneg %p86
    %p93 = scmp.eq.s32.totalorder %s9, 3
    %p94 = por %p92, %p93
    %p95 = scmp.ne.s32.totalorder %s87, %s90
    %p96 = scmp.eq.s32.totalorder %s9, 0
    %p97 = por %p95, %p96
    %p98 = scmp.ne.s32.totalorder %s87, %s90
    %p99 = scmp.eq.s32.totalorder %s14, 3
    %p100 = por %p98, %p99
    %p101 = scmp.ne.s32.totalorder %s90, %s91
    %p102 = scmp.eq.s32.totalorder %s14, 0
    %p103 = por %p101, %p102
    %p104 = scmp.ne.s32.totalorder %s90, %s91
    %p105 = scmp.eq.s32.totalorder %s15, 3
    %p106 = por %p104, %p105
    %p108 = scmp.ne.s32.totalorder %s91, %s107
    %p109 = scmp.eq.s32.totalorder %s15, 0
    %p110 = por %p108, %p109
    %p111 = scmp.le.s32.totalorder 1, %s9
    %p112 = scmp.lt.s32.totalorder %s9, 5
    %p113 = pnand %p111, %p112
    %p114 = pneg %p113
    // Predicated region
    $region9: #{seg_net_forward.7} parent=5 // pred_check
      _
    $region10: #{seg_net_forward.7} parent=5 // pred_check_branch
      %116 = sbr.rel (%p113) target = $region12
    $region11: #{seg_net_forward.7} parent=5 // pred_region
      %s117 = ssub.s32 %s9, 1
      // Predicated region
      $region13: #{seg_net_forward.7} parent=11 // pred_check
        %p118 = pneg %p56
      $region14: #{seg_net_forward.7} parent=11 // pred_check_branch
        %120 = sbr.rel (%p118) target = $region16
      $region15: #{seg_net_forward.7} parent=11 // pred_region
        _
      $region16: #{seg_net_forward.7} parent=11 // pred_fallthru
        _
      // Predicated region
      $region17: #{seg_net_forward.7} parent=11 // pred_check
        %p121 = pneg %p77
      $region18: #{seg_net_forward.7} parent=11 // pred_check_branch
        %123 = sbr.rel (%p121) target = $region20
      $region19: #{seg_net_forward.7} parent=11 // pred_region
        _
      $region20: #{seg_net_forward.7} parent=11 // pred_fallthru
        _
    $region12: #{seg_net_forward.7} parent=5 // pred_fallthru
      _
    %p124 = scmp.lt.s32.totalorder %s9, 4
    // Predicated region
    $region21: #{seg_net_forward.7} parent=5 // pred_check
      %p125 = pneg %p124
    $region22: #{seg_net_forward.7} parent=5 // pred_check_branch
      %127 = sbr.rel (%p125) target = $region24
    $region23: #{seg_net_forward.7} parent=5 // pred_region
      // Predicated region
      $region25: #{seg_net_forward.7} parent=23 // pred_check
        %p128 = pneg %p29
      $region26: #{seg_net_forward.7} parent=23 // pred_check_branch
        %130 = sbr.rel (%p128) target = $region28
      $region27: #{seg_net_forward.7} parent=23 // pred_region
        %p131 = scmp.lt.s32.totalorder %s9, 3
        %s132 = scalar_select %p131, %s9, 3
        %s133 = smul.addr %s132, 54
        %s134 = smul.addr %s133, 4
        %s135 = scalar_lea.vmem %s0, %s134
      $region28: #{seg_net_forward.7} parent=23 // pred_fallthru
        _
    $region24: #{seg_net_forward.7} parent=5 // pred_fallthru
      _
    %p136 = scmp.le.s32.totalorder 1, %s9
    %p137 = scmp.lt.s32.totalorder %s9, 5
    %p138 = pnand %p136, %p137
    %p139 = pneg %p138
    // Predicated region
    $region29: #{seg_net_forward.7} parent=5 // pred_check
      _
    $region30: #{seg_net_forward.7} parent=5 // pred_check_branch
      %141 = sbr.rel (%p138) target = $region32
    $region31: #{seg_net_forward.7} parent=5 // pred_region
      %s142 = ssub.s32 %s9, 1
      %p143 = scmp.lt.s32.totalorder %s14, 3
      %s144 = scalar_select %p143, %s14, 3
      %s145 = smul.addr %s144, 54
      %s146 = smul.addr %s145, 4
      %s147 = scalar_lea.vmem %s0, %s146
      %p148 = pneg %p35
      %p149 = pneg %p32
      %p150 = pneg %p56
      %p151 = pneg %p53
      %p152 = pneg %p77
      %p153 = pneg %p74
      %p154 = pneg %p103
      %p155 = pneg %p100
      %p156 = scmp.lt.s32.totalorder %s14, 3
      %s157 = scalar_select %p156, %s14, 3
      %s158 = smul.addr %s157, 32
      %s159 = smul.addr %s158, 4
      %s160 = scalar_lea.vmem %s3, %s159
      %p161 = scmp.lt.s32.totalorder %s14, 3
      %s162 = scalar_select %p161, %s14, 3
      %s163 = smul.addr %s162, 54
      %s164 = smul.addr %s163, 4
      %s165 = scalar_lea.vmem %s0, %s164
      %p166 = scmp.lt.s32.totalorder %s14, 3
      %s167 = scalar_select %p166, %s14, 3
      %s168 = smul.addr %s167, 32
      %s169 = smul.addr %s168, 4
      %s170 = scalar_lea.vmem %s3, %s169
      %v171 = vld [vmem:[%s165] sm:$0xf]
      %v172 = vld [vmem:[%s165 + $0x4] sm:$0xf]
      %v173 = vld [vmem:[%s165 + $0x8] sm:$0x1]
      %v174 = vld [vmem:[%s165 + $0xc] sm:$0xf]
      %v175 = vld [vmem:[%s165 + $0x10] sm:$0xf]
      %v176 = vld [vmem:[%s165 + $0x14] sm:$0x1]
      %v177 = vld [vmem:[%s165 + $0x18] sm:$0xf]
      %v178 = vld [vmem:[%s165 + $0x1c] sm:$0xf]
      %v179 = vld [vmem:[%s165 + $0x20] sm:$0x1]
      %v180 = vld [vmem:[%s165 + $0x24] sm:$0xf]
      %v181 = vld [vmem:[%s165 + $0x28] sm:$0xf]
      %v182 = vld [vmem:[%s165 + $0x2c] sm:$0x1]
      %v183 = vld [vmem:[%s165 + $0x30] sm:$0xf]
      %v184 = vld [vmem:[%s165 + $0x34] sm:$0xf]
      %v185 = vld [vmem:[%s165 + $0x38] sm:$0x1]
      %v186 = vld [vmem:[%s165 + $0x3c] sm:$0xf]
      %v187 = vld [vmem:[%s165 + $0x40] sm:$0xf]
      %v188 = vld [vmem:[%s165 + $0x44] sm:$0x1]
      %v189 = vld [vmem:[%s165 + $0x48] sm:$0xf]
      %v190 = vld [vmem:[%s165 + $0x4c] sm:$0xf]
      %v191 = vld [vmem:[%s165 + $0x50] sm:$0x1]
      %v192 = vld [vmem:[%s165 + $0x54] sm:$0xf]
      %v193 = vld [vmem:[%s165 + $0x58] sm:$0xf]
      %v194 = vld [vmem:[%s165 + $0x5c] sm:$0x1]
      %v195 = vld [vmem:[%s165 + $0x60] sm:$0xf]
      %v196 = vld [vmem:[%s165 + $0x64] sm:$0xf]
      %v197 = vld [vmem:[%s165 + $0x68] sm:$0x1]
      %v198 = vld [vmem:[%s165 + $0x6c] sm:$0xf]
      %v199 = vld [vmem:[%s165 + $0x70] sm:$0xf]
      %v200 = vld [vmem:[%s165 + $0x74] sm:$0x1]
      %v201 = vld [vmem:[%s165 + $0x78] sm:$0xf]
      %v202 = vld [vmem:[%s165 + $0x7c] sm:$0xf]
      %v203 = vld [vmem:[%s165 + $0x80] sm:$0x1]
      %v204 = vld [vmem:[%s165 + $0x84] sm:$0xf]
      %v205 = vld [vmem:[%s165 + $0x88] sm:$0xf]
      %v206 = vld [vmem:[%s165 + $0x8c] sm:$0x1]
      %v207 = vld [vmem:[%s165 + $0x90] sm:$0xf]
      %v208 = vld [vmem:[%s165 + $0x94] sm:$0xf]
      %v209 = vld [vmem:[%s165 + $0x98] sm:$0x1]
      %v210 = vld [vmem:[%s165 + $0x9c] sm:$0xf]
      %v211 = vld [vmem:[%s165 + $0xa0] sm:$0xf]
      %v212 = vld [vmem:[%s165 + $0xa4] sm:$0x1]
      %v213 = vld [vmem:[%s165 + $0xa8] sm:$0xf]
      %v214 = vld [vmem:[%s165 + $0xac] sm:$0xf]
      %v215 = vld [vmem:[%s165 + $0xb0] sm:$0x1]
      %v216 = vld [vmem:[%s165 + $0xb4] sm:$0xf]
      %v217 = vld [vmem:[%s165 + $0xb8] sm:$0xf]
      %v218 = vld [vmem:[%s165 + $0xbc] sm:$0x1]
      %v219 = vld [vmem:[%s165 + $0xc0] sm:$0xf]
      %v220 = vld [vmem:[%s165 + $0xc4] sm:$0xf]
      %v221 = vld [vmem:[%s165 + $0xc8] sm:$0x1]
      %v222 = vld [vmem:[%s165 + $0xcc] sm:$0xf]
      %v223 = vld [vmem:[%s165 + $0xd0] sm:$0xf]
      %v224 = vld [vmem:[%s165 + $0xd4] sm:$0x1]
      %v225 = vunpack.c.l.bf16 %v171
      %v226 = vunpack.c.l.bf16 %v172
      %v227 = vunpack.c.l.bf16 %v173
      %v228 = vunpack.c.l.bf16 %v174
      %v229 = vunpack.c.l.bf16 %v175
      %v230 = vunpack.c.l.bf16 %v176
      %v231 = vunpack.c.l.bf16 %v177
      %v232 = vunpack.c.l.bf16 %v178
      %v233 = vunpack.c.l.bf16 %v179
      %v234 = vunpack.c.l.bf16 %v180
      %v235 = vunpack.c.l.bf16 %v181
      %v236 = vunpack.c.l.bf16 %v182
      %v237 = vunpack.c.l.bf16 %v183
      %v238 = vunpack.c.l.bf16 %v184
      %v239 = vunpack.c.l.bf16 %v185
      %v240 = vunpack.c.l.bf16 %v186
      %v241 = vunpack.c.l.bf16 %v187
      %v242 = vunpack.c.l.bf16 %v188
      %v243 = vunpack.c.l.bf16 %v189
      %v244 = vunpack.c.l.bf16 %v190
      %v245 = vunpack.c.l.bf16 %v191
      %v246 = vunpack.c.l.bf16 %v192
      %v247 = vunpack.c.l.bf16 %v193
      %v248 = vunpack.c.l.bf16 %v194
      %v249 = vunpack.c.l.bf16 %v195
      %v250 = vunpack.c.l.bf16 %v196
      %v251 = vunpack.c.l.bf16 %v197
      %v252 = vunpack.c.l.bf16 %v198
      %v253 = vunpack.c.l.bf16 %v199
      %v254 = vunpack.c.l.bf16 %v200
      %v255 = vunpack.c.l.bf16 %v201
      %v256 = vunpack.c.l.bf16 %v202
      %v257 = vunpack.c.l.bf16 %v203
      %v258 = vunpack.c.l.bf16 %v204
      %v259 = vunpack.c.l.bf16 %v205
      %v260 = vunpack.c.l.bf16 %v206
      %v261 = vunpack.c.l.bf16 %v207
      %v262 = vunpack.c.l.bf16 %v208
      %v263 = vunpack.c.l.bf16 %v209
      %v264 = vunpack.c.l.bf16 %v210
      %v265 = vunpack.c.l.bf16 %v211
      %v266 = vunpack.c.l.bf16 %v212
      %v267 = vunpack.c.l.bf16 %v213
      %v268 = vunpack.c.l.bf16 %v214
      %v269 = vunpack.c.l.bf16 %v215
      %v270 = vunpack.c.l.bf16 %v216
      %v271 = vunpack.c.l.bf16 %v217
      %v272 = vunpack.c.l.bf16 %v218
      %v273 = vunpack.c.l.bf16 %v219
      %v274 = vunpack.c.l.bf16 %v220
      %v275 = vunpack.c.l.bf16 %v221
      %v276 = vunpack.c.l.bf16 %v222
      %v277 = vunpack.c.l.bf16 %v223
      %v278 = vunpack.c.l.bf16 %v224
      %v279 = vld [vmem:[%s1] sm:$0x7]
      %vm328 = vcmask 1046528
      %v329 = vrot.slane %v225, 1
      %v330 = vrot.slane %v226, 1
      %v331 = vsel %vm328, %v329, %v330
      %v332 = vrot.slane %v227, 1
      %v333 = vsel %vm328, %v330, %v332
      %v334 = vrot.slane %v228, 1
      %v335 = vrot.slane %v229, 1
      %v336 = vsel %vm328, %v334, %v335
      %v337 = vrot.slane %v230, 1
      %v338 = vsel %vm328, %v335, %v337
      %v339 = vrot.slane %v231, 1
      %v340 = vrot.slane %v232, 1
      %v341 = vsel %vm328, %v339, %v340
      %v342 = vrot.slane %v233, 1
      %v343 = vsel %vm328, %v340, %v342
      %v344 = vrot.slane %v234, 1
      %v345 = vrot.slane %v235, 1
      %v346 = vsel %vm328, %v344, %v345
      %v347 = vrot.slane %v236, 1
      %v348 = vsel %vm328, %v345, %v347
      %v349 = vrot.slane %v237, 1
      %v350 = vrot.slane %v238, 1
      %v351 = vsel %vm328, %v349, %v350
      %v352 = vrot.slane %v239, 1
      %v353 = vsel %vm328, %v350, %v352
      %v354 = vrot.slane %v240, 1
      %v355 = vrot.slane %v241, 1
      %v356 = vsel %vm328, %v354, %v355
      %v357 = vrot.slane %v242, 1
      %v358 = vsel %vm328, %v355, %v357
      %v359 = vrot.slane %v243, 1
      %v360 = vrot.slane %v244, 1
      %v361 = vsel %vm328, %v359, %v360
      %v362 = vrot.slane %v245, 1
      %v363 = vsel %vm328, %v360, %v362
      %v364 = vrot.slane %v246, 1
      %v365 = vrot.slane %v247, 1
      %v366 = vsel %vm328, %v364, %v365
      %v367 = vrot.slane %v248, 1
      %v368 = vsel %vm328, %v365, %v367
      %v369 = vrot.slane %v249, 1
      %v370 = vrot.slane %v250, 1
      %v371 = vsel %vm328, %v369, %v370
      %v372 = vrot.slane %v251, 1
      %v373 = vsel %vm328, %v370, %v372
      %v374 = vrot.slane %v252, 1
      %v375 = vrot.slane %v253, 1
      %v376 = vsel %vm328, %v374, %v375
      %v377 = vrot.slane %v254, 1
      %v378 = vsel %vm328, %v375, %v377
      %v379 = vrot.slane %v255, 1
      %v380 = vrot.slane %v256, 1
      %v381 = vsel %vm328, %v379, %v380
      %v382 = vrot.slane %v257, 1
      %v383 = vsel %vm328, %v380, %v382
      %v384 = vrot.slane %v258, 1
      %v385 = vrot.slane %v259, 1
      %v386 = vsel %vm328, %v384, %v385
      %v387 = vrot.slane %v260, 1
      %v388 = vsel %vm328, %v385, %v387
      %v389 = vrot.slane %v261, 1
      %v390 = vrot.slane %v262, 1
      %v391 = vsel %vm328, %v389, %v390
      %v392 = vrot.slane %v263, 1
      %v393 = vsel %vm328, %v390, %v392
      %v394 = vrot.slane %v264, 1
      %v395 = vrot.slane %v265, 1
      %v396 = vsel %vm328, %v394, %v395
      %v397 = vrot.slane %v266, 1
      %v398 = vsel %vm328, %v395, %v397
      %v399 = vrot.slane %v267, 1
      %v400 = vrot.slane %v268, 1
      %v401 = vsel %vm328, %v399, %v400
      %v402 = vrot.slane %v269, 1
      %v403 = vsel %vm328, %v400, %v402
      %v404 = vrot.slane %v270, 1
      %v405 = vrot.slane %v271, 1
      %v406 = vsel %vm328, %v404, %v405
      %v407 = vrot.slane %v272, 1
      %v408 = vsel %vm328, %v405, %v407
      %s409 = scalar_lea.vmem %s1, 4
      %v410 = vld [vmem:[%s409] sm:$0x7]
      %vm411 = vcmask 23552
      %v412 = vsel %vm411, %v331, 0
      %v414 = vsel %vm411, %v333, 0
      %v416 = vsel %vm411, %v336, 0
      %v418 = vsel %vm411, %v338, 0
      %v420 = vsel %vm411, %v341, 0
      %v422 = vsel %vm411, %v343, 0
      %v424 = vsel %vm411, %v346, 0
      %v426 = vsel %vm411, %v348, 0
      %v428 = vsel %vm411, %v351, 0
      %v430 = vsel %vm411, %v353, 0
      %v432 = vsel %vm411, %v356, 0
      %v434 = vsel %vm411, %v358, 0
      %v436 = vsel %vm411, %v361, 0
      %v438 = vsel %vm411, %v363, 0
      %v440 = vsel %vm411, %v366, 0
      %v442 = vsel %vm411, %v368, 0
      %v444 = vsel %vm411, %v371, 0
      %v446 = vsel %vm411, %v373, 0
      %v448 = vsel %vm411, %v376, 0
      %v450 = vsel %vm411, %v378, 0
      %v452 = vsel %vm411, %v381, 0
      %v454 = vsel %vm411, %v383, 0
      %v456 = vsel %vm411, %v386, 0
      %v458 = vsel %vm411, %v388, 0
      %v460 = vsel %vm411, %v391, 0
      %v462 = vsel %vm411, %v393, 0
      %v464 = vsel %vm411, %v396, 0
      %v466 = vsel %vm411, %v398, 0
      %v468 = vsel %vm411, %v401, 0
      %v470 = vsel %vm411, %v403, 0
      %v472 = vsel %vm411, %v406, 0
      %v474 = vsel %vm411, %v408, 0
      %vm476 = vcmask 1042432
      %v478 = vsel %vm476, %v410, 0
      %480 = vmatprep.subr.mxu0 0.0
      %481 = vmatpush1.msra.mxu0 %v478
      %482 = vmatprep.subr.mxu0 0.0
      %483 = vmatpush1.msra.mxu0 0.0
      %484 = vmatprep.subr.mxu0 0.0
      %485 = vmatpush1.msra.mxu0 0.0
      %486 = vmatprep.subr.mxu0 0.0
      %487 = vmatpush1.msra.mxu0 0.0
      %488 = vmatprep.subr.mxu0 0.0
      %489 = vmatpush1.msra.mxu0 0.0
      %490 = vmatprep.subr.mxu0 0.0
      %491 = vmatpush1.msra.mxu0 0.0
      %492 = vmatprep.subr.mxu0 0.0
      %493 = vmatpush1.msra.mxu0 0.0
      %494 = vmatprep.subr.mxu0 0.0
      %495 = vmatpush1.msra.mxu0 0.0
      %496 = vmatprep.subr.mxu0 0.0
      %497 = vmatpush1.msra.mxu0 0.0
      %498 = vmatprep.subr.mxu0 0.0
      %499 = vmatpush1.msra.mxu0 0.0
      %500 = vmatprep.subr.mxu0 0.0
      %501 = vmatpush1.msra.mxu0 0.0
      %502 = vmatprep.subr.mxu0 0.0
      %503 = vmatpush1.msra.mxu0 0.0
      %504 = vmatprep.subr.mxu0 0.0
      %505 = vmatpush1.msra.mxu0 0.0
      %506 = vmatprep.subr.mxu0 0.0
      %507 = vmatpush1.msra.mxu0 0.0
      %508 = vmatprep.subr.mxu0 0.0
      %509 = vmatpush1.msra.mxu0 0.0
      %510 = vmatprep.subr.mxu0 0.0
      %511 = vmatpush1.msra.mxu0 0.0
      %512 = vmatprep.subr.mxu0 0.0
      %513 = vmatpush1.msra.mxu0 0.0
      %514 = vmatprep.subr.mxu0 0.0
      %515 = vmatpush1.msra.mxu0 0.0
      %516 = vmatprep.subr.mxu0 0.0
      %517 = vmatpush1.msra.mxu0 0.0
      %518 = vmatprep.subr.mxu0 0.0
      %519 = vmatpush1.msra.mxu0 0.0
      %520 = vmatprep.subr.mxu0 0.0
      %521 = vmatpush1.msra.mxu0 0.0
      %522 = vmatprep.subr.mxu0 0.0
      %523 = vmatpush1.msra.mxu0 0.0
      %524 = vmatprep.subr.mxu0 0.0
      %525 = vmatpush1.msra.mxu0 0.0
      %526 = vmatprep.subr.mxu0 0.0
      %527 = vmatpush1.msra.mxu0 0.0
      %528 = vmatprep.subr.mxu0 0.0
      %529 = vmatpush1.msra.mxu0 0.0
      %530 = vmatprep.subr.mxu0 0.0
      %531 = vmatpush1.msra.mxu0 0.0
      %532 = vmatprep.subr.mxu0 0.0
      %533 = vmatpush1.msra.mxu0 0.0
      %534 = vmatprep.subr.mxu0 0.0
      %535 = vmatpush1.msra.mxu0 0.0
      %536 = vmatprep.subr.mxu0 0.0
      %537 = vmatpush1.msra.mxu0 0.0
      %538 = vmatprep.subr.mxu0 0.0
      %539 = vmatpush1.msra.mxu0 0.0
      %540 = vmatprep.subr.mxu0 0.0
      %541 = vmatpush1.msra.mxu0 0.0
      %542 = vmatprep.subr.mxu0 0.0
      %543 = vmatpush1.msra.mxu0 0.0
      %544 = vmatprep.mubr.f32.mxu0 0.0
      %545 = vmatmul.mubr.f32.gmra.mrb[0].mxu0 %v412
      %v546 = vpop.f32.mrb[0].mxu0
      %v547 = vadd.f32 0.0, %v546
      %v548 = vpop.f32.mrb[0].mxu0
      %549 = vmatprep.mubr.f32.mxu0 0.0
      %550 = vmatmul.mubr.f32.gmra.mrb[0].mxu0 %v414
      %v551 = vpop.f32.mrb[0].mxu0
      %v552 = vadd.f32 0.0, %v551
      %v553 = vpop.f32.mrb[0].mxu0
      %554 = vmatprep.mubr.f32.mxu0 0.0
      %555 = vmatmul.mubr.f32.gmra.mrb[0].mxu0 %v416
      %v556 = vpop.f32.mrb[0].mxu0
      %v557 = vadd.f32 0.0, %v556
      %v558 = vpop.f32.mrb[0].mxu0
      %559 = vmatprep.mubr.f32.mxu0 0.0
      %560 = vmatmul.mubr.f32.gmra.mrb[0].mxu0 %v418
      %v561 = vpop.f32.mrb[0].mxu0
      %v562 = vadd.f32 0.0, %v561
      %v563 = vpop.f32.mrb[0].mxu0
      %564 = vmatprep.mubr.f32.mxu0 0.0
      %565 = vmatmul.mubr.f32.gmra.mrb[0].mxu0 %v420
      %v566 = vpop.f32.mrb[0].mxu0
      %v567 = vadd.f32 0.0, %v566
      %v568 = vpop.f32.mrb[0].mxu0
      %569 = vmatprep.mubr.f32.mxu0 0.0
      %570 = vmatmul.mubr.f32.gmra.mrb[0].mxu0 %v422
      %v571 = vpop.f32.mrb[0].mxu0
      %v572 = vadd.f32 0.0, %v571
      %v573 = vpop.f32.mrb[0].mxu0
      %574 = vmatprep.mubr.f32.mxu0 0.0
      %575 = vmatmul.mubr.f32.gmra.mrb[0].mxu0 %v424
      %v576 = vpop.f32.mrb[0].mxu0
      %v577 = vadd.f32 0.0, %v576
      %v578 = vpop.f32.mrb[0].mxu0
      %579 = vmatprep.mubr.f32.mxu0 0.0
      %580 = vmatmul.mubr.f32.gmra.mrb[0].mxu0 %v426
      %v581 = vpop.f32.mrb[0].mxu0
      %v582 = vadd.f32 0.0, %v581
      %v583 = vpop.f32.mrb[0].mxu0
      %584 = vmatprep.mubr.f32.mxu0 0.0
      %585 = vmatmul.mubr.f32.gmra.mrb[0].mxu0 %v428
      %v586 = vpop.f32.mrb[0].mxu0
      %v587 = vadd.f32 0.0, %v586
      %v588 = vpop.f32.mrb[0].mxu0
      %589 = vmatprep.mubr.f32.mxu0 0.0
      %590 = vmatmul.mubr.f32.gmra.mrb[0].mxu0 %v430
      %v591 = vpop.f32.mrb[0].mxu0
      %v592 = vadd.f32 0.0, %v591
      %v593 = vpop.f32.mrb[0].mxu0
      %594 = vmatprep.mubr.f32.mxu0 0.0
      %595 = vmatmul.mubr.f32.gmra.mrb[0].mxu0 %v432
      %v596 = vpop.f32.mrb[0].mxu0
      %v597 = vadd.f32 0.0, %v596
      %v598 = vpop.f32.mrb[0].mxu0
      %599 = vmatprep.mubr.f32.mxu0 0.0
      %600 = vmatmul.mubr.f32.gmra.mrb[0].mxu0 %v434
      %v601 = vpop.f32.mrb[0].mxu0
      %v602 = vadd.f32 0.0, %v601
      %v603 = vpop.f32.mrb[0].mxu0
      %604 = vmatprep.mubr.f32.mxu0 0.0
      %605 = vmatmul.mubr.f32.gmra.mrb[0].mxu0 %v436
      %v606 = vpop.f32.mrb[0].mxu0
      %v607 = vadd.f32 0.0, %v606
      %v608 = vpop.f32.mrb[0].mxu0
      %609 = vmatprep.mubr.f32.mxu0 0.0
      %610 = vmatmul.mubr.f32.gmra.mrb[0].mxu0 %v438
      %v611 = vpop.f32.mrb[0].mxu0
      %v612 = vadd.f32 0.0, %v611
      %v613 = vpop.f32.mrb[0].mxu0
      %614 = vmatprep.mubr.f32.mxu0 0.0
      %615 = vmatmul.mubr.f32.gmra.mrb[0].mxu0 %v440
      %v616 = vpop.f32.mrb[0].mxu0
      %v617 = vadd.f32 0.0, %v616
      %v618 = vpop.f32.mrb[0].mxu0
      %619 = vmatprep.mubr.f32.mxu0 0.0
      %620 = vmatmul.mubr.f32.gmra.mrb[0].mxu0 %v442
      %v621 = vpop.f32.mrb[0].mxu0
      %v622 = vadd.f32 0.0, %v621
      %v623 = vpop.f32.mrb[0].mxu0
      %624 = vmatprep.mubr.f32.mxu0 0.0
      %625 = vmatmul.mubr.f32.gmra.mrb[0].mxu0 %v444
      %v626 = vpop.f32.mrb[0].mxu0
      %v627 = vadd.f32 0.0, %v626
      %v628 = vpop.f32.mrb[0].mxu0
      %629 = vmatprep.mubr.f32.mxu0 0.0
      %630 = vmatmul.mubr.f32.gmra.mrb[0].mxu0 %v446
      %v631 = vpop.f32.mrb[0].mxu0
      %v632 = vadd.f32 0.0, %v631
      %v633 = vpop.f32.mrb[0].mxu0
      %634 = vmatprep.mubr.f32.mxu0 0.0
      %635 = vmatmul.mubr.f32.gmra.mrb[0].mxu0 %v448
      %v636 = vpop.f32.mrb[0].mxu0
      %v637 = vadd.f32 0.0, %v636
      %v638 = vpop.f32.mrb[0].mxu0
      %639 = vmatprep.mubr.f32.mxu0 0.0
      %640 = vmatmul.mubr.f32.gmra.mrb[0].mxu0 %v450
      %v641 = vpop.f32.mrb[0].mxu0
      %v642 = vadd.f32 0.0, %v641
      %v643 = vpop.f32.mrb[0].mxu0
      %644 = vmatprep.mubr.f32.mxu0 0.0
      %645 = vmatmul.mubr.f32.gmra.mrb[0].mxu0 %v452
      %v646 = vpop.f32.mrb[0].mxu0
      %v647 = vadd.f32 0.0, %v646
      %v648 = vpop.f32.mrb[0].mxu0
      %649 = vmatprep.mubr.f32.mxu0 0.0
      %650 = vmatmul.mubr.f32.gmra.mrb[0].mxu0 %v454
      %v651 = vpop.f32.mrb[0].mxu0
      %v652 = vadd.f32 0.0, %v651
      %v653 = vpop.f32.mrb[0].mxu0
      %654 = vmatprep.mubr.f32.mxu0 0.0
      %655 = vmatmul.mubr.f32.gmra.mrb[0].mxu0 %v456
      %v656 = vpop.f32.mrb[0].mxu0
      %v657 = vadd.f32 0.0, %v656
      %v658 = vpop.f32.mrb[0].mxu0
      %659 = vmatprep.mubr.f32.mxu0 0.0
      %660 = vmatmul.mubr.f32.gmra.mrb[0].mxu0 %v458
      %v661 = vpop.f32.mrb[0].mxu0
      %v662 = vadd.f32 0.0, %v661
      %v663 = vpop.f32.mrb[0].mxu0
      %664 = vmatprep.mubr.f32.mxu0 0.0
      %665 = vmatmul.mubr.f32.gmra.mrb[0].mxu0 %v460
      %v666 = vpop.f32.mrb[0].mxu0
      %v667 = vadd.f32 0.0, %v666
      %v668 = vpop.f32.mrb[0].mxu0
      %669 = vmatprep.mubr.f32.mxu0 0.0
      %670 = vmatmul.mubr.f32.gmra.mrb[0].mxu0 %v462
      %v671 = vpop.f32.mrb[0].mxu0
      %v672 = vadd.f32 0.0, %v671
      %v673 = vpop.f32.mrb[0].mxu0
      %674 = vmatprep.mubr.f32.mxu0 0.0
      %675 = vmatmul.mubr.f32.gmra.mrb[0].mxu0 %v464
      %v676 = vpop.f32.mrb[0].mxu0
      %v677 = vadd.f32 0.0, %v676
      %v678 = vpop.f32.mrb[0].mxu0
      %679 = vmatprep.mubr.f32.mxu0 0.0
      %680 = vmatmul.mubr.f32.gmra.mrb[0].mxu0 %v466
      %v681 = vpop.f32.mrb[0].mxu0
      %v682 = vadd.f32 0.0, %v681
      %v683 = vpop.f32.mrb[0].mxu0
      %684 = vmatprep.mubr.f32.mxu0 0.0
      %685 = vmatmul.mubr.f32.gmra.mrb[0].mxu0 %v468
      %v686 = vpop.f32.mrb[0].mxu0
      %v687 = vadd.f32 0.0, %v686
      %v688 = vpop.f32.mrb[0].mxu0
      %689 = vmatprep.mubr.f32.mxu0 0.0
      %690 = vmatmul.mubr.f32.gmra.mrb[0].mxu0 %v470
      %v691 = vpop.f32.mrb[0].mxu0
      %v692 = vadd.f32 0.0, %v691
      %v693 = vpop.f32.mrb[0].mxu0
      %694 = vmatprep.mubr.f32.mxu0 0.0
      %695 = vmatmul.mubr.f32.gmra.mrb[0].mxu0 %v472
      %v696 = vpop.f32.mrb[0].mxu0
      %v697 = vadd.f32 0.0, %v696
      %v698 = vpop.f32.mrb[0].mxu0
      %699 = vmatprep.mubr.f32.mxu0 0.0
      %700 = vmatmul.mubr.f32.gmra.mrb[0].mxu0 %v474
      %v701 = vpop.f32.mrb[0].mxu0
      %v702 = vadd.f32 0.0, %v701
      %v703 = vpop.f32.mrb[0].mxu0
      %704 = vdwg.mxu0
      %v705 = vsel %vm411, %v225, 0
      %v707 = vsel %vm411, %v226, 0
      %v709 = vsel %vm411, %v228, 0
      %v711 = vsel %vm411, %v229, 0
      %v713 = vsel %vm411, %v231, 0
      %v715 = vsel %vm411, %v232, 0
      %v717 = vsel %vm411, %v234, 0
      %v719 = vsel %vm411, %v235, 0
      %v721 = vsel %vm411, %v237, 0
      %v723 = vsel %vm411, %v238, 0
      %v725 = vsel %vm411, %v240, 0
      %v727 = vsel %vm411, %v241, 0
      %v729 = vsel %vm411, %v243, 0
      %v731 = vsel %vm411, %v244, 0
      %v733 = vsel %vm411, %v246, 0
      %v735 = vsel %vm411, %v247, 0
      %v737 = vsel %vm411, %v249, 0
      %v739 = vsel %vm411, %v250, 0
      %v741 = vsel %vm411, %v252, 0
      %v743 = vsel %vm411, %v253, 0
      %v745 = vsel %vm411, %v255, 0
      %v747 = vsel %vm411, %v256, 0
      %v749 = vsel %vm411, %v258, 0
      %v751 = vsel %vm411, %v259, 0
      %v753 = vsel %vm411, %v261, 0
      %v755 = vsel %vm411, %v262, 0
      %v757 = vsel %vm411, %v264, 0
      %v759 = vsel %vm411, %v265, 0
      %v761 = vsel %vm411, %v267, 0
      %v763 = vsel %vm411, %v268, 0
      %v765 = vsel %vm411, %v270, 0
      %v767 = vsel %vm411, %v271, 0
      %v770 = vsel %vm476, %v279, 0
      %772 = vmatprep.subr.mxu0 0.0
      %773 = vmatpush1.msra.mxu0 %v770
      %774 = vmatprep.subr.mxu0 0.0
      %775 = vmatpush1.msra.mxu0 0.0
      %776 = vmatprep.subr.mxu0 0.0
      %777 = vmatpush1.msra.mxu0 0.0
      %778 = vmatprep.subr.mxu0 0.0
      %779 = vmatpush1.msra.mxu0 0.0
      %780 = vmatprep.subr.mxu0 0.0
      %781 = vmatpush1.msra.mxu0 0.0
      %782 = vmatprep.subr.mxu0 0.0
      %783 = vmatpush1.msra.mxu0 0.0
      %784 = vmatprep.subr.mxu0 0.0
      %785 = vmatpush1.msra.mxu0 0.0
      %786 = vmatprep.subr.mxu0 0.0
      %787 = vmatpush1.msra.mxu0 0.0
      %788 = vmatprep.subr.mxu0 0.0
      %789 = vmatpush1.msra.mxu0 0.0
      %790 = vmatprep.subr.mxu0 0.0
      %791 = vmatpush1.msra.mxu0 0.0
      %792 = vmatprep.subr.mxu0 0.0
      %793 = vmatpush1.msra.mxu0 0.0
      %794 = vmatprep.subr.mxu0 0.0
      %795 = vmatpush1.msra.mxu0 0.0
      %796 = vmatprep.subr.mxu0 0.0
      %797 = vmatpush1.msra.mxu0 0.0
      %798 = vmatprep.subr.mxu0 0.0
      %799 = vmatpush1.msra.mxu0 0.0
      %800 = vmatprep.subr.mxu0 0.0
      %801 = vmatpush1.msra.mxu0 0.0
      %802 = vmatprep.subr.mxu0 0.0
      %803 = vmatpush1.msra.mxu0 0.0
      %804 = vmatprep.subr.mxu0 0.0
      %805 = vmatpush1.msra.mxu0 0.0
      %806 = vmatprep.subr.mxu0 0.0
      %807 = vmatpush1.msra.mxu0 0.0
      %808 = vmatprep.subr.mxu0 0.0
      %809 = vmatpush1.msra.mxu0 0.0
      %810 = vmatprep.subr.mxu0 0.0
      %811 = vmatpush1.msra.mxu0 0.0
      %812 = vmatprep.subr.mxu0 0.0
      %813 = vmatpush1.msra.mxu0 0.0
      %814 = vmatprep.subr.mxu0 0.0
      %815 = vmatpush1.msra.mxu0 0.0
      %816 = vmatprep.subr.mxu0 0.0
      %817 = vmatpush1.msra.mxu0 0.0
      %818 = vmatprep.subr.mxu0 0.0
      %819 = vmatpush1.msra.mxu0 0.0
      %820 = vmatprep.subr.mxu0 0.0
      %821 = vmatpush1.msra.mxu0 0.0
      %822 = vmatprep.subr.mxu0 0.0
      %823 = vmatpush1.msra.mxu0 0.0
      %824 = vmatprep.subr.mxu0 0.0
      %825 = vmatpush1.msra.mxu0 0.0
      %826 = vmatprep.subr.mxu0 0.0
      %827 = vmatpush1.msra.mxu0 0.0
      %828 = vmatprep.subr.mxu0 0.0
      %829 = vmatpush1.msra.mxu0 0.0
      %830 = vmatprep.subr.mxu0 0.0
      %831 = vmatpush1.msra.mxu0 0.0
      %832 = vmatprep.subr.mxu0 0.0
      %833 = vmatpush1.msra.mxu0 0.0
      %834 = vmatprep.subr.mxu0 0.0
      %835 = vmatpush1.msra.mxu0 0.0
      %836 = vmatprep.mubr.f32.mxu0 0.0
      %837 = vmatmul.mubr.f32.gmra.mrb[0].mxu0 %v705
      %v838 = vpop.f32.mrb[0].mxu0
      %v839 = vadd.f32 %v547, %v838
      %v840 = vpop.f32.mrb[0].mxu0
      %841 = vmatprep.mubr.f32.mxu0 0.0
      %842 = vmatmul.mubr.f32.gmra.mrb[0].mxu0 %v707
      %v843 = vpop.f32.mrb[0].mxu0
      %v844 = vadd.f32 %v552, %v843
      %v845 = vpop.f32.mrb[0].mxu0
      %846 = vmatprep.mubr.f32.mxu0 0.0
      %847 = vmatmul.mubr.f32.gmra.mrb[0].mxu0 %v709
      %v848 = vpop.f32.mrb[0].mxu0
      %v849 = vadd.f32 %v557, %v848
      %v850 = vpop.f32.mrb[0].mxu0
      %851 = vmatprep.mubr.f32.mxu0 0.0
      %852 = vmatmul.mubr.f32.gmra.mrb[0].mxu0 %v711
      %v853 = vpop.f32.mrb[0].mxu0
      %v854 = vadd.f32 %v562, %v853
      %v855 = vpop.f32.mrb[0].mxu0
      %856 = vmatprep.mubr.f32.mxu0 0.0
      %857 = vmatmul.mubr.f32.gmra.mrb[0].mxu0 %v713
      %v858 = vpop.f32.mrb[0].mxu0
      %v859 = vadd.f32 %v567, %v858
      %v860 = vpop.f32.mrb[0].mxu0
      %861 = vmatprep.mubr.f32.mxu0 0.0
      %862 = vmatmul.mubr.f32.gmra.mrb[0].mxu0 %v715
      %v863 = vpop.f32.mrb[0].mxu0
      %v864 = vadd.f32 %v572, %v863
      %v865 = vpop.f32.mrb[0].mxu0
      %866 = vmatprep.mubr.f32.mxu0 0.0
      %867 = vmatmul.mubr.f32.gmra.mrb[0].mxu0 %v717
      %v868 = vpop.f32.mrb[0].mxu0
      %v869 = vadd.f32 %v577, %v868
      %v870 = vpop.f32.mrb[0].mxu0
      %871 = vmatprep.mubr.f32.mxu0 0.0
      %872 = vmatmul.mubr.f32.gmra.mrb[0].mxu0 %v719
      %v873 = vpop.f32.mrb[0].mxu0
      %v874 = vadd.f32 %v582, %v873
      %v875 = vpop.f32.mrb[0].mxu0
      %876 = vmatprep.mubr.f32.mxu0 0.0
      %877 = vmatmul.mubr.f32.gmra.mrb[0].mxu0 %v721
      %v878 = vpop.f32.mrb[0].mxu0
      %v879 = vadd.f32 %v587, %v878
      %v880 = vpop.f32.mrb[0].mxu0
      %881 = vmatprep.mubr.f32.mxu0 0.0
      %882 = vmatmul.mubr.f32.gmra.mrb[0].mxu0 %v723
      %v883 = vpop.f32.mrb[0].mxu0
      %v884 = vadd.f32 %v592, %v883
      %v885 = vpop.f32.mrb[0].mxu0
      %886 = vmatprep.mubr.f32.mxu0 0.0
      %887 = vmatmul.mubr.f32.gmra.mrb[0].mxu0 %v725
      %v888 = vpop.f32.mrb[0].mxu0
      %v889 = vadd.f32 %v597, %v888
      %v890 = vpop.f32.mrb[0].mxu0
      %891 = vmatprep.mubr.f32.mxu0 0.0
      %892 = vmatmul.mubr.f32.gmra.mrb[0].mxu0 %v727
      %v893 = vpop.f32.mrb[0].mxu0
      %v894 = vadd.f32 %v602, %v893
      %v895 = vpop.f32.mrb[0].mxu0
      %896 = vmatprep.mubr.f32.mxu0 0.0
      %897 = vmatmul.mubr.f32.gmra.mrb[0].mxu0 %v729
      %v898 = vpop.f32.mrb[0].mxu0
      %v899 = vadd.f32 %v607, %v898
      %v900 = vpop.f32.mrb[0].mxu0
      %901 = vmatprep.mubr.f32.mxu0 0.0
      %902 = vmatmul.mubr.f32.gmra.mrb[0].mxu0 %v731
      %v903 = vpop.f32.mrb[0].mxu0
      %v904 = vadd.f32 %v612, %v903
      %v905 = vpop.f32.mrb[0].mxu0
      %906 = vmatprep.mubr.f32.mxu0 0.0
      %907 = vmatmul.mubr.f32.gmra.mrb[0].mxu0 %v733
      %v908 = vpop.f32.mrb[0].mxu0
      %v909 = vadd.f32 %v617, %v908
      %v910 = vpop.f32.mrb[0].mxu0
      %911 = vmatprep.mubr.f32.mxu0 0.0
      %912 = vmatmul.mubr.f32.gmra.mrb[0].mxu0 %v735
      %v913 = vpop.f32.mrb[0].mxu0
      %v914 = vadd.f32 %v622, %v913
      %v915 = vpop.f32.mrb[0].mxu0
      %916 = vmatprep.mubr.f32.mxu0 0.0
      %917 = vmatmul.mubr.f32.gmra.mrb[0].mxu0 %v737
      %v918 = vpop.f32.mrb[0].mxu0
      %v919 = vadd.f32 %v627, %v918
      %v920 = vpop.f32.mrb[0].mxu0
      %921 = vmatprep.mubr.f32.mxu0 0.0
      %922 = vmatmul.mubr.f32.gmra.mrb[0].mxu0 %v739
      %v923 = vpop.f32.mrb[0].mxu0
      %v924 = vadd.f32 %v632, %v923
      %v925 = vpop.f32.mrb[0].mxu0
      %926 = vmatprep.mubr.f32.mxu0 0.0
      %927 = vmatmul.mubr.f32.gmra.mrb[0].mxu0 %v741
      %v928 = vpop.f32.mrb[0].mxu0
      %v929 = vadd.f32 %v637, %v928
      %v930 = vpop.f32.mrb[0].mxu0
      %931 = vmatprep.mubr.f32.mxu0 0.0
      %932 = vmatmul.mubr.f32.gmra.mrb[0].mxu0 %v743
      %v933 = vpop.f32.mrb[0].mxu0
      %v934 = vadd.f32 %v642, %v933
      %v935 = vpop.f32.mrb[0].mxu0
      %936 = vmatprep.mubr.f32.mxu0 0.0
      %937 = vmatmul.mubr.f32.gmra.mrb[0].mxu0 %v745
      %v938 = vpop.f32.mrb[0].mxu0
      %v939 = vadd.f32 %v647, %v938
      %v940 = vpop.f32.mrb[0].mxu0
      %941 = vmatprep.mubr.f32.mxu0 0.0
      %942 = vmatmul.mubr.f32.gmra.mrb[0].mxu0 %v747
      %v943 = vpop.f32.mrb[0].mxu0
      %v944 = vadd.f32 %v652, %v943
      %v945 = vpop.f32.mrb[0].mxu0
      %946 = vmatprep.mubr.f32.mxu0 0.0
      %947 = vmatmul.mubr.f32.gmra.mrb[0].mxu0 %v749
      %v948 = vpop.f32.mrb[0].mxu0
      %v949 = vadd.f32 %v657, %v948
      %v950 = vpop.f32.mrb[0].mxu0
      %951 = vmatprep.mubr.f32.mxu0 0.0
      %952 = vmatmul.mubr.f32.gmra.mrb[0].mxu0 %v751
      %v953 = vpop.f32.mrb[0].mxu0
      %v954 = vadd.f32 %v662, %v953
      %v955 = vpop.f32.mrb[0].mxu0
      %956 = vmatprep.mubr.f32.mxu0 0.0
      %957 = vmatmul.mubr.f32.gmra.mrb[0].mxu0 %v753
      %v958 = vpop.f32.mrb[0].mxu0
      %v959 = vadd.f32 %v667, %v958
      %v960 = vpop.f32.mrb[0].mxu0
      %961 = vmatprep.mubr.f32.mxu0 0.0
      %962 = vmatmul.mubr.f32.gmra.mrb[0].mxu0 %v755
      %v963 = vpop.f32.mrb[0].mxu0
      %v964 = vadd.f32 %v672, %v963
      %v965 = vpop.f32.mrb[0].mxu0
      %966 = vmatprep.mubr.f32.mxu0 0.0
      %967 = vmatmul.mubr.f32.gmra.mrb[0].mxu0 %v757
      %v968 = vpop.f32.mrb[0].mxu0
      %v969 = vadd.f32 %v677, %v968
      %v970 = vpop.f32.mrb[0].mxu0
      %971 = vmatprep.mubr.f32.mxu0 0.0
      %972 = vmatmul.mubr.f32.gmra.mrb[0].mxu0 %v759
      %v973 = vpop.f32.mrb[0].mxu0
      %v974 = vadd.f32 %v682, %v973
      %v975 = vpop.f32.mrb[0].mxu0
      %976 = vmatprep.mubr.f32.mxu0 0.0
      %977 = vmatmul.mubr.f32.gmra.mrb[0].mxu0 %v761
      %v978 = vpop.f32.mrb[0].mxu0
      %v979 = vadd.f32 %v687, %v978
      %v980 = vpop.f32.mrb[0].mxu0
      %981 = vmatprep.mubr.f32.mxu0 0.0
      %982 = vmatmul.mubr.f32.gmra.mrb[0].mxu0 %v763
      %v983 = vpop.f32.mrb[0].mxu0
      %v984 = vadd.f32 %v692, %v983
      %v985 = vpop.f32.mrb[0].mxu0
      %986 = vmatprep.mubr.f32.mxu0 0.0
      %987 = vmatmul.mubr.f32.gmra.mrb[0].mxu0 %v765
      %v988 = vpop.f32.mrb[0].mxu0
      %v989 = vadd.f32 %v697, %v988
      %v990 = vpop.f32.mrb[0].mxu0
      %991 = vmatprep.mubr.f32.mxu0 0.0
      %992 = vmatmul.mubr.f32.gmra.mrb[0].mxu0 %v767
      %v993 = vpop.f32.mrb[0].mxu0
      %v994 = vadd.f32 %v702, %v993
      %v995 = vpop.f32.mrb[0].mxu0
      %996 = vdwg.mxu0
      %vm997 = vcmask 1045504
      %v998 = vrot.slane %v225, 2
      %v999 = vrot.slane %v226, 2
      %v1000 = vsel %vm997, %v998, %v999
      %v1001 = vrot.slane %v227, 2
      %v1002 = vsel %vm997, %v999, %v1001
      %v1003 = vrot.slane %v228, 2
      %v1004 = vrot.slane %v229, 2
      %v1005 = vsel %vm997, %v1003, %v1004
      %v1006 = vrot.slane %v230, 2
      %v1007 = vsel %vm997, %v1004, %v1006
      %v1008 = vrot.slane %v231, 2
      %v1009 = vrot.slane %v232, 2
      %v1010 = vsel %vm997, %v1008, %v1009
      %v1011 = vrot.slane %v233, 2
      %v1012 = vsel %vm997, %v1009, %v1011
      %v1013 = vrot.slane %v234, 2
      %v1014 = vrot.slane %v235, 2
      %v1015 = vsel %vm997, %v1013, %v1014
      %v1016 = vrot.slane %v236, 2
      %v1017 = vsel %vm997, %v1014, %v1016
      %v1018 = vrot.slane %v237, 2
      %v1019 = vrot.slane %v238, 2
      %v1020 = vsel %vm997, %v1018, %v1019
      %v1021 = vrot.slane %v239, 2
      %v1022 = vsel %vm997, %v1019, %v1021
      %v1023 = vrot.slane %v240, 2
      %v1024 = vrot.slane %v241, 2
      %v1025 = vsel %vm997, %v1023, %v1024
      %v1026 = vrot.slane %v242, 2
      %v1027 = vsel %vm997, %v1024, %v1026
      %v1028 = vrot.slane %v243, 2
      %v1029 = vrot.slane %v244, 2
      %v1030 = vsel %vm997, %v1028, %v1029
      %v1031 = vrot.slane %v245, 2
      %v1032 = vsel %vm997, %v1029, %v1031
      %v1033 = vrot.slane %v246, 2
      %v1034 = vrot.slane %v247, 2
      %v1035 = vsel %vm997, %v1033, %v1034
      %v1036 = vrot.slane %v248, 2
      %v1037 = vsel %vm997, %v1034, %v1036
      %v1038 = vrot.slane %v249, 2
      %v1039 = vrot.slane %v250, 2
      %v1040 = vsel %vm997, %v1038, %v1039
      %v1041 = vrot.slane %v251, 2
      %v1042 = vsel %vm997, %v1039, %v1041
      %v1043 = vrot.slane %v252, 2
      %v1044 = vrot.slane %v253, 2
      %v1045 = vsel %vm997, %v1043, %v1044
      %v1046 = vrot.slane %v254, 2
      %v1047 = vsel %vm997, %v1044, %v1046
      %v1048 = vrot.slane %v255, 2
      %v1049 = vrot.slane %v256, 2
      %v1050 = vsel %vm997, %v1048, %v1049
      %v1051 = vrot.slane %v257, 2
      %v1052 = vsel %vm997, %v1049, %v1051
      %v1053 = vrot.slane %v258, 2
      %v1054 = vrot.slane %v259, 2
      %v1055 = vsel %vm997, %v1053, %v1054
      %v1056 = vrot.slane %v260, 2
      %v1057 = vsel %vm997, %v1054, %v1056
      %v1058 = vrot.slane %v261, 2
      %v1059 = vrot.slane %v262, 2
      %v1060 = vsel %vm997, %v1058, %v1059
      %v1061 = vrot.slane %v263, 2
      %v1062 = vsel %vm997, %v1059, %v1061
      %v1063 = vrot.slane %v264, 2
      %v1064 = vrot.slane %v265, 2
      %v1065 = vsel %vm997, %v1063, %v1064
      %v1066 = vrot.slane %v266, 2
      %v1067 = vsel %vm997, %v1064, %v1066
      %v1068 = vrot.slane %v267, 2
      %v1069 = vrot.slane %v268, 2
      %v1070 = vsel %vm997, %v1068, %v1069
      %v1071 = vrot.slane %v269, 2
      %v1072 = vsel %vm997, %v1069, %v1071
      %v1073 = vrot.slane %v270, 2
      %v1074 = vrot.slane %v271, 2
      %v1075 = vsel %vm997, %v1073, %v1074
      %v1076 = vrot.slane %v272, 2
      %v1077 = vsel %vm997, %v1074, %v1076
      %s1078 = scalar_lea.vmem %s1, 8
      %v1079 = vld [vmem:[%s1078] sm:$0x7]
      %v1080 = vsel %vm411, %v1000, 0
      %v1082 = vsel %vm411, %v1002, 0
      %v1084 = vsel %vm411, %v1005, 0
      %v1086 = vsel %vm411, %v1007, 0
      %v1088 = vsel %vm411, %v1010, 0
      %v1090 = vsel %vm411, %v1012, 0
      %v1092 = vsel %vm411, %v1015, 0
      %v1094 = vsel %vm411, %v1017, 0
      %v1096 = vsel %vm411, %v1020, 0
      %v1098 = vsel %vm411, %v1022, 0
      %v1100 = vsel %vm411, %v1025, 0
      %v1102 = vsel %vm411, %v1027, 0
      %v1104 = vsel %vm411, %v1030, 0
      %v1106 = vsel %vm411, %v1032, 0
      %v1108 = vsel %vm411, %v1035, 0
      %v1110 = vsel %vm411, %v1037, 0
      %v1112 = vsel %vm411, %v1040, 0
      %v1114 = vsel %vm411, %v1042, 0
      %v1116 = vsel %vm411, %v1045, 0
      %v1118 = vsel %vm411, %v1047, 0
      %v1120 = vsel %vm411, %v1050, 0
      %v1122 = vsel %vm411, %v1052, 0
      %v1124 = vsel %vm411, %v1055, 0
      %v1126 = vsel %vm411, %v1057, 0
      %v1128 = vsel %vm411, %v1060, 0
      %v1130 = vsel %vm411, %v1062, 0
      %v1132 = vsel %vm411, %v1065, 0
      %v1134 = vsel %vm411, %v1067, 0
      %v1136 = vsel %vm411, %v1070, 0
      %v1138 = vsel %vm411, %v1072, 0
      %v1140 = vsel %vm411, %v1075, 0
      %v1142 = vsel %vm411, %v1077, 0
      %v1145 = vsel %vm476, %v1079, 0
      %1147 = vmatprep.subr.mxu0 0.0
      %1148 = vmatpush1.msra.mxu0 %v1145
      %1149 = vmatprep.subr.mxu0 0.0
      %1150 = vmatpush1.msra.mxu0 0.0
      %1151 = vmatprep.subr.mxu0 0.0
      %1152 = vmatpush1.msra.mxu0 0.0
      %1153 = vmatprep.subr.mxu0 0.0
      %1154 = vmatpush1.msra.mxu0 0.0
      %1155 = vmatprep.subr.mxu0 0.0
      %1156 = vmatpush1.msra.mxu0 0.0
      %1157 = vmatprep.subr.mxu0 0.0
      %1158 = vmatpush1.msra.mxu0 0.0
      %1159 = vmatprep.subr.mxu0 0.0
      %1160 = vmatpush1.msra.mxu0 0.0
      %1161 = vmatprep.subr.mxu0 0.0
      %1162 = vmatpush1.msra.mxu0 0.0
      %1163 = vmatprep.subr.mxu0 0.0
      %1164 = vmatpush1.msra.mxu0 0.0
      %1165 = vmatprep.subr.mxu0 0.0
      %1166 = vmatpush1.msra.mxu0 0.0
      %1167 = vmatprep.subr.mxu0 0.0
      %1168 = vmatpush1.msra.mxu0 0.0
      %1169 = vmatprep.subr.mxu0 0.0
      %1170 = vmatpush1.msra.mxu0 0.0
      %1171 = vmatprep.subr.mxu0 0.0
      %1172 = vmatpush1.msra.mxu0 0.0
      %1173 = vmatprep.subr.mxu0 0.0
      %1174 = vmatpush1.msra.mxu0 0.0
      %1175 = vmatprep.subr.mxu0 0.0
      %1176 = vmatpush1.msra.mxu0 0.0
      %1177 = vmatprep.subr.mxu0 0.0
      %1178 = vmatpush1.msra.mxu0 0.0
      %1179 = vmatprep.subr.mxu0 0.0
      %1180 = vmatpush1.msra.mxu0 0.0
      %1181 = vmatprep.subr.mxu0 0.0
      %1182 = vmatpush1.msra.mxu0 0.0
      %1183 = vmatprep.subr.mxu0 0.0
      %1184 = vmatpush1.msra.mxu0 0.0
      %1185 = vmatprep.subr.mxu0 0.0
      %1186 = vmatpush1.msra.mxu0 0.0
      %1187 = vmatprep.subr.mxu0 0.0
      %1188 = vmatpush1.msra.mxu0 0.0
      %1189 = vmatprep.subr.mxu0 0.0
      %1190 = vmatpush1.msra.mxu0 0.0
      %1191 = vmatprep.subr.mxu0 0.0
      %1192 = vmatpush1.msra.mxu0 0.0
      %1193 = vmatprep.subr.mxu0 0.0
      %1194 = vmatpush1.msra.mxu0 0.0
      %1195 = vmatprep.subr.mxu0 0.0
      %1196 = vmatpush1.msra.mxu0 0.0
      %1197 = vmatprep.subr.mxu0 0.0
      %1198 = vmatpush1.msra.mxu0 0.0
      %1199 = vmatprep.subr.mxu0 0.0
      %1200 = vmatpush1.msra.mxu0 0.0
      %1201 = vmatprep.subr.mxu0 0.0
      %1202 = vmatpush1.msra.mxu0 0.0
      %1203 = vmatprep.subr.mxu0 0.0
      %1204 = vmatpush1.msra.mxu0 0.0
      %1205 = vmatprep.subr.mxu0 0.0
      %1206 = vmatpush1.msra.mxu0 0.0
      %1207 = vmatprep.subr.mxu0 0.0
      %1208 = vmatpush1.msra.mxu0 0.0
      %1209 = vmatprep.subr.mxu0 0.0
      %1210 = vmatpush1.msra.mxu0 0.0
      %1211 = vmatprep.mubr.f32.mxu0 0.0
      %1212 = vmatmul.mubr.f32.gmra.mrb[0].mxu0 %v1080
      %v1213 = vpop.f32.mrb[0].mxu0
      %v1214 = vadd.f32 0.0, %v1213
      %v1215 = vpop.f32.mrb[0].mxu0
      %1216 = vmatprep.mubr.f32.mxu0 0.0
      %1217 = vmatmul.mubr.f32.gmra.mrb[0].mxu0 %v1082
      %v1218 = vpop.f32.mrb[0].mxu0
      %v1219 = vadd.f32 0.0, %v1218
      %v1220 = vpop.f32.mrb[0].mxu0
      %1221 = vmatprep.mubr.f32.mxu0 0.0
      %1222 = vmatmul.mubr.f32.gmra.mrb[0].mxu0 %v1084
      %v1223 = vpop.f32.mrb[0].mxu0
      %v1224 = vadd.f32 0.0, %v1223
      %v1225 = vpop.f32.mrb[0].mxu0
      %1226 = vmatprep.mubr.f32.mxu0 0.0
      %1227 = vmatmul.mubr.f32.gmra.mrb[0].mxu0 %v1086
      %v1228 = vpop.f32.mrb[0].mxu0
      %v1229 = vadd.f32 0.0, %v1228
      %v1230 = vpop.f32.mrb[0].mxu0
      %1231 = vmatprep.mubr.f32.mxu0 0.0
      %1232 = vmatmul.mubr.f32.gmra.mrb[0].mxu0 %v1088
      %v1233 = vpop.f32.mrb[0].mxu0
      %v1234 = vadd.f32 0.0, %v1233
      %v1235 = vpop.f32.mrb[0].mxu0
      %1236 = vmatprep.mubr.f32.mxu0 0.0
      %1237 = vmatmul.mubr.f32.gmra.mrb[0].mxu0 %v1090
      %v1238 = vpop.f32.mrb[0].mxu0
      %v1239 = vadd.f32 0.0, %v1238
      %v1240 = vpop.f32.mrb[0].mxu0
      %1241 = vmatprep.mubr.f32.mxu0 0.0
      %1242 = vmatmul.mubr.f32.gmra.mrb[0].mxu0 %v1092
      %v1243 = vpop.f32.mrb[0].mxu0
      %v1244 = vadd.f32 0.0, %v1243
      %v1245 = vpop.f32.mrb[0].mxu0
      %1246 = vmatprep.mubr.f32.mxu0 0.0
      %1247 = vmatmul.mubr.f32.gmra.mrb[0].mxu0 %v1094
      %v1248 = vpop.f32.mrb[0].mxu0
      %v1249 = vadd.f32 0.0, %v1248
      %v1250 = vpop.f32.mrb[0].mxu0
      %1251 = vmatprep.mubr.f32.mxu0 0.0
      %1252 = vmatmul.mubr.f32.gmra.mrb[0].mxu0 %v1096
      %v1253 = vpop.f32.mrb[0].mxu0
      %v1254 = vadd.f32 0.0, %v1253
      %v1255 = vpop.f32.mrb[0].mxu0
      %1256 = vmatprep.mubr.f32.mxu0 0.0
      %1257 = vmatmul.mubr.f32.gmra.mrb[0].mxu0 %v1098
      %v1258 = vpop.f32.mrb[0].mxu0
      %v1259 = vadd.f32 0.0, %v1258
      %v1260 = vpop.f32.mrb[0].mxu0
      %1261 = vmatprep.mubr.f32.mxu0 0.0
      %1262 = vmatmul.mubr.f32.gmra.mrb[0].mxu0 %v1100
      %v1263 = vpop.f32.mrb[0].mxu0
      %v1264 = vadd.f32 0.0, %v1263
      %v1265 = vpop.f32.mrb[0].mxu0
      %1266 = vmatprep.mubr.f32.mxu0 0.0
      %1267 = vmatmul.mubr.f32.gmra.mrb[0].mxu0 %v1102
      %v1268 = vpop.f32.mrb[0].mxu0
      %v1269 = vadd.f32 0.0, %v1268
      %v1270 = vpop.f32.mrb[0].mxu0
      %1271 = vmatprep.mubr.f32.mxu0 0.0
      %1272 = vmatmul.mubr.f32.gmra.mrb[0].mxu0 %v1104
      %v1273 = vpop.f32.mrb[0].mxu0
      %v1274 = vadd.f32 0.0, %v1273
      %v1275 = vpop.f32.mrb[0].mxu0
      %1276 = vmatprep.mubr.f32.mxu0 0.0
      %1277 = vmatmul.mubr.f32.gmra.mrb[0].mxu0 %v1106
      %v1278 = vpop.f32.mrb[0].mxu0
      %v1279 = vadd.f32 0.0, %v1278
      %v1280 = vpop.f32.mrb[0].mxu0
      %1281 = vmatprep.mubr.f32.mxu0 0.0
      %1282 = vmatmul.mubr.f32.gmra.mrb[0].mxu0 %v1108
      %v1283 = vpop.f32.mrb[0].mxu0
      %v1284 = vadd.f32 0.0, %v1283
      %v1285 = vpop.f32.mrb[0].mxu0
      %1286 = vmatprep.mubr.f32.mxu0 0.0
      %1287 = vmatmul.mubr.f32.gmra.mrb[0].mxu0 %v1110
      %v1288 = vpop.f32.mrb[0].mxu0
      %v1289 = vadd.f32 0.0, %v1288
      %v1290 = vpop.f32.mrb[0].mxu0
      %1291 = vmatprep.mubr.f32.mxu0 0.0
      %1292 = vmatmul.mubr.f32.gmra.mrb[0].mxu0 %v1112
      %v1293 = vpop.f32.mrb[0].mxu0
      %v1294 = vadd.f32 0.0, %v1293
      %v1295 = vpop.f32.mrb[0].mxu0
      %1296 = vmatprep.mubr.f32.mxu0 0.0
      %1297 = vmatmul.mubr.f32.gmra.mrb[0].mxu0 %v1114
      %v1298 = vpop.f32.mrb[0].mxu0
      %v1299 = vadd.f32 0.0, %v1298
      %v1300 = vpop.f32.mrb[0].mxu0
      %1301 = vmatprep.mubr.f32.mxu0 0.0
      %1302 = vmatmul.mubr.f32.gmra.mrb[0].mxu0 %v1116
      %v1303 = vpop.f32.mrb[0].mxu0
      %v1304 = vadd.f32 0.0, %v1303
      %v1305 = vpop.f32.mrb[0].mxu0
      %1306 = vmatprep.mubr.f32.mxu0 0.0
      %1307 = vmatmul.mubr.f32.gmra.mrb[0].mxu0 %v1118
      %v1308 = vpop.f32.mrb[0].mxu0
      %v1309 = vadd.f32 0.0, %v1308
      %v1310 = vpop.f32.mrb[0].mxu0
      %1311 = vmatprep.mubr.f32.mxu0 0.0
      %1312 = vmatmul.mubr.f32.gmra.mrb[0].mxu0 %v1120
      %v1313 = vpop.f32.mrb[0].mxu0
      %v1314 = vadd.f32 0.0, %v1313
      %v1315 = vpop.f32.mrb[0].mxu0
      %1316 = vmatprep.mubr.f32.mxu0 0.0
      %1317 = vmatmul.mubr.f32.gmra.mrb[0].mxu0 %v1122
      %v1318 = vpop.f32.mrb[0].mxu0
      %v1319 = vadd.f32 0.0, %v1318
      %v1320 = vpop.f32.mrb[0].mxu0
      %1321 = vmatprep.mubr.f32.mxu0 0.0
      %1322 = vmatmul.mubr.f32.gmra.mrb[0].mxu0 %v1124
      %v1323 = vpop.f32.mrb[0].mxu0
      %v1324 = vadd.f32 0.0, %v1323
      %v1325 = vpop.f32.mrb[0].mxu0
      %1326 = vmatprep.mubr.f32.mxu0 0.0
      %1327 = vmatmul.mubr.f32.gmra.mrb[0].mxu0 %v1126
      %v1328 = vpop.f32.mrb[0].mxu0
      %v1329 = vadd.f32 0.0, %v1328
      %v1330 = vpop.f32.mrb[0].mxu0
      %1331 = vmatprep.mubr.f32.mxu0 0.0
      %1332 = vmatmul.mubr.f32.gmra.mrb[0].mxu0 %v1128
      %v1333 = vpop.f32.mrb[0].mxu0
      %v1334 = vadd.f32 0.0, %v1333
      %v1335 = vpop.f32.mrb[0].mxu0
      %1336 = vmatprep.mubr.f32.mxu0 0.0
      %1337 = vmatmul.mubr.f32.gmra.mrb[0].mxu0 %v1130
      %v1338 = vpop.f32.mrb[0].mxu0
      %v1339 = vadd.f32 0.0, %v1338
      %v1340 = vpop.f32.mrb[0].mxu0
      %1341 = vmatprep.mubr.f32.mxu0 0.0
      %1342 = vmatmul.mubr.f32.gmra.mrb[0].mxu0 %v1132
      %v1343 = vpop.f32.mrb[0].mxu0
      %v1344 = vadd.f32 0.0, %v1343
      %v1345 = vpop.f32.mrb[0].mxu0
      %1346 = vmatprep.mubr.f32.mxu0 0.0
      %1347 = vmatmul.mubr.f32.gmra.mrb[0].mxu0 %v1134
      %v1348 = vpop.f32.mrb[0].mxu0
      %v1349 = vadd.f32 0.0, %v1348
      %v1350 = vpop.f32.mrb[0].mxu0
      %1351 = vmatprep.mubr.f32.mxu0 0.0
      %1352 = vmatmul.mubr.f32.gmra.mrb[0].mxu0 %v1136
      %v1353 = vpop.f32.mrb[0].mxu0
      %v1354 = vadd.f32 0.0, %v1353
      %v1355 = vpop.f32.mrb[0].mxu0
      %1356 = vmatprep.mubr.f32.mxu0 0.0
      %1357 = vmatmul.mubr.f32.gmra.mrb[0].mxu0 %v1138
      %v1358 = vpop.f32.mrb[0].mxu0
      %v1359 = vadd.f32 0.0, %v1358
      %v1360 = vpop.f32.mrb[0].mxu0
      %1361 = vmatprep.mubr.f32.mxu0 0.0
      %1362 = vmatmul.mubr.f32.gmra.mrb[0].mxu0 %v1140
      %v1363 = vpop.f32.mrb[0].mxu0
      %v1364 = vadd.f32 0.0, %v1363
      %v1365 = vpop.f32.mrb[0].mxu0
      %1366 = vmatprep.mubr.f32.mxu0 0.0
      %1367 = vmatmul.mubr.f32.gmra.mrb[0].mxu0 %v1142
      %v1368 = vpop.f32.mrb[0].mxu0
      %v1369 = vadd.f32 0.0, %v1368
      %v1370 = vpop.f32.mrb[0].mxu0
      %1371 = vdwg.mxu0
      %v1372 = vadd.f32 %v839, %v1214
      %v1373 = vadd.f32 %v844, %v1219
      %v1374 = vadd.f32 %v849, %v1224
      %v1375 = vadd.f32 %v854, %v1229
      %v1376 = vadd.f32 %v859, %v1234
      %v1377 = vadd.f32 %v864, %v1239
      %v1378 = vadd.f32 %v869, %v1244
      %v1379 = vadd.f32 %v874, %v1249
      %v1380 = vadd.f32 %v879, %v1254
      %v1381 = vadd.f32 %v884, %v1259
      %v1382 = vadd.f32 %v889, %v1264
      %v1383 = vadd.f32 %v894, %v1269
      %v1384 = vadd.f32 %v899, %v1274
      %v1385 = vadd.f32 %v904, %v1279
      %v1386 = vadd.f32 %v909, %v1284
      %v1387 = vadd.f32 %v914, %v1289
      %v1388 = vadd.f32 %v919, %v1294
      %v1389 = vadd.f32 %v924, %v1299
      %v1390 = vadd.f32 %v929, %v1304
      %v1391 = vadd.f32 %v934, %v1309
      %v1392 = vadd.f32 %v939, %v1314
      %v1393 = vadd.f32 %v944, %v1319
      %v1394 = vadd.f32 %v949, %v1324
      %v1395 = vadd.f32 %v954, %v1329
      %v1396 = vadd.f32 %v959, %v1334
      %v1397 = vadd.f32 %v964, %v1339
      %v1398 = vadd.f32 %v969, %v1344
      %v1399 = vadd.f32 %v974, %v1349
      %v1400 = vadd.f32 %v979, %v1354
      %v1401 = vadd.f32 %v984, %v1359
      %v1402 = vadd.f32 %v989, %v1364
      %v1403 = vadd.f32 %v994, %v1369
      %s1404 = scalar_lea.vmem %s1, 12
      %v1405 = vld [vmem:[%s1404] sm:$0x7]
      %v1407 = vsel %vm411, %v273, 0
      %v1410 = vsel %vm411, %v274, 0
      %v1413 = vsel %vm476, %v1405, 0
      %1415 = vmatprep.subr.mxu0 0.0
      %1416 = vmatpush1.msra.mxu0 %v1413
      %1417 = vmatprep.subr.mxu0 0.0
      %1418 = vmatpush1.msra.mxu0 0.0
      %1419 = vmatprep.subr.mxu0 0.0
      %1420 = vmatpush1.msra.mxu0 0.0
      %1421 = vmatprep.subr.mxu0 0.0
      %1422 = vmatpush1.msra.mxu0 0.0
      %1423 = vmatprep.subr.mxu0 0.0
      %1424 = vmatpush1.msra.mxu0 0.0
      %1425 = vmatprep.subr.mxu0 0.0
      %1426 = vmatpush1.msra.mxu0 0.0
      %1427 = vmatprep.subr.mxu0 0.0
      %1428 = vmatpush1.msra.mxu0 0.0
      %1429 = vmatprep.subr.mxu0 0.0
      %1430 = vmatpush1.msra.mxu0 0.0
      %1431 = vmatprep.subr.mxu0 0.0
      %1432 = vmatpush1.msra.mxu0 0.0
      %1433 = vmatprep.subr.mxu0 0.0
      %1434 = vmatpush1.msra.mxu0 0.0
      %1435 = vmatprep.subr.mxu0 0.0
      %1436 = vmatpush1.msra.mxu0 0.0
      %1437 = vmatprep.subr.mxu0 0.0
      %1438 = vmatpush1.msra.mxu0 0.0
      %1439 = vmatprep.subr.mxu0 0.0
      %1440 = vmatpush1.msra.mxu0 0.0
      %1441 = vmatprep.subr.mxu0 0.0
      %1442 = vmatpush1.msra.mxu0 0.0
      %1443 = vmatprep.subr.mxu0 0.0
      %1444 = vmatpush1.msra.mxu0 0.0
      %1445 = vmatprep.subr.mxu0 0.0
      %1446 = vmatpush1.msra.mxu0 0.0
      %1447 = vmatprep.subr.mxu0 0.0
      %1448 = vmatpush1.msra.mxu0 0.0
      %1449 = vmatprep.subr.mxu0 0.0
      %1450 = vmatpush1.msra.mxu0 0.0
      %1451 = vmatprep.subr.mxu0 0.0
      %1452 = vmatpush1.msra.mxu0 0.0
      %1453 = vmatprep.subr.mxu0 0.0
      %1454 = vmatpush1.msra.mxu0 0.0
      %1455 = vmatprep.subr.mxu0 0.0
      %1456 = vmatpush1.msra.mxu0 0.0
      %1457 = vmatprep.subr.mxu0 0.0
      %1458 = vmatpush1.msra.mxu0 0.0
      %1459 = vmatprep.subr.mxu0 0.0
      %1460 = vmatpush1.msra.mxu0 0.0
      %1461 = vmatprep.subr.mxu0 0.0
      %1462 = vmatpush1.msra.mxu0 0.0
      %1463 = vmatprep.subr.mxu0 0.0
      %1464 = vmatpush1.msra.mxu0 0.0
      %1465 = vmatprep.subr.mxu0 0.0
      %1466 = vmatpush1.msra.mxu0 0.0
      %1467 = vmatprep.subr.mxu0 0.0
      %1468 = vmatpush1.msra.mxu0 0.0
      %1469 = vmatprep.subr.mxu0 0.0
      %1470 = vmatpush1.msra.mxu0 0.0
      %1471 = vmatprep.subr.mxu0 0.0
      %1472 = vmatpush1.msra.mxu0 0.0
      %1473 = vmatprep.subr.mxu0 0.0
      %1474 = vmatpush1.msra.mxu0 0.0
      %1475 = vmatprep.subr.mxu0 0.0
      %1476 = vmatpush1.msra.mxu0 0.0
      %1477 = vmatprep.subr.mxu0 0.0
      %1478 = vmatpush1.msra.mxu0 0.0
      %1479 = vmatprep.mubr.f32.mxu0 0.0
      %1480 = vmatmul.mubr.f32.gmra.mrb[0].mxu0 %v709
      %v1481 = vpop.f32.mrb[0].mxu0
      %v1482 = vadd.f32 0.0, %v1481
      %v1483 = vpop.f32.mrb[0].mxu0
      %1484 = vmatprep.mubr.f32.mxu0 0.0
      %1485 = vmatmul.mubr.f32.gmra.mrb[0].mxu0 %v711
      %v1486 = vpop.f32.mrb[0].mxu0
      %v1487 = vadd.f32 0.0, %v1486
      %v1488 = vpop.f32.mrb[0].mxu0
      %1489 = vmatprep.mubr.f32.mxu0 0.0
      %1490 = vmatmul.mubr.f32.gmra.mrb[0].mxu0 %v713
      %v1491 = vpop.f32.mrb[0].mxu0
      %v1492 = vadd.f32 0.0, %v1491
      %v1493 = vpop.f32.mrb[0].mxu0
      %1494 = vmatprep.mubr.f32.mxu0 0.0
      %1495 = vmatmul.mubr.f32.gmra.mrb[0].mxu0 %v715
      %v1496 = vpop.f32.mrb[0].mxu0
      %v1497 = vadd.f32 0.0, %v1496
      %v1498 = vpop.f32.mrb[0].mxu0
      %1499 = vmatprep.mubr.f32.mxu0 0.0
      %1500 = vmatmul.mubr.f32.gmra.mrb[0].mxu0 %v717
      %v1501 = vpop.f32.mrb[0].mxu0
      %v1502 = vadd.f32 0.0, %v1501
      %v1503 = vpop.f32.mrb[0].mxu0
      %1504 = vmatprep.mubr.f32.mxu0 0.0
      %1505 = vmatmul.mubr.f32.gmra.mrb[0].mxu0 %v719
      %v1506 = vpop.f32.mrb[0].mxu0
      %v1507 = vadd.f32 0.0, %v1506
      %v1508 = vpop.f32.mrb[0].mxu0
      %1509 = vmatprep.mubr.f32.mxu0 0.0
      %1510 = vmatmul.mubr.f32.gmra.mrb[0].mxu0 %v721
      %v1511 = vpop.f32.mrb[0].mxu0
      %v1512 = vadd.f32 0.0, %v1511
      %v1513 = vpop.f32.mrb[0].mxu0
      %1514 = vmatprep.mubr.f32.mxu0 0.0
      %1515 = vmatmul.mubr.f32.gmra.mrb[0].mxu0 %v723
      %v1516 = vpop.f32.mrb[0].mxu0
      %v1517 = vadd.f32 0.0, %v1516
      %v1518 = vpop.f32.mrb[0].mxu0
      %1519 = vmatprep.mubr.f32.mxu0 0.0
      %1520 = vmatmul.mubr.f32.gmra.mrb[0].mxu0 %v725
      %v1521 = vpop.f32.mrb[0].mxu0
      %v1522 = vadd.f32 0.0, %v1521
      %v1523 = vpop.f32.mrb[0].mxu0
      %1524 = vmatprep.mubr.f32.mxu0 0.0
      %1525 = vmatmul.mubr.f32.gmra.mrb[0].mxu0 %v727
      %v1526 = vpop.f32.mrb[0].mxu0
      %v1527 = vadd.f32 0.0, %v1526
      %v1528 = vpop.f32.mrb[0].mxu0
      %1529 = vmatprep.mubr.f32.mxu0 0.0
      %1530 = vmatmul.mubr.f32.gmra.mrb[0].mxu0 %v729
      %v1531 = vpop.f32.mrb[0].mxu0
      %v1532 = vadd.f32 0.0, %v1531
      %v1533 = vpop.f32.mrb[0].mxu0
      %1534 = vmatprep.mubr.f32.mxu0 0.0
      %1535 = vmatmul.mubr.f32.gmra.mrb[0].mxu0 %v731
      %v1536 = vpop.f32.mrb[0].mxu0
      %v1537 = vadd.f32 0.0, %v1536
      %v1538 = vpop.f32.mrb[0].mxu0
      %1539 = vmatprep.mubr.f32.mxu0 0.0
      %1540 = vmatmul.mubr.f32.gmra.mrb[0].mxu0 %v733
      %v1541 = vpop.f32.mrb[0].mxu0
      %v1542 = vadd.f32 0.0, %v1541
      %v1543 = vpop.f32.mrb[0].mxu0
      %1544 = vmatprep.mubr.f32.mxu0 0.0
      %1545 = vmatmul.mubr.f32.gmra.mrb[0].mxu0 %v735
      %v1546 = vpop.f32.mrb[0].mxu0
      %v1547 = vadd.f32 0.0, %v1546
      %v1548 = vpop.f32.mrb[0].mxu0
      %1549 = vmatprep.mubr.f32.mxu0 0.0
      %1550 = vmatmul.mubr.f32.gmra.mrb[0].mxu0 %v737
      %v1551 = vpop.f32.mrb[0].mxu0
      %v1552 = vadd.f32 0.0, %v1551
      %v1553 = vpop.f32.mrb[0].mxu0
      %1554 = vmatprep.mubr.f32.mxu0 0.0
      %1555 = vmatmul.mubr.f32.gmra.mrb[0].mxu0 %v739
      %v1556 = vpop.f32.mrb[0].mxu0
      %v1557 = vadd.f32 0.0, %v1556
      %v1558 = vpop.f32.mrb[0].mxu0
      %1559 = vmatprep.mubr.f32.mxu0 0.0
      %1560 = vmatmul.mubr.f32.gmra.mrb[0].mxu0 %v741
      %v1561 = vpop.f32.mrb[0].mxu0
      %v1562 = vadd.f32 0.0, %v1561
      %v1563 = vpop.f32.mrb[0].mxu0
      %1564 = vmatprep.mubr.f32.mxu0 0.0
      %1565 = vmatmul.mubr.f32.gmra.mrb[0].mxu0 %v743
      %v1566 = vpop.f32.mrb[0].mxu0
      %v1567 = vadd.f32 0.0, %v1566
      %v1568 = vpop.f32.mrb[0].mxu0
      %1569 = vmatprep.mubr.f32.mxu0 0.0
      %1570 = vmatmul.mubr.f32.gmra.mrb[0].mxu0 %v745
      %v1571 = vpop.f32.mrb[0].mxu0
      %v1572 = vadd.f32 0.0, %v1571
      %v1573 = vpop.f32.mrb[0].mxu0
      %1574 = vmatprep.mubr.f32.mxu0 0.0
      %1575 = vmatmul.mubr.f32.gmra.mrb[0].mxu0 %v747
      %v1576 = vpop.f32.mrb[0].mxu0
      %v1577 = vadd.f32 0.0, %v1576
      %v1578 = vpop.f32.mrb[0].mxu0
      %1579 = vmatprep.mubr.f32.mxu0 0.0
      %1580 = vmatmul.mubr.f32.gmra.mrb[0].mxu0 %v749
      %v1581 = vpop.f32.mrb[0].mxu0
      %v1582 = vadd.f32 0.0, %v1581
      %v1583 = vpop.f32.mrb[0].mxu0
      %1584 = vmatprep.mubr.f32.mxu0 0.0
      %1585 = vmatmul.mubr.f32.gmra.mrb[0].mxu0 %v751
      %v1586 = vpop.f32.mrb[0].mxu0
      %v1587 = vadd.f32 0.0, %v1586
      %v1588 = vpop.f32.mrb[0].mxu0
      %1589 = vmatprep.mubr.f32.mxu0 0.0
      %1590 = vmatmul.mubr.f32.gmra.mrb[0].mxu0 %v753
      %v1591 = vpop.f32.mrb[0].mxu0
      %v1592 = vadd.f32 0.0, %v1591
      %v1593 = vpop.f32.mrb[0].mxu0
      %1594 = vmatprep.mubr.f32.mxu0 0.0
      %1595 = vmatmul.mubr.f32.gmra.mrb[0].mxu0 %v755
      %v1596 = vpop.f32.mrb[0].mxu0
      %v1597 = vadd.f32 0.0, %v1596
      %v1598 = vpop.f32.mrb[0].mxu0
      %1599 = vmatprep.mubr.f32.mxu0 0.0
      %1600 = vmatmul.mubr.f32.gmra.mrb[0].mxu0 %v757
      %v1601 = vpop.f32.mrb[0].mxu0
      %v1602 = vadd.f32 0.0, %v1601
      %v1603 = vpop.f32.mrb[0].mxu0
      %1604 = vmatprep.mubr.f32.mxu0 0.0
      %1605 = vmatmul.mubr.f32.gmra.mrb[0].mxu0 %v759
      %v1606 = vpop.f32.mrb[0].mxu0
      %v1607 = vadd.f32 0.0, %v1606
      %v1608 = vpop.f32.mrb[0].mxu0
      %1609 = vmatprep.mubr.f32.mxu0 0.0
      %1610 = vmatmul.mubr.f32.gmra.mrb[0].mxu0 %v761
      %v1611 = vpop.f32.mrb[0].mxu0
      %v1612 = vadd.f32 0.0, %v1611
      %v1613 = vpop.f32.mrb[0].mxu0
      %1614 = vmatprep.mubr.f32.mxu0 0.0
      %1615 = vmatmul.mubr.f32.gmra.mrb[0].mxu0 %v763
      %v1616 = vpop.f32.mrb[0].mxu0
      %v1617 = vadd.f32 0.0, %v1616
      %v1618 = vpop.f32.mrb[0].mxu0
      %1619 = vmatprep.mubr.f32.mxu0 0.0
      %1620 = vmatmul.mubr.f32.gmra.mrb[0].mxu0 %v765
      %v1621 = vpop.f32.mrb[0].mxu0
      %v1622 = vadd.f32 0.0, %v1621
      %v1623 = vpop.f32.mrb[0].mxu0
      %1624 = vmatprep.mubr.f32.mxu0 0.0
      %1625 = vmatmul.mubr.f32.gmra.mrb[0].mxu0 %v767
      %v1626 = vpop.f32.mrb[0].mxu0
      %v1627 = vadd.f32 0.0, %v1626
      %v1628 = vpop.f32.mrb[0].mxu0
      %1629 = vmatprep.mubr.f32.mxu0 0.0
      %1630 = vmatmul.mubr.f32.gmra.mrb[0].mxu0 %v1407
      %v1631 = vpop.f32.mrb[0].mxu0
      %v1632 = vadd.f32 0.0, %v1631
      %v1633 = vpop.f32.mrb[0].mxu0
      %1634 = vmatprep.mubr.f32.mxu0 0.0
      %1635 = vmatmul.mubr.f32.gmra.mrb[0].mxu0 %v1410
      %v1636 = vpop.f32.mrb[0].mxu0
      %v1637 = vadd.f32 0.0, %v1636
      %v1638 = vpop.f32.mrb[0].mxu0
      %1639 = vdwg.mxu0
      %v1640 = vadd.f32 %v1372, %v1482
      %v1641 = vadd.f32 %v1373, %v1487
      %v1642 = vadd.f32 %v1374, %v1492
      %v1643 = vadd.f32 %v1375, %v1497
      %v1644 = vadd.f32 %v1376, %v1502
      %v1645 = vadd.f32 %v1377, %v1507
      %v1646 = vadd.f32 %v1378, %v1512
      %v1647 = vadd.f32 %v1379, %v1517
      %v1648 = vadd.f32 %v1380, %v1522
      %v1649 = vadd.f32 %v1381, %v1527
      %v1650 = vadd.f32 %v1382, %v1532
      %v1651 = vadd.f32 %v1383, %v1537
      %v1652 = vadd.f32 %v1384, %v1542
      %v1653 = vadd.f32 %v1385, %v1547
      %v1654 = vadd.f32 %v1386, %v1552
      %v1655 = vadd.f32 %v1387, %v1557
      %v1656 = vadd.f32 %v1388, %v1562
      %v1657 = vadd.f32 %v1389, %v1567
      %v1658 = vadd.f32 %v1390, %v1572
      %v1659 = vadd.f32 %v1391, %v1577
      %v1660 = vadd.f32 %v1392, %v1582
      %v1661 = vadd.f32 %v1393, %v1587
      %v1662 = vadd.f32 %v1394, %v1592
      %v1663 = vadd.f32 %v1395, %v1597
      %v1664 = vadd.f32 %v1396, %v1602
      %v1665 = vadd.f32 %v1397, %v1607
      %v1666 = vadd.f32 %v1398, %v1612
      %v1667 = vadd.f32 %v1399, %v1617
      %v1668 = vadd.f32 %v1400, %v1622
      %v1669 = vadd.f32 %v1401, %v1627
      %v1670 = vadd.f32 %v1402, %v1632
      %v1671 = vadd.f32 %v1403, %v1637
      %v1673 = vrot.slane %v273, 1
      %v1674 = vrot.slane %v274, 1
      %v1675 = vsel %vm328, %v1673, %v1674
      %v1676 = vrot.slane %v275, 1
      %v1677 = vsel %vm328, %v1674, %v1676
      %s1678 = scalar_lea.vmem %s1, 16
      %v1679 = vld [vmem:[%s1678] sm:$0x7]
      %v1680 = vsel %vm411, %v1675, 0
      %v1682 = vsel %vm411, %v1677, 0
      %v1685 = vsel %vm476, %v1679, 0
      %1687 = vmatprep.subr.mxu0 0.0
      %1688 = vmatpush1.msra.mxu0 %v1685
      %1689 = vmatprep.subr.mxu0 0.0
      %1690 = vmatpush1.msra.mxu0 0.0
      %1691 = vmatprep.subr.mxu0 0.0
      %1692 = vmatpush1.msra.mxu0 0.0
      %1693 = vmatprep.subr.mxu0 0.0
      %1694 = vmatpush1.msra.mxu0 0.0
      %1695 = vmatprep.subr.mxu0 0.0
      %1696 = vmatpush1.msra.mxu0 0.0
      %1697 = vmatprep.subr.mxu0 0.0
      %1698 = vmatpush1.msra.mxu0 0.0
      %1699 = vmatprep.subr.mxu0 0.0
      %1700 = vmatpush1.msra.mxu0 0.0
      %1701 = vmatprep.subr.mxu0 0.0
      %1702 = vmatpush1.msra.mxu0 0.0
      %1703 = vmatprep.subr.mxu0 0.0
      %1704 = vmatpush1.msra.mxu0 0.0
      %1705 = vmatprep.subr.mxu0 0.0
      %1706 = vmatpush1.msra.mxu0 0.0
      %1707 = vmatprep.subr.mxu0 0.0
      %1708 = vmatpush1.msra.mxu0 0.0
      %1709 = vmatprep.subr.mxu0 0.0
      %1710 = vmatpush1.msra.mxu0 0.0
      %1711 = vmatprep.subr.mxu0 0.0
      %1712 = vmatpush1.msra.mxu0 0.0
      %1713 = vmatprep.subr.mxu0 0.0
      %1714 = vmatpush1.msra.mxu0 0.0
      %1715 = vmatprep.subr.mxu0 0.0
      %1716 = vmatpush1.msra.mxu0 0.0
      %1717 = vmatprep.subr.mxu0 0.0
      %1718 = vmatpush1.msra.mxu0 0.0
      %1719 = vmatprep.subr.mxu0 0.0
      %1720 = vmatpush1.msra.mxu0 0.0
      %1721 = vmatprep.subr.mxu0 0.0
      %1722 = vmatpush1.msra.mxu0 0.0
      %1723 = vmatprep.subr.mxu0 0.0
      %1724 = vmatpush1.msra.mxu0 0.0
      %1725 = vmatprep.subr.mxu0 0.0
      %1726 = vmatpush1.msra.mxu0 0.0
      %1727 = vmatprep.subr.mxu0 0.0
      %1728 = vmatpush1.msra.mxu0 0.0
      %1729 = vmatprep.subr.mxu0 0.0
      %1730 = vmatpush1.msra.mxu0 0.0
      %1731 = vmatprep.subr.mxu0 0.0
      %1732 = vmatpush1.msra.mxu0 0.0
      %1733 = vmatprep.subr.mxu0 0.0
      %1734 = vmatpush1.msra.mxu0 0.0
      %1735 = vmatprep.subr.mxu0 0.0
      %1736 = vmatpush1.msra.mxu0 0.0
      %1737 = vmatprep.subr.mxu0 0.0
      %1738 = vmatpush1.msra.mxu0 0.0
      %1739 = vmatprep.subr.mxu0 0.0
      %1740 = vmatpush1.msra.mxu0 0.0
      %1741 = vmatprep.subr.mxu0 0.0
      %1742 = vmatpush1.msra.mxu0 0.0
      %1743 = vmatprep.subr.mxu0 0.0
      %1744 = vmatpush1.msra.mxu0 0.0
      %1745 = vmatprep.subr.mxu0 0.0
      %1746 = vmatpush1.msra.mxu0 0.0
      %1747 = vmatprep.subr.mxu0 0.0
      %1748 = vmatpush1.msra.mxu0 0.0
      %1749 = vmatprep.subr.mxu0 0.0
      %1750 = vmatpush1.msra.mxu0 0.0
      %1751 = vmatprep.mubr.f32.mxu0 0.0
      %1752 = vmatmul.mubr.f32.gmra.mrb[0].mxu0 %v416
      %v1753 = vpop.f32.mrb[0].mxu0
      %v1754 = vadd.f32 0.0, %v1753
      %v1755 = vpop.f32.mrb[0].mxu0
      %1756 = vmatprep.mubr.f32.mxu0 0.0
      %1757 = vmatmul.mubr.f32.gmra.mrb[0].mxu0 %v418
      %v1758 = vpop.f32.mrb[0].mxu0
      %v1759 = vadd.f32 0.0, %v1758
      %v1760 = vpop.f32.mrb[0].mxu0
      %1761 = vmatprep.mubr.f32.mxu0 0.0
      %1762 = vmatmul.mubr.f32.gmra.mrb[0].mxu0 %v420
      %v1763 = vpop.f32.mrb[0].mxu0
      %v1764 = vadd.f32 0.0, %v1763
      %v1765 = vpop.f32.mrb[0].mxu0
      %1766 = vmatprep.mubr.f32.mxu0 0.0
      %1767 = vmatmul.mubr.f32.gmra.mrb[0].mxu0 %v422
      %v1768 = vpop.f32.mrb[0].mxu0
      %v1769 = vadd.f32 0.0, %v1768
      %v1770 = vpop.f32.mrb[0].mxu0
      %1771 = vmatprep.mubr.f32.mxu0 0.0
      %1772 = vmatmul.mubr.f32.gmra.mrb[0].mxu0 %v424
      %v1773 = vpop.f32.mrb[0].mxu0
      %v1774 = vadd.f32 0.0, %v1773
      %v1775 = vpop.f32.mrb[0].mxu0
      %1776 = vmatprep.mubr.f32.mxu0 0.0
      %1777 = vmatmul.mubr.f32.gmra.mrb[0].mxu0 %v426
      %v1778 = vpop.f32.mrb[0].mxu0
      %v1779 = vadd.f32 0.0, %v1778
      %v1780 = vpop.f32.mrb[0].mxu0
      %1781 = vmatprep.mubr.f32.mxu0 0.0
      %1782 = vmatmul.mubr.f32.gmra.mrb[0].mxu0 %v428
      %v1783 = vpop.f32.mrb[0].mxu0
      %v1784 = vadd.f32 0.0, %v1783
      %v1785 = vpop.f32.mrb[0].mxu0
      %1786 = vmatprep.mubr.f32.mxu0 0.0
      %1787 = vmatmul.mubr.f32.gmra.mrb[0].mxu0 %v430
      %v1788 = vpop.f32.mrb[0].mxu0
      %v1789 = vadd.f32 0.0, %v1788
      %v1790 = vpop.f32.mrb[0].mxu0
      %1791 = vmatprep.mubr.f32.mxu0 0.0
      %1792 = vmatmul.mubr.f32.gmra.mrb[0].mxu0 %v432
      %v1793 = vpop.f32.mrb[0].mxu0
      %v1794 = vadd.f32 0.0, %v1793
      %v1795 = vpop.f32.mrb[0].mxu0
      %1796 = vmatprep.mubr.f32.mxu0 0.0
      %1797 = vmatmul.mubr.f32.gmra.mrb[0].mxu0 %v434
      %v1798 = vpop.f32.mrb[0].mxu0
      %v1799 = vadd.f32 0.0, %v1798
      %v1800 = vpop.f32.mrb[0].mxu0
      %1801 = vmatprep.mubr.f32.mxu0 0.0
      %1802 = vmatmul.mubr.f32.gmra.mrb[0].mxu0 %v436
      %v1803 = vpop.f32.mrb[0].mxu0
      %v1804 = vadd.f32 0.0, %v1803
      %v1805 = vpop.f32.mrb[0].mxu0
      %1806 = vmatprep.mubr.f32.mxu0 0.0
      %1807 = vmatmul.mubr.f32.gmra.mrb[0].mxu0 %v438
      %v1808 = vpop.f32.mrb[0].mxu0
      %v1809 = vadd.f32 0.0, %v1808
      %v1810 = vpop.f32.mrb[0].mxu0
      %1811 = vmatprep.mubr.f32.mxu0 0.0
      %1812 = vmatmul.mubr.f32.gmra.mrb[0].mxu0 %v440
      %v1813 = vpop.f32.mrb[0].mxu0
      %v1814 = vadd.f32 0.0, %v1813
      %v1815 = vpop.f32.mrb[0].mxu0
      %1816 = vmatprep.mubr.f32.mxu0 0.0
      %1817 = vmatmul.mubr.f32.gmra.mrb[0].mxu0 %v442
      %v1818 = vpop.f32.mrb[0].mxu0
      %v1819 = vadd.f32 0.0, %v1818
      %v1820 = vpop.f32.mrb[0].mxu0
      %1821 = vmatprep.mubr.f32.mxu0 0.0
      %1822 = vmatmul.mubr.f32.gmra.mrb[0].mxu0 %v444
      %v1823 = vpop.f32.mrb[0].mxu0
      %v1824 = vadd.f32 0.0, %v1823
      %v1825 = vpop.f32.mrb[0].mxu0
      %1826 = vmatprep.mubr.f32.mxu0 0.0
      %1827 = vmatmul.mubr.f32.gmra.mrb[0].mxu0 %v446
      %v1828 = vpop.f32.mrb[0].mxu0
      %v1829 = vadd.f32 0.0, %v1828
      %v1830 = vpop.f32.mrb[0].mxu0
      %1831 = vmatprep.mubr.f32.mxu0 0.0
      %1832 = vmatmul.mubr.f32.gmra.mrb[0].mxu0 %v448
      %v1833 = vpop.f32.mrb[0].mxu0
      %v1834 = vadd.f32 0.0, %v1833
      %v1835 = vpop.f32.mrb[0].mxu0
      %1836 = vmatprep.mubr.f32.mxu0 0.0
      %1837 = vmatmul.mubr.f32.gmra.mrb[0].mxu0 %v450
      %v1838 = vpop.f32.mrb[0].mxu0
      %v1839 = vadd.f32 0.0, %v1838
      %v1840 = vpop.f32.mrb[0].mxu0
      %1841 = vmatprep.mubr.f32.mxu0 0.0
      %1842 = vmatmul.mubr.f32.gmra.mrb[0].mxu0 %v452
      %v1843 = vpop.f32.mrb[0].mxu0
      %v1844 = vadd.f32 0.0, %v1843
      %v1845 = vpop.f32.mrb[0].mxu0
      %1846 = vmatprep.mubr.f32.mxu0 0.0
      %1847 = vmatmul.mubr.f32.gmra.mrb[0].mxu0 %v454
      %v1848 = vpop.f32.mrb[0].mxu0
      %v1849 = vadd.f32 0.0, %v1848
      %v1850 = vpop.f32.mrb[0].mxu0
      %1851 = vmatprep.mubr.f32.mxu0 0.0
      %1852 = vmatmul.mubr.f32.gmra.mrb[0].mxu0 %v456
      %v1853 = vpop.f32.mrb[0].mxu0
      %v1854 = vadd.f32 0.0, %v1853
      %v1855 = vpop.f32.mrb[0].mxu0
      %1856 = vmatprep.mubr.f32.mxu0 0.0
      %1857 = vmatmul.mubr.f32.gmra.mrb[0].mxu0 %v458
      %v1858 = vpop.f32.mrb[0].mxu0
      %v1859 = vadd.f32 0.0, %v1858
      %v1860 = vpop.f32.mrb[0].mxu0
      %1861 = vmatprep.mubr.f32.mxu0 0.0
      %1862 = vmatmul.mubr.f32.gmra.mrb[0].mxu0 %v460
      %v1863 = vpop.f32.mrb[0].mxu0
      %v1864 = vadd.f32 0.0, %v1863
      %v1865 = vpop.f32.mrb[0].mxu0
      %1866 = vmatprep.mubr.f32.mxu0 0.0
      %1867 = vmatmul.mubr.f32.gmra.mrb[0].mxu0 %v462
      %v1868 = vpop.f32.mrb[0].mxu0
      %v1869 = vadd.f32 0.0, %v1868
      %v1870 = vpop.f32.mrb[0].mxu0
      %1871 = vmatprep.mubr.f32.mxu0 0.0
      %1872 = vmatmul.mubr.f32.gmra.mrb[0].mxu0 %v464
      %v1873 = vpop.f32.mrb[0].mxu0
      %v1874 = vadd.f32 0.0, %v1873
      %v1875 = vpop.f32.mrb[0].mxu0
      %1876 = vmatprep.mubr.f32.mxu0 0.0
      %1877 = vmatmul.mubr.f32.gmra.mrb[0].mxu0 %v466
      %v1878 = vpop.f32.mrb[0].mxu0
      %v1879 = vadd.f32 0.0, %v1878
      %v1880 = vpop.f32.mrb[0].mxu0
      %1881 = vmatprep.mubr.f32.mxu0 0.0
      %1882 = vmatmul.mubr.f32.gmra.mrb[0].mxu0 %v468
      %v1883 = vpop.f32.mrb[0].mxu0
      %v1884 = vadd.f32 0.0, %v1883
      %v1885 = vpop.f32.mrb[0].mxu0
      %1886 = vmatprep.mubr.f32.mxu0 0.0
      %1887 = vmatmul.mubr.f32.gmra.mrb[0].mxu0 %v470
      %v1888 = vpop.f32.mrb[0].mxu0
      %v1889 = vadd.f32 0.0, %v1888
      %v1890 = vpop.f32.mrb[0].mxu0
      %1891 = vmatprep.mubr.f32.mxu0 0.0
      %1892 = vmatmul.mubr.f32.gmra.mrb[0].mxu0 %v472
      %v1893 = vpop.f32.mrb[0].mxu0
      %v1894 = vadd.f32 0.0, %v1893
      %v1895 = vpop.f32.mrb[0].mxu0
      %1896 = vmatprep.mubr.f32.mxu0 0.0
      %1897 = vmatmul.mubr.f32.gmra.mrb[0].mxu0 %v474
      %v1898 = vpop.f32.mrb[0].mxu0
      %v1899 = vadd.f32 0.0, %v1898
      %v1900 = vpop.f32.mrb[0].mxu0
      %1901 = vmatprep.mubr.f32.mxu0 0.0
      %1902 = vmatmul.mubr.f32.gmra.mrb[0].mxu0 %v1680
      %v1903 = vpop.f32.mrb[0].mxu0
      %v1904 = vadd.f32 0.0, %v1903
      %v1905 = vpop.f32.mrb[0].mxu0
      %1906 = vmatprep.mubr.f32.mxu0 0.0
      %1907 = vmatmul.mubr.f32.gmra.mrb[0].mxu0 %v1682
      %v1908 = vpop.f32.mrb[0].mxu0
      %v1909 = vadd.f32 0.0, %v1908
      %v1910 = vpop.f32.mrb[0].mxu0
      %1911 = vdwg.mxu0
      %v1912 = vadd.f32 %v1640, %v1754
      %v1913 = vadd.f32 %v1641, %v1759
      %v1914 = vadd.f32 %v1642, %v1764
      %v1915 = vadd.f32 %v1643, %v1769
      %v1916 = vadd.f32 %v1644, %v1774
      %v1917 = vadd.f32 %v1645, %v1779
      %v1918 = vadd.f32 %v1646, %v1784
      %v1919 = vadd.f32 %v1647, %v1789
      %v1920 = vadd.f32 %v1648, %v1794
      %v1921 = vadd.f32 %v1649, %v1799
      %v1922 = vadd.f32 %v1650, %v1804
      %v1923 = vadd.f32 %v1651, %v1809
      %v1924 = vadd.f32 %v1652, %v1814
      %v1925 = vadd.f32 %v1653, %v1819
      %v1926 = vadd.f32 %v1654, %v1824
      %v1927 = vadd.f32 %v1655, %v1829
      %v1928 = vadd.f32 %v1656, %v1834
      %v1929 = vadd.f32 %v1657, %v1839
      %v1930 = vadd.f32 %v1658, %v1844
      %v1931 = vadd.f32 %v1659, %v1849
      %v1932 = vadd.f32 %v1660, %v1854
      %v1933 = vadd.f32 %v1661, %v1859
      %v1934 = vadd.f32 %v1662, %v1864
      %v1935 = vadd.f32 %v1663, %v1869
      %v1936 = vadd.f32 %v1664, %v1874
      %v1937 = vadd.f32 %v1665, %v1879
      %v1938 = vadd.f32 %v1666, %v1884
      %v1939 = vadd.f32 %v1667, %v1889
      %v1940 = vadd.f32 %v1668, %v1894
      %v1941 = vadd.f32 %v1669, %v1899
      %v1942 = vadd.f32 %v1670, %v1904
      %v1943 = vadd.f32 %v1671, %v1909
      %v1944 = vrot.slane %v273, 2
      %v1945 = vrot.slane %v274, 2
      %v1946 = vsel %vm997, %v1944, %v1945
      %v1947 = vrot.slane %v275, 2
      %v1948 = vsel %vm997, %v1945, %v1947
      %s1949 = scalar_lea.vmem %s1, 20
      %v1950 = vld [vmem:[%s1949] sm:$0x7]
      %v1951 = vsel %vm411, %v1946, 0
      %v1953 = vsel %vm411, %v1948, 0
      %v1956 = vsel %vm476, %v1950, 0
      %1958 = vmatprep.subr.mxu0 0.0
      %1959 = vmatpush1.msra.mxu0 %v1956
      %1960 = vmatprep.subr.mxu0 0.0
      %1961 = vmatpush1.msra.mxu0 0.0
      %1962 = vmatprep.subr.mxu0 0.0
      %1963 = vmatpush1.msra.mxu0 0.0
      %1964 = vmatprep.subr.mxu0 0.0
      %1965 = vmatpush1.msra.mxu0 0.0
      %1966 = vmatprep.subr.mxu0 0.0
      %1967 = vmatpush1.msra.mxu0 0.0
      %1968 = vmatprep.subr.mxu0 0.0
      %1969 = vmatpush1.msra.mxu0 0.0
      %1970 = vmatprep.subr.mxu0 0.0
      %1971 = vmatpush1.msra.mxu0 0.0
      %1972 = vmatprep.subr.mxu0 0.0
      %1973 = vmatpush1.msra.mxu0 0.0
      %1974 = vmatprep.subr.mxu0 0.0
      %1975 = vmatpush1.msra.mxu0 0.0
      %1976 = vmatprep.subr.mxu0 0.0
      %1977 = vmatpush1.msra.mxu0 0.0
      %1978 = vmatprep.subr.mxu0 0.0
      %1979 = vmatpush1.msra.mxu0 0.0
      %1980 = vmatprep.subr.mxu0 0.0
      %1981 = vmatpush1.msra.mxu0 0.0
      %1982 = vmatprep.subr.mxu0 0.0
      %1983 = vmatpush1.msra.mxu0 0.0
      %1984 = vmatprep.subr.mxu0 0.0
      %1985 = vmatpush1.msra.mxu0 0.0
      %1986 = vmatprep.subr.mxu0 0.0
      %1987 = vmatpush1.msra.mxu0 0.0
      %1988 = vmatprep.subr.mxu0 0.0
      %1989 = vmatpush1.msra.mxu0 0.0
      %1990 = vmatprep.subr.mxu0 0.0
      %1991 = vmatpush1.msra.mxu0 0.0
      %1992 = vmatprep.subr.mxu0 0.0
      %1993 = vmatpush1.msra.mxu0 0.0
      %1994 = vmatprep.subr.mxu0 0.0
      %1995 = vmatpush1.msra.mxu0 0.0
      %1996 = vmatprep.subr.mxu0 0.0
      %1997 = vmatpush1.msra.mxu0 0.0
      %1998 = vmatprep.subr.mxu0 0.0
      %1999 = vmatpush1.msra.mxu0 0.0
      %2000 = vmatprep.subr.mxu0 0.0
      %2001 = vmatpush1.msra.mxu0 0.0
      %2002 = vmatprep.subr.mxu0 0.0
      %2003 = vmatpush1.msra.mxu0 0.0
      %2004 = vmatprep.subr.mxu0 0.0
      %2005 = vmatpush1.msra.mxu0 0.0
      %2006 = vmatprep.subr.mxu0 0.0
      %2007 = vmatpush1.msra.mxu0 0.0
      %2008 = vmatprep.subr.mxu0 0.0
      %2009 = vmatpush1.msra.mxu0 0.0
      %2010 = vmatprep.subr.mxu0 0.0
      %2011 = vmatpush1.msra.mxu0 0.0
      %2012 = vmatprep.subr.mxu0 0.0
      %2013 = vmatpush1.msra.mxu0 0.0
      %2014 = vmatprep.subr.mxu0 0.0
      %2015 = vmatpush1.msra.mxu0 0.0
      %2016 = vmatprep.subr.mxu0 0.0
      %2017 = vmatpush1.msra.mxu0 0.0
      %2018 = vmatprep.subr.mxu0 0.0
      %2019 = vmatpush1.msra.mxu0 0.0
      %2020 = vmatprep.subr.mxu0 0.0
      %2021 = vmatpush1.msra.mxu0 0.0
      %2022 = vmatprep.mubr.f32.mxu0 0.0
      %2023 = vmatmul.mubr.f32.gmra.mrb[0].mxu0 %v1084
      %v2024 = vpop.f32.mrb[0].mxu0
      %v2025 = vadd.f32 0.0, %v2024
      %v2026 = vpop.f32.mrb[0].mxu0
      %2027 = vmatprep.mubr.f32.mxu0 0.0
      %2028 = vmatmul.mubr.f32.gmra.mrb[0].mxu0 %v1086
      %v2029 = vpop.f32.mrb[0].mxu0
      %v2030 = vadd.f32 0.0, %v2029
      %v2031 = vpop.f32.mrb[0].mxu0
      %2032 = vmatprep.mubr.f32.mxu0 0.0
      %2033 = vmatmul.mubr.f32.gmra.mrb[0].mxu0 %v1088
      %v2034 = vpop.f32.mrb[0].mxu0
      %v2035 = vadd.f32 0.0, %v2034
      %v2036 = vpop.f32.mrb[0].mxu0
      %2037 = vmatprep.mubr.f32.mxu0 0.0
      %2038 = vmatmul.mubr.f32.gmra.mrb[0].mxu0 %v1090
      %v2039 = vpop.f32.mrb[0].mxu0
      %v2040 = vadd.f32 0.0, %v2039
      %v2041 = vpop.f32.mrb[0].mxu0
      %2042 = vmatprep.mubr.f32.mxu0 0.0
      %2043 = vmatmul.mubr.f32.gmra.mrb[0].mxu0 %v1092
      %v2044 = vpop.f32.mrb[0].mxu0
      %v2045 = vadd.f32 0.0, %v2044
      %v2046 = vpop.f32.mrb[0].mxu0
      %2047 = vmatprep.mubr.f32.mxu0 0.0
      %2048 = vmatmul.mubr.f32.gmra.mrb[0].mxu0 %v1094
      %v2049 = vpop.f32.mrb[0].mxu0
      %v2050 = vadd.f32 0.0, %v2049
      %v2051 = vpop.f32.mrb[0].mxu0
      %2052 = vmatprep.mubr.f32.mxu0 0.0
      %2053 = vmatmul.mubr.f32.gmra.mrb[0].mxu0 %v1096
      %v2054 = vpop.f32.mrb[0].mxu0
      %v2055 = vadd.f32 0.0, %v2054
      %v2056 = vpop.f32.mrb[0].mxu0
      %2057 = vmatprep.mubr.f32.mxu0 0.0
      %2058 = vmatmul.mubr.f32.gmra.mrb[0].mxu0 %v1098
      %v2059 = vpop.f32.mrb[0].mxu0
      %v2060 = vadd.f32 0.0, %v2059
      %v2061 = vpop.f32.mrb[0].mxu0
      %2062 = vmatprep.mubr.f32.mxu0 0.0
      %2063 = vmatmul.mubr.f32.gmra.mrb[0].mxu0 %v1100
      %v2064 = vpop.f32.mrb[0].mxu0
      %v2065 = vadd.f32 0.0, %v2064
      %v2066 = vpop.f32.mrb[0].mxu0
      %2067 = vmatprep.mubr.f32.mxu0 0.0
      %2068 = vmatmul.mubr.f32.gmra.mrb[0].mxu0 %v1102
      %v2069 = vpop.f32.mrb[0].mxu0
      %v2070 = vadd.f32 0.0, %v2069
      %v2071 = vpop.f32.mrb[0].mxu0
      %2072 = vmatprep.mubr.f32.mxu0 0.0
      %2073 = vmatmul.mubr.f32.gmra.mrb[0].mxu0 %v1104
      %v2074 = vpop.f32.mrb[0].mxu0
      %v2075 = vadd.f32 0.0, %v2074
      %v2076 = vpop.f32.mrb[0].mxu0
      %2077 = vmatprep.mubr.f32.mxu0 0.0
      %2078 = vmatmul.mubr.f32.gmra.mrb[0].mxu0 %v1106
      %v2079 = vpop.f32.mrb[0].mxu0
      %v2080 = vadd.f32 0.0, %v2079
      %v2081 = vpop.f32.mrb[0].mxu0
      %2082 = vmatprep.mubr.f32.mxu0 0.0
      %2083 = vmatmul.mubr.f32.gmra.mrb[0].mxu0 %v1108
      %v2084 = vpop.f32.mrb[0].mxu0
      %v2085 = vadd.f32 0.0, %v2084
      %v2086 = vpop.f32.mrb[0].mxu0
      %2087 = vmatprep.mubr.f32.mxu0 0.0
      %2088 = vmatmul.mubr.f32.gmra.mrb[0].mxu0 %v1110
      %v2089 = vpop.f32.mrb[0].mxu0
      %v2090 = vadd.f32 0.0, %v2089
      %v2091 = vpop.f32.mrb[0].mxu0
      %2092 = vmatprep.mubr.f32.mxu0 0.0
      %2093 = vmatmul.mubr.f32.gmra.mrb[0].mxu0 %v1112
      %v2094 = vpop.f32.mrb[0].mxu0
      %v2095 = vadd.f32 0.0, %v2094
      %v2096 = vpop.f32.mrb[0].mxu0
      %2097 = vmatprep.mubr.f32.mxu0 0.0
      %2098 = vmatmul.mubr.f32.gmra.mrb[0].mxu0 %v1114
      %v2099 = vpop.f32.mrb[0].mxu0
      %v2100 = vadd.f32 0.0, %v2099
      %v2101 = vpop.f32.mrb[0].mxu0
      %2102 = vmatprep.mubr.f32.mxu0 0.0
      %2103 = vmatmul.mubr.f32.gmra.mrb[0].mxu0 %v1116
      %v2104 = vpop.f32.mrb[0].mxu0
      %v2105 = vadd.f32 0.0, %v2104
      %v2106 = vpop.f32.mrb[0].mxu0
      %2107 = vmatprep.mubr.f32.mxu0 0.0
      %2108 = vmatmul.mubr.f32.gmra.mrb[0].mxu0 %v1118
      %v2109 = vpop.f32.mrb[0].mxu0
      %v2110 = vadd.f32 0.0, %v2109
      %v2111 = vpop.f32.mrb[0].mxu0
      %2112 = vmatprep.mubr.f32.mxu0 0.0
      %2113 = vmatmul.mubr.f32.gmra.mrb[0].mxu0 %v1120
      %v2114 = vpop.f32.mrb[0].mxu0
      %v2115 = vadd.f32 0.0, %v2114
      %v2116 = vpop.f32.mrb[0].mxu0
      %2117 = vmatprep.mubr.f32.mxu0 0.0
      %2118 = vmatmul.mubr.f32.gmra.mrb[0].mxu0 %v1122
      %v2119 = vpop.f32.mrb[0].mxu0
      %v2120 = vadd.f32 0.0, %v2119
      %v2121 = vpop.f32.mrb[0].mxu0
      %2122 = vmatprep.mubr.f32.mxu0 0.0
      %2123 = vmatmul.mubr.f32.gmra.mrb[0].mxu0 %v1124
      %v2124 = vpop.f32.mrb[0].mxu0
      %v2125 = vadd.f32 0.0, %v2124
      %v2126 = vpop.f32.mrb[0].mxu0
      %2127 = vmatprep.mubr.f32.mxu0 0.0
      %2128 = vmatmul.mubr.f32.gmra.mrb[0].mxu0 %v1126
      %v2129 = vpop.f32.mrb[0].mxu0
      %v2130 = vadd.f32 0.0, %v2129
      %v2131 = vpop.f32.mrb[0].mxu0
      %2132 = vmatprep.mubr.f32.mxu0 0.0
      %2133 = vmatmul.mubr.f32.gmra.mrb[0].mxu0 %v1128
      %v2134 = vpop.f32.mrb[0].mxu0
      %v2135 = vadd.f32 0.0, %v2134
      %v2136 = vpop.f32.mrb[0].mxu0
      %2137 = vmatprep.mubr.f32.mxu0 0.0
      %2138 = vmatmul.mubr.f32.gmra.mrb[0].mxu0 %v1130
      %v2139 = vpop.f32.mrb[0].mxu0
      %v2140 = vadd.f32 0.0, %v2139
      %v2141 = vpop.f32.mrb[0].mxu0
      %2142 = vmatprep.mubr.f32.mxu0 0.0
      %2143 = vmatmul.mubr.f32.gmra.mrb[0].mxu0 %v1132
      %v2144 = vpop.f32.mrb[0].mxu0
      %v2145 = vadd.f32 0.0, %v2144
      %v2146 = vpop.f32.mrb[0].mxu0
      %2147 = vmatprep.mubr.f32.mxu0 0.0
      %2148 = vmatmul.mubr.f32.gmra.mrb[0].mxu0 %v1134
      %v2149 = vpop.f32.mrb[0].mxu0
      %v2150 = vadd.f32 0.0, %v2149
      %v2151 = vpop.f32.mrb[0].mxu0
      %2152 = vmatprep.mubr.f32.mxu0 0.0
      %2153 = vmatmul.mubr.f32.gmra.mrb[0].mxu0 %v1136
      %v2154 = vpop.f32.mrb[0].mxu0
      %v2155 = vadd.f32 0.0, %v2154
      %v2156 = vpop.f32.mrb[0].mxu0
      %2157 = vmatprep.mubr.f32.mxu0 0.0
      %2158 = vmatmul.mubr.f32.gmra.mrb[0].mxu0 %v1138
      %v2159 = vpop.f32.mrb[0].mxu0
      %v2160 = vadd.f32 0.0, %v2159
      %v2161 = vpop.f32.mrb[0].mxu0
      %2162 = vmatprep.mubr.f32.mxu0 0.0
      %2163 = vmatmul.mubr.f32.gmra.mrb[0].mxu0 %v1140
      %v2164 = vpop.f32.mrb[0].mxu0
      %v2165 = vadd.f32 0.0, %v2164
      %v2166 = vpop.f32.mrb[0].mxu0
      %2167 = vmatprep.mubr.f32.mxu0 0.0
      %2168 = vmatmul.mubr.f32.gmra.mrb[0].mxu0 %v1142
      %v2169 = vpop.f32.mrb[0].mxu0
      %v2170 = vadd.f32 0.0, %v2169
      %v2171 = vpop.f32.mrb[0].mxu0
      %2172 = vmatprep.mubr.f32.mxu0 0.0
      %2173 = vmatmul.mubr.f32.gmra.mrb[0].mxu0 %v1951
      %v2174 = vpop.f32.mrb[0].mxu0
      %v2175 = vadd.f32 0.0, %v2174
      %v2176 = vpop.f32.mrb[0].mxu0
      %2177 = vmatprep.mubr.f32.mxu0 0.0
      %2178 = vmatmul.mubr.f32.gmra.mrb[0].mxu0 %v1953
      %v2179 = vpop.f32.mrb[0].mxu0
      %v2180 = vadd.f32 0.0, %v2179
      %v2181 = vpop.f32.mrb[0].mxu0
      %2182 = vdwg.mxu0
      %v2183 = vadd.f32 %v1912, %v2025
      %v2184 = vadd.f32 %v1913, %v2030
      %v2185 = vadd.f32 %v1914, %v2035
      %v2186 = vadd.f32 %v1915, %v2040
      %v2187 = vadd.f32 %v1916, %v2045
      %v2188 = vadd.f32 %v1917, %v2050
      %v2189 = vadd.f32 %v1918, %v2055
      %v2190 = vadd.f32 %v1919, %v2060
      %v2191 = vadd.f32 %v1920, %v2065
      %v2192 = vadd.f32 %v1921, %v2070
      %v2193 = vadd.f32 %v1922, %v2075
      %v2194 = vadd.f32 %v1923, %v2080
      %v2195 = vadd.f32 %v1924, %v2085
      %v2196 = vadd.f32 %v1925, %v2090
      %v2197 = vadd.f32 %v1926, %v2095
      %v2198 = vadd.f32 %v1927, %v2100
      %v2199 = vadd.f32 %v1928, %v2105
      %v2200 = vadd.f32 %v1929, %v2110
      %v2201 = vadd.f32 %v1930, %v2115
      %v2202 = vadd.f32 %v1931, %v2120
      %v2203 = vadd.f32 %v1932, %v2125
      %v2204 = vadd.f32 %v1933, %v2130
      %v2205 = vadd.f32 %v1934, %v2135
      %v2206 = vadd.f32 %v1935, %v2140
      %v2207 = vadd.f32 %v1936, %v2145
      %v2208 = vadd.f32 %v1937, %v2150
      %v2209 = vadd.f32 %v1938, %v2155
      %v2210 = vadd.f32 %v1939, %v2160
      %v2211 = vadd.f32 %v1940, %v2165
      %v2212 = vadd.f32 %v1941, %v2170
      %v2213 = vadd.f32 %v1942, %v2175
      %v2214 = vadd.f32 %v1943, %v2180
      %s2215 = scalar_lea.vmem %s1, 24
      %v2216 = vld [vmem:[%s2215] sm:$0x7]
      %v2218 = vsel %vm411, %v276, 0
      %v2221 = vsel %vm411, %v277, 0
      %v2224 = vsel %vm476, %v2216, 0
      %2226 = vmatprep.subr.mxu0 0.0
      %2227 = vmatpush1.msra.mxu0 %v2224
      %2228 = vmatprep.subr.mxu0 0.0
      %2229 = vmatpush1.msra.mxu0 0.0
      %2230 = vmatprep.subr.mxu0 0.0
      %2231 = vmatpush1.msra.mxu0 0.0
      %2232 = vmatprep.subr.mxu0 0.0
      %2233 = vmatpush1.msra.mxu0 0.0
      %2234 = vmatprep.subr.mxu0 0.0
      %2235 = vmatpush1.msra.mxu0 0.0
      %2236 = vmatprep.subr.mxu0 0.0
      %2237 = vmatpush1.msra.mxu0 0.0
      %2238 = vmatprep.subr.mxu0 0.0
      %2239 = vmatpush1.msra.mxu0 0.0
      %2240 = vmatprep.subr.mxu0 0.0
      %2241 = vmatpush1.msra.mxu0 0.0
      %2242 = vmatprep.subr.mxu0 0.0
      %2243 = vmatpush1.msra.mxu0 0.0
      %2244 = vmatprep.subr.mxu0 0.0
      %2245 = vmatpush1.msra.mxu0 0.0
      %2246 = vmatprep.subr.mxu0 0.0
      %2247 = vmatpush1.msra.mxu0 0.0
      %2248 = vmatprep.subr.mxu0 0.0
      %2249 = vmatpush1.msra.mxu0 0.0
      %2250 = vmatprep.subr.mxu0 0.0
      %2251 = vmatpush1.msra.mxu0 0.0
      %2252 = vmatprep.subr.mxu0 0.0
      %2253 = vmatpush1.msra.mxu0 0.0
      %2254 = vmatprep.subr.mxu0 0.0
      %2255 = vmatpush1.msra.mxu0 0.0
      %2256 = vmatprep.subr.mxu0 0.0
      %2257 = vmatpush1.msra.mxu0 0.0
      %2258 = vmatprep.subr.mxu0 0.0
      %2259 = vmatpush1.msra.mxu0 0.0
      %2260 = vmatprep.subr.mxu0 0.0
      %2261 = vmatpush1.msra.mxu0 0.0
      %2262 = vmatprep.subr.mxu0 0.0
      %2263 = vmatpush1.msra.mxu0 0.0
      %2264 = vmatprep.subr.mxu0 0.0
      %2265 = vmatpush1.msra.mxu0 0.0
      %2266 = vmatprep.subr.mxu0 0.0
      %2267 = vmatpush1.msra.mxu0 0.0
      %2268 = vmatprep.subr.mxu0 0.0
      %2269 = vmatpush1.msra.mxu0 0.0
      %2270 = vmatprep.subr.mxu0 0.0
      %2271 = vmatpush1.msra.mxu0 0.0
      %2272 = vmatprep.subr.mxu0 0.0
      %2273 = vmatpush1.msra.mxu0 0.0
      %2274 = vmatprep.subr.mxu0 0.0
      %2275 = vmatpush1.msra.mxu0 0.0
      %2276 = vmatprep.subr.mxu0 0.0
      %2277 = vmatpush1.msra.mxu0 0.0
      %2278 = vmatprep.subr.mxu0 0.0
      %2279 = vmatpush1.msra.mxu0 0.0
      %2280 = vmatprep.subr.mxu0 0.0
      %2281 = vmatpush1.msra.mxu0 0.0
      %2282 = vmatprep.subr.mxu0 0.0
      %2283 = vmatpush1.msra.mxu0 0.0
      %2284 = vmatprep.subr.mxu0 0.0
      %2285 = vmatpush1.msra.mxu0 0.0
      %2286 = vmatprep.subr.mxu0 0.0
      %2287 = vmatpush1.msra.mxu0 0.0
      %2288 = vmatprep.subr.mxu0 0.0
      %2289 = vmatpush1.msra.mxu0 0.0
      %2290 = vmatprep.mubr.f32.mxu0 0.0
      %2291 = vmatmul.mubr.f32.gmra.mrb[0].mxu0 %v713
      %v2292 = vpop.f32.mrb[0].mxu0
      %v2293 = vadd.f32 0.0, %v2292
      %v2294 = vpop.f32.mrb[0].mxu0
      %2295 = vmatprep.mubr.f32.mxu0 0.0
      %2296 = vmatmul.mubr.f32.gmra.mrb[0].mxu0 %v715
      %v2297 = vpop.f32.mrb[0].mxu0
      %v2298 = vadd.f32 0.0, %v2297
      %v2299 = vpop.f32.mrb[0].mxu0
      %2300 = vmatprep.mubr.f32.mxu0 0.0
      %2301 = vmatmul.mubr.f32.gmra.mrb[0].mxu0 %v717
      %v2302 = vpop.f32.mrb[0].mxu0
      %v2303 = vadd.f32 0.0, %v2302
      %v2304 = vpop.f32.mrb[0].mxu0
      %2305 = vmatprep.mubr.f32.mxu0 0.0
      %2306 = vmatmul.mubr.f32.gmra.mrb[0].mxu0 %v719
      %v2307 = vpop.f32.mrb[0].mxu0
      %v2308 = vadd.f32 0.0, %v2307
      %v2309 = vpop.f32.mrb[0].mxu0
      %2310 = vmatprep.mubr.f32.mxu0 0.0
      %2311 = vmatmul.mubr.f32.gmra.mrb[0].mxu0 %v721
      %v2312 = vpop.f32.mrb[0].mxu0
      %v2313 = vadd.f32 0.0, %v2312
      %v2314 = vpop.f32.mrb[0].mxu0
      %2315 = vmatprep.mubr.f32.mxu0 0.0
      %2316 = vmatmul.mubr.f32.gmra.mrb[0].mxu0 %v723
      %v2317 = vpop.f32.mrb[0].mxu0
      %v2318 = vadd.f32 0.0, %v2317
      %v2319 = vpop.f32.mrb[0].mxu0
      %2320 = vmatprep.mubr.f32.mxu0 0.0
      %2321 = vmatmul.mubr.f32.gmra.mrb[0].mxu0 %v725
      %v2322 = vpop.f32.mrb[0].mxu0
      %v2323 = vadd.f32 0.0, %v2322
      %v2324 = vpop.f32.mrb[0].mxu0
      %2325 = vmatprep.mubr.f32.mxu0 0.0
      %2326 = vmatmul.mubr.f32.gmra.mrb[0].mxu0 %v727
      %v2327 = vpop.f32.mrb[0].mxu0
      %v2328 = vadd.f32 0.0, %v2327
      %v2329 = vpop.f32.mrb[0].mxu0
      %2330 = vmatprep.mubr.f32.mxu0 0.0
      %2331 = vmatmul.mubr.f32.gmra.mrb[0].mxu0 %v729
      %v2332 = vpop.f32.mrb[0].mxu0
      %v2333 = vadd.f32 0.0, %v2332
      %v2334 = vpop.f32.mrb[0].mxu0
      %2335 = vmatprep.mubr.f32.mxu0 0.0
      %2336 = vmatmul.mubr.f32.gmra.mrb[0].mxu0 %v731
      %v2337 = vpop.f32.mrb[0].mxu0
      %v2338 = vadd.f32 0.0, %v2337
      %v2339 = vpop.f32.mrb[0].mxu0
      %2340 = vmatprep.mubr.f32.mxu0 0.0
      %2341 = vmatmul.mubr.f32.gmra.mrb[0].mxu0 %v733
      %v2342 = vpop.f32.mrb[0].mxu0
      %v2343 = vadd.f32 0.0, %v2342
      %v2344 = vpop.f32.mrb[0].mxu0
      %2345 = vmatprep.mubr.f32.mxu0 0.0
      %2346 = vmatmul.mubr.f32.gmra.mrb[0].mxu0 %v735
      %v2347 = vpop.f32.mrb[0].mxu0
      %v2348 = vadd.f32 0.0, %v2347
      %v2349 = vpop.f32.mrb[0].mxu0
      %2350 = vmatprep.mubr.f32.mxu0 0.0
      %2351 = vmatmul.mubr.f32.gmra.mrb[0].mxu0 %v737
      %v2352 = vpop.f32.mrb[0].mxu0
      %v2353 = vadd.f32 0.0, %v2352
      %v2354 = vpop.f32.mrb[0].mxu0
      %2355 = vmatprep.mubr.f32.mxu0 0.0
      %2356 = vmatmul.mubr.f32.gmra.mrb[0].mxu0 %v739
      %v2357 = vpop.f32.mrb[0].mxu0
      %v2358 = vadd.f32 0.0, %v2357
      %v2359 = vpop.f32.mrb[0].mxu0
      %2360 = vmatprep.mubr.f32.mxu0 0.0
      %2361 = vmatmul.mubr.f32.gmra.mrb[0].mxu0 %v741
      %v2362 = vpop.f32.mrb[0].mxu0
      %v2363 = vadd.f32 0.0, %v2362
      %v2364 = vpop.f32.mrb[0].mxu0
      %2365 = vmatprep.mubr.f32.mxu0 0.0
      %2366 = vmatmul.mubr.f32.gmra.mrb[0].mxu0 %v743
      %v2367 = vpop.f32.mrb[0].mxu0
      %v2368 = vadd.f32 0.0, %v2367
      %v2369 = vpop.f32.mrb[0].mxu0
      %2370 = vmatprep.mubr.f32.mxu0 0.0
      %2371 = vmatmul.mubr.f32.gmra.mrb[0].mxu0 %v745
      %v2372 = vpop.f32.mrb[0].mxu0
      %v2373 = vadd.f32 0.0, %v2372
      %v2374 = vpop.f32.mrb[0].mxu0
      %2375 = vmatprep.mubr.f32.mxu0 0.0
      %2376 = vmatmul.mubr.f32.gmra.mrb[0].mxu0 %v747
      %v2377 = vpop.f32.mrb[0].mxu0
      %v2378 = vadd.f32 0.0, %v2377
      %v2379 = vpop.f32.mrb[0].mxu0
      %2380 = vmatprep.mubr.f32.mxu0 0.0
      %2381 = vmatmul.mubr.f32.gmra.mrb[0].mxu0 %v749
      %v2382 = vpop.f32.mrb[0].mxu0
      %v2383 = vadd.f32 0.0, %v2382
      %v2384 = vpop.f32.mrb[0].mxu0
      %2385 = vmatprep.mubr.f32.mxu0 0.0
      %2386 = vmatmul.mubr.f32.gmra.mrb[0].mxu0 %v751
      %v2387 = vpop.f32.mrb[0].mxu0
      %v2388 = vadd.f32 0.0, %v2387
      %v2389 = vpop.f32.mrb[0].mxu0
      %2390 = vmatprep.mubr.f32.mxu0 0.0
      %2391 = vmatmul.mubr.f32.gmra.mrb[0].mxu0 %v753
      %v2392 = vpop.f32.mrb[0].mxu0
      %v2393 = vadd.f32 0.0, %v2392
      %v2394 = vpop.f32.mrb[0].mxu0
      %2395 = vmatprep.mubr.f32.mxu0 0.0
      %2396 = vmatmul.mubr.f32.gmra.mrb[0].mxu0 %v755
      %v2397 = vpop.f32.mrb[0].mxu0
      %v2398 = vadd.f32 0.0, %v2397
      %v2399 = vpop.f32.mrb[0].mxu0
      %2400 = vmatprep.mubr.f32.mxu0 0.0
      %2401 = vmatmul.mubr.f32.gmra.mrb[0].mxu0 %v757
      %v2402 = vpop.f32.mrb[0].mxu0
      %v2403 = vadd.f32 0.0, %v2402
      %v2404 = vpop.f32.mrb[0].mxu0
      %2405 = vmatprep.mubr.f32.mxu0 0.0
      %2406 = vmatmul.mubr.f32.gmra.mrb[0].mxu0 %v759
      %v2407 = vpop.f32.mrb[0].mxu0
      %v2408 = vadd.f32 0.0, %v2407
      %v2409 = vpop.f32.mrb[0].mxu0
      %2410 = vmatprep.mubr.f32.mxu0 0.0
      %2411 = vmatmul.mubr.f32.gmra.mrb[0].mxu0 %v761
      %v2412 = vpop.f32.mrb[0].mxu0
      %v2413 = vadd.f32 0.0, %v2412
      %v2414 = vpop.f32.mrb[0].mxu0
      %2415 = vmatprep.mubr.f32.mxu0 0.0
      %2416 = vmatmul.mubr.f32.gmra.mrb[0].mxu0 %v763
      %v2417 = vpop.f32.mrb[0].mxu0
      %v2418 = vadd.f32 0.0, %v2417
      %v2419 = vpop.f32.mrb[0].mxu0
      %2420 = vmatprep.mubr.f32.mxu0 0.0
      %2421 = vmatmul.mubr.f32.gmra.mrb[0].mxu0 %v765
      %v2422 = vpop.f32.mrb[0].mxu0
      %v2423 = vadd.f32 0.0, %v2422
      %v2424 = vpop.f32.mrb[0].mxu0
      %2425 = vmatprep.mubr.f32.mxu0 0.0
      %2426 = vmatmul.mubr.f32.gmra.mrb[0].mxu0 %v767
      %v2427 = vpop.f32.mrb[0].mxu0
      %v2428 = vadd.f32 0.0, %v2427
      %v2429 = vpop.f32.mrb[0].mxu0
      %2430 = vmatprep.mubr.f32.mxu0 0.0
      %2431 = vmatmul.mubr.f32.gmra.mrb[0].mxu0 %v1407
      %v2432 = vpop.f32.mrb[0].mxu0
      %v2433 = vadd.f32 0.0, %v2432
      %v2434 = vpop.f32.mrb[0].mxu0
      %2435 = vmatprep.mubr.f32.mxu0 0.0
      %2436 = vmatmul.mubr.f32.gmra.mrb[0].mxu0 %v1410
      %v2437 = vpop.f32.mrb[0].mxu0
      %v2438 = vadd.f32 0.0, %v2437
      %v2439 = vpop.f32.mrb[0].mxu0
      %2440 = vmatprep.mubr.f32.mxu0 0.0
      %2441 = vmatmul.mubr.f32.gmra.mrb[0].mxu0 %v2218
      %v2442 = vpop.f32.mrb[0].mxu0
      %v2443 = vadd.f32 0.0, %v2442
      %v2444 = vpop.f32.mrb[0].mxu0
      %2445 = vmatprep.mubr.f32.mxu0 0.0
      %2446 = vmatmul.mubr.f32.gmra.mrb[0].mxu0 %v2221
      %v2447 = vpop.f32.mrb[0].mxu0
      %v2448 = vadd.f32 0.0, %v2447
      %v2449 = vpop.f32.mrb[0].mxu0
      %2450 = vdwg.mxu0
      %v2451 = vadd.f32 %v2183, %v2293
      %v2452 = vadd.f32 %v2184, %v2298
      %v2453 = vadd.f32 %v2185, %v2303
      %v2454 = vadd.f32 %v2186, %v2308
      %v2455 = vadd.f32 %v2187, %v2313
      %v2456 = vadd.f32 %v2188, %v2318
      %v2457 = vadd.f32 %v2189, %v2323
      %v2458 = vadd.f32 %v2190, %v2328
      %v2459 = vadd.f32 %v2191, %v2333
      %v2460 = vadd.f32 %v2192, %v2338
      %v2461 = vadd.f32 %v2193, %v2343
      %v2462 = vadd.f32 %v2194, %v2348
      %v2463 = vadd.f32 %v2195, %v2353
      %v2464 = vadd.f32 %v2196, %v2358
      %v2465 = vadd.f32 %v2197, %v2363
      %v2466 = vadd.f32 %v2198, %v2368
      %v2467 = vadd.f32 %v2199, %v2373
      %v2468 = vadd.f32 %v2200, %v2378
      %v2469 = vadd.f32 %v2201, %v2383
      %v2470 = vadd.f32 %v2202, %v2388
      %v2471 = vadd.f32 %v2203, %v2393
      %v2472 = vadd.f32 %v2204, %v2398
      %v2473 = vadd.f32 %v2205, %v2403
      %v2474 = vadd.f32 %v2206, %v2408
      %v2475 = vadd.f32 %v2207, %v2413
      %v2476 = vadd.f32 %v2208, %v2418
      %v2477 = vadd.f32 %v2209, %v2423
      %v2478 = vadd.f32 %v2210, %v2428
      %v2479 = vadd.f32 %v2211, %v2433
      %v2480 = vadd.f32 %v2212, %v2438
      %v2481 = vadd.f32 %v2213, %v2443
      %v2482 = vadd.f32 %v2214, %v2448
      %v2484 = vrot.slane %v276, 1
      %v2485 = vrot.slane %v277, 1
      %v2486 = vsel %vm328, %v2484, %v2485
      %v2487 = vrot.slane %v278, 1
      %v2488 = vsel %vm328, %v2485, %v2487
      %s2489 = scalar_lea.vmem %s1, 28
      %v2490 = vld [vmem:[%s2489] sm:$0x7]
      %v2491 = vsel %vm411, %v2486, 0
      %v2493 = vsel %vm411, %v2488, 0
      %v2496 = vsel %vm476, %v2490, 0
      %2498 = vmatprep.subr.mxu0 0.0
      %2499 = vmatpush1.msra.mxu0 %v2496
      %2500 = vmatprep.subr.mxu0 0.0
      %2501 = vmatpush1.msra.mxu0 0.0
      %2502 = vmatprep.subr.mxu0 0.0
      %2503 = vmatpush1.msra.mxu0 0.0
      %2504 = vmatprep.subr.mxu0 0.0
      %2505 = vmatpush1.msra.mxu0 0.0
      %2506 = vmatprep.subr.mxu0 0.0
      %2507 = vmatpush1.msra.mxu0 0.0
      %2508 = vmatprep.subr.mxu0 0.0
      %2509 = vmatpush1.msra.mxu0 0.0
      %2510 = vmatprep.subr.mxu0 0.0
      %2511 = vmatpush1.msra.mxu0 0.0
      %2512 = vmatprep.subr.mxu0 0.0
      %2513 = vmatpush1.msra.mxu0 0.0
      %2514 = vmatprep.subr.mxu0 0.0
      %2515 = vmatpush1.msra.mxu0 0.0
      %2516 = vmatprep.subr.mxu0 0.0
      %2517 = vmatpush1.msra.mxu0 0.0
      %2518 = vmatprep.subr.mxu0 0.0
      %2519 = vmatpush1.msra.mxu0 0.0
      %2520 = vmatprep.subr.mxu0 0.0
      %2521 = vmatpush1.msra.mxu0 0.0
      %2522 = vmatprep.subr.mxu0 0.0
      %2523 = vmatpush1.msra.mxu0 0.0
      %2524 = vmatprep.subr.mxu0 0.0
      %2525 = vmatpush1.msra.mxu0 0.0
      %2526 = vmatprep.subr.mxu0 0.0
      %2527 = vmatpush1.msra.mxu0 0.0
      %2528 = vmatprep.subr.mxu0 0.0
      %2529 = vmatpush1.msra.mxu0 0.0
      %2530 = vmatprep.subr.mxu0 0.0
      %2531 = vmatpush1.msra.mxu0 0.0
      %2532 = vmatprep.subr.mxu0 0.0
      %2533 = vmatpush1.msra.mxu0 0.0
      %2534 = vmatprep.subr.mxu0 0.0
      %2535 = vmatpush1.msra.mxu0 0.0
      %2536 = vmatprep.subr.mxu0 0.0
      %2537 = vmatpush1.msra.mxu0 0.0
      %2538 = vmatprep.subr.mxu0 0.0
      %2539 = vmatpush1.msra.mxu0 0.0
      %2540 = vmatprep.subr.mxu0 0.0
      %2541 = vmatpush1.msra.mxu0 0.0
      %2542 = vmatprep.subr.mxu0 0.0
      %2543 = vmatpush1.msra.mxu0 0.0
      %2544 = vmatprep.subr.mxu0 0.0
      %2545 = vmatpush1.msra.mxu0 0.0
      %2546 = vmatprep.subr.mxu0 0.0
      %2547 = vmatpush1.msra.mxu0 0.0
      %2548 = vmatprep.subr.mxu0 0.0
      %2549 = vmatpush1.msra.mxu0 0.0
      %2550 = vmatprep.subr.mxu0 0.0
      %2551 = vmatpush1.msra.mxu0 0.0
      %2552 = vmatprep.subr.mxu0 0.0
      %2553 = vmatpush1.msra.mxu0 0.0
      %2554 = vmatprep.subr.mxu0 0.0
      %2555 = vmatpush1.msra.mxu0 0.0
      %2556 = vmatprep.subr.mxu0 0.0
      %2557 = vmatpush1.msra.mxu0 0.0
      %2558 = vmatprep.subr.mxu0 0.0
      %2559 = vmatpush1.msra.mxu0 0.0
      %2560 = vmatprep.subr.mxu0 0.0
      %2561 = vmatpush1.msra.mxu0 0.0
      %2562 = vmatprep.mubr.f32.mxu0 0.0
      %2563 = vmatmul.mubr.f32.gmra.mrb[0].mxu0 %v420
      %v2564 = vpop.f32.mrb[0].mxu0
      %v2565 = vadd.f32 0.0, %v2564
      %v2566 = vpop.f32.mrb[0].mxu0
      %2567 = vmatprep.mubr.f32.mxu0 0.0
      %2568 = vmatmul.mubr.f32.gmra.mrb[0].mxu0 %v422
      %v2569 = vpop.f32.mrb[0].mxu0
      %v2570 = vadd.f32 0.0, %v2569
      %v2571 = vpop.f32.mrb[0].mxu0
      %2572 = vmatprep.mubr.f32.mxu0 0.0
      %2573 = vmatmul.mubr.f32.gmra.mrb[0].mxu0 %v424
      %v2574 = vpop.f32.mrb[0].mxu0
      %v2575 = vadd.f32 0.0, %v2574
      %v2576 = vpop.f32.mrb[0].mxu0
      %2577 = vmatprep.mubr.f32.mxu0 0.0
      %2578 = vmatmul.mubr.f32.gmra.mrb[0].mxu0 %v426
      %v2579 = vpop.f32.mrb[0].mxu0
      %v2580 = vadd.f32 0.0, %v2579
      %v2581 = vpop.f32.mrb[0].mxu0
      %2582 = vmatprep.mubr.f32.mxu0 0.0
      %2583 = vmatmul.mubr.f32.gmra.mrb[0].mxu0 %v428
      %v2584 = vpop.f32.mrb[0].mxu0
      %v2585 = vadd.f32 0.0, %v2584
      %v2586 = vpop.f32.mrb[0].mxu0
      %2587 = vmatprep.mubr.f32.mxu0 0.0
      %2588 = vmatmul.mubr.f32.gmra.mrb[0].mxu0 %v430
      %v2589 = vpop.f32.mrb[0].mxu0
      %v2590 = vadd.f32 0.0, %v2589
      %v2591 = vpop.f32.mrb[0].mxu0
      %2592 = vmatprep.mubr.f32.mxu0 0.0
      %2593 = vmatmul.mubr.f32.gmra.mrb[0].mxu0 %v432
      %v2594 = vpop.f32.mrb[0].mxu0
      %v2595 = vadd.f32 0.0, %v2594
      %v2596 = vpop.f32.mrb[0].mxu0
      %2597 = vmatprep.mubr.f32.mxu0 0.0
      %2598 = vmatmul.mubr.f32.gmra.mrb[0].mxu0 %v434
      %v2599 = vpop.f32.mrb[0].mxu0
      %v2600 = vadd.f32 0.0, %v2599
      %v2601 = vpop.f32.mrb[0].mxu0
      %2602 = vmatprep.mubr.f32.mxu0 0.0
      %2603 = vmatmul.mubr.f32.gmra.mrb[0].mxu0 %v436
      %v2604 = vpop.f32.mrb[0].mxu0
      %v2605 = vadd.f32 0.0, %v2604
      %v2606 = vpop.f32.mrb[0].mxu0
      %2607 = vmatprep.mubr.f32.mxu0 0.0
      %2608 = vmatmul.mubr.f32.gmra.mrb[0].mxu0 %v438
      %v2609 = vpop.f32.mrb[0].mxu0
      %v2610 = vadd.f32 0.0, %v2609
      %v2611 = vpop.f32.mrb[0].mxu0
      %2612 = vmatprep.mubr.f32.mxu0 0.0
      %2613 = vmatmul.mubr.f32.gmra.mrb[0].mxu0 %v440
      %v2614 = vpop.f32.mrb[0].mxu0
      %v2615 = vadd.f32 0.0, %v2614
      %v2616 = vpop.f32.mrb[0].mxu0
      %2617 = vmatprep.mubr.f32.mxu0 0.0
      %2618 = vmatmul.mubr.f32.gmra.mrb[0].mxu0 %v442
      %v2619 = vpop.f32.mrb[0].mxu0
      %v2620 = vadd.f32 0.0, %v2619
      %v2621 = vpop.f32.mrb[0].mxu0
      %2622 = vmatprep.mubr.f32.mxu0 0.0
      %2623 = vmatmul.mubr.f32.gmra.mrb[0].mxu0 %v444
      %v2624 = vpop.f32.mrb[0].mxu0
      %v2625 = vadd.f32 0.0, %v2624
      %v2626 = vpop.f32.mrb[0].mxu0
      %2627 = vmatprep.mubr.f32.mxu0 0.0
      %2628 = vmatmul.mubr.f32.gmra.mrb[0].mxu0 %v446
      %v2629 = vpop.f32.mrb[0].mxu0
      %v2630 = vadd.f32 0.0, %v2629
      %v2631 = vpop.f32.mrb[0].mxu0
      %2632 = vmatprep.mubr.f32.mxu0 0.0
      %2633 = vmatmul.mubr.f32.gmra.mrb[0].mxu0 %v448
      %v2634 = vpop.f32.mrb[0].mxu0
      %v2635 = vadd.f32 0.0, %v2634
      %v2636 = vpop.f32.mrb[0].mxu0
      %2637 = vmatprep.mubr.f32.mxu0 0.0
      %2638 = vmatmul.mubr.f32.gmra.mrb[0].mxu0 %v450
      %v2639 = vpop.f32.mrb[0].mxu0
      %v2640 = vadd.f32 0.0, %v2639
      %v2641 = vpop.f32.mrb[0].mxu0
      %2642 = vmatprep.mubr.f32.mxu0 0.0
      %2643 = vmatmul.mubr.f32.gmra.mrb[0].mxu0 %v452
      %v2644 = vpop.f32.mrb[0].mxu0
      %v2645 = vadd.f32 0.0, %v2644
      %v2646 = vpop.f32.mrb[0].mxu0
      %2647 = vmatprep.mubr.f32.mxu0 0.0
      %2648 = vmatmul.mubr.f32.gmra.mrb[0].mxu0 %v454
      %v2649 = vpop.f32.mrb[0].mxu0
      %v2650 = vadd.f32 0.0, %v2649
      %v2651 = vpop.f32.mrb[0].mxu0
      %2652 = vmatprep.mubr.f32.mxu0 0.0
      %2653 = vmatmul.mubr.f32.gmra.mrb[0].mxu0 %v456
      %v2654 = vpop.f32.mrb[0].mxu0
      %v2655 = vadd.f32 0.0, %v2654
      %v2656 = vpop.f32.mrb[0].mxu0
      %2657 = vmatprep.mubr.f32.mxu0 0.0
      %2658 = vmatmul.mubr.f32.gmra.mrb[0].mxu0 %v458
      %v2659 = vpop.f32.mrb[0].mxu0
      %v2660 = vadd.f32 0.0, %v2659
      %v2661 = vpop.f32.mrb[0].mxu0
      %2662 = vmatprep.mubr.f32.mxu0 0.0
      %2663 = vmatmul.mubr.f32.gmra.mrb[0].mxu0 %v460
      %v2664 = vpop.f32.mrb[0].mxu0
      %v2665 = vadd.f32 0.0, %v2664
      %v2666 = vpop.f32.mrb[0].mxu0
      %2667 = vmatprep.mubr.f32.mxu0 0.0
      %2668 = vmatmul.mubr.f32.gmra.mrb[0].mxu0 %v462
      %v2669 = vpop.f32.mrb[0].mxu0
      %v2670 = vadd.f32 0.0, %v2669
      %v2671 = vpop.f32.mrb[0].mxu0
      %2672 = vmatprep.mubr.f32.mxu0 0.0
      %2673 = vmatmul.mubr.f32.gmra.mrb[0].mxu0 %v464
      %v2674 = vpop.f32.mrb[0].mxu0
      %v2675 = vadd.f32 0.0, %v2674
      %v2676 = vpop.f32.mrb[0].mxu0
      %2677 = vmatprep.mubr.f32.mxu0 0.0
      %2678 = vmatmul.mubr.f32.gmra.mrb[0].mxu0 %v466
      %v2679 = vpop.f32.mrb[0].mxu0
      %v2680 = vadd.f32 0.0, %v2679
      %v2681 = vpop.f32.mrb[0].mxu0
      %2682 = vmatprep.mubr.f32.mxu0 0.0
      %2683 = vmatmul.mubr.f32.gmra.mrb[0].mxu0 %v468
      %v2684 = vpop.f32.mrb[0].mxu0
      %v2685 = vadd.f32 0.0, %v2684
      %v2686 = vpop.f32.mrb[0].mxu0
      %2687 = vmatprep.mubr.f32.mxu0 0.0
      %2688 = vmatmul.mubr.f32.gmra.mrb[0].mxu0 %v470
      %v2689 = vpop.f32.mrb[0].mxu0
      %v2690 = vadd.f32 0.0, %v2689
      %v2691 = vpop.f32.mrb[0].mxu0
      %2692 = vmatprep.mubr.f32.mxu0 0.0
      %2693 = vmatmul.mubr.f32.gmra.mrb[0].mxu0 %v472
      %v2694 = vpop.f32.mrb[0].mxu0
      %v2695 = vadd.f32 0.0, %v2694
      %v2696 = vpop.f32.mrb[0].mxu0
      %2697 = vmatprep.mubr.f32.mxu0 0.0
      %2698 = vmatmul.mubr.f32.gmra.mrb[0].mxu0 %v474
      %v2699 = vpop.f32.mrb[0].mxu0
      %v2700 = vadd.f32 0.0, %v2699
      %v2701 = vpop.f32.mrb[0].mxu0
      %2702 = vmatprep.mubr.f32.mxu0 0.0
      %2703 = vmatmul.mubr.f32.gmra.mrb[0].mxu0 %v1680
      %v2704 = vpop.f32.mrb[0].mxu0
      %v2705 = vadd.f32 0.0, %v2704
      %v2706 = vpop.f32.mrb[0].mxu0
      %2707 = vmatprep.mubr.f32.mxu0 0.0
      %2708 = vmatmul.mubr.f32.gmra.mrb[0].mxu0 %v1682
      %v2709 = vpop.f32.mrb[0].mxu0
      %v2710 = vadd.f32 0.0, %v2709
      %v2711 = vpop.f32.mrb[0].mxu0
      %2712 = vmatprep.mubr.f32.mxu0 0.0
      %2713 = vmatmul.mubr.f32.gmra.mrb[0].mxu0 %v2491
      %v2714 = vpop.f32.mrb[0].mxu0
      %v2715 = vadd.f32 0.0, %v2714
      %v2716 = vpop.f32.mrb[0].mxu0
      %2717 = vmatprep.mubr.f32.mxu0 0.0
      %2718 = vmatmul.mubr.f32.gmra.mrb[0].mxu0 %v2493
      %v2719 = vpop.f32.mrb[0].mxu0
      %v2720 = vadd.f32 0.0, %v2719
      %v2721 = vpop.f32.mrb[0].mxu0
      %2722 = vdwg.mxu0
      %v2723 = vadd.f32 %v2451, %v2565
      %v2724 = vadd.f32 %v2452, %v2570
      %v2725 = vadd.f32 %v2453, %v2575
      %v2726 = vadd.f32 %v2454, %v2580
      %v2727 = vadd.f32 %v2455, %v2585
      %v2728 = vadd.f32 %v2456, %v2590
      %v2729 = vadd.f32 %v2457, %v2595
      %v2730 = vadd.f32 %v2458, %v2600
      %v2731 = vadd.f32 %v2459, %v2605
      %v2732 = vadd.f32 %v2460, %v2610
      %v2733 = vadd.f32 %v2461, %v2615
      %v2734 = vadd.f32 %v2462, %v2620
      %v2735 = vadd.f32 %v2463, %v2625
      %v2736 = vadd.f32 %v2464, %v2630
      %v2737 = vadd.f32 %v2465, %v2635
      %v2738 = vadd.f32 %v2466, %v2640
      %v2739 = vadd.f32 %v2467, %v2645
      %v2740 = vadd.f32 %v2468, %v2650
      %v2741 = vadd.f32 %v2469, %v2655
      %v2742 = vadd.f32 %v2470, %v2660
      %v2743 = vadd.f32 %v2471, %v2665
      %v2744 = vadd.f32 %v2472, %v2670
      %v2745 = vadd.f32 %v2473, %v2675
      %v2746 = vadd.f32 %v2474, %v2680
      %v2747 = vadd.f32 %v2475, %v2685
      %v2748 = vadd.f32 %v2476, %v2690
      %v2749 = vadd.f32 %v2477, %v2695
      %v2750 = vadd.f32 %v2478, %v2700
      %v2751 = vadd.f32 %v2479, %v2705
      %v2752 = vadd.f32 %v2480, %v2710
      %v2753 = vadd.f32 %v2481, %v2715
      %v2754 = vadd.f32 %v2482, %v2720
      %v2755 = vrot.slane %v276, 2
      %v2756 = vrot.slane %v277, 2
      %v2757 = vsel %vm997, %v2755, %v2756
      %v2758 = vrot.slane %v278, 2
      %v2759 = vsel %vm997, %v2756, %v2758
      %s2760 = scalar_lea.vmem %s1, 32
      %v2761 = vld [vmem:[%s2760] sm:$0x7]
      %v2762 = vsel %vm411, %v2757, 0
      %v2764 = vsel %vm411, %v2759, 0
      %v2767 = vsel %vm476, %v2761, 0
      %2769 = vmatprep.subr.mxu0 0.0
      %2770 = vmatpush1.msra.mxu0 %v2767
      %2771 = vmatprep.subr.mxu0 0.0
      %2772 = vmatpush1.msra.mxu0 0.0
      %2773 = vmatprep.subr.mxu0 0.0
      %2774 = vmatpush1.msra.mxu0 0.0
      %2775 = vmatprep.subr.mxu0 0.0
      %2776 = vmatpush1.msra.mxu0 0.0
      %2777 = vmatprep.subr.mxu0 0.0
      %2778 = vmatpush1.msra.mxu0 0.0
      %2779 = vmatprep.subr.mxu0 0.0
      %2780 = vmatpush1.msra.mxu0 0.0
      %2781 = vmatprep.subr.mxu0 0.0
      %2782 = vmatpush1.msra.mxu0 0.0
      %2783 = vmatprep.subr.mxu0 0.0
      %2784 = vmatpush1.msra.mxu0 0.0
      %2785 = vmatprep.subr.mxu0 0.0
      %2786 = vmatpush1.msra.mxu0 0.0
      %2787 = vmatprep.subr.mxu0 0.0
      %2788 = vmatpush1.msra.mxu0 0.0
      %2789 = vmatprep.subr.mxu0 0.0
      %2790 = vmatpush1.msra.mxu0 0.0
      %2791 = vmatprep.subr.mxu0 0.0
      %2792 = vmatpush1.msra.mxu0 0.0
      %2793 = vmatprep.subr.mxu0 0.0
      %2794 = vmatpush1.msra.mxu0 0.0
      %2795 = vmatprep.subr.mxu0 0.0
      %2796 = vmatpush1.msra.mxu0 0.0
      %2797 = vmatprep.subr.mxu0 0.0
      %2798 = vmatpush1.msra.mxu0 0.0
      %2799 = vmatprep.subr.mxu0 0.0
      %2800 = vmatpush1.msra.mxu0 0.0
      %2801 = vmatprep.subr.mxu0 0.0
      %2802 = vmatpush1.msra.mxu0 0.0
      %2803 = vmatprep.subr.mxu0 0.0
      %2804 = vmatpush1.msra.mxu0 0.0
      %2805 = vmatprep.subr.mxu0 0.0
      %2806 = vmatpush1.msra.mxu0 0.0
      %2807 = vmatprep.subr.mxu0 0.0
      %2808 = vmatpush1.msra.mxu0 0.0
      %2809 = vmatprep.subr.mxu0 0.0
      %2810 = vmatpush1.msra.mxu0 0.0
      %2811 = vmatprep.subr.mxu0 0.0
      %2812 = vmatpush1.msra.mxu0 0.0
      %2813 = vmatprep.subr.mxu0 0.0
      %2814 = vmatpush1.msra.mxu0 0.0
      %2815 = vmatprep.subr.mxu0 0.0
      %2816 = vmatpush1.msra.mxu0 0.0
      %2817 = vmatprep.subr.mxu0 0.0
      %2818 = vmatpush1.msra.mxu0 0.0
      %2819 = vmatprep.subr.mxu0 0.0
      %2820 = vmatpush1.msra.mxu0 0.0
      %2821 = vmatprep.subr.mxu0 0.0
      %2822 = vmatpush1.msra.mxu0 0.0
      %2823 = vmatprep.subr.mxu0 0.0
      %2824 = vmatpush1.msra.mxu0 0.0
      %2825 = vmatprep.subr.mxu0 0.0
      %2826 = vmatpush1.msra.mxu0 0.0
      %2827 = vmatprep.subr.mxu0 0.0
      %2828 = vmatpush1.msra.mxu0 0.0
      %2829 = vmatprep.subr.mxu0 0.0
      %2830 = vmatpush1.msra.mxu0 0.0
      %2831 = vmatprep.subr.mxu0 0.0
      %2832 = vmatpush1.msra.mxu0 0.0
      %2833 = vmatprep.mubr.f32.mxu0 0.0
      %2834 = vmatmul.mubr.f32.gmra.mrb[0].mxu0 %v1088
      %v2835 = vpop.f32.mrb[0].mxu0
      %v2836 = vadd.f32 0.0, %v2835
      %v2837 = vpop.f32.mrb[0].mxu0
      %2838 = vmatprep.mubr.f32.mxu0 0.0
      %2839 = vmatmul.mubr.f32.gmra.mrb[0].mxu0 %v1090
      %v2840 = vpop.f32.mrb[0].mxu0
      %v2841 = vadd.f32 0.0, %v2840
      %v2842 = vpop.f32.mrb[0].mxu0
      %2843 = vmatprep.mubr.f32.mxu0 0.0
      %2844 = vmatmul.mubr.f32.gmra.mrb[0].mxu0 %v1092
      %v2845 = vpop.f32.mrb[0].mxu0
      %v2846 = vadd.f32 0.0, %v2845
      %v2847 = vpop.f32.mrb[0].mxu0
      %2848 = vmatprep.mubr.f32.mxu0 0.0
      %2849 = vmatmul.mubr.f32.gmra.mrb[0].mxu0 %v1094
      %v2850 = vpop.f32.mrb[0].mxu0
      %v2851 = vadd.f32 0.0, %v2850
      %v2852 = vpop.f32.mrb[0].mxu0
      %2853 = vmatprep.mubr.f32.mxu0 0.0
      %2854 = vmatmul.mubr.f32.gmra.mrb[0].mxu0 %v1096
      %v2855 = vpop.f32.mrb[0].mxu0
      %v2856 = vadd.f32 0.0, %v2855
      %v2857 = vpop.f32.mrb[0].mxu0
      %2858 = vmatprep.mubr.f32.mxu0 0.0
      %2859 = vmatmul.mubr.f32.gmra.mrb[0].mxu0 %v1098
      %v2860 = vpop.f32.mrb[0].mxu0
      %v2861 = vadd.f32 0.0, %v2860
      %v2862 = vpop.f32.mrb[0].mxu0
      %2863 = vmatprep.mubr.f32.mxu0 0.0
      %2864 = vmatmul.mubr.f32.gmra.mrb[0].mxu0 %v1100
      %v2865 = vpop.f32.mrb[0].mxu0
      %v2866 = vadd.f32 0.0, %v2865
      %v2867 = vpop.f32.mrb[0].mxu0
      %2868 = vmatprep.mubr.f32.mxu0 0.0
      %2869 = vmatmul.mubr.f32.gmra.mrb[0].mxu0 %v1102
      %v2870 = vpop.f32.mrb[0].mxu0
      %v2871 = vadd.f32 0.0, %v2870
      %v2872 = vpop.f32.mrb[0].mxu0
      %2873 = vmatprep.mubr.f32.mxu0 0.0
      %2874 = vmatmul.mubr.f32.gmra.mrb[0].mxu0 %v1104
      %v2875 = vpop.f32.mrb[0].mxu0
      %v2876 = vadd.f32 0.0, %v2875
      %v2877 = vpop.f32.mrb[0].mxu0
      %2878 = vmatprep.mubr.f32.mxu0 0.0
      %2879 = vmatmul.mubr.f32.gmra.mrb[0].mxu0 %v1106
      %v2880 = vpop.f32.mrb[0].mxu0
      %v2881 = vadd.f32 0.0, %v2880
      %v2882 = vpop.f32.mrb[0].mxu0
      %2883 = vmatprep.mubr.f32.mxu0 0.0
      %2884 = vmatmul.mubr.f32.gmra.mrb[0].mxu0 %v1108
      %v2885 = vpop.f32.mrb[0].mxu0
      %v2886 = vadd.f32 0.0, %v2885
      %v2887 = vpop.f32.mrb[0].mxu0
      %2888 = vmatprep.mubr.f32.mxu0 0.0
      %2889 = vmatmul.mubr.f32.gmra.mrb[0].mxu0 %v1110
      %v2890 = vpop.f32.mrb[0].mxu0
      %v2891 = vadd.f32 0.0, %v2890
      %v2892 = vpop.f32.mrb[0].mxu0
      %2893 = vmatprep.mubr.f32.mxu0 0.0
      %2894 = vmatmul.mubr.f32.gmra.mrb[0].mxu0 %v1112
      %v2895 = vpop.f32.mrb[0].mxu0
      %v2896 = vadd.f32 0.0, %v2895
      %v2897 = vpop.f32.mrb[0].mxu0
      %2898 = vmatprep.mubr.f32.mxu0 0.0
      %2899 = vmatmul.mubr.f32.gmra.mrb[0].mxu0 %v1114
      %v2900 = vpop.f32.mrb[0].mxu0
      %v2901 = vadd.f32 0.0, %v2900
      %v2902 = vpop.f32.mrb[0].mxu0
      %2903 = vmatprep.mubr.f32.mxu0 0.0
      %2904 = vmatmul.mubr.f32.gmra.mrb[0].mxu0 %v1116
      %v2905 = vpop.f32.mrb[0].mxu0
      %v2906 = vadd.f32 0.0, %v2905
      %v2907 = vpop.f32.mrb[0].mxu0
      %2908 = vmatprep.mubr.f32.mxu0 0.0
      %2909 = vmatmul.mubr.f32.gmra.mrb[0].mxu0 %v1118
      %v2910 = vpop.f32.mrb[0].mxu0
      %v2911 = vadd.f32 0.0, %v2910
      %v2912 = vpop.f32.mrb[0].mxu0
      %2913 = vmatprep.mubr.f32.mxu0 0.0
      %2914 = vmatmul.mubr.f32.gmra.mrb[0].mxu0 %v1120
      %v2915 = vpop.f32.mrb[0].mxu0
      %v2916 = vadd.f32 0.0, %v2915
      %v2917 = vpop.f32.mrb[0].mxu0
      %2918 = vmatprep.mubr.f32.mxu0 0.0
      %2919 = vmatmul.mubr.f32.gmra.mrb[0].mxu0 %v1122
      %v2920 = vpop.f32.mrb[0].mxu0
      %v2921 = vadd.f32 0.0, %v2920
      %v2922 = vpop.f32.mrb[0].mxu0
      %2923 = vmatprep.mubr.f32.mxu0 0.0
      %2924 = vmatmul.mubr.f32.gmra.mrb[0].mxu0 %v1124
      %v2925 = vpop.f32.mrb[0].mxu0
      %v2926 = vadd.f32 0.0, %v2925
      %v2927 = vpop.f32.mrb[0].mxu0
      %2928 = vmatprep.mubr.f32.mxu0 0.0
      %2929 = vmatmul.mubr.f32.gmra.mrb[0].mxu0 %v1126
      %v2930 = vpop.f32.mrb[0].mxu0
      %v2931 = vadd.f32 0.0, %v2930
      %v2932 = vpop.f32.mrb[0].mxu0
      %2933 = vmatprep.mubr.f32.mxu0 0.0
      %2934 = vmatmul.mubr.f32.gmra.mrb[0].mxu0 %v1128
      %v2935 = vpop.f32.mrb[0].mxu0
      %v2936 = vadd.f32 0.0, %v2935
      %v2937 = vpop.f32.mrb[0].mxu0
      %2938 = vmatprep.mubr.f32.mxu0 0.0
      %2939 = vmatmul.mubr.f32.gmra.mrb[0].mxu0 %v1130
      %v2940 = vpop.f32.mrb[0].mxu0
      %v2941 = vadd.f32 0.0, %v2940
      %v2942 = vpop.f32.mrb[0].mxu0
      %2943 = vmatprep.mubr.f32.mxu0 0.0
      %2944 = vmatmul.mubr.f32.gmra.mrb[0].mxu0 %v1132
      %v2945 = vpop.f32.mrb[0].mxu0
      %v2946 = vadd.f32 0.0, %v2945
      %v2947 = vpop.f32.mrb[0].mxu0
      %2948 = vmatprep.mubr.f32.mxu0 0.0
      %2949 = vmatmul.mubr.f32.gmra.mrb[0].mxu0 %v1134
      %v2950 = vpop.f32.mrb[0].mxu0
      %v2951 = vadd.f32 0.0, %v2950
      %v2952 = vpop.f32.mrb[0].mxu0
      %2953 = vmatprep.mubr.f32.mxu0 0.0
      %2954 = vmatmul.mubr.f32.gmra.mrb[0].mxu0 %v1136
      %v2955 = vpop.f32.mrb[0].mxu0
      %v2956 = vadd.f32 0.0, %v2955
      %v2957 = vpop.f32.mrb[0].mxu0
      %2958 = vmatprep.mubr.f32.mxu0 0.0
      %2959 = vmatmul.mubr.f32.gmra.mrb[0].mxu0 %v1138
      %v2960 = vpop.f32.mrb[0].mxu0
      %v2961 = vadd.f32 0.0, %v2960
      %v2962 = vpop.f32.mrb[0].mxu0
      %2963 = vmatprep.mubr.f32.mxu0 0.0
      %2964 = vmatmul.mubr.f32.gmra.mrb[0].mxu0 %v1140
      %v2965 = vpop.f32.mrb[0].mxu0
      %v2966 = vadd.f32 0.0, %v2965
      %v2967 = vpop.f32.mrb[0].mxu0
      %2968 = vmatprep.mubr.f32.mxu0 0.0
      %2969 = vmatmul.mubr.f32.gmra.mrb[0].mxu0 %v1142
      %v2970 = vpop.f32.mrb[0].mxu0
      %v2971 = vadd.f32 0.0, %v2970
      %v2972 = vpop.f32.mrb[0].mxu0
      %2973 = vmatprep.mubr.f32.mxu0 0.0
      %2974 = vmatmul.mubr.f32.gmra.mrb[0].mxu0 %v1951
      %v2975 = vpop.f32.mrb[0].mxu0
      %v2976 = vadd.f32 0.0, %v2975
      %v2977 = vpop.f32.mrb[0].mxu0
      %2978 = vmatprep.mubr.f32.mxu0 0.0
      %2979 = vmatmul.mubr.f32.gmra.mrb[0].mxu0 %v1953
      %v2980 = vpop.f32.mrb[0].mxu0
      %v2981 = vadd.f32 0.0, %v2980
      %v2982 = vpop.f32.mrb[0].mxu0
      %2983 = vmatprep.mubr.f32.mxu0 0.0
      %2984 = vmatmul.mubr.f32.gmra.mrb[0].mxu0 %v2762
      %v2985 = vpop.f32.mrb[0].mxu0
      %v2986 = vadd.f32 0.0, %v2985
      %v2987 = vpop.f32.mrb[0].mxu0
      %2988 = vmatprep.mubr.f32.mxu0 0.0
      %2989 = vmatmul.mubr.f32.gmra.mrb[0].mxu0 %v2764
      %v2990 = vpop.f32.mrb[0].mxu0
      %v2991 = vadd.f32 0.0, %v2990
      %v2992 = vpop.f32.mrb[0].mxu0
      %2993 = vdwg.mxu0
      %v2994 = vadd.f32 %v2723, %v2836
      %v2995 = vadd.f32 %v2724, %v2841
      %v2996 = vadd.f32 %v2725, %v2846
      %v2997 = vadd.f32 %v2726, %v2851
      %v2998 = vadd.f32 %v2727, %v2856
      %v2999 = vadd.f32 %v2728, %v2861
      %v3000 = vadd.f32 %v2729, %v2866
      %v3001 = vadd.f32 %v2730, %v2871
      %v3002 = vadd.f32 %v2731, %v2876
      %v3003 = vadd.f32 %v2732, %v2881
      %v3004 = vadd.f32 %v2733, %v2886
      %v3005 = vadd.f32 %v2734, %v2891
      %v3006 = vadd.f32 %v2735, %v2896
      %v3007 = vadd.f32 %v2736, %v2901
      %v3008 = vadd.f32 %v2737, %v2906
      %v3009 = vadd.f32 %v2738, %v2911
      %v3010 = vadd.f32 %v2739, %v2916
      %v3011 = vadd.f32 %v2740, %v2921
      %v3012 = vadd.f32 %v2741, %v2926
      %v3013 = vadd.f32 %v2742, %v2931
      %v3014 = vadd.f32 %v2743, %v2936
      %v3015 = vadd.f32 %v2744, %v2941
      %v3016 = vadd.f32 %v2745, %v2946
      %v3017 = vadd.f32 %v2746, %v2951
      %v3018 = vadd.f32 %v2747, %v2956
      %v3019 = vadd.f32 %v2748, %v2961
      %v3020 = vadd.f32 %v2749, %v2966
      %v3021 = vadd.f32 %v2750, %v2971
      %v3022 = vadd.f32 %v2751, %v2976
      %v3023 = vadd.f32 %v2752, %v2981
      %v3024 = vadd.f32 %v2753, %v2986
      %v3025 = vadd.f32 %v2754, %v2991
      %v3026 = vld [vmem:[%s2] sm:$0x1]
      %v3028 = vlaneseq
      %v3029 = vshrl.u32 %v3028, 7
      %v3030 = vsub.s32 0, %v3029
      %v3031 = vrot.slane %v3026, %v3030
      %v3033 = vadd.f32 %v2994, %v3031
      %v3034 = vadd.f32 %v2995, %v3031
      %v3035 = vadd.f32 %v2996, %v3031
      %v3036 = vadd.f32 %v2997, %v3031
      %v3037 = vadd.f32 %v2998, %v3031
      %v3038 = vadd.f32 %v2999, %v3031
      %v3039 = vadd.f32 %v3000, %v3031
      %v3040 = vadd.f32 %v3001, %v3031
      %v3041 = vadd.f32 %v3002, %v3031
      %v3042 = vadd.f32 %v3003, %v3031
      %v3043 = vadd.f32 %v3004, %v3031
      %v3044 = vadd.f32 %v3005, %v3031
      %v3045 = vadd.f32 %v3006, %v3031
      %v3046 = vadd.f32 %v3007, %v3031
      %v3047 = vadd.f32 %v3008, %v3031
      %v3048 = vadd.f32 %v3009, %v3031
      %v3049 = vadd.f32 %v3010, %v3031
      %v3050 = vadd.f32 %v3011, %v3031
      %v3051 = vadd.f32 %v3012, %v3031
      %v3052 = vadd.f32 %v3013, %v3031
      %v3053 = vadd.f32 %v3014, %v3031
      %v3054 = vadd.f32 %v3015, %v3031
      %v3055 = vadd.f32 %v3016, %v3031
      %v3056 = vadd.f32 %v3017, %v3031
      %v3057 = vadd.f32 %v3018, %v3031
      %v3058 = vadd.f32 %v3019, %v3031
      %v3059 = vadd.f32 %v3020, %v3031
      %v3060 = vadd.f32 %v3021, %v3031
      %v3061 = vadd.f32 %v3022, %v3031
      %v3062 = vadd.f32 %v3023, %v3031
      %v3063 = vadd.f32 %v3024, %v3031
      %v3064 = vadd.f32 %v3025, %v3031
      %v3065 = vmax.f32 %v3033, 0.0
      %v3066 = vmax.f32 %v3034, 0.0
      %v3067 = vmax.f32 %v3035, 0.0
      %v3068 = vmax.f32 %v3036, 0.0
      %v3069 = vmax.f32 %v3037, 0.0
      %v3070 = vmax.f32 %v3038, 0.0
      %v3071 = vmax.f32 %v3039, 0.0
      %v3072 = vmax.f32 %v3040, 0.0
      %v3073 = vmax.f32 %v3041, 0.0
      %v3074 = vmax.f32 %v3042, 0.0
      %v3075 = vmax.f32 %v3043, 0.0
      %v3076 = vmax.f32 %v3044, 0.0
      %v3077 = vmax.f32 %v3045, 0.0
      %v3078 = vmax.f32 %v3046, 0.0
      %v3079 = vmax.f32 %v3047, 0.0
      %v3080 = vmax.f32 %v3048, 0.0
      %v3081 = vmax.f32 %v3049, 0.0
      %v3082 = vmax.f32 %v3050, 0.0
      %v3083 = vmax.f32 %v3051, 0.0
      %v3084 = vmax.f32 %v3052, 0.0
      %v3085 = vmax.f32 %v3053, 0.0
      %v3086 = vmax.f32 %v3054, 0.0
      %v3087 = vmax.f32 %v3055, 0.0
      %v3088 = vmax.f32 %v3056, 0.0
      %v3089 = vmax.f32 %v3057, 0.0
      %v3090 = vmax.f32 %v3058, 0.0
      %v3091 = vmax.f32 %v3059, 0.0
      %v3092 = vmax.f32 %v3060, 0.0
      %v3093 = vmax.f32 %v3061, 0.0
      %v3094 = vmax.f32 %v3062, 0.0
      %v3095 = vmax.f32 %v3063, 0.0
      %v3096 = vmax.f32 %v3064, 0.0
      %v3097 = vpack.c.bf16 %v3066, %v3065
      %v3098 = vpack.c.bf16 %v3068, %v3067
      %v3099 = vpack.c.bf16 %v3070, %v3069
      %v3100 = vpack.c.bf16 %v3072, %v3071
      %v3101 = vpack.c.bf16 %v3074, %v3073
      %v3102 = vpack.c.bf16 %v3076, %v3075
      %v3103 = vpack.c.bf16 %v3078, %v3077
      %v3104 = vpack.c.bf16 %v3080, %v3079
      %v3105 = vpack.c.bf16 %v3082, %v3081
      %v3106 = vpack.c.bf16 %v3084, %v3083
      %v3107 = vpack.c.bf16 %v3086, %v3085
      %v3108 = vpack.c.bf16 %v3088, %v3087
      %v3109 = vpack.c.bf16 %v3090, %v3089
      %v3110 = vpack.c.bf16 %v3092, %v3091
      %v3111 = vpack.c.bf16 %v3094, %v3093
      %v3112 = vpack.c.bf16 %v3096, %v3095
      %v3129 = vunpack.c.l.b16 %v3097
      %v3130 = vunpack.c.h.b16 %v3097
      %v3131 = vunpack.c.l.b16 %v3098
      %v3132 = vunpack.c.h.b16 %v3098
      %v3133 = vunpack.c.l.b16 %v3099
      %v3134 = vunpack.c.h.b16 %v3099
      %v3135 = vunpack.c.l.b16 %v3100
      %v3136 = vunpack.c.h.b16 %v3100
      %v3137 = vunpack.c.l.b16 %v3101
      %v3138 = vunpack.c.h.b16 %v3101
      %v3139 = vunpack.c.l.b16 %v3102
      %v3140 = vunpack.c.h.b16 %v3102
      %v3141 = vunpack.c.l.b16 %v3103
      %v3142 = vunpack.c.h.b16 %v3103
      %v3143 = vunpack.c.l.b16 %v3104
      %v3144 = vunpack.c.h.b16 %v3104
      %v3145 = vunpack.c.l.b16 %v3105
      %v3146 = vunpack.c.h.b16 %v3105
      %v3147 = vunpack.c.l.b16 %v3106
      %v3148 = vunpack.c.h.b16 %v3106
      %v3149 = vunpack.c.l.b16 %v3107
      %v3150 = vunpack.c.h.b16 %v3107
      %v3151 = vunpack.c.l.b16 %v3108
      %v3152 = vunpack.c.h.b16 %v3108
      %v3153 = vunpack.c.l.b16 %v3109
      %v3154 = vunpack.c.h.b16 %v3109
      %v3155 = vunpack.c.l.b16 %v3110
      %v3156 = vunpack.c.h.b16 %v3110
      %v3157 = vunpack.c.l.b16 %v3111
      %v3158 = vunpack.c.h.b16 %v3111
      %v3159 = vunpack.c.l.b16 %v3112
      %v3160 = vunpack.c.h.b16 %v3112
      %v3161 = vpack.c.b16 %v3129, %v3129
      %v3162 = vpack.c.b16 %v3130, %v3130
      %v3163 = vpack.c.b16 %v3131, %v3131
      %v3164 = vpack.c.b16 %v3132, %v3132
      %v3165 = vpack.c.b16 %v3133, %v3133
      %v3166 = vpack.c.b16 %v3134, %v3134
      %v3167 = vpack.c.b16 %v3135, %v3135
      %v3168 = vpack.c.b16 %v3136, %v3136
      %v3169 = vpack.c.b16 %v3137, %v3137
      %v3170 = vpack.c.b16 %v3138, %v3138
      %v3171 = vpack.c.b16 %v3139, %v3139
      %v3172 = vpack.c.b16 %v3140, %v3140
      %v3173 = vpack.c.b16 %v3141, %v3141
      %v3174 = vpack.c.b16 %v3142, %v3142
      %v3175 = vpack.c.b16 %v3143, %v3143
      %v3176 = vpack.c.b16 %v3144, %v3144
      %v3177 = vpack.c.b16 %v3145, %v3145
      %v3178 = vpack.c.b16 %v3146, %v3146
      %v3179 = vpack.c.b16 %v3147, %v3147
      %v3180 = vpack.c.b16 %v3148, %v3148
      %v3181 = vpack.c.b16 %v3149, %v3149
      %v3182 = vpack.c.b16 %v3150, %v3150
      %v3183 = vpack.c.b16 %v3151, %v3151
      %v3184 = vpack.c.b16 %v3152, %v3152
      %v3185 = vpack.c.b16 %v3153, %v3153
      %v3186 = vpack.c.b16 %v3154, %v3154
      %v3187 = vpack.c.b16 %v3155, %v3155
      %v3188 = vpack.c.b16 %v3156, %v3156
      %v3189 = vpack.c.b16 %v3157, %v3157
      %v3190 = vpack.c.b16 %v3158, %v3158
      %v3191 = vpack.c.b16 %v3159, %v3159
      %v3192 = vpack.c.b16 %v3160, %v3160
      %vm3225 = vcmask 60416
      %3226 = vst.msk [vmem:[%s170] sm:$0xf] %vm3225, %v3161
      %3227 = vst.msk [vmem:[%s170 + $0x4] sm:$0xf] %vm3225, %v3162
      %3228 = vst.msk [vmem:[%s170 + $0x8] sm:$0xf] %vm3225, %v3163
      %3229 = vst.msk [vmem:[%s170 + $0xc] sm:$0xf] %vm3225, %v3164
      %3230 = vst.msk [vmem:[%s170 + $0x10] sm:$0xf] %vm3225, %v3165
      %3231 = vst.msk [vmem:[%s170 + $0x14] sm:$0xf] %vm3225, %v3166
      %3232 = vst.msk [vmem:[%s170 + $0x18] sm:$0xf] %vm3225, %v3167
      %3233 = vst.msk [vmem:[%s170 + $0x1c] sm:$0xf] %vm3225, %v3168
      %3234 = vst.msk [vmem:[%s170 + $0x20] sm:$0xf] %vm3225, %v3169
      %3235 = vst.msk [vmem:[%s170 + $0x24] sm:$0xf] %vm3225, %v3170
      %3236 = vst.msk [vmem:[%s170 + $0x28] sm:$0xf] %vm3225, %v3171
      %3237 = vst.msk [vmem:[%s170 + $0x2c] sm:$0xf] %vm3225, %v3172
      %3238 = vst.msk [vmem:[%s170 + $0x30] sm:$0xf] %vm3225, %v3173
      %3239 = vst.msk [vmem:[%s170 + $0x34] sm:$0xf] %vm3225, %v3174
      %3240 = vst.msk [vmem:[%s170 + $0x38] sm:$0xf] %vm3225, %v3175
      %3241 = vst.msk [vmem:[%s170 + $0x3c] sm:$0xf] %vm3225, %v3176
      %3242 = vst.msk [vmem:[%s170 + $0x40] sm:$0xf] %vm3225, %v3177
      %3243 = vst.msk [vmem:[%s170 + $0x44] sm:$0xf] %vm3225, %v3178
      %3244 = vst.msk [vmem:[%s170 + $0x48] sm:$0xf] %vm3225, %v3179
      %3245 = vst.msk [vmem:[%s170 + $0x4c] sm:$0xf] %vm3225, %v3180
      %3246 = vst.msk [vmem:[%s170 + $0x50] sm:$0xf] %vm3225, %v3181
      %3247 = vst.msk [vmem:[%s170 + $0x54] sm:$0xf] %vm3225, %v3182
      %3248 = vst.msk [vmem:[%s170 + $0x58] sm:$0xf] %vm3225, %v3183
      %3249 = vst.msk [vmem:[%s170 + $0x5c] sm:$0xf] %vm3225, %v3184
      %3250 = vst.msk [vmem:[%s170 + $0x60] sm:$0xf] %vm3225, %v3185
      %3251 = vst.msk [vmem:[%s170 + $0x64] sm:$0xf] %vm3225, %v3186
      %3252 = vst.msk [vmem:[%s170 + $0x68] sm:$0xf] %vm3225, %v3187
      %3253 = vst.msk [vmem:[%s170 + $0x6c] sm:$0xf] %vm3225, %v3188
      %3254 = vst.msk [vmem:[%s170 + $0x70] sm:$0xf] %vm3225, %v3189
      %3255 = vst.msk [vmem:[%s170 + $0x74] sm:$0xf] %vm3225, %v3190
      %3256 = vst.msk [vmem:[%s170 + $0x78] sm:$0xf] %vm3225, %v3191
      %3257 = vst.msk [vmem:[%s170 + $0x7c] sm:$0xf] %vm3225, %v3192
      %p3258 = scmp.lt.s32.totalorder %s14, 3
      %s3259 = scalar_select %p3258, %s14, 3
      %s3260 = smul.addr %s3259, 32
      %s3261 = smul.addr %s3260, 4
      %s3262 = scalar_lea.vmem %s3, %s3261
      // Predicated region
      $region33: #{seg_net_forward.7} parent=31 // pred_check
        %p3263 = pneg %p100
      $region34: #{seg_net_forward.7} parent=31 // pred_check_branch
        %3265 = sbr.rel (%p3263) target = $region36
      $region35: #{seg_net_forward.7} parent=31 // pred_region
        _
      $region36: #{seg_net_forward.7} parent=31 // pred_fallthru
        _
    $region32: #{seg_net_forward.7} parent=5 // pred_fallthru
      _
    %p3266 = scmp.le.s32.totalorder 2, %s9
    // Predicated region
    $region37: #{seg_net_forward.7} parent=5 // pred_check
      %p3267 = pneg %p3266
    $region38: #{seg_net_forward.7} parent=5 // pred_check_branch
      %3269 = sbr.rel (%p3267) target = $region40
    $region39: #{seg_net_forward.7} parent=5 // pred_region
      %s3270 = ssub.s32 %s9, 2
      // Predicated region
      $region41: #{seg_net_forward.7} parent=39 // pred_check
        %p3271 = pneg %p106
      $region42: #{seg_net_forward.7} parent=39 // pred_check_branch
        %3273 = sbr.rel (%p3271) target = $region44
      $region43: #{seg_net_forward.7} parent=39 // pred_region
        %p3274 = scmp.lt.s32.totalorder %s15, 3
        %s3275 = scalar_select %p3274, %s15, 3
        %s3276 = smul.addr %s3275, 32
        %s3277 = smul.addr %s3276, 4
        %s3278 = scalar_lea.vmem %s3, %s3277
      $region44: #{seg_net_forward.7} parent=39 // pred_fallthru
        _
    $region40: #{seg_net_forward.7} parent=5 // pred_fallthru
      _
  $region6: #{seg_net_forward.7} parent=0 // loop_footer
    %s13 = sadd.s32 1, %s9
  $region7: #{seg_net_forward.7} parent=0 // loop_footer_branch
    %8 = sbr.rel target = $region3
  $region8: #{seg_net_forward.7} parent=0 // loop_exit
    _

// kernel: seg_net_forward.9
$region0: #{seg_net_forward.9}
  #allocation0 [shape = 'u32[]', space=smem, size = 0x4, offset = 0x4, fixed_abs, tag = 'smem constant byte address 0x4 - core index']
  #allocation1 [shape = 'u32[144,128]{1,0:T(1,128)}', space=vmem, size = 0x12000, scoped, tag = 'internal scratch']
  %s0 = inlined_call_operand.vmem [shape: bf16[4,4,5,5,16], index: 0, kind: input, shape index: {}]
  %s1 = inlined_call_operand.vmem [shape: f32[9,16,32], index: 1, kind: input, shape index: {}]
  %s2 = inlined_call_operand.vmem [shape: f32[1,32], index: 2, kind: input, shape index: {}]
  %s3 = inlined_call_operand.vmem [shape: bf16[4,16,32], index: 3, kind: output, shape index: {}]
  %s4 = sld [smem:[#allocation0]]
  $region45: #{seg_net_forward.9} parent=0
    _
  %s6 = ssub.s32 1, %s4
  %s7 = scalar_select 0, %s6, %s4
  loop: start=0, step=1, limit=6
  $region2: #{seg_net_forward.9} parent=0 // loop_pre_header
    _
  $region3: #{seg_net_forward.9} parent=0 // loop_header
    %s9 = sphi 0, %s13
    %p10 = scmp.ge.s32.totalorder %s9, 6
    %s19 = sphi 0, %s21
    %s22 = sphi 0, %s19
    %s23 = sphi 0, %s22
    %s39 = sphi 0, %s23
    %s43 = sphi 0, %s43
    %s45 = sphi 0, %s43
    %s46 = sphi 0, %s45
    %s60 = sphi 0, %s46
    %s64 = sphi 0, %s64
    %s66 = sphi 0, %s64
    %s67 = sphi 0, %s66
    %s81 = sphi 0, %s67
    %s87 = sphi 0, %s89
    %s90 = sphi 0, %s87
    %s91 = sphi 0, %s90
    %s107 = sphi 0, %s91
  $region4: #{seg_net_forward.9} parent=0 // loop_header_branch
    %12 = sbr.rel (%p10) target = $region8
  $region5: #{seg_net_forward.9} parent=0 // loop_body
    %s14 = ssub.s32 %s9, 1
    %s15 = ssub.s32 %s9, 2
    %s16 = sadd.s32 %s9, 1
    %s17 = ssub.s32 %s9, %s16
    %p18 = scmp.eq.s32.totalorder %s17, 0
    %s20 = sadd.s32 %s19, 1
    %s21 = scalar_select %p18, %s19, %s20
    %p24 = pneg %p18
    %p25 = scmp.eq.s32.totalorder %s9, 3
    %p26 = por %p24, %p25
    %p27 = scmp.ne.s32.totalorder %s19, %s22
    %p28 = scmp.eq.s32.totalorder %s9, 0
    %p29 = por %p27, %p28
    %p30 = scmp.ne.s32.totalorder %s19, %s22
    %p31 = scmp.eq.s32.totalorder %s14, 3
    %p32 = por %p30, %p31
    %p33 = scmp.ne.s32.totalorder %s22, %s23
    %p34 = scmp.eq.s32.totalorder %s14, 0
    %p35 = por %p33, %p34
    %p36 = scmp.ne.s32.totalorder %s22, %s23
    %p37 = scmp.eq.s32.totalorder %s15, 3
    %p38 = por %p36, %p37
    %p40 = scmp.ne.s32.totalorder %s23, %s39
    %p41 = scmp.eq.s32.totalorder %s15, 0
    %p42 = por %p40, %p41
    %s44 = sadd.s32 %s43, 1
    %p47 = scmp.eq.s32.totalorder %s9, 3
    %p48 = scmp.ne.s32.totalorder %s43, %s45
    %p49 = scmp.eq.s32.totalorder %s9, 0
    %p50 = por %p48, %p49
    %p51 = scmp.ne.s32.totalorder %s43, %s45
    %p52 = scmp.eq.s32.totalorder %s14, 3
    %p53 = por %p51, %p52
    %p54 = scmp.ne.s32.totalorder %s45, %s46
    %p55 = scmp.eq.s32.totalorder %s14, 0
    %p56 = por %p54, %p55
    %p57 = scmp.ne.s32.totalorder %s45, %s46
    %p58 = scmp.eq.s32.totalorder %s15, 3
    %p59 = por %p57, %p58
    %p61 = scmp.ne.s32.totalorder %s46, %s60
    %p62 = scmp.eq.s32.totalorder %s15, 0
    %p63 = por %p61, %p62
    %s65 = sadd.s32 %s64, 1
    %p68 = scmp.eq.s32.totalorder %s9, 3
    %p69 = scmp.ne.s32.totalorder %s64, %s66
    %p70 = scmp.eq.s32.totalorder %s9, 0
    %p71 = por %p69, %p70
    %p72 = scmp.ne.s32.totalorder %s64, %s66
    %p73 = scmp.eq.s32.totalorder %s14, 3
    %p74 = por %p72, %p73
    %p75 = scmp.ne.s32.totalorder %s66, %s67
    %p76 = scmp.eq.s32.totalorder %s14, 0
    %p77 = por %p75, %p76
    %p78 = scmp.ne.s32.totalorder %s66, %s67
    %p79 = scmp.eq.s32.totalorder %s15, 3
    %p80 = por %p78, %p79
    %p82 = scmp.ne.s32.totalorder %s67, %s81
    %p83 = scmp.eq.s32.totalorder %s15, 0
    %p84 = por %p82, %p83
    %s85 = ssub.s32 %s9, %s16
    %p86 = scmp.eq.s32.totalorder %s85, 0
    %s88 = sadd.s32 %s87, 1
    %s89 = scalar_select %p86, %s87, %s88
    %p92 = pneg %p86
    %p93 = scmp.eq.s32.totalorder %s9, 3
    %p94 = por %p92, %p93
    %p95 = scmp.ne.s32.totalorder %s87, %s90
    %p96 = scmp.eq.s32.totalorder %s9, 0
    %p97 = por %p95, %p96
    %p98 = scmp.ne.s32.totalorder %s87, %s90
    %p99 = scmp.eq.s32.totalorder %s14, 3
    %p100 = por %p98, %p99
    %p101 = scmp.ne.s32.totalorder %s90, %s91
    %p102 = scmp.eq.s32.totalorder %s14, 0
    %p103 = por %p101, %p102
    %p104 = scmp.ne.s32.totalorder %s90, %s91
    %p105 = scmp.eq.s32.totalorder %s15, 3
    %p106 = por %p104, %p105
    %p108 = scmp.ne.s32.totalorder %s91, %s107
    %p109 = scmp.eq.s32.totalorder %s15, 0
    %p110 = por %p108, %p109
    %p111 = scmp.le.s32.totalorder 1, %s9
    %p112 = scmp.lt.s32.totalorder %s9, 5
    %p113 = pnand %p111, %p112
    %p114 = pneg %p113
    // Predicated region
    $region9: #{seg_net_forward.9} parent=5 // pred_check
      _
    $region10: #{seg_net_forward.9} parent=5 // pred_check_branch
      %116 = sbr.rel (%p113) target = $region12
    $region11: #{seg_net_forward.9} parent=5 // pred_region
      %s117 = ssub.s32 %s9, 1
      // Predicated region
      $region13: #{seg_net_forward.9} parent=11 // pred_check
        %p118 = pneg %p56
      $region14: #{seg_net_forward.9} parent=11 // pred_check_branch
        %120 = sbr.rel (%p118) target = $region16
      $region15: #{seg_net_forward.9} parent=11 // pred_region
        _
      $region16: #{seg_net_forward.9} parent=11 // pred_fallthru
        _
      // Predicated region
      $region17: #{seg_net_forward.9} parent=11 // pred_check
        %p121 = pneg %p77
      $region18: #{seg_net_forward.9} parent=11 // pred_check_branch
        %123 = sbr.rel (%p121) target = $region20
      $region19: #{seg_net_forward.9} parent=11 // pred_region
        _
      $region20: #{seg_net_forward.9} parent=11 // pred_fallthru
        _
    $region12: #{seg_net_forward.9} parent=5 // pred_fallthru
      _
    %p124 = scmp.lt.s32.totalorder %s9, 4
    // Predicated region
    $region21: #{seg_net_forward.9} parent=5 // pred_check
      %p125 = pneg %p124
    $region22: #{seg_net_forward.9} parent=5 // pred_check_branch
      %127 = sbr.rel (%p125) target = $region24
    $region23: #{seg_net_forward.9} parent=5 // pred_region
      // Predicated region
      $region25: #{seg_net_forward.9} parent=23 // pred_check
        %p128 = pneg %p29
      $region26: #{seg_net_forward.9} parent=23 // pred_check_branch
        %130 = sbr.rel (%p128) target = $region28
      $region27: #{seg_net_forward.9} parent=23 // pred_region
        %p131 = scmp.lt.s32.totalorder %s9, 3
        %s132 = scalar_select %p131, %s9, 3
        %s133 = smul.addr %s132, 20
        %s134 = smul.addr %s133, 4
        %s135 = scalar_lea.vmem %s0, %s134
      $region28: #{seg_net_forward.9} parent=23 // pred_fallthru
        _
    $region24: #{seg_net_forward.9} parent=5 // pred_fallthru
      _
    %p136 = scmp.le.s32.totalorder 1, %s9
    %p137 = scmp.lt.s32.totalorder %s9, 5
    %p138 = pnand %p136, %p137
    %p139 = pneg %p138
    // Predicated region
    $region29: #{seg_net_forward.9} parent=5 // pred_check
      _
    $region30: #{seg_net_forward.9} parent=5 // pred_check_branch
      %141 = sbr.rel (%p138) target = $region32
    $region31: #{seg_net_forward.9} parent=5 // pred_region
      %s142 = ssub.s32 %s9, 1
      %p143 = scmp.lt.s32.totalorder %s14, 3
      %s144 = scalar_select %p143, %s14, 3
      %s145 = smul.addr %s144, 20
      %s146 = smul.addr %s145, 4
      %s147 = scalar_lea.vmem %s0, %s146
      %p148 = pneg %p35
      %p149 = pneg %p32
      %p150 = pneg %p56
      %p151 = pneg %p53
      %p152 = pneg %p77
      %p153 = pneg %p74
      %p154 = pneg %p103
      %p155 = pneg %p100
      %p156 = scmp.lt.s32.totalorder %s14, 3
      %s157 = scalar_select %p156, %s14, 3
      %s158 = smul.addr %s157, 2
      %s159 = smul.addr %s158, 4
      %s160 = scalar_lea.vmem %s3, %s159
      %p161 = scmp.lt.s32.totalorder %s14, 3
      %s162 = scalar_select %p161, %s14, 3
      %s163 = smul.addr %s162, 20
      %s164 = smul.addr %s163, 4
      %s165 = scalar_lea.vmem %s0, %s164
      %p166 = scmp.lt.s32.totalorder %s14, 3
      %s167 = scalar_select %p166, %s14, 3
      %s168 = smul.addr %s167, 2
      %s169 = smul.addr %s168, 4
      %s170 = scalar_lea.vmem %s3, %s169
      %v171 = vld [vmem:[%s165] sm:$0x7]
      %v172 = vld [vmem:[%s165 + $0x4] sm:$0x7]
      %v173 = vld [vmem:[%s165 + $0x8] sm:$0x7]
      %v174 = vld [vmem:[%s165 + $0xc] sm:$0x7]
      %v175 = vld [vmem:[%s165 + $0x10] sm:$0x7]
      %v176 = vld [vmem:[%s165 + $0x14] sm:$0x7]
      %v177 = vld [vmem:[%s165 + $0x18] sm:$0x7]
      %v178 = vld [vmem:[%s165 + $0x1c] sm:$0x7]
      %v179 = vld [vmem:[%s165 + $0x20] sm:$0x7]
      %v180 = vld [vmem:[%s165 + $0x24] sm:$0x7]
      %v181 = vld [vmem:[%s165 + $0x28] sm:$0x7]
      %v182 = vld [vmem:[%s165 + $0x2c] sm:$0x7]
      %v183 = vld [vmem:[%s165 + $0x30] sm:$0x7]
      %v184 = vld [vmem:[%s165 + $0x34] sm:$0x7]
      %v185 = vld [vmem:[%s165 + $0x3c] sm:$0x7]
      %v186 = vld [vmem:[%s165 + $0x40] sm:$0x7]
      %v187 = vld [vmem:[%s165 + $0x44] sm:$0x7]
      %v188 = vld [vmem:[%s165 + $0x48] sm:$0x7]
      %v189 = vunpack.c.l.bf16 %v171
      %v190 = vunpack.c.l.bf16 %v172
      %v191 = vunpack.c.l.bf16 %v173
      %v192 = vunpack.c.l.bf16 %v174
      %v193 = vunpack.c.l.bf16 %v175
      %v194 = vunpack.c.l.bf16 %v176
      %v195 = vunpack.c.l.bf16 %v177
      %v196 = vunpack.c.l.bf16 %v178
      %v197 = vunpack.c.l.bf16 %v179
      %v198 = vunpack.c.l.bf16 %v180
      %v199 = vunpack.c.l.bf16 %v181
      %v200 = vunpack.c.l.bf16 %v182
      %v201 = vunpack.c.l.bf16 %v183
      %v202 = vunpack.c.l.bf16 %v184
      %v203 = vunpack.c.l.bf16 %v185
      %v204 = vunpack.c.l.bf16 %v186
      %v205 = vunpack.c.l.bf16 %v187
      %v206 = vunpack.c.l.bf16 %v188
      %v207 = vld [vmem:[%s1] sm:$0xff]
      %v208 = vld [vmem:[%s1 + $0x8] sm:$0xff]
      %s209 = scalar_lea.vmem %s1, 16
      %v210 = vld [vmem:[%s209] sm:$0xff]
      %v211 = vld [vmem:[%s209 + $0x8] sm:$0xff]
      %v216 = vcombine.low %v194, %v195
      %v217 = vcombine.low %v196, %v197
      %vm218 = vcmask 130048
      %v219 = vsel %vm218, %v216, 0
      %v221 = vsel %vm218, %v217, 0
      %223 = vmatprep.subr.mxu0 0.0
      %224 = vmatpush1.msra.mxu0 %v210
      %225 = vmatprep.subr.mxu0 0.0
      %226 = vmatpush1.msra.mxu0 %v211
      %227 = vmatprep.subr.mxu0 0.0
      %228 = vmatpush1.msra.mxu0 0.0
      %229 = vmatprep.subr.mxu0 0.0
      %230 = vmatpush1.msra.mxu0 0.0
      %231 = vmatprep.subr.mxu0 0.0
      %232 = vmatpush1.msra.mxu0 0.0
      %233 = vmatprep.subr.mxu0 0.0
      %234 = vmatpush1.msra.mxu0 0.0
      %235 = vmatprep.subr.mxu0 0.0
      %236 = vmatpush1.msra.mxu0 0.0
      %237 = vmatprep.subr.mxu0 0.0
      %238 = vmatpush1.msra.mxu0 0.0
      %239 = vmatprep.subr.mxu0 0.0
      %240 = vmatpush1.msra.mxu0 0.0
      %241 = vmatprep.subr.mxu0 0.0
      %242 = vmatpush1.msra.mxu0 0.0
      %243 = vmatprep.subr.mxu0 0.0
      %244 = vmatpush1.msra.mxu0 0.0
      %245 = vmatprep.subr.mxu0 0.0
      %246 = vmatpush1.msra.mxu0 0.0
      %247 = vmatprep.subr.mxu0 0.0
      %248 = vmatpush1.msra.mxu0 0.0
      %249 = vmatprep.subr.mxu0 0.0
      %250 = vmatpush1.msra.mxu0 0.0
      %251 = vmatprep.subr.mxu0 0.0
      %252 = vmatpush1.msra.mxu0 0.0
      %253 = vmatprep.subr.mxu0 0.0
      %254 = vmatpush1.msra.mxu0 0.0
      %255 = vmatprep.subr.mxu0 0.0
      %256 = vmatpush1.msra.mxu0 0.0
      %257 = vmatprep.subr.mxu0 0.0
      %258 = vmatpush1.msra.mxu0 0.0
      %259 = vmatprep.subr.mxu0 0.0
      %260 = vmatpush1.msra.mxu0 0.0
      %261 = vmatprep.subr.mxu0 0.0
      %262 = vmatpush1.msra.mxu0 0.0
      %263 = vmatprep.subr.mxu0 0.0
      %264 = vmatpush1.msra.mxu0 0.0
      %265 = vmatprep.subr.mxu0 0.0
      %266 = vmatpush1.msra.mxu0 0.0
      %267 = vmatprep.subr.mxu0 0.0
      %268 = vmatpush1.msra.mxu0 0.0
      %269 = vmatprep.subr.mxu0 0.0
      %270 = vmatpush1.msra.mxu0 0.0
      %271 = vmatprep.subr.mxu0 0.0
      %272 = vmatpush1.msra.mxu0 0.0
      %273 = vmatprep.subr.mxu0 0.0
      %274 = vmatpush1.msra.mxu0 0.0
      %275 = vmatprep.subr.mxu0 0.0
      %276 = vmatpush1.msra.mxu0 0.0
      %277 = vmatprep.subr.mxu0 0.0
      %278 = vmatpush1.msra.mxu0 0.0
      %279 = vmatprep.subr.mxu0 0.0
      %280 = vmatpush1.msra.mxu0 0.0
      %281 = vmatprep.subr.mxu0 0.0
      %282 = vmatpush1.msra.mxu0 0.0
      %283 = vmatprep.subr.mxu0 0.0
      %284 = vmatpush1.msra.mxu0 0.0
      %285 = vmatprep.subr.mxu0 0.0
      %286 = vmatpush1.msra.mxu0 0.0
      %287 = vmatprep.mubr.f32.mxu0 0.0
      %288 = vmatmul.mubr.f32.gmra.mrb[0].mxu0 %v219
      %v289 = vpop.f32.mrb[0].mxu0
      %v290 = vadd.f32 0.0, %v289
      %v291 = vpop.f32.mrb[0].mxu0
      %292 = vmatprep.mubr.f32.mxu0 0.0
      %293 = vmatmul.mubr.f32.gmra.mrb[0].mxu0 %v221
      %v294 = vpop.f32.mrb[0].mxu0
      %v295 = vadd.f32 0.0, %v294
      %v296 = vpop.f32.mrb[0].mxu0
      %297 = vdwg.mxu0
      %v302 = vcombine.low %v189, %v190
      %v303 = vcombine.low %v191, %v192
      %v304 = vsel %vm218, %v302, 0
      %v306 = vsel %vm218, %v303, 0
      %308 = vmatprep.subr.mxu0 0.0
      %309 = vmatpush1.msra.mxu0 %v207
      %310 = vmatprep.subr.mxu0 0.0
      %311 = vmatpush1.msra.mxu0 %v208
      %312 = vmatprep.subr.mxu0 0.0
      %313 = vmatpush1.msra.mxu0 0.0
      %314 = vmatprep.subr.mxu0 0.0
      %315 = vmatpush1.msra.mxu0 0.0
      %316 = vmatprep.subr.mxu0 0.0
      %317 = vmatpush1.msra.mxu0 0.0
      %318 = vmatprep.subr.mxu0 0.0
      %319 = vmatpush1.msra.mxu0 0.0
      %320 = vmatprep.subr.mxu0 0.0
      %321 = vmatpush1.msra.mxu0 0.0
      %322 = vmatprep.subr.mxu0 0.0
      %323 = vmatpush1.msra.mxu0 0.0
      %324 = vmatprep.subr.mxu0 0.0
      %325 = vmatpush1.msra.mxu0 0.0
      %326 = vmatprep.subr.mxu0 0.0
      %327 = vmatpush1.msra.mxu0 0.0
      %328 = vmatprep.subr.mxu0 0.0
      %329 = vmatpush1.msra.mxu0 0.0
      %330 = vmatprep.subr.mxu0 0.0
      %331 = vmatpush1.msra.mxu0 0.0
      %332 = vmatprep.subr.mxu0 0.0
      %333 = vmatpush1.msra.mxu0 0.0
      %334 = vmatprep.subr.mxu0 0.0
      %335 = vmatpush1.msra.mxu0 0.0
      %336 = vmatprep.subr.mxu0 0.0
      %337 = vmatpush1.msra.mxu0 0.0
      %338 = vmatprep.subr.mxu0 0.0
      %339 = vmatpush1.msra.mxu0 0.0
      %340 = vmatprep.subr.mxu0 0.0
      %341 = vmatpush1.msra.mxu0 0.0
      %342 = vmatprep.subr.mxu0 0.0
      %343 = vmatpush1.msra.mxu0 0.0
      %344 = vmatprep.subr.mxu0 0.0
      %345 = vmatpush1.msra.mxu0 0.0
      %346 = vmatprep.subr.mxu0 0.0
      %347 = vmatpush1.msra.mxu0 0.0
      %348 = vmatprep.subr.mxu0 0.0
      %349 = vmatpush1.msra.mxu0 0.0
      %350 = vmatprep.subr.mxu0 0.0
      %351 = vmatpush1.msra.mxu0 0.0
      %352 = vmatprep.subr.mxu0 0.0
      %353 = vmatpush1.msra.mxu0 0.0
      %354 = vmatprep.subr.mxu0 0.0
      %355 = vmatpush1.msra.mxu0 0.0
      %356 = vmatprep.subr.mxu0 0.0
      %357 = vmatpush1.msra.mxu0 0.0
      %358 = vmatprep.subr.mxu0 0.0
      %359 = vmatpush1.msra.mxu0 0.0
      %360 = vmatprep.subr.mxu0 0.0
      %361 = vmatpush1.msra.mxu0 0.0
      %362 = vmatprep.subr.mxu0 0.0
      %363 = vmatpush1.msra.mxu0 0.0
      %364 = vmatprep.subr.mxu0 0.0
      %365 = vmatpush1.msra.mxu0 0.0
      %366 = vmatprep.subr.mxu0 0.0
      %367 = vmatpush1.msra.mxu0 0.0
      %368 = vmatprep.subr.mxu0 0.0
      %369 = vmatpush1.msra.mxu0 0.0
      %370 = vmatprep.subr.mxu0 0.0
      %371 = vmatpush1.msra.mxu0 0.0
      %372 = vmatprep.mubr.f32.mxu0 0.0
      %373 = vmatmul.mubr.f32.gmra.mrb[0].mxu0 %v304
      %v374 = vpop.f32.mrb[0].mxu0
      %v375 = vadd.f32 %v290, %v374
      %v376 = vpop.f32.mrb[0].mxu0
      %377 = vmatprep.mubr.f32.mxu0 0.0
      %378 = vmatmul.mubr.f32.gmra.mrb[0].mxu0 %v306
      %v379 = vpop.f32.mrb[0].mxu0
      %v380 = vadd.f32 %v295, %v379
      %v381 = vpop.f32.mrb[0].mxu0
      %382 = vdwg.mxu0
      %v383 = vcombine.high %v189, %v189
      %v384 = vcombine.high %v190, %v190
      %v385 = vcombine.high %v191, %v191
      %v386 = vcombine.high %v192, %v192
      %vm387 = vcmask 1042432
      %vm388 = vcmask 1046532
      %vm389 = vmor %vm387, %vm388
      %v390 = vrot.slane %v189, 5
      %v391 = vrot.slane %v390, 4
      %v392 = vrot.slane %v383, 5
      %v393 = vsel %vm389, %v391, %v392
      %v394 = vrot.slane %v190, 5
      %v395 = vrot.slane %v394, 4
      %v396 = vrot.slane %v384, 5
      %v397 = vsel %vm389, %v395, %v396
      %v398 = vrot.slane %v191, 5
      %v399 = vrot.slane %v398, 4
      %v400 = vrot.slane %v385, 5
      %v401 = vsel %vm389, %v399, %v400
      %v402 = vrot.slane %v192, 5
      %v403 = vrot.slane %v402, 4
      %v404 = vrot.slane %v386, 5
      %v405 = vsel %vm389, %v403, %v404
      %s406 = scalar_lea.vmem %s1, 32
      %v407 = vld [vmem:[%s406] sm:$0xff]
      %v408 = vld [vmem:[%s406 + $0x8] sm:$0xff]
      %v409 = vcombine.low %v393, %v397
      %v410 = vcombine.low %v401, %v405
      %v411 = vsel %vm218, %v409, 0
      %v413 = vsel %vm218, %v410, 0
      %415 = vmatprep.subr.mxu0 0.0
      %416 = vmatpush1.msra.mxu0 %v407
      %417 = vmatprep.subr.mxu0 0.0
      %418 = vmatpush1.msra.mxu0 %v408
      %419 = vmatprep.subr.mxu0 0.0
      %420 = vmatpush1.msra.mxu0 0.0
      %421 = vmatprep.subr.mxu0 0.0
      %422 = vmatpush1.msra.mxu0 0.0
      %423 = vmatprep.subr.mxu0 0.0
      %424 = vmatpush1.msra.mxu0 0.0
      %425 = vmatprep.subr.mxu0 0.0
      %426 = vmatpush1.msra.mxu0 0.0
      %427 = vmatprep.subr.mxu0 0.0
      %428 = vmatpush1.msra.mxu0 0.0
      %429 = vmatprep.subr.mxu0 0.0
      %430 = vmatpush1.msra.mxu0 0.0
      %431 = vmatprep.subr.mxu0 0.0
      %432 = vmatpush1.msra.mxu0 0.0
      %433 = vmatprep.subr.mxu0 0.0
      %434 = vmatpush1.msra.mxu0 0.0
      %435 = vmatprep.subr.mxu0 0.0
      %436 = vmatpush1.msra.mxu0 0.0
      %437 = vmatprep.subr.mxu0 0.0
      %438 = vmatpush1.msra.mxu0 0.0
      %439 = vmatprep.subr.mxu0 0.0
      %440 = vmatpush1.msra.mxu0 0.0
      %441 = vmatprep.subr.mxu0 0.0
      %442 = vmatpush1.msra.mxu0 0.0
      %443 = vmatprep.subr.mxu0 0.0
      %444 = vmatpush1.msra.mxu0 0.0
      %445 = vmatprep.subr.mxu0 0.0
      %446 = vmatpush1.msra.mxu0 0.0
      %447 = vmatprep.subr.mxu0 0.0
      %448 = vmatpush1.msra.mxu0 0.0
      %449 = vmatprep.subr.mxu0 0.0
      %450 = vmatpush1.msra.mxu0 0.0
      %451 = vmatprep.subr.mxu0 0.0
      %452 = vmatpush1.msra.mxu0 0.0
      %453 = vmatprep.subr.mxu0 0.0
      %454 = vmatpush1.msra.mxu0 0.0
      %455 = vmatprep.subr.mxu0 0.0
      %456 = vmatpush1.msra.mxu0 0.0
      %457 = vmatprep.subr.mxu0 0.0
      %458 = vmatpush1.msra.mxu0 0.0
      %459 = vmatprep.subr.mxu0 0.0
      %460 = vmatpush1.msra.mxu0 0.0
      %461 = vmatprep.subr.mxu0 0.0
      %462 = vmatpush1.msra.mxu0 0.0
      %463 = vmatprep.subr.mxu0 0.0
      %464 = vmatpush1.msra.mxu0 0.0
      %465 = vmatprep.subr.mxu0 0.0
      %466 = vmatpush1.msra.mxu0 0.0
      %467 = vmatprep.subr.mxu0 0.0
      %468 = vmatpush1.msra.mxu0 0.0
      %469 = vmatprep.subr.mxu0 0.0
      %470 = vmatpush1.msra.mxu0 0.0
      %471 = vmatprep.subr.mxu0 0.0
      %472 = vmatpush1.msra.mxu0 0.0
      %473 = vmatprep.subr.mxu0 0.0
      %474 = vmatpush1.msra.mxu0 0.0
      %475 = vmatprep.subr.mxu0 0.0
      %476 = vmatpush1.msra.mxu0 0.0
      %477 = vmatprep.subr.mxu0 0.0
      %478 = vmatpush1.msra.mxu0 0.0
      %479 = vmatprep.mubr.f32.mxu0 0.0
      %480 = vmatmul.mubr.f32.gmra.mrb[0].mxu0 %v411
      %v481 = vpop.f32.mrb[0].mxu0
      %v482 = vadd.f32 0.0, %v481
      %v483 = vpop.f32.mrb[0].mxu0
      %484 = vmatprep.mubr.f32.mxu0 0.0
      %485 = vmatmul.mubr.f32.gmra.mrb[0].mxu0 %v413
      %v486 = vpop.f32.mrb[0].mxu0
      %v487 = vadd.f32 0.0, %v486
      %v488 = vpop.f32.mrb[0].mxu0
      %489 = vdwg.mxu0
      %v490 = vadd.f32 %v375, %v482
      %v491 = vadd.f32 %v380, %v487
      %s492 = scalar_lea.vmem %s1, 48
      %v493 = vld [vmem:[%s492] sm:$0xff]
      %v494 = vld [vmem:[%s492 + $0x8] sm:$0xff]
      %v499 = vcombine.low %v199, %v200
      %v500 = vcombine.low %v201, %v202
      %v501 = vsel %vm218, %v499, 0
      %v503 = vsel %vm218, %v500, 0
      %505 = vmatprep.subr.mxu0 0.0
      %506 = vmatpush1.msra.mxu0 %v493
      %507 = vmatprep.subr.mxu0 0.0
      %508 = vmatpush1.msra.mxu0 %v494
      %509 = vmatprep.subr.mxu0 0.0
      %510 = vmatpush1.msra.mxu0 0.0
      %511 = vmatprep.subr.mxu0 0.0
      %512 = vmatpush1.msra.mxu0 0.0
      %513 = vmatprep.subr.mxu0 0.0
      %514 = vmatpush1.msra.mxu0 0.0
      %515 = vmatprep.subr.mxu0 0.0
      %516 = vmatpush1.msra.mxu0 0.0
      %517 = vmatprep.subr.mxu0 0.0
      %518 = vmatpush1.msra.mxu0 0.0
      %519 = vmatprep.subr.mxu0 0.0
      %520 = vmatpush1.msra.mxu0 0.0
      %521 = vmatprep.subr.mxu0 0.0
      %522 = vmatpush1.msra.mxu0 0.0
      %523 = vmatprep.subr.mxu0 0.0
      %524 = vmatpush1.msra.mxu0 0.0
      %525 = vmatprep.subr.mxu0 0.0
      %526 = vmatpush1.msra.mxu0 0.0
      %527 = vmatprep.subr.mxu0 0.0
      %528 = vmatpush1.msra.mxu0 0.0
      %529 = vmatprep.subr.mxu0 0.0
      %530 = vmatpush1.msra.mxu0 0.0
      %531 = vmatprep.subr.mxu0 0.0
      %532 = vmatpush1.msra.mxu0 0.0
      %533 = vmatprep.subr.mxu0 0.0
      %534 = vmatpush1.msra.mxu0 0.0
      %535 = vmatprep.subr.mxu0 0.0
      %536 = vmatpush1.msra.mxu0 0.0
      %537 = vmatprep.subr.mxu0 0.0
      %538 = vmatpush1.msra.mxu0 0.0
      %539 = vmatprep.subr.mxu0 0.0
      %540 = vmatpush1.msra.mxu0 0.0
      %541 = vmatprep.subr.mxu0 0.0
      %542 = vmatpush1.msra.mxu0 0.0
      %543 = vmatprep.subr.mxu0 0.0
      %544 = vmatpush1.msra.mxu0 0.0
      %545 = vmatprep.subr.mxu0 0.0
      %546 = vmatpush1.msra.mxu0 0.0
      %547 = vmatprep.subr.mxu0 0.0
      %548 = vmatpush1.msra.mxu0 0.0
      %549 = vmatprep.subr.mxu0 0.0
      %550 = vmatpush1.msra.mxu0 0.0
      %551 = vmatprep.subr.mxu0 0.0
      %552 = vmatpush1.msra.mxu0 0.0
      %553 = vmatprep.subr.mxu0 0.0
      %554 = vmatpush1.msra.mxu0 0.0
      %555 = vmatprep.subr.mxu0 0.0
      %556 = vmatpush1.msra.mxu0 0.0
      %557 = vmatprep.subr.mxu0 0.0
      %558 = vmatpush1.msra.mxu0 0.0
      %559 = vmatprep.subr.mxu0 0.0
      %560 = vmatpush1.msra.mxu0 0.0
      %561 = vmatprep.subr.mxu0 0.0
      %562 = vmatpush1.msra.mxu0 0.0
      %563 = vmatprep.subr.mxu0 0.0
      %564 = vmatpush1.msra.mxu0 0.0
      %565 = vmatprep.subr.mxu0 0.0
      %566 = vmatpush1.msra.mxu0 0.0
      %567 = vmatprep.subr.mxu0 0.0
      %568 = vmatpush1.msra.mxu0 0.0
      %569 = vmatprep.mubr.f32.mxu0 0.0
      %570 = vmatmul.mubr.f32.gmra.mrb[0].mxu0 %v501
      %v571 = vpop.f32.mrb[0].mxu0
      %v572 = vadd.f32 0.0, %v571
      %v573 = vpop.f32.mrb[0].mxu0
      %574 = vmatprep.mubr.f32.mxu0 0.0
      %575 = vmatmul.mubr.f32.gmra.mrb[0].mxu0 %v503
      %v576 = vpop.f32.mrb[0].mxu0
      %v577 = vadd.f32 0.0, %v576
      %v578 = vpop.f32.mrb[0].mxu0
      %579 = vdwg.mxu0
      %v580 = vadd.f32 %v490, %v572
      %v581 = vadd.f32 %v491, %v577
      %s582 = scalar_lea.vmem %s1, 64
      %v583 = vld [vmem:[%s582] sm:$0xff]
      %v584 = vld [vmem:[%s582 + $0x8] sm:$0xff]
      %v589 = vcombine.low %v203, %v204
      %v590 = vcombine.low %v205, %v206
      %v591 = vsel %vm218, %v589, 0
      %v593 = vsel %vm218, %v590, 0
      %595 = vmatprep.subr.mxu0 0.0
      %596 = vmatpush1.msra.mxu0 %v583
      %597 = vmatprep.subr.mxu0 0.0
      %598 = vmatpush1.msra.mxu0 %v584
      %599 = vmatprep.subr.mxu0 0.0
      %600 = vmatpush1.msra.mxu0 0.0
      %601 = vmatprep.subr.mxu0 0.0
      %602 = vmatpush1.msra.mxu0 0.0
      %603 = vmatprep.subr.mxu0 0.0
      %604 = vmatpush1.msra.mxu0 0.0
      %605 = vmatprep.subr.mxu0 0.0
      %606 = vmatpush1.msra.mxu0 0.0
      %607 = vmatprep.subr.mxu0 0.0
      %608 = vmatpush1.msra.mxu0 0.0
      %609 = vmatprep.subr.mxu0 0.0
      %610 = vmatpush1.msra.mxu0 0.0
      %611 = vmatprep.subr.mxu0 0.0
      %612 = vmatpush1.msra.mxu0 0.0
      %613 = vmatprep.subr.mxu0 0.0
      %614 = vmatpush1.msra.mxu0 0.0
      %615 = vmatprep.subr.mxu0 0.0
      %616 = vmatpush1.msra.mxu0 0.0
      %617 = vmatprep.subr.mxu0 0.0
      %618 = vmatpush1.msra.mxu0 0.0
      %619 = vmatprep.subr.mxu0 0.0
      %620 = vmatpush1.msra.mxu0 0.0
      %621 = vmatprep.subr.mxu0 0.0
      %622 = vmatpush1.msra.mxu0 0.0
      %623 = vmatprep.subr.mxu0 0.0
      %624 = vmatpush1.msra.mxu0 0.0
      %625 = vmatprep.subr.mxu0 0.0
      %626 = vmatpush1.msra.mxu0 0.0
      %627 = vmatprep.subr.mxu0 0.0
      %628 = vmatpush1.msra.mxu0 0.0
      %629 = vmatprep.subr.mxu0 0.0
      %630 = vmatpush1.msra.mxu0 0.0
      %631 = vmatprep.subr.mxu0 0.0
      %632 = vmatpush1.msra.mxu0 0.0
      %633 = vmatprep.subr.mxu0 0.0
      %634 = vmatpush1.msra.mxu0 0.0
      %635 = vmatprep.subr.mxu0 0.0
      %636 = vmatpush1.msra.mxu0 0.0
      %637 = vmatprep.subr.mxu0 0.0
      %638 = vmatpush1.msra.mxu0 0.0
      %639 = vmatprep.subr.mxu0 0.0
      %640 = vmatpush1.msra.mxu0 0.0
      %641 = vmatprep.subr.mxu0 0.0
      %642 = vmatpush1.msra.mxu0 0.0
      %643 = vmatprep.subr.mxu0 0.0
      %644 = vmatpush1.msra.mxu0 0.0
      %645 = vmatprep.subr.mxu0 0.0
      %646 = vmatpush1.msra.mxu0 0.0
      %647 = vmatprep.subr.mxu0 0.0
      %648 = vmatpush1.msra.mxu0 0.0
      %649 = vmatprep.subr.mxu0 0.0
      %650 = vmatpush1.msra.mxu0 0.0
      %651 = vmatprep.subr.mxu0 0.0
      %652 = vmatpush1.msra.mxu0 0.0
      %653 = vmatprep.subr.mxu0 0.0
      %654 = vmatpush1.msra.mxu0 0.0
      %655 = vmatprep.subr.mxu0 0.0
      %656 = vmatpush1.msra.mxu0 0.0
      %657 = vmatprep.subr.mxu0 0.0
      %658 = vmatpush1.msra.mxu0 0.0
      %659 = vmatprep.mubr.f32.mxu0 0.0
      %660 = vmatmul.mubr.f32.gmra.mrb[0].mxu0 %v591
      %v661 = vpop.f32.mrb[0].mxu0
      %v662 = vadd.f32 0.0, %v661
      %v663 = vpop.f32.mrb[0].mxu0
      %664 = vmatprep.mubr.f32.mxu0 0.0
      %665 = vmatmul.mubr.f32.gmra.mrb[0].mxu0 %v593
      %v666 = vpop.f32.mrb[0].mxu0
      %v667 = vadd.f32 0.0, %v666
      %v668 = vpop.f32.mrb[0].mxu0
      %669 = vdwg.mxu0
      %v670 = vadd.f32 %v580, %v662
      %v671 = vadd.f32 %v581, %v667
      %v672 = vcombine.high %v199, %v199
      %v673 = vcombine.high %v200, %v200
      %v674 = vcombine.high %v201, %v201
      %v675 = vcombine.high %v202, %v202
      %v676 = vrot.slane %v199, 5
      %v677 = vrot.slane %v676, 4
      %v678 = vrot.slane %v672, 5
      %v679 = vsel %vm389, %v677, %v678
      %v680 = vrot.slane %v200, 5
      %v681 = vrot.slane %v680, 4
      %v682 = vrot.slane %v673, 5
      %v683 = vsel %vm389, %v681, %v682
      %v684 = vrot.slane %v201, 5
      %v685 = vrot.slane %v684, 4
      %v686 = vrot.slane %v674, 5
      %v687 = vsel %vm389, %v685, %v686
      %v688 = vrot.slane %v202, 5
      %v689 = vrot.slane %v688, 4
      %v690 = vrot.slane %v675, 5
      %v691 = vsel %vm389, %v689, %v690
      %s692 = scalar_lea.vmem %s1, 80
      %v693 = vld [vmem:[%s692] sm:$0xff]
      %v694 = vld [vmem:[%s692 + $0x8] sm:$0xff]
      %v695 = vcombine.low %v679, %v683
      %v696 = vcombine.low %v687, %v691
      %v697 = vsel %vm218, %v695, 0
      %v699 = vsel %vm218, %v696, 0
      %701 = vmatprep.subr.mxu0 0.0
      %702 = vmatpush1.msra.mxu0 %v693
      %703 = vmatprep.subr.mxu0 0.0
      %704 = vmatpush1.msra.mxu0 %v694
      %705 = vmatprep.subr.mxu0 0.0
      %706 = vmatpush1.msra.mxu0 0.0
      %707 = vmatprep.subr.mxu0 0.0
      %708 = vmatpush1.msra.mxu0 0.0
      %709 = vmatprep.subr.mxu0 0.0
      %710 = vmatpush1.msra.mxu0 0.0
      %711 = vmatprep.subr.mxu0 0.0
      %712 = vmatpush1.msra.mxu0 0.0
      %713 = vmatprep.subr.mxu0 0.0
      %714 = vmatpush1.msra.mxu0 0.0
      %715 = vmatprep.subr.mxu0 0.0
      %716 = vmatpush1.msra.mxu0 0.0
      %717 = vmatprep.subr.mxu0 0.0
      %718 = vmatpush1.msra.mxu0 0.0
      %719 = vmatprep.subr.mxu0 0.0
      %720 = vmatpush1.msra.mxu0 0.0
      %721 = vmatprep.subr.mxu0 0.0
      %722 = vmatpush1.msra.mxu0 0.0
      %723 = vmatprep.subr.mxu0 0.0
      %724 = vmatpush1.msra.mxu0 0.0
      %725 = vmatprep.subr.mxu0 0.0
      %726 = vmatpush1.msra.mxu0 0.0
      %727 = vmatprep.subr.mxu0 0.0
      %728 = vmatpush1.msra.mxu0 0.0
      %729 = vmatprep.subr.mxu0 0.0
      %730 = vmatpush1.msra.mxu0 0.0
      %731 = vmatprep.subr.mxu0 0.0
      %732 = vmatpush1.msra.mxu0 0.0
      %733 = vmatprep.subr.mxu0 0.0
      %734 = vmatpush1.msra.mxu0 0.0
      %735 = vmatprep.subr.mxu0 0.0
      %736 = vmatpush1.msra.mxu0 0.0
      %737 = vmatprep.subr.mxu0 0.0
      %738 = vmatpush1.msra.mxu0 0.0
      %739 = vmatprep.subr.mxu0 0.0
      %740 = vmatpush1.msra.mxu0 0.0
      %741 = vmatprep.subr.mxu0 0.0
      %742 = vmatpush1.msra.mxu0 0.0
      %743 = vmatprep.subr.mxu0 0.0
      %744 = vmatpush1.msra.mxu0 0.0
      %745 = vmatprep.subr.mxu0 0.0
      %746 = vmatpush1.msra.mxu0 0.0
      %747 = vmatprep.subr.mxu0 0.0
      %748 = vmatpush1.msra.mxu0 0.0
      %749 = vmatprep.subr.mxu0 0.0
      %750 = vmatpush1.msra.mxu0 0.0
      %751 = vmatprep.subr.mxu0 0.0
      %752 = vmatpush1.msra.mxu0 0.0
      %753 = vmatprep.subr.mxu0 0.0
      %754 = vmatpush1.msra.mxu0 0.0
      %755 = vmatprep.subr.mxu0 0.0
      %756 = vmatpush1.msra.mxu0 0.0
      %757 = vmatprep.subr.mxu0 0.0
      %758 = vmatpush1.msra.mxu0 0.0
      %759 = vmatprep.subr.mxu0 0.0
      %760 = vmatpush1.msra.mxu0 0.0
      %761 = vmatprep.subr.mxu0 0.0
      %762 = vmatpush1.msra.mxu0 0.0
      %763 = vmatprep.subr.mxu0 0.0
      %764 = vmatpush1.msra.mxu0 0.0
      %765 = vmatprep.mubr.f32.mxu0 0.0
      %766 = vmatmul.mubr.f32.gmra.mrb[0].mxu0 %v697
      %v767 = vpop.f32.mrb[0].mxu0
      %v768 = vadd.f32 0.0, %v767
      %v769 = vpop.f32.mrb[0].mxu0
      %770 = vmatprep.mubr.f32.mxu0 0.0
      %771 = vmatmul.mubr.f32.gmra.mrb[0].mxu0 %v699
      %v772 = vpop.f32.mrb[0].mxu0
      %v773 = vadd.f32 0.0, %v772
      %v774 = vpop.f32.mrb[0].mxu0
      %775 = vdwg.mxu0
      %v776 = vadd.f32 %v670, %v768
      %v777 = vadd.f32 %v671, %v773
      %s778 = scalar_lea.vmem %s1, 96
      %v779 = vld [vmem:[%s778] sm:$0xff]
      %v780 = vld [vmem:[%s778 + $0x8] sm:$0xff]
      %v782 = vcombine.low %v190, %v191
      %v783 = vcombine.low %v192, %v193
      %v784 = vsel %vm218, %v782, 0
      %v786 = vsel %vm218, %v783, 0
      %788 = vmatprep.subr.mxu0 0.0
      %789 = vmatpush1.msra.mxu0 %v779
      %790 = vmatprep.subr.mxu0 0.0
      %791 = vmatpush1.msra.mxu0 %v780
      %792 = vmatprep.subr.mxu0 0.0
      %793 = vmatpush1.msra.mxu0 0.0
      %794 = vmatprep.subr.mxu0 0.0
      %795 = vmatpush1.msra.mxu0 0.0
      %796 = vmatprep.subr.mxu0 0.0
      %797 = vmatpush1.msra.mxu0 0.0
      %798 = vmatprep.subr.mxu0 0.0
      %799 = vmatpush1.msra.mxu0 0.0
      %800 = vmatprep.subr.mxu0 0.0
      %801 = vmatpush1.msra.mxu0 0.0
      %802 = vmatprep.subr.mxu0 0.0
      %803 = vmatpush1.msra.mxu0 0.0
      %804 = vmatprep.subr.mxu0 0.0
      %805 = vmatpush1.msra.mxu0 0.0
      %806 = vmatprep.subr.mxu0 0.0
      %807 = vmatpush1.msra.mxu0 0.0
      %808 = vmatprep.subr.mxu0 0.0
      %809 = vmatpush1.msra.mxu0 0.0
      %810 = vmatprep.subr.mxu0 0.0
      %811 = vmatpush1.msra.mxu0 0.0
      %812 = vmatprep.subr.mxu0 0.0
      %813 = vmatpush1.msra.mxu0 0.0
      %814 = vmatprep.subr.mxu0 0.0
      %815 = vmatpush1.msra.mxu0 0.0
      %816 = vmatprep.subr.mxu0 0.0
      %817 = vmatpush1.msra.mxu0 0.0
      %818 = vmatprep.subr.mxu0 0.0
      %819 = vmatpush1.msra.mxu0 0.0
      %820 = vmatprep.subr.mxu0 0.0
      %821 = vmatpush1.msra.mxu0 0.0
      %822 = vmatprep.subr.mxu0 0.0
      %823 = vmatpush1.msra.mxu0 0.0
      %824 = vmatprep.subr.mxu0 0.0
      %825 = vmatpush1.msra.mxu0 0.0
      %826 = vmatprep.subr.mxu0 0.0
      %827 = vmatpush1.msra.mxu0 0.0
      %828 = vmatprep.subr.mxu0 0.0
      %829 = vmatpush1.msra.mxu0 0.0
      %830 = vmatprep.subr.mxu0 0.0
      %831 = vmatpush1.msra.mxu0 0.0
      %832 = vmatprep.subr.mxu0 0.0
      %833 = vmatpush1.msra.mxu0 0.0
      %834 = vmatprep.subr.mxu0 0.0
      %835 = vmatpush1.msra.mxu0 0.0
      %836 = vmatprep.subr.mxu0 0.0
      %837 = vmatpush1.msra.mxu0 0.0
      %838 = vmatprep.subr.mxu0 0.0
      %839 = vmatpush1.msra.mxu0 0.0
      %840 = vmatprep.subr.mxu0 0.0
      %841 = vmatpush1.msra.mxu0 0.0
      %842 = vmatprep.subr.mxu0 0.0
      %843 = vmatpush1.msra.mxu0 0.0
      %844 = vmatprep.subr.mxu0 0.0
      %845 = vmatpush1.msra.mxu0 0.0
      %846 = vmatprep.subr.mxu0 0.0
      %847 = vmatpush1.msra.mxu0 0.0
      %848 = vmatprep.subr.mxu0 0.0
      %849 = vmatpush1.msra.mxu0 0.0
      %850 = vmatprep.subr.mxu0 0.0
      %851 = vmatpush1.msra.mxu0 0.0
      %852 = vmatprep.mubr.f32.mxu0 0.0
      %853 = vmatmul.mubr.f32.gmra.mrb[0].mxu0 %v784
      %v854 = vpop.f32.mrb[0].mxu0
      %v855 = vadd.f32 0.0, %v854
      %v856 = vpop.f32.mrb[0].mxu0
      %857 = vmatprep.mubr.f32.mxu0 0.0
      %858 = vmatmul.mubr.f32.gmra.mrb[0].mxu0 %v786
      %v859 = vpop.f32.mrb[0].mxu0
      %v860 = vadd.f32 0.0, %v859
      %v861 = vpop.f32.mrb[0].mxu0
      %862 = vdwg.mxu0
      %v863 = vadd.f32 %v776, %v855
      %v864 = vadd.f32 %v777, %v860
      %s865 = scalar_lea.vmem %s1, 112
      %v866 = vld [vmem:[%s865] sm:$0xff]
      %v867 = vld [vmem:[%s865 + $0x8] sm:$0xff]
      %v869 = vcombine.low %v195, %v196
      %v870 = vcombine.low %v197, %v198
      %v871 = vsel %vm218, %v869, 0
      %v873 = vsel %vm218, %v870, 0
      %875 = vmatprep.subr.mxu0 0.0
      %876 = vmatpush1.msra.mxu0 %v866
      %877 = vmatprep.subr.mxu0 0.0
      %878 = vmatpush1.msra.mxu0 %v867
      %879 = vmatprep.subr.mxu0 0.0
      %880 = vmatpush1.msra.mxu0 0.0
      %881 = vmatprep.subr.mxu0 0.0
      %882 = vmatpush1.msra.mxu0 0.0
      %883 = vmatprep.subr.mxu0 0.0
      %884 = vmatpush1.msra.mxu0 0.0
      %885 = vmatprep.subr.mxu0 0.0
      %886 = vmatpush1.msra.mxu0 0.0
      %887 = vmatprep.subr.mxu0 0.0
      %888 = vmatpush1.msra.mxu0 0.0
      %889 = vmatprep.subr.mxu0 0.0
      %890 = vmatpush1.msra.mxu0 0.0
      %891 = vmatprep.subr.mxu0 0.0
      %892 = vmatpush1.msra.mxu0 0.0
      %893 = vmatprep.subr.mxu0 0.0
      %894 = vmatpush1.msra.mxu0 0.0
      %895 = vmatprep.subr.mxu0 0.0
      %896 = vmatpush1.msra.mxu0 0.0
      %897 = vmatprep.subr.mxu0 0.0
      %898 = vmatpush1.msra.mxu0 0.0
      %899 = vmatprep.subr.mxu0 0.0
      %900 = vmatpush1.msra.mxu0 0.0
      %901 = vmatprep.subr.mxu0 0.0
      %902 = vmatpush1.msra.mxu0 0.0
      %903 = vmatprep.subr.mxu0 0.0
      %904 = vmatpush1.msra.mxu0 0.0
      %905 = vmatprep.subr.mxu0 0.0
      %906 = vmatpush1.msra.mxu0 0.0
      %907 = vmatprep.subr.mxu0 0.0
      %908 = vmatpush1.msra.mxu0 0.0
      %909 = vmatprep.subr.mxu0 0.0
      %910 = vmatpush1.msra.mxu0 0.0
      %911 = vmatprep.subr.mxu0 0.0
      %912 = vmatpush1.msra.mxu0 0.0
      %913 = vmatprep.subr.mxu0 0.0
      %914 = vmatpush1.msra.mxu0 0.0
      %915 = vmatprep.subr.mxu0 0.0
      %916 = vmatpush1.msra.mxu0 0.0
      %917 = vmatprep.subr.mxu0 0.0
      %918 = vmatpush1.msra.mxu0 0.0
      %919 = vmatprep.subr.mxu0 0.0
      %920 = vmatpush1.msra.mxu0 0.0
      %921 = vmatprep.subr.mxu0 0.0
      %922 = vmatpush1.msra.mxu0 0.0
      %923 = vmatprep.subr.mxu0 0.0
      %924 = vmatpush1.msra.mxu0 0.0
      %925 = vmatprep.subr.mxu0 0.0
      %926 = vmatpush1.msra.mxu0 0.0
      %927 = vmatprep.subr.mxu0 0.0
      %928 = vmatpush1.msra.mxu0 0.0
      %929 = vmatprep.subr.mxu0 0.0
      %930 = vmatpush1.msra.mxu0 0.0
      %931 = vmatprep.subr.mxu0 0.0
      %932 = vmatpush1.msra.mxu0 0.0
      %933 = vmatprep.subr.mxu0 0.0
      %934 = vmatpush1.msra.mxu0 0.0
      %935 = vmatprep.subr.mxu0 0.0
      %936 = vmatpush1.msra.mxu0 0.0
      %937 = vmatprep.subr.mxu0 0.0
      %938 = vmatpush1.msra.mxu0 0.0
      %939 = vmatprep.mubr.f32.mxu0 0.0
      %940 = vmatmul.mubr.f32.gmra.mrb[0].mxu0 %v871
      %v941 = vpop.f32.mrb[0].mxu0
      %v942 = vadd.f32 0.0, %v941
      %v943 = vpop.f32.mrb[0].mxu0
      %944 = vmatprep.mubr.f32.mxu0 0.0
      %945 = vmatmul.mubr.f32.gmra.mrb[0].mxu0 %v873
      %v946 = vpop.f32.mrb[0].mxu0
      %v947 = vadd.f32 0.0, %v946
      %v948 = vpop.f32.mrb[0].mxu0
      %949 = vdwg.mxu0
      %v950 = vadd.f32 %v863, %v942
      %v951 = vadd.f32 %v864, %v947
      %v952 = vcombine.high %v193, %v193
      %v953 = vrot.slane %v193, 5
      %v954 = vrot.slane %v953, 4
      %v955 = vrot.slane %v952, 5
      %v956 = vsel %vm389, %v954, %v955
      %s957 = scalar_lea.vmem %s1, 128
      %v958 = vld [vmem:[%s957] sm:$0xff]
      %v959 = vld [vmem:[%s957 + $0x8] sm:$0xff]
      %v960 = vcombine.low %v397, %v401
      %v961 = vcombine.low %v405, %v956
      %v962 = vsel %vm218, %v960, 0
      %v964 = vsel %vm218, %v961, 0
      %966 = vmatprep.subr.mxu0 0.0
      %967 = vmatpush1.msra.mxu0 %v958
      %968 = vmatprep.subr.mxu0 0.0
      %969 = vmatpush1.msra.mxu0 %v959
      %970 = vmatprep.subr.mxu0 0.0
      %971 = vmatpush1.msra.mxu0 0.0
      %972 = vmatprep.subr.mxu0 0.0
      %973 = vmatpush1.msra.mxu0 0.0
      %974 = vmatprep.subr.mxu0 0.0
      %975 = vmatpush1.msra.mxu0 0.0
      %976 = vmatprep.subr.mxu0 0.0
      %977 = vmatpush1.msra.mxu0 0.0
      %978 = vmatprep.subr.mxu0 0.0
      %979 = vmatpush1.msra.mxu0 0.0
      %980 = vmatprep.subr.mxu0 0.0
      %981 = vmatpush1.msra.mxu0 0.0
      %982 = vmatprep.subr.mxu0 0.0
      %983 = vmatpush1.msra.mxu0 0.0
      %984 = vmatprep.subr.mxu0 0.0
      %985 = vmatpush1.msra.mxu0 0.0
      %986 = vmatprep.subr.mxu0 0.0
      %987 = vmatpush1.msra.mxu0 0.0
      %988 = vmatprep.subr.mxu0 0.0
      %989 = vmatpush1.msra.mxu0 0.0
      %990 = vmatprep.subr.mxu0 0.0
      %991 = vmatpush1.msra.mxu0 0.0
      %992 = vmatprep.subr.mxu0 0.0
      %993 = vmatpush1.msra.mxu0 0.0
      %994 = vmatprep.subr.mxu0 0.0
      %995 = vmatpush1.msra.mxu0 0.0
      %996 = vmatprep.subr.mxu0 0.0
      %997 = vmatpush1.msra.mxu0 0.0
      %998 = vmatprep.subr.mxu0 0.0
      %999 = vmatpush1.msra.mxu0 0.0
      %1000 = vmatprep.subr.mxu0 0.0
      %1001 = vmatpush1.msra.mxu0 0.0
      %1002 = vmatprep.subr.mxu0 0.0
      %1003 = vmatpush1.msra.mxu0 0.0
      %1004 = vmatprep.subr.mxu0 0.0
      %1005 = vmatpush1.msra.mxu0 0.0
      %1006 = vmatprep.subr.mxu0 0.0
      %1007 = vmatpush1.msra.mxu0 0.0
      %1008 = vmatprep.subr.mxu0 0.0
      %1009 = vmatpush1.msra.mxu0 0.0
      %1010 = vmatprep.subr.mxu0 0.0
      %1011 = vmatpush1.msra.mxu0 0.0
      %1012 = vmatprep.subr.mxu0 0.0
      %1013 = vmatpush1.msra.mxu0 0.0
      %1014 = vmatprep.subr.mxu0 0.0
      %1015 = vmatpush1.msra.mxu0 0.0
      %1016 = vmatprep.subr.mxu0 0.0
      %1017 = vmatpush1.msra.mxu0 0.0
      %1018 = vmatprep.subr.mxu0 0.0
      %1019 = vmatpush1.msra.mxu0 0.0
      %1020 = vmatprep.subr.mxu0 0.0
      %1021 = vmatpush1.msra.mxu0 0.0
      %1022 = vmatprep.subr.mxu0 0.0
      %1023 = vmatpush1.msra.mxu0 0.0
      %1024 = vmatprep.subr.mxu0 0.0
      %1025 = vmatpush1.msra.mxu0 0.0
      %1026 = vmatprep.subr.mxu0 0.0
      %1027 = vmatpush1.msra.mxu0 0.0
      %1028 = vmatprep.subr.mxu0 0.0
      %1029 = vmatpush1.msra.mxu0 0.0
      %1030 = vmatprep.mubr.f32.mxu0 0.0
      %1031 = vmatmul.mubr.f32.gmra.mrb[0].mxu0 %v962
      %v1032 = vpop.f32.mrb[0].mxu0
      %v1033 = vadd.f32 0.0, %v1032
      %v1034 = vpop.f32.mrb[0].mxu0
      %1035 = vmatprep.mubr.f32.mxu0 0.0
      %1036 = vmatmul.mubr.f32.gmra.mrb[0].mxu0 %v964
      %v1037 = vpop.f32.mrb[0].mxu0
      %v1038 = vadd.f32 0.0, %v1037
      %v1039 = vpop.f32.mrb[0].mxu0
      %1040 = vdwg.mxu0
      %v1041 = vadd.f32 %v950, %v1033
      %v1042 = vadd.f32 %v951, %v1038
      %v1043 = vld [vmem:[%s2] sm:$0x1]
      %v1045 = vlaneseq
      %v1046 = vshrl.u32 %v1045, 7
      %v1047 = vsub.s32 0, %v1046
      %v1048 = vrot.slane %v1043, %v1047
      %v1050 = vadd.f32 %v1041, %v1048
      %v1051 = vadd.f32 %v1042, %v1048
      %v1052 = vmax.f32 %v1050, 0.0
      %v1053 = vmax.f32 %v1051, 0.0
      %v1054 = vpack.c.bf16 %v1053, %v1052
      %v1056 = vunpack.c.l.b16 %v1054
      %v1057 = vunpack.c.h.b16 %v1054
      %v1058 = vpack.c.b16 %v1056, %v1056
      %v1059 = vpack.c.b16 %v1057, %v1057
      %vm1062 = vcmask 257024
      %1063 = vst.msk [vmem:[%s170] sm:$0xf] %vm1062, %v1058
      %1064 = vst.msk [vmem:[%s170 + $0x4] sm:$0xf] %vm1062, %v1059
      %p1065 = scmp.lt.s32.totalorder %s14, 3
      %s1066 = scalar_select %p1065, %s14, 3
      %s1067 = smul.addr %s1066, 2
      %s1068 = smul.addr %s1067, 4
      %s1069 = scalar_lea.vmem %s3, %s1068
      // Predicated region
      $region33: #{seg_net_forward.9} parent=31 // pred_check
        %p1070 = pneg %p100
      $region34: #{seg_net_forward.9} parent=31 // pred_check_branch
        %1072 = sbr.rel (%p1070) target = $region36
      $region35: #{seg_net_forward.9} parent=31 // pred_region
        _
      $region36: #{seg_net_forward.9} parent=31 // pred_fallthru
        _
    $region32: #{seg_net_forward.9} parent=5 // pred_fallthru
      _
    %p1073 = scmp.le.s32.totalorder 2, %s9
    // Predicated region
    $region37: #{seg_net_forward.9} parent=5 // pred_check
      %p1074 = pneg %p1073
    $region38: #{seg_net_forward.9} parent=5 // pred_check_branch
      %1076 = sbr.rel (%p1074) target = $region40
    $region39: #{seg_net_forward.9} parent=5 // pred_region
      %s1077 = ssub.s32 %s9, 2
      // Predicated region
      $region41: #{seg_net_forward.9} parent=39 // pred_check
        %p1078 = pneg %p106
      $region42: #{seg_net_forward.9} parent=39 // pred_check_branch
        %1080 = sbr.rel (%p1078) target = $region44
      $region43: #{seg_net_forward.9} parent=39 // pred_region
        %p1081 = scmp.lt.s32.totalorder %s15, 3
        %s1082 = scalar_select %p1081, %s15, 3
        %s1083 = smul.addr %s1082, 2
        %s1084 = smul.addr %s1083, 4
        %s1085 = scalar_lea.vmem %s3, %s1084
      $region44: #{seg_net_forward.9} parent=39 // pred_fallthru
        _
    $region40: #{seg_net_forward.9} parent=5 // pred_fallthru
      _
  $region6: #{seg_net_forward.9} parent=0 // loop_footer
    %s13 = sadd.s32 1, %s9
  $region7: #{seg_net_forward.9} parent=0 // loop_footer_branch
    %8 = sbr.rel target = $region3
  $region8: #{seg_net_forward.9} parent=0 // loop_exit
    _

// kernel: seg_net_forward.10
$region0: #{seg_net_forward.10}
  #allocation0 [shape = 'u32[]', space=smem, size = 0x4, offset = 0x4, fixed_abs, tag = 'smem constant byte address 0x4 - core index']
  #allocation1 [shape = 'u32[144,128]{1,0:T(1,128)}', space=vmem, size = 0x12000, scoped, tag = 'internal scratch']
  %s0 = inlined_call_operand.vmem [shape: bf16[4,4,3,3,32], index: 0, kind: input, shape index: {}]
  %s1 = inlined_call_operand.vmem [shape: f32[9,32,32], index: 1, kind: input, shape index: {}]
  %s2 = inlined_call_operand.vmem [shape: f32[1,32], index: 2, kind: input, shape index: {}]
  %s3 = inlined_call_operand.vmem [shape: bf16[4,4,32], index: 3, kind: output, shape index: {}]
  %s4 = sld [smem:[#allocation0]]
  $region45: #{seg_net_forward.10} parent=0
    _
  %s6 = ssub.s32 1, %s4
  %s7 = scalar_select 0, %s6, %s4
  loop: start=0, step=1, limit=6
  $region2: #{seg_net_forward.10} parent=0 // loop_pre_header
    _
  $region3: #{seg_net_forward.10} parent=0 // loop_header
    %s9 = sphi 0, %s13
    %p10 = scmp.ge.s32.totalorder %s9, 6
    %s19 = sphi 0, %s21
    %s22 = sphi 0, %s19
    %s23 = sphi 0, %s22
    %s39 = sphi 0, %s23
    %s43 = sphi 0, %s43
    %s45 = sphi 0, %s43
    %s46 = sphi 0, %s45
    %s60 = sphi 0, %s46
    %s64 = sphi 0, %s64
    %s66 = sphi 0, %s64
    %s67 = sphi 0, %s66
    %s81 = sphi 0, %s67
    %s87 = sphi 0, %s89
    %s90 = sphi 0, %s87
    %s91 = sphi 0, %s90
    %s107 = sphi 0, %s91
  $region4: #{seg_net_forward.10} parent=0 // loop_header_branch
    %12 = sbr.rel (%p10) target = $region8
  $region5: #{seg_net_forward.10} parent=0 // loop_body
    %s14 = ssub.s32 %s9, 1
    %s15 = ssub.s32 %s9, 2
    %s16 = sadd.s32 %s9, 1
    %s17 = ssub.s32 %s9, %s16
    %p18 = scmp.eq.s32.totalorder %s17, 0
    %s20 = sadd.s32 %s19, 1
    %s21 = scalar_select %p18, %s19, %s20
    %p24 = pneg %p18
    %p25 = scmp.eq.s32.totalorder %s9, 3
    %p26 = por %p24, %p25
    %p27 = scmp.ne.s32.totalorder %s19, %s22
    %p28 = scmp.eq.s32.totalorder %s9, 0
    %p29 = por %p27, %p28
    %p30 = scmp.ne.s32.totalorder %s19, %s22
    %p31 = scmp.eq.s32.totalorder %s14, 3
    %p32 = por %p30, %p31
    %p33 = scmp.ne.s32.totalorder %s22, %s23
    %p34 = scmp.eq.s32.totalorder %s14, 0
    %p35 = por %p33, %p34
    %p36 = scmp.ne.s32.totalorder %s22, %s23
    %p37 = scmp.eq.s32.totalorder %s15, 3
    %p38 = por %p36, %p37
    %p40 = scmp.ne.s32.totalorder %s23, %s39
    %p41 = scmp.eq.s32.totalorder %s15, 0
    %p42 = por %p40, %p41
    %s44 = sadd.s32 %s43, 1
    %p47 = scmp.eq.s32.totalorder %s9, 3
    %p48 = scmp.ne.s32.totalorder %s43, %s45
    %p49 = scmp.eq.s32.totalorder %s9, 0
    %p50 = por %p48, %p49
    %p51 = scmp.ne.s32.totalorder %s43, %s45
    %p52 = scmp.eq.s32.totalorder %s14, 3
    %p53 = por %p51, %p52
    %p54 = scmp.ne.s32.totalorder %s45, %s46
    %p55 = scmp.eq.s32.totalorder %s14, 0
    %p56 = por %p54, %p55
    %p57 = scmp.ne.s32.totalorder %s45, %s46
    %p58 = scmp.eq.s32.totalorder %s15, 3
    %p59 = por %p57, %p58
    %p61 = scmp.ne.s32.totalorder %s46, %s60
    %p62 = scmp.eq.s32.totalorder %s15, 0
    %p63 = por %p61, %p62
    %s65 = sadd.s32 %s64, 1
    %p68 = scmp.eq.s32.totalorder %s9, 3
    %p69 = scmp.ne.s32.totalorder %s64, %s66
    %p70 = scmp.eq.s32.totalorder %s9, 0
    %p71 = por %p69, %p70
    %p72 = scmp.ne.s32.totalorder %s64, %s66
    %p73 = scmp.eq.s32.totalorder %s14, 3
    %p74 = por %p72, %p73
    %p75 = scmp.ne.s32.totalorder %s66, %s67
    %p76 = scmp.eq.s32.totalorder %s14, 0
    %p77 = por %p75, %p76
    %p78 = scmp.ne.s32.totalorder %s66, %s67
    %p79 = scmp.eq.s32.totalorder %s15, 3
    %p80 = por %p78, %p79
    %p82 = scmp.ne.s32.totalorder %s67, %s81
    %p83 = scmp.eq.s32.totalorder %s15, 0
    %p84 = por %p82, %p83
    %s85 = ssub.s32 %s9, %s16
    %p86 = scmp.eq.s32.totalorder %s85, 0
    %s88 = sadd.s32 %s87, 1
    %s89 = scalar_select %p86, %s87, %s88
    %p92 = pneg %p86
    %p93 = scmp.eq.s32.totalorder %s9, 3
    %p94 = por %p92, %p93
    %p95 = scmp.ne.s32.totalorder %s87, %s90
    %p96 = scmp.eq.s32.totalorder %s9, 0
    %p97 = por %p95, %p96
    %p98 = scmp.ne.s32.totalorder %s87, %s90
    %p99 = scmp.eq.s32.totalorder %s14, 3
    %p100 = por %p98, %p99
    %p101 = scmp.ne.s32.totalorder %s90, %s91
    %p102 = scmp.eq.s32.totalorder %s14, 0
    %p103 = por %p101, %p102
    %p104 = scmp.ne.s32.totalorder %s90, %s91
    %p105 = scmp.eq.s32.totalorder %s15, 3
    %p106 = por %p104, %p105
    %p108 = scmp.ne.s32.totalorder %s91, %s107
    %p109 = scmp.eq.s32.totalorder %s15, 0
    %p110 = por %p108, %p109
    %p111 = scmp.le.s32.totalorder 1, %s9
    %p112 = scmp.lt.s32.totalorder %s9, 5
    %p113 = pnand %p111, %p112
    %p114 = pneg %p113
    // Predicated region
    $region9: #{seg_net_forward.10} parent=5 // pred_check
      _
    $region10: #{seg_net_forward.10} parent=5 // pred_check_branch
      %116 = sbr.rel (%p113) target = $region12
    $region11: #{seg_net_forward.10} parent=5 // pred_region
      %s117 = ssub.s32 %s9, 1
      // Predicated region
      $region13: #{seg_net_forward.10} parent=11 // pred_check
        %p118 = pneg %p56
      $region14: #{seg_net_forward.10} parent=11 // pred_check_branch
        %120 = sbr.rel (%p118) target = $region16
      $region15: #{seg_net_forward.10} parent=11 // pred_region
        _
      $region16: #{seg_net_forward.10} parent=11 // pred_fallthru
        _
      // Predicated region
      $region17: #{seg_net_forward.10} parent=11 // pred_check
        %p121 = pneg %p77
      $region18: #{seg_net_forward.10} parent=11 // pred_check_branch
        %123 = sbr.rel (%p121) target = $region20
      $region19: #{seg_net_forward.10} parent=11 // pred_region
        _
      $region20: #{seg_net_forward.10} parent=11 // pred_fallthru
        _
    $region12: #{seg_net_forward.10} parent=5 // pred_fallthru
      _
    %p124 = scmp.lt.s32.totalorder %s9, 4
    // Predicated region
    $region21: #{seg_net_forward.10} parent=5 // pred_check
      %p125 = pneg %p124
    $region22: #{seg_net_forward.10} parent=5 // pred_check_branch
      %127 = sbr.rel (%p125) target = $region24
    $region23: #{seg_net_forward.10} parent=5 // pred_region
      // Predicated region
      $region25: #{seg_net_forward.10} parent=23 // pred_check
        %p128 = pneg %p29
      $region26: #{seg_net_forward.10} parent=23 // pred_check_branch
        %130 = sbr.rel (%p128) target = $region28
      $region27: #{seg_net_forward.10} parent=23 // pred_region
        %p131 = scmp.lt.s32.totalorder %s9, 3
        %s132 = scalar_select %p131, %s9, 3
        %s133 = smul.addr %s132, 12
        %s134 = smul.addr %s133, 2
        %s135 = scalar_lea.vmem %s0, %s134
      $region28: #{seg_net_forward.10} parent=23 // pred_fallthru
        _
    $region24: #{seg_net_forward.10} parent=5 // pred_fallthru
      _
    %p136 = scmp.le.s32.totalorder 1, %s9
    %p137 = scmp.lt.s32.totalorder %s9, 5
    %p138 = pnand %p136, %p137
    %p139 = pneg %p138
    // Predicated region
    $region29: #{seg_net_forward.10} parent=5 // pred_check
      _
    $region30: #{seg_net_forward.10} parent=5 // pred_check_branch
      %141 = sbr.rel (%p138) target = $region32
    $region31: #{seg_net_forward.10} parent=5 // pred_region
      %s142 = ssub.s32 %s9, 1
      %p143 = scmp.lt.s32.totalorder %s14, 3
      %s144 = scalar_select %p143, %s14, 3
      %s145 = smul.addr %s144, 12
      %s146 = smul.addr %s145, 2
      %s147 = scalar_lea.vmem %s0, %s146
      %p148 = pneg %p35
      %p149 = pneg %p32
      %p150 = pneg %p56
      %p151 = pneg %p53
      %p152 = pneg %p77
      %p153 = pneg %p74
      %p154 = pneg %p103
      %p155 = pneg %p100
      %p156 = scmp.lt.s32.totalorder %s14, 3
      %s157 = scalar_select %p156, %s14, 3
      %s158 = smul.addr %s157, 2
      %s159 = scalar_lea.vmem %s3, %s158
      %p160 = scmp.lt.s32.totalorder %s14, 3
      %s161 = scalar_select %p160, %s14, 3
      %s162 = smul.addr %s161, 12
      %s163 = smul.addr %s162, 2
      %s164 = scalar_lea.vmem %s0, %s163
      %p165 = scmp.lt.s32.totalorder %s14, 3
      %s166 = scalar_select %p165, %s14, 3
      %s167 = smul.addr %s166, 2
      %s168 = scalar_lea.vmem %s3, %s167
      %v169 = vld [vmem:[%s164] sm:$0x3]
      %v170 = vld [vmem:[%s164 + $0x2] sm:$0x3]
      %v171 = vld [vmem:[%s164 + $0x4] sm:$0x3]
      %v172 = vld [vmem:[%s164 + $0x6] sm:$0x3]
      %v173 = vld [vmem:[%s164 + $0x8] sm:$0x3]
      %v174 = vld [vmem:[%s164 + $0xa] sm:$0x3]
      %v175 = vld [vmem:[%s164 + $0xc] sm:$0x3]
      %v176 = vld [vmem:[%s164 + $0xe] sm:$0x3]
      %v177 = vld [vmem:[%s164 + $0x12] sm:$0x3]
      %v178 = vld [vmem:[%s164 + $0x14] sm:$0x3]
      %v179 = vunpack.c.l.bf16 %v169
      %v180 = vunpack.c.l.bf16 %v170
      %v181 = vunpack.c.l.bf16 %v171
      %v182 = vunpack.c.l.bf16 %v172
      %v183 = vunpack.c.l.bf16 %v173
      %v184 = vunpack.c.l.bf16 %v174
      %v185 = vunpack.c.l.bf16 %v175
      %v186 = vunpack.c.l.bf16 %v176
      %v187 = vunpack.c.l.bf16 %v177
      %v188 = vunpack.c.l.bf16 %v178
      %v189 = vld [vmem:[%s1] sm:$0xff]
      %v190 = vld [vmem:[%s1 + $0x8] sm:$0xff]
      %v191 = vld [vmem:[%s1 + $0x10] sm:$0xff]
      %v192 = vld [vmem:[%s1 + $0x18] sm:$0xff]
      %s193 = scalar_lea.vmem %s1, 32
      %v194 = vld [vmem:[%s193] sm:$0xff]
      %v195 = vld [vmem:[%s193 + $0x8] sm:$0xff]
      %v196 = vld [vmem:[%s193 + $0x10] sm:$0xff]
      %v197 = vld [vmem:[%s193 + $0x18] sm:$0xff]
      %v200 = vcombine.low %v182, %v183
      %v202 = vunpack.c.l.s4 1983009808
      %v203 = vunpack.c.0.s8 %v202
      %v204 = vlaneseq
      %v205 = vshrl.u32 %v204, 7
      %v206 = vsub.s32 %v203, %v205
      %v207 = vrot.slane %v200, %v206
      %vm208 = vcmask 261120
      %v209 = vsel %vm208, %v207, 0
      %211 = vmatprep.subr.mxu0 0.0
      %212 = vmatpush1.msra.mxu0 %v194
      %213 = vmatprep.subr.mxu0 0.0
      %214 = vmatpush1.msra.mxu0 %v195
      %215 = vmatprep.subr.mxu0 0.0
      %216 = vmatpush1.msra.mxu0 %v196
      %217 = vmatprep.subr.mxu0 0.0
      %218 = vmatpush1.msra.mxu0 %v197
      %219 = vmatprep.subr.mxu0 0.0
      %220 = vmatpush1.msra.mxu0 0.0
      %221 = vmatprep.subr.mxu0 0.0
      %222 = vmatpush1.msra.mxu0 0.0
      %223 = vmatprep.subr.mxu0 0.0
      %224 = vmatpush1.msra.mxu0 0.0
      %225 = vmatprep.subr.mxu0 0.0
      %226 = vmatpush1.msra.mxu0 0.0
      %227 = vmatprep.subr.mxu0 0.0
      %228 = vmatpush1.msra.mxu0 0.0
      %229 = vmatprep.subr.mxu0 0.0
      %230 = vmatpush1.msra.mxu0 0.0
      %231 = vmatprep.subr.mxu0 0.0
      %232 = vmatpush1.msra.mxu0 0.0
      %233 = vmatprep.subr.mxu0 0.0
      %234 = vmatpush1.msra.mxu0 0.0
      %235 = vmatprep.subr.mxu0 0.0
      %236 = vmatpush1.msra.mxu0 0.0
      %237 = vmatprep.subr.mxu0 0.0
      %238 = vmatpush1.msra.mxu0 0.0
      %239 = vmatprep.subr.mxu0 0.0
      %240 = vmatpush1.msra.mxu0 0.0
      %241 = vmatprep.subr.mxu0 0.0
      %242 = vmatpush1.msra.mxu0 0.0
      %243 = vmatprep.subr.mxu0 0.0
      %244 = vmatpush1.msra.mxu0 0.0
      %245 = vmatprep.subr.mxu0 0.0
      %246 = vmatpush1.msra.mxu0 0.0
      %247 = vmatprep.subr.mxu0 0.0
      %248 = vmatpush1.msra.mxu0 0.0
      %249 = vmatprep.subr.mxu0 0.0
      %250 = vmatpush1.msra.mxu0 0.0
      %251 = vmatprep.subr.mxu0 0.0
      %252 = vmatpush1.msra.mxu0 0.0
      %253 = vmatprep.subr.mxu0 0.0
      %254 = vmatpush1.msra.mxu0 0.0
      %255 = vmatprep.subr.mxu0 0.0
      %256 = vmatpush1.msra.mxu0 0.0
      %257 = vmatprep.subr.mxu0 0.0
      %258 = vmatpush1.msra.mxu0 0.0
      %259 = vmatprep.subr.mxu0 0.0
      %260 = vmatpush1.msra.mxu0 0.0
      %261 = vmatprep.subr.mxu0 0.0
      %262 = vmatpush1.msra.mxu0 0.0
      %263 = vmatprep.subr.mxu0 0.0
      %264 = vmatpush1.msra.mxu0 0.0
      %265 = vmatprep.subr.mxu0 0.0
      %266 = vmatpush1.msra.mxu0 0.0
      %267 = vmatprep.subr.mxu0 0.0
      %268 = vmatpush1.msra.mxu0 0.0
      %269 = vmatprep.subr.mxu0 0.0
      %270 = vmatpush1.msra.mxu0 0.0
      %271 = vmatprep.subr.mxu0 0.0
      %272 = vmatpush1.msra.mxu0 0.0
      %273 = vmatprep.subr.mxu0 0.0
      %274 = vmatpush1.msra.mxu0 0.0
      %275 = vmatprep.mubr.f32.mxu0 0.0
      %276 = vmatmul.mubr.f32.gmra.mrb[0].mxu0 %v209
      %v277 = vpop.f32.mrb[0].mxu0
      %v278 = vadd.f32 0.0, %v277
      %v279 = vpop.f32.mrb[0].mxu0
      %280 = vdwg.mxu0
      %v283 = vcombine.low %v179, %v180
      %v285 = vunpack.c.l.s4 1983009808
      %v286 = vunpack.c.0.s8 %v285
      %v287 = vlaneseq
      %v288 = vshrl.u32 %v287, 7
      %v289 = vsub.s32 %v286, %v288
      %v290 = vrot.slane %v283, %v289
      %v291 = vsel %vm208, %v290, 0
      %293 = vmatprep.subr.mxu0 0.0
      %294 = vmatpush1.msra.mxu0 %v189
      %295 = vmatprep.subr.mxu0 0.0
      %296 = vmatpush1.msra.mxu0 %v190
      %297 = vmatprep.subr.mxu0 0.0
      %298 = vmatpush1.msra.mxu0 %v191
      %299 = vmatprep.subr.mxu0 0.0
      %300 = vmatpush1.msra.mxu0 %v192
      %301 = vmatprep.subr.mxu0 0.0
      %302 = vmatpush1.msra.mxu0 0.0
      %303 = vmatprep.subr.mxu0 0.0
      %304 = vmatpush1.msra.mxu0 0.0
      %305 = vmatprep.subr.mxu0 0.0
      %306 = vmatpush1.msra.mxu0 0.0
      %307 = vmatprep.subr.mxu0 0.0
      %308 = vmatpush1.msra.mxu0 0.0
      %309 = vmatprep.subr.mxu0 0.0
      %310 = vmatpush1.msra.mxu0 0.0
      %311 = vmatprep.subr.mxu0 0.0
      %312 = vmatpush1.msra.mxu0 0.0
      %313 = vmatprep.subr.mxu0 0.0
      %314 = vmatpush1.msra.mxu0 0.0
      %315 = vmatprep.subr.mxu0 0.0
      %316 = vmatpush1.msra.mxu0 0.0
      %317 = vmatprep.subr.mxu0 0.0
      %318 = vmatpush1.msra.mxu0 0.0
      %319 = vmatprep.subr.mxu0 0.0
      %320 = vmatpush1.msra.mxu0 0.0
      %321 = vmatprep.subr.mxu0 0.0
      %322 = vmatpush1.msra.mxu0 0.0
      %323 = vmatprep.subr.mxu0 0.0
      %324 = vmatpush1.msra.mxu0 0.0
      %325 = vmatprep.subr.mxu0 0.0
      %326 = vmatpush1.msra.mxu0 0.0
      %327 = vmatprep.subr.mxu0 0.0
      %328 = vmatpush1.msra.mxu0 0.0
      %329 = vmatprep.subr.mxu0 0.0
      %330 = vmatpush1.msra.mxu0 0.0
      %331 = vmatprep.subr.mxu0 0.0
      %332 = vmatpush1.msra.mxu0 0.0
      %333 = vmatprep.subr.mxu0 0.0
      %334 = vmatpush1.msra.mxu0 0.0
      %335 = vmatprep.subr.mxu0 0.0
      %336 = vmatpush1.msra.mxu0 0.0
      %337 = vmatprep.subr.mxu0 0.0
      %338 = vmatpush1.msra.mxu0 0.0
      %339 = vmatprep.subr.mxu0 0.0
      %340 = vmatpush1.msra.mxu0 0.0
      %341 = vmatprep.subr.mxu0 0.0
      %342 = vmatpush1.msra.mxu0 0.0
      %343 = vmatprep.subr.mxu0 0.0
      %344 = vmatpush1.msra.mxu0 0.0
      %345 = vmatprep.subr.mxu0 0.0
      %346 = vmatpush1.msra.mxu0 0.0
      %347 = vmatprep.subr.mxu0 0.0
      %348 = vmatpush1.msra.mxu0 0.0
      %349 = vmatprep.subr.mxu0 0.0
      %350 = vmatpush1.msra.mxu0 0.0
      %351 = vmatprep.subr.mxu0 0.0
      %352 = vmatpush1.msra.mxu0 0.0
      %353 = vmatprep.subr.mxu0 0.0
      %354 = vmatpush1.msra.mxu0 0.0
      %355 = vmatprep.subr.mxu0 0.0
      %356 = vmatpush1.msra.mxu0 0.0
      %357 = vmatprep.mubr.f32.mxu0 0.0
      %358 = vmatmul.mubr.f32.gmra.mrb[0].mxu0 %v291
      %v359 = vpop.f32.mrb[0].mxu0
      %v360 = vadd.f32 %v278, %v359
      %v361 = vpop.f32.mrb[0].mxu0
      %362 = vdwg.mxu0
      %v364 = vunpack.c.l.s4 1983009808
      %v365 = vunpack.c.0.s8 %v364
      %v366 = vlaneseq
      %v367 = vshrl.u32 %v366, 7
      %v368 = vsub.s32 %v365, %v367
      %v369 = vrot.slane %v179, %v368
      %v370 = vcombine.high %v369, %v369
      %v372 = vunpack.c.l.s4 1983009808
      %v373 = vunpack.c.0.s8 %v372
      %v374 = vlaneseq
      %v375 = vshrl.u32 %v374, 7
      %v376 = vsub.s32 %v373, %v375
      %v377 = vrot.slane %v180, %v376
      %v378 = vcombine.high %v377, %v377
      %vm379 = vcmask 1040384
      %vm380 = vcmask 1042434
      %vm381 = vmor %vm379, %vm380
      %vm382 = vcmask 1044484
      %vm383 = vmor %vm381, %vm382
      %vm384 = vcmask 1046534
      %vm385 = vmor %vm383, %vm384
      %v386 = vrot.slane %v369, 7
      %v387 = vrot.slane %v386, 2
      %v388 = vrot.slane %v370, 7
      %v389 = vsel %vm385, %v387, %v388
      %v390 = vrot.slane %v377, 7
      %v391 = vrot.slane %v390, 2
      %v392 = vrot.slane %v378, 7
      %v393 = vsel %vm385, %v391, %v392
      %s394 = scalar_lea.vmem %s1, 64
      %v395 = vld [vmem:[%s394] sm:$0xff]
      %v396 = vld [vmem:[%s394 + $0x8] sm:$0xff]
      %v397 = vld [vmem:[%s394 + $0x10] sm:$0xff]
      %v398 = vld [vmem:[%s394 + $0x18] sm:$0xff]
      %v399 = vcombine.low %v389, %v393
      %v401 = vunpack.c.l.s4 1983009808
      %v402 = vunpack.c.0.s8 %v401
      %v403 = vlaneseq
      %v404 = vshrl.u32 %v403, 7
      %v405 = vsub.s32 %v402, %v404
      %v406 = vrot.slane %v399, %v405
      %v407 = vsel %vm208, %v406, 0
      %409 = vmatprep.subr.mxu0 0.0
      %410 = vmatpush1.msra.mxu0 %v395
      %411 = vmatprep.subr.mxu0 0.0
      %412 = vmatpush1.msra.mxu0 %v396
      %413 = vmatprep.subr.mxu0 0.0
      %414 = vmatpush1.msra.mxu0 %v397
      %415 = vmatprep.subr.mxu0 0.0
      %416 = vmatpush1.msra.mxu0 %v398
      %417 = vmatprep.subr.mxu0 0.0
      %418 = vmatpush1.msra.mxu0 0.0
      %419 = vmatprep.subr.mxu0 0.0
      %420 = vmatpush1.msra.mxu0 0.0
      %421 = vmatprep.subr.mxu0 0.0
      %422 = vmatpush1.msra.mxu0 0.0
      %423 = vmatprep.subr.mxu0 0.0
      %424 = vmatpush1.msra.mxu0 0.0
      %425 = vmatprep.subr.mxu0 0.0
      %426 = vmatpush1.msra.mxu0 0.0
      %427 = vmatprep.subr.mxu0 0.0
      %428 = vmatpush1.msra.mxu0 0.0
      %429 = vmatprep.subr.mxu0 0.0
      %430 = vmatpush1.msra.mxu0 0.0
      %431 = vmatprep.subr.mxu0 0.0
      %432 = vmatpush1.msra.mxu0 0.0
      %433 = vmatprep.subr.mxu0 0.0
      %434 = vmatpush1.msra.mxu0 0.0
      %435 = vmatprep.subr.mxu0 0.0
      %436 = vmatpush1.msra.mxu0 0.0
      %437 = vmatprep.subr.mxu0 0.0
      %438 = vmatpush1.msra.mxu0 0.0
      %439 = vmatprep.subr.mxu0 0.0
      %440 = vmatpush1.msra.mxu0 0.0
      %441 = vmatprep.subr.mxu0 0.0
      %442 = vmatpush1.msra.mxu0 0.0
      %443 = vmatprep.subr.mxu0 0.0
      %444 = vmatpush1.msra.mxu0 0.0
      %445 = vmatprep.subr.mxu0 0.0
      %446 = vmatpush1.msra.mxu0 0.0
      %447 = vmatprep.subr.mxu0 0.0
      %448 = vmatpush1.msra.mxu0 0.0
      %449 = vmatprep.subr.mxu0 0.0
      %450 = vmatpush1.msra.mxu0 0.0
      %451 = vmatprep.subr.mxu0 0.0
      %452 = vmatpush1.msra.mxu0 0.0
      %453 = vmatprep.subr.mxu0 0.0
      %454 = vmatpush1.msra.mxu0 0.0
      %455 = vmatprep.subr.mxu0 0.0
      %456 = vmatpush1.msra.mxu0 0.0
      %457 = vmatprep.subr.mxu0 0.0
      %458 = vmatpush1.msra.mxu0 0.0
      %459 = vmatprep.subr.mxu0 0.0
      %460 = vmatpush1.msra.mxu0 0.0
      %461 = vmatprep.subr.mxu0 0.0
      %462 = vmatpush1.msra.mxu0 0.0
      %463 = vmatprep.subr.mxu0 0.0
      %464 = vmatpush1.msra.mxu0 0.0
      %465 = vmatprep.subr.mxu0 0.0
      %466 = vmatpush1.msra.mxu0 0.0
      %467 = vmatprep.subr.mxu0 0.0
      %468 = vmatpush1.msra.mxu0 0.0
      %469 = vmatprep.subr.mxu0 0.0
      %470 = vmatpush1.msra.mxu0 0.0
      %471 = vmatprep.subr.mxu0 0.0
      %472 = vmatpush1.msra.mxu0 0.0
      %473 = vmatprep.mubr.f32.mxu0 0.0
      %474 = vmatmul.mubr.f32.gmra.mrb[0].mxu0 %v407
      %v475 = vpop.f32.mrb[0].mxu0
      %v476 = vadd.f32 0.0, %v475
      %v477 = vpop.f32.mrb[0].mxu0
      %478 = vdwg.mxu0
      %v479 = vadd.f32 %v360, %v476
      %s480 = scalar_lea.vmem %s1, 96
      %v481 = vld [vmem:[%s480] sm:$0xff]
      %v482 = vld [vmem:[%s480 + $0x8] sm:$0xff]
      %v483 = vld [vmem:[%s480 + $0x10] sm:$0xff]
      %v484 = vld [vmem:[%s480 + $0x18] sm:$0xff]
      %v487 = vcombine.low %v185, %v186
      %v489 = vunpack.c.l.s4 1983009808
      %v490 = vunpack.c.0.s8 %v489
      %v491 = vlaneseq
      %v492 = vshrl.u32 %v491, 7
      %v493 = vsub.s32 %v490, %v492
      %v494 = vrot.slane %v487, %v493
      %v495 = vsel %vm208, %v494, 0
      %497 = vmatprep.subr.mxu0 0.0
      %498 = vmatpush1.msra.mxu0 %v481
      %499 = vmatprep.subr.mxu0 0.0
      %500 = vmatpush1.msra.mxu0 %v482
      %501 = vmatprep.subr.mxu0 0.0
      %502 = vmatpush1.msra.mxu0 %v483
      %503 = vmatprep.subr.mxu0 0.0
      %504 = vmatpush1.msra.mxu0 %v484
      %505 = vmatprep.subr.mxu0 0.0
      %506 = vmatpush1.msra.mxu0 0.0
      %507 = vmatprep.subr.mxu0 0.0
      %508 = vmatpush1.msra.mxu0 0.0
      %509 = vmatprep.subr.mxu0 0.0
      %510 = vmatpush1.msra.mxu0 0.0
      %511 = vmatprep.subr.mxu0 0.0
      %512 = vmatpush1.msra.mxu0 0.0
      %513 = vmatprep.subr.mxu0 0.0
      %514 = vmatpush1.msra.mxu0 0.0
      %515 = vmatprep.subr.mxu0 0.0
      %516 = vmatpush1.msra.mxu0 0.0
      %517 = vmatprep.subr.mxu0 0.0
      %518 = vmatpush1.msra.mxu0 0.0
      %519 = vmatprep.subr.mxu0 0.0
      %520 = vmatpush1.msra.mxu0 0.0
      %521 = vmatprep.subr.mxu0 0.0
      %522 = vmatpush1.msra.mxu0 0.0
      %523 = vmatprep.subr.mxu0 0.0
      %524 = vmatpush1.msra.mxu0 0.0
      %525 = vmatprep.subr.mxu0 0.0
      %526 = vmatpush1.msra.mxu0 0.0
      %527 = vmatprep.subr.mxu0 0.0
      %528 = vmatpush1.msra.mxu0 0.0
      %529 = vmatprep.subr.mxu0 0.0
      %530 = vmatpush1.msra.mxu0 0.0
      %531 = vmatprep.subr.mxu0 0.0
      %532 = vmatpush1.msra.mxu0 0.0
      %533 = vmatprep.subr.mxu0 0.0
      %534 = vmatpush1.msra.mxu0 0.0
      %535 = vmatprep.subr.mxu0 0.0
      %536 = vmatpush1.msra.mxu0 0.0
      %537 = vmatprep.subr.mxu0 0.0
      %538 = vmatpush1.msra.mxu0 0.0
      %539 = vmatprep.subr.mxu0 0.0
      %540 = vmatpush1.msra.mxu0 0.0
      %541 = vmatprep.subr.mxu0 0.0
      %542 = vmatpush1.msra.mxu0 0.0
      %543 = vmatprep.subr.mxu0 0.0
      %544 = vmatpush1.msra.mxu0 0.0
      %545 = vmatprep.subr.mxu0 0.0
      %546 = vmatpush1.msra.mxu0 0.0
      %547 = vmatprep.subr.mxu0 0.0
      %548 = vmatpush1.msra.mxu0 0.0
      %549 = vmatprep.subr.mxu0 0.0
      %550 = vmatpush1.msra.mxu0 0.0
      %551 = vmatprep.subr.mxu0 0.0
      %552 = vmatpush1.msra.mxu0 0.0
      %553 = vmatprep.subr.mxu0 0.0
      %554 = vmatpush1.msra.mxu0 0.0
      %555 = vmatprep.subr.mxu0 0.0
      %556 = vmatpush1.msra.mxu0 0.0
      %557 = vmatprep.subr.mxu0 0.0
      %558 = vmatpush1.msra.mxu0 0.0
      %559 = vmatprep.subr.mxu0 0.0
      %560 = vmatpush1.msra.mxu0 0.0
      %561 = vmatprep.mubr.f32.mxu0 0.0
      %562 = vmatmul.mubr.f32.gmra.mrb[0].mxu0 %v495
      %v563 = vpop.f32.mrb[0].mxu0
      %v564 = vadd.f32 0.0, %v563
      %v565 = vpop.f32.mrb[0].mxu0
      %566 = vdwg.mxu0
      %v567 = vadd.f32 %v479, %v564
      %s568 = scalar_lea.vmem %s1, 128
      %v569 = vld [vmem:[%s568] sm:$0xff]
      %v570 = vld [vmem:[%s568 + $0x8] sm:$0xff]
      %v571 = vld [vmem:[%s568 + $0x10] sm:$0xff]
      %v572 = vld [vmem:[%s568 + $0x18] sm:$0xff]
      %v575 = vcombine.low %v187, %v188
      %v577 = vunpack.c.l.s4 1983009808
      %v578 = vunpack.c.0.s8 %v577
      %v579 = vlaneseq
      %v580 = vshrl.u32 %v579, 7
      %v581 = vsub.s32 %v578, %v580
      %v582 = vrot.slane %v575, %v581
      %v583 = vsel %vm208, %v582, 0
      %585 = vmatprep.subr.mxu0 0.0
      %586 = vmatpush1.msra.mxu0 %v569
      %587 = vmatprep.subr.mxu0 0.0
      %588 = vmatpush1.msra.mxu0 %v570
      %589 = vmatprep.subr.mxu0 0.0
      %590 = vmatpush1.msra.mxu0 %v571
      %591 = vmatprep.subr.mxu0 0.0
      %592 = vmatpush1.msra.mxu0 %v572
      %593 = vmatprep.subr.mxu0 0.0
      %594 = vmatpush1.msra.mxu0 0.0
      %595 = vmatprep.subr.mxu0 0.0
      %596 = vmatpush1.msra.mxu0 0.0
      %597 = vmatprep.subr.mxu0 0.0
      %598 = vmatpush1.msra.mxu0 0.0
      %599 = vmatprep.subr.mxu0 0.0
      %600 = vmatpush1.msra.mxu0 0.0
      %601 = vmatprep.subr.mxu0 0.0
      %602 = vmatpush1.msra.mxu0 0.0
      %603 = vmatprep.subr.mxu0 0.0
      %604 = vmatpush1.msra.mxu0 0.0
      %605 = vmatprep.subr.mxu0 0.0
      %606 = vmatpush1.msra.mxu0 0.0
      %607 = vmatprep.subr.mxu0 0.0
      %608 = vmatpush1.msra.mxu0 0.0
      %609 = vmatprep.subr.mxu0 0.0
      %610 = vmatpush1.msra.mxu0 0.0
      %611 = vmatprep.subr.mxu0 0.0
      %612 = vmatpush1.msra.mxu0 0.0
      %613 = vmatprep.subr.mxu0 0.0
      %614 = vmatpush1.msra.mxu0 0.0
      %615 = vmatprep.subr.mxu0 0.0
      %616 = vmatpush1.msra.mxu0 0.0
      %617 = vmatprep.subr.mxu0 0.0
      %618 = vmatpush1.msra.mxu0 0.0
      %619 = vmatprep.subr.mxu0 0.0
      %620 = vmatpush1.msra.mxu0 0.0
      %621 = vmatprep.subr.mxu0 0.0
      %622 = vmatpush1.msra.mxu0 0.0
      %623 = vmatprep.subr.mxu0 0.0
      %624 = vmatpush1.msra.mxu0 0.0
      %625 = vmatprep.subr.mxu0 0.0
      %626 = vmatpush1.msra.mxu0 0.0
      %627 = vmatprep.subr.mxu0 0.0
      %628 = vmatpush1.msra.mxu0 0.0
      %629 = vmatprep.subr.mxu0 0.0
      %630 = vmatpush1.msra.mxu0 0.0
      %631 = vmatprep.subr.mxu0 0.0
      %632 = vmatpush1.msra.mxu0 0.0
      %633 = vmatprep.subr.mxu0 0.0
      %634 = vmatpush1.msra.mxu0 0.0
      %635 = vmatprep.subr.mxu0 0.0
      %636 = vmatpush1.msra.mxu0 0.0
      %637 = vmatprep.subr.mxu0 0.0
      %638 = vmatpush1.msra.mxu0 0.0
      %639 = vmatprep.subr.mxu0 0.0
      %640 = vmatpush1.msra.mxu0 0.0
      %641 = vmatprep.subr.mxu0 0.0
      %642 = vmatpush1.msra.mxu0 0.0
      %643 = vmatprep.subr.mxu0 0.0
      %644 = vmatpush1.msra.mxu0 0.0
      %645 = vmatprep.subr.mxu0 0.0
      %646 = vmatpush1.msra.mxu0 0.0
      %647 = vmatprep.subr.mxu0 0.0
      %648 = vmatpush1.msra.mxu0 0.0
      %649 = vmatprep.mubr.f32.mxu0 0.0
      %650 = vmatmul.mubr.f32.gmra.mrb[0].mxu0 %v583
      %v651 = vpop.f32.mrb[0].mxu0
      %v652 = vadd.f32 0.0, %v651
      %v653 = vpop.f32.mrb[0].mxu0
      %654 = vdwg.mxu0
      %v655 = vadd.f32 %v567, %v652
      %v657 = vunpack.c.l.s4 1983009808
      %v658 = vunpack.c.0.s8 %v657
      %v659 = vlaneseq
      %v660 = vshrl.u32 %v659, 7
      %v661 = vsub.s32 %v658, %v660
      %v662 = vrot.slane %v185, %v661
      %v663 = vcombine.high %v662, %v662
      %v665 = vunpack.c.l.s4 1983009808
      %v666 = vunpack.c.0.s8 %v665
      %v667 = vlaneseq
      %v668 = vshrl.u32 %v667, 7
      %v669 = vsub.s32 %v666, %v668
      %v670 = vrot.slane %v186, %v669
      %v671 = vcombine.high %v670, %v670
      %v672 = vrot.slane %v662, 7
      %v673 = vrot.slane %v672, 2
      %v674 = vrot.slane %v663, 7
      %v675 = vsel %vm385, %v673, %v674
      %v676 = vrot.slane %v670, 7
      %v677 = vrot.slane %v676, 2
      %v678 = vrot.slane %v671, 7
      %v679 = vsel %vm385, %v677, %v678
      %s680 = scalar_lea.vmem %s1, 160
      %v681 = vld [vmem:[%s680] sm:$0xff]
      %v682 = vld [vmem:[%s680 + $0x8] sm:$0xff]
      %v683 = vld [vmem:[%s680 + $0x10] sm:$0xff]
      %v684 = vld [vmem:[%s680 + $0x18] sm:$0xff]
      %v685 = vcombine.low %v675, %v679
      %v687 = vunpack.c.l.s4 1983009808
      %v688 = vunpack.c.0.s8 %v687
      %v689 = vlaneseq
      %v690 = vshrl.u32 %v689, 7
      %v691 = vsub.s32 %v688, %v690
      %v692 = vrot.slane %v685, %v691
      %v693 = vsel %vm208, %v692, 0
      %695 = vmatprep.subr.mxu0 0.0
      %696 = vmatpush1.msra.mxu0 %v681
      %697 = vmatprep.subr.mxu0 0.0
      %698 = vmatpush1.msra.mxu0 %v682
      %699 = vmatprep.subr.mxu0 0.0
      %700 = vmatpush1.msra.mxu0 %v683
      %701 = vmatprep.subr.mxu0 0.0
      %702 = vmatpush1.msra.mxu0 %v684
      %703 = vmatprep.subr.mxu0 0.0
      %704 = vmatpush1.msra.mxu0 0.0
      %705 = vmatprep.subr.mxu0 0.0
      %706 = vmatpush1.msra.mxu0 0.0
      %707 = vmatprep.subr.mxu0 0.0
      %708 = vmatpush1.msra.mxu0 0.0
      %709 = vmatprep.subr.mxu0 0.0
      %710 = vmatpush1.msra.mxu0 0.0
      %711 = vmatprep.subr.mxu0 0.0
      %712 = vmatpush1.msra.mxu0 0.0
      %713 = vmatprep.subr.mxu0 0.0
      %714 = vmatpush1.msra.mxu0 0.0
      %715 = vmatprep.subr.mxu0 0.0
      %716 = vmatpush1.msra.mxu0 0.0
      %717 = vmatprep.subr.mxu0 0.0
      %718 = vmatpush1.msra.mxu0 0.0
      %719 = vmatprep.subr.mxu0 0.0
      %720 = vmatpush1.msra.mxu0 0.0
      %721 = vmatprep.subr.mxu0 0.0
      %722 = vmatpush1.msra.mxu0 0.0
      %723 = vmatprep.subr.mxu0 0.0
      %724 = vmatpush1.msra.mxu0 0.0
      %725 = vmatprep.subr.mxu0 0.0
      %726 = vmatpush1.msra.mxu0 0.0
      %727 = vmatprep.subr.mxu0 0.0
      %728 = vmatpush1.msra.mxu0 0.0
      %729 = vmatprep.subr.mxu0 0.0
      %730 = vmatpush1.msra.mxu0 0.0
      %731 = vmatprep.subr.mxu0 0.0
      %732 = vmatpush1.msra.mxu0 0.0
      %733 = vmatprep.subr.mxu0 0.0
      %734 = vmatpush1.msra.mxu0 0.0
      %735 = vmatprep.subr.mxu0 0.0
      %736 = vmatpush1.msra.mxu0 0.0
      %737 = vmatprep.subr.mxu0 0.0
      %738 = vmatpush1.msra.mxu0 0.0
      %739 = vmatprep.subr.mxu0 0.0
      %740 = vmatpush1.msra.mxu0 0.0
      %741 = vmatprep.subr.mxu0 0.0
      %742 = vmatpush1.msra.mxu0 0.0
      %743 = vmatprep.subr.mxu0 0.0
      %744 = vmatpush1.msra.mxu0 0.0
      %745 = vmatprep.subr.mxu0 0.0
      %746 = vmatpush1.msra.mxu0 0.0
      %747 = vmatprep.subr.mxu0 0.0
      %748 = vmatpush1.msra.mxu0 0.0
      %749 = vmatprep.subr.mxu0 0.0
      %750 = vmatpush1.msra.mxu0 0.0
      %751 = vmatprep.subr.mxu0 0.0
      %752 = vmatpush1.msra.mxu0 0.0
      %753 = vmatprep.subr.mxu0 0.0
      %754 = vmatpush1.msra.mxu0 0.0
      %755 = vmatprep.subr.mxu0 0.0
      %756 = vmatpush1.msra.mxu0 0.0
      %757 = vmatprep.subr.mxu0 0.0
      %758 = vmatpush1.msra.mxu0 0.0
      %759 = vmatprep.mubr.f32.mxu0 0.0
      %760 = vmatmul.mubr.f32.gmra.mrb[0].mxu0 %v693
      %v761 = vpop.f32.mrb[0].mxu0
      %v762 = vadd.f32 0.0, %v761
      %v763 = vpop.f32.mrb[0].mxu0
      %764 = vdwg.mxu0
      %v765 = vadd.f32 %v655, %v762
      %s766 = scalar_lea.vmem %s1, 192
      %v767 = vld [vmem:[%s766] sm:$0xff]
      %v768 = vld [vmem:[%s766 + $0x8] sm:$0xff]
      %v769 = vld [vmem:[%s766 + $0x10] sm:$0xff]
      %v770 = vld [vmem:[%s766 + $0x18] sm:$0xff]
      %v772 = vcombine.low %v180, %v181
      %v774 = vunpack.c.l.s4 1983009808
      %v775 = vunpack.c.0.s8 %v774
      %v776 = vlaneseq
      %v777 = vshrl.u32 %v776, 7
      %v778 = vsub.s32 %v775, %v777
      %v779 = vrot.slane %v772, %v778
      %v780 = vsel %vm208, %v779, 0
      %782 = vmatprep.subr.mxu0 0.0
      %783 = vmatpush1.msra.mxu0 %v767
      %784 = vmatprep.subr.mxu0 0.0
      %785 = vmatpush1.msra.mxu0 %v768
      %786 = vmatprep.subr.mxu0 0.0
      %787 = vmatpush1.msra.mxu0 %v769
      %788 = vmatprep.subr.mxu0 0.0
      %789 = vmatpush1.msra.mxu0 %v770
      %790 = vmatprep.subr.mxu0 0.0
      %791 = vmatpush1.msra.mxu0 0.0
      %792 = vmatprep.subr.mxu0 0.0
      %793 = vmatpush1.msra.mxu0 0.0
      %794 = vmatprep.subr.mxu0 0.0
      %795 = vmatpush1.msra.mxu0 0.0
      %796 = vmatprep.subr.mxu0 0.0
      %797 = vmatpush1.msra.mxu0 0.0
      %798 = vmatprep.subr.mxu0 0.0
      %799 = vmatpush1.msra.mxu0 0.0
      %800 = vmatprep.subr.mxu0 0.0
      %801 = vmatpush1.msra.mxu0 0.0
      %802 = vmatprep.subr.mxu0 0.0
      %803 = vmatpush1.msra.mxu0 0.0
      %804 = vmatprep.subr.mxu0 0.0
      %805 = vmatpush1.msra.mxu0 0.0
      %806 = vmatprep.subr.mxu0 0.0
      %807 = vmatpush1.msra.mxu0 0.0
      %808 = vmatprep.subr.mxu0 0.0
      %809 = vmatpush1.msra.mxu0 0.0
      %810 = vmatprep.subr.mxu0 0.0
      %811 = vmatpush1.msra.mxu0 0.0
      %812 = vmatprep.subr.mxu0 0.0
      %813 = vmatpush1.msra.mxu0 0.0
      %814 = vmatprep.subr.mxu0 0.0
      %815 = vmatpush1.msra.mxu0 0.0
      %816 = vmatprep.subr.mxu0 0.0
      %817 = vmatpush1.msra.mxu0 0.0
      %818 = vmatprep.subr.mxu0 0.0
      %819 = vmatpush1.msra.mxu0 0.0
      %820 = vmatprep.subr.mxu0 0.0
      %821 = vmatpush1.msra.mxu0 0.0
      %822 = vmatprep.subr.mxu0 0.0
      %823 = vmatpush1.msra.mxu0 0.0
      %824 = vmatprep.subr.mxu0 0.0
      %825 = vmatpush1.msra.mxu0 0.0
      %826 = vmatprep.subr.mxu0 0.0
      %827 = vmatpush1.msra.mxu0 0.0
      %828 = vmatprep.subr.mxu0 0.0
      %829 = vmatpush1.msra.mxu0 0.0
      %830 = vmatprep.subr.mxu0 0.0
      %831 = vmatpush1.msra.mxu0 0.0
      %832 = vmatprep.subr.mxu0 0.0
      %833 = vmatpush1.msra.mxu0 0.0
      %834 = vmatprep.subr.mxu0 0.0
      %835 = vmatpush1.msra.mxu0 0.0
      %836 = vmatprep.subr.mxu0 0.0
      %837 = vmatpush1.msra.mxu0 0.0
      %838 = vmatprep.subr.mxu0 0.0
      %839 = vmatpush1.msra.mxu0 0.0
      %840 = vmatprep.subr.mxu0 0.0
      %841 = vmatpush1.msra.mxu0 0.0
      %842 = vmatprep.subr.mxu0 0.0
      %843 = vmatpush1.msra.mxu0 0.0
      %844 = vmatprep.subr.mxu0 0.0
      %845 = vmatpush1.msra.mxu0 0.0
      %846 = vmatprep.mubr.f32.mxu0 0.0
      %847 = vmatmul.mubr.f32.gmra.mrb[0].mxu0 %v780
      %v848 = vpop.f32.mrb[0].mxu0
      %v849 = vadd.f32 0.0, %v848
      %v850 = vpop.f32.mrb[0].mxu0
      %851 = vdwg.mxu0
      %v852 = vadd.f32 %v765, %v849
      %s853 = scalar_lea.vmem %s1, 224
      %v854 = vld [vmem:[%s853] sm:$0xff]
      %v855 = vld [vmem:[%s853 + $0x8] sm:$0xff]
      %v856 = vld [vmem:[%s853 + $0x10] sm:$0xff]
      %v857 = vld [vmem:[%s853 + $0x18] sm:$0xff]
      %v859 = vcombine.low %v183, %v184
      %v861 = vunpack.c.l.s4 1983009808
      %v862 = vunpack.c.0.s8 %v861
      %v863 = vlaneseq
      %v864 = vshrl.u32 %v863, 7
      %v865 = vsub.s32 %v862, %v864
      %v866 = vrot.slane %v859, %v865
      %v867 = vsel %vm208, %v866, 0
      %869 = vmatprep.subr.mxu0 0.0
      %870 = vmatpush1.msra.mxu0 %v854
      %871 = vmatprep.subr.mxu0 0.0
      %872 = vmatpush1.msra.mxu0 %v855
      %873 = vmatprep.subr.mxu0 0.0
      %874 = vmatpush1.msra.mxu0 %v856
      %875 = vmatprep.subr.mxu0 0.0
      %876 = vmatpush1.msra.mxu0 %v857
      %877 = vmatprep.subr.mxu0 0.0
      %878 = vmatpush1.msra.mxu0 0.0
      %879 = vmatprep.subr.mxu0 0.0
      %880 = vmatpush1.msra.mxu0 0.0
      %881 = vmatprep.subr.mxu0 0.0
      %882 = vmatpush1.msra.mxu0 0.0
      %883 = vmatprep.subr.mxu0 0.0
      %884 = vmatpush1.msra.mxu0 0.0
      %885 = vmatprep.subr.mxu0 0.0
      %886 = vmatpush1.msra.mxu0 0.0
      %887 = vmatprep.subr.mxu0 0.0
      %888 = vmatpush1.msra.mxu0 0.0
      %889 = vmatprep.subr.mxu0 0.0
      %890 = vmatpush1.msra.mxu0 0.0
      %891 = vmatprep.subr.mxu0 0.0
      %892 = vmatpush1.msra.mxu0 0.0
      %893 = vmatprep.subr.mxu0 0.0
      %894 = vmatpush1.msra.mxu0 0.0
      %895 = vmatprep.subr.mxu0 0.0
      %896 = vmatpush1.msra.mxu0 0.0
      %897 = vmatprep.subr.mxu0 0.0
      %898 = vmatpush1.msra.mxu0 0.0
      %899 = vmatprep.subr.mxu0 0.0
      %900 = vmatpush1.msra.mxu0 0.0
      %901 = vmatprep.subr.mxu0 0.0
      %902 = vmatpush1.msra.mxu0 0.0
      %903 = vmatprep.subr.mxu0 0.0
      %904 = vmatpush1.msra.mxu0 0.0
      %905 = vmatprep.subr.mxu0 0.0
      %906 = vmatpush1.msra.mxu0 0.0
      %907 = vmatprep.subr.mxu0 0.0
      %908 = vmatpush1.msra.mxu0 0.0
      %909 = vmatprep.subr.mxu0 0.0
      %910 = vmatpush1.msra.mxu0 0.0
      %911 = vmatprep.subr.mxu0 0.0
      %912 = vmatpush1.msra.mxu0 0.0
      %913 = vmatprep.subr.mxu0 0.0
      %914 = vmatpush1.msra.mxu0 0.0
      %915 = vmatprep.subr.mxu0 0.0
      %916 = vmatpush1.msra.mxu0 0.0
      %917 = vmatprep.subr.mxu0 0.0
      %918 = vmatpush1.msra.mxu0 0.0
      %919 = vmatprep.subr.mxu0 0.0
      %920 = vmatpush1.msra.mxu0 0.0
      %921 = vmatprep.subr.mxu0 0.0
      %922 = vmatpush1.msra.mxu0 0.0
      %923 = vmatprep.subr.mxu0 0.0
      %924 = vmatpush1.msra.mxu0 0.0
      %925 = vmatprep.subr.mxu0 0.0
      %926 = vmatpush1.msra.mxu0 0.0
      %927 = vmatprep.subr.mxu0 0.0
      %928 = vmatpush1.msra.mxu0 0.0
      %929 = vmatprep.subr.mxu0 0.0
      %930 = vmatpush1.msra.mxu0 0.0
      %931 = vmatprep.subr.mxu0 0.0
      %932 = vmatpush1.msra.mxu0 0.0
      %933 = vmatprep.mubr.f32.mxu0 0.0
      %934 = vmatmul.mubr.f32.gmra.mrb[0].mxu0 %v867
      %v935 = vpop.f32.mrb[0].mxu0
      %v936 = vadd.f32 0.0, %v935
      %v937 = vpop.f32.mrb[0].mxu0
      %938 = vdwg.mxu0
      %v939 = vadd.f32 %v852, %v936
      %v941 = vunpack.c.l.s4 1983009808
      %v942 = vunpack.c.0.s8 %v941
      %v943 = vlaneseq
      %v944 = vshrl.u32 %v943, 7
      %v945 = vsub.s32 %v942, %v944
      %v946 = vrot.slane %v181, %v945
      %v947 = vcombine.high %v946, %v946
      %v948 = vrot.slane %v946, 7
      %v949 = vrot.slane %v948, 2
      %v950 = vrot.slane %v947, 7
      %v951 = vsel %vm385, %v949, %v950
      %s952 = scalar_lea.vmem %s1, 256
      %v953 = vld [vmem:[%s952] sm:$0xff]
      %v954 = vld [vmem:[%s952 + $0x8] sm:$0xff]
      %v955 = vld [vmem:[%s952 + $0x10] sm:$0xff]
      %v956 = vld [vmem:[%s952 + $0x18] sm:$0xff]
      %v957 = vcombine.low %v393, %v951
      %v959 = vunpack.c.l.s4 1983009808
      %v960 = vunpack.c.0.s8 %v959
      %v961 = vlaneseq
      %v962 = vshrl.u32 %v961, 7
      %v963 = vsub.s32 %v960, %v962
      %v964 = vrot.slane %v957, %v963
      %v965 = vsel %vm208, %v964, 0
      %967 = vmatprep.subr.mxu0 0.0
      %968 = vmatpush1.msra.mxu0 %v953
      %969 = vmatprep.subr.mxu0 0.0
      %970 = vmatpush1.msra.mxu0 %v954
      %971 = vmatprep.subr.mxu0 0.0
      %972 = vmatpush1.msra.mxu0 %v955
      %973 = vmatprep.subr.mxu0 0.0
      %974 = vmatpush1.msra.mxu0 %v956
      %975 = vmatprep.subr.mxu0 0.0
      %976 = vmatpush1.msra.mxu0 0.0
      %977 = vmatprep.subr.mxu0 0.0
      %978 = vmatpush1.msra.mxu0 0.0
      %979 = vmatprep.subr.mxu0 0.0
      %980 = vmatpush1.msra.mxu0 0.0
      %981 = vmatprep.subr.mxu0 0.0
      %982 = vmatpush1.msra.mxu0 0.0
      %983 = vmatprep.subr.mxu0 0.0
      %984 = vmatpush1.msra.mxu0 0.0
      %985 = vmatprep.subr.mxu0 0.0
      %986 = vmatpush1.msra.mxu0 0.0
      %987 = vmatprep.subr.mxu0 0.0
      %988 = vmatpush1.msra.mxu0 0.0
      %989 = vmatprep.subr.mxu0 0.0
      %990 = vmatpush1.msra.mxu0 0.0
      %991 = vmatprep.subr.mxu0 0.0
      %992 = vmatpush1.msra.mxu0 0.0
      %993 = vmatprep.subr.mxu0 0.0
      %994 = vmatpush1.msra.mxu0 0.0
      %995 = vmatprep.subr.mxu0 0.0
      %996 = vmatpush1.msra.mxu0 0.0
      %997 = vmatprep.subr.mxu0 0.0
      %998 = vmatpush1.msra.mxu0 0.0
      %999 = vmatprep.subr.mxu0 0.0
      %1000 = vmatpush1.msra.mxu0 0.0
      %1001 = vmatprep.subr.mxu0 0.0
      %1002 = vmatpush1.msra.mxu0 0.0
      %1003 = vmatprep.subr.mxu0 0.0
      %1004 = vmatpush1.msra.mxu0 0.0
      %1005 = vmatprep.subr.mxu0 0.0
      %1006 = vmatpush1.msra.mxu0 0.0
      %1007 = vmatprep.subr.mxu0 0.0
      %1008 = vmatpush1.msra.mxu0 0.0
      %1009 = vmatprep.subr.mxu0 0.0
      %1010 = vmatpush1.msra.mxu0 0.0
      %1011 = vmatprep.subr.mxu0 0.0
      %1012 = vmatpush1.msra.mxu0 0.0
      %1013 = vmatprep.subr.mxu0 0.0
      %1014 = vmatpush1.msra.mxu0 0.0
      %1015 = vmatprep.subr.mxu0 0.0
      %1016 = vmatpush1.msra.mxu0 0.0
      %1017 = vmatprep.subr.mxu0 0.0
      %1018 = vmatpush1.msra.mxu0 0.0
      %1019 = vmatprep.subr.mxu0 0.0
      %1020 = vmatpush1.msra.mxu0 0.0
      %1021 = vmatprep.subr.mxu0 0.0
      %1022 = vmatpush1.msra.mxu0 0.0
      %1023 = vmatprep.subr.mxu0 0.0
      %1024 = vmatpush1.msra.mxu0 0.0
      %1025 = vmatprep.subr.mxu0 0.0
      %1026 = vmatpush1.msra.mxu0 0.0
      %1027 = vmatprep.subr.mxu0 0.0
      %1028 = vmatpush1.msra.mxu0 0.0
      %1029 = vmatprep.subr.mxu0 0.0
      %1030 = vmatpush1.msra.mxu0 0.0
      %1031 = vmatprep.mubr.f32.mxu0 0.0
      %1032 = vmatmul.mubr.f32.gmra.mrb[0].mxu0 %v965
      %v1033 = vpop.f32.mrb[0].mxu0
      %v1034 = vadd.f32 0.0, %v1033
      %v1035 = vpop.f32.mrb[0].mxu0
      %1036 = vdwg.mxu0
      %v1037 = vadd.f32 %v939, %v1034
      %v1038 = vld [vmem:[%s2] sm:$0x1]
      %v1040 = vlaneseq
      %v1041 = vshrl.u32 %v1040, 7
      %v1042 = vsub.s32 0, %v1041
      %v1043 = vrot.slane %v1038, %v1042
      %v1045 = vadd.f32 %v1037, %v1043
      %v1046 = vmax.f32 %v1045, 0.0
      %v1047 = vpack.c.bf16 %v1046, %v1046
      %vm1048 = vcmask 254976
      %1049 = vst.msk [vmem:[%s168] sm:$0x3] %vm1048, %v1047
      %p1050 = scmp.lt.s32.totalorder %s14, 3
      %s1051 = scalar_select %p1050, %s14, 3
      %s1052 = smul.addr %s1051, 2
      %s1053 = scalar_lea.vmem %s3, %s1052
      // Predicated region
      $region33: #{seg_net_forward.10} parent=31 // pred_check
        %p1054 = pneg %p100
      $region34: #{seg_net_forward.10} parent=31 // pred_check_branch
        %1056 = sbr.rel (%p1054) target = $region36
      $region35: #{seg_net_forward.10} parent=31 // pred_region
        _
      $region36: #{seg_net_forward.10} parent=31 // pred_fallthru
        _
    $region32: #{seg_net_forward.10} parent=5 // pred_fallthru
      _
    %p1057 = scmp.le.s32.totalorder 2, %s9
    // Predicated region
    $region37: #{seg_net_forward.10} parent=5 // pred_check
      %p1058 = pneg %p1057
    $region38: #{seg_net_forward.10} parent=5 // pred_check_branch
      %1060 = sbr.rel (%p1058) target = $region40
    $region39: #{seg_net_forward.10} parent=5 // pred_region
      %s1061 = ssub.s32 %s9, 2
      // Predicated region
      $region41: #{seg_net_forward.10} parent=39 // pred_check
        %p1062 = pneg %p106
      $region42: #{seg_net_forward.10} parent=39 // pred_check_branch
        %1064 = sbr.rel (%p1062) target = $region44
      $region43: #{seg_net_forward.10} parent=39 // pred_region
        %p1065 = scmp.lt.s32.totalorder %s15, 3
        %s1066 = scalar_select %p1065, %s15, 3
        %s1067 = smul.addr %s1066, 2
        %s1068 = scalar_lea.vmem %s3, %s1067
      $region44: #{seg_net_forward.10} parent=39 // pred_fallthru
        _
    $region40: #{seg_net_forward.10} parent=5 // pred_fallthru
      _
  $region6: #{seg_net_forward.10} parent=0 // loop_footer
    %s13 = sadd.s32 1, %s9
  $region7: #{seg_net_forward.10} parent=0 // loop_footer_branch
    %8 = sbr.rel target = $region3
  $region8: #{seg_net_forward.10} parent=0 // loop_exit
    _

// kernel: seg_net_forward.13
$region0: #{seg_net_forward.13}
  #allocation0 [shape = 'u32[]', space=smem, size = 0x4, offset = 0x4, fixed_abs, tag = 'smem constant byte address 0x4 - core index']
  #allocation1 [shape = 'u32[144,128]{1,0:T(1,128)}', space=vmem, size = 0x12000, scoped, tag = 'internal scratch']
  #allocation2 [shape = 'f32[1,1]{1,0:T(1,128)S(1)}', space=vmem, size = 0x200, scoped, tag = 'scoped memory for seg_net_forward.13']
  %s0 = inlined_call_operand.vmem [shape: bf16[16,32], index: 0, kind: input, shape index: {}]
  %s1 = inlined_call_operand.vmem [shape: f32[32,32], index: 1, kind: input, shape index: {}]
  %s2 = inlined_call_operand.vmem [shape: f32[1,32], index: 2, kind: input, shape index: {}]
  %s3 = inlined_call_operand.vmem [shape: f32[32,32], index: 3, kind: input, shape index: {}]
  %s4 = inlined_call_operand.vmem [shape: f32[1,32], index: 4, kind: input, shape index: {}]
  %s5 = inlined_call_operand.vmem [shape: f32[32,1], index: 5, kind: input, shape index: {}]
  %s6 = inlined_call_operand.<no memory space> [shape: f32[1,1], index: 6, kind: input, shape index: {}]
  %s7 = inlined_call_operand.vmem [shape: f32[32,128], index: 7, kind: input, shape index: {}]
  %s8 = inlined_call_operand.vmem [shape: f32[32,128], index: 8, kind: input, shape index: {}]
  %s9 = inlined_call_operand.vmem [shape: f32[1,128], index: 9, kind: input, shape index: {}]
  %s10 = inlined_call_operand.vmem [shape: f32[16,128], index: 10, kind: output, shape index: {}]
  %s11 = sld [smem:[#allocation0]]
  $region50: #{seg_net_forward.13} parent=0
    _
  %s13 = ssub.s32 1, %s11
  %s14 = scalar_select 0, %s13, %s11
  %v15 = vstv %s6
  %16 = vst [vmem:[#allocation2] sm:$0x1] %v15
  // Predicated region
  $region2: #{seg_net_forward.13} parent=0 // pred_check
    _
  $region3: #{seg_net_forward.13} parent=0 // pred_check_branch
    %18 = sbr.rel (0) target = $region5
  $region4: #{seg_net_forward.13} parent=0 // pred_region
    _
  $region5: #{seg_net_forward.13} parent=0 // pred_fallthru
    _
  // Predicated region
  $region6: #{seg_net_forward.13} parent=0 // pred_check
    _
  $region7: #{seg_net_forward.13} parent=0 // pred_check_branch
    %20 = sbr.rel (0) target = $region9
  $region8: #{seg_net_forward.13} parent=0 // pred_region
    _
  $region9: #{seg_net_forward.13} parent=0 // pred_fallthru
    _
  // Predicated region
  $region10: #{seg_net_forward.13} parent=0 // pred_check
    _
  $region11: #{seg_net_forward.13} parent=0 // pred_check_branch
    %22 = sbr.rel (0) target = $region13
  $region12: #{seg_net_forward.13} parent=0 // pred_region
    _
  $region13: #{seg_net_forward.13} parent=0 // pred_fallthru
    _
  // Predicated region
  $region14: #{seg_net_forward.13} parent=0 // pred_check
    _
  $region15: #{seg_net_forward.13} parent=0 // pred_check_branch
    %24 = sbr.rel (0) target = $region17
  $region16: #{seg_net_forward.13} parent=0 // pred_region
    _
  $region17: #{seg_net_forward.13} parent=0 // pred_fallthru
    _
  // Predicated region
  $region18: #{seg_net_forward.13} parent=0 // pred_check
    _
  $region19: #{seg_net_forward.13} parent=0 // pred_check_branch
    %26 = sbr.rel (0) target = $region21
  $region20: #{seg_net_forward.13} parent=0 // pred_region
    _
  $region21: #{seg_net_forward.13} parent=0 // pred_fallthru
    _
  // Predicated region
  $region22: #{seg_net_forward.13} parent=0 // pred_check
    _
  $region23: #{seg_net_forward.13} parent=0 // pred_check_branch
    %28 = sbr.rel (0) target = $region25
  $region24: #{seg_net_forward.13} parent=0 // pred_region
    _
  $region25: #{seg_net_forward.13} parent=0 // pred_fallthru
    _
  // Predicated region
  $region26: #{seg_net_forward.13} parent=0 // pred_check
    _
  $region27: #{seg_net_forward.13} parent=0 // pred_check_branch
    %30 = sbr.rel (0) target = $region29
  $region28: #{seg_net_forward.13} parent=0 // pred_region
    _
  $region29: #{seg_net_forward.13} parent=0 // pred_fallthru
    _
  // Predicated region
  $region30: #{seg_net_forward.13} parent=0 // pred_check
    _
  $region31: #{seg_net_forward.13} parent=0 // pred_check_branch
    %32 = sbr.rel (0) target = $region33
  $region32: #{seg_net_forward.13} parent=0 // pred_region
    _
  $region33: #{seg_net_forward.13} parent=0 // pred_fallthru
    _
  // Predicated region
  $region34: #{seg_net_forward.13} parent=0 // pred_check
    _
  $region35: #{seg_net_forward.13} parent=0 // pred_check_branch
    %34 = sbr.rel (0) target = $region37
  $region36: #{seg_net_forward.13} parent=0 // pred_region
    _
  $region37: #{seg_net_forward.13} parent=0 // pred_fallthru
    _
  // Predicated region
  $region38: #{seg_net_forward.13} parent=0 // pred_check
    _
  $region39: #{seg_net_forward.13} parent=0 // pred_check_branch
    %36 = sbr.rel (0) target = $region41
  $region40: #{seg_net_forward.13} parent=0 // pred_region
    _
  $region41: #{seg_net_forward.13} parent=0 // pred_fallthru
    _
  %v37 = vld [vmem:[%s0] sm:$0xf]
  %v38 = vld [vmem:[%s0 + $0x4] sm:$0xf]
  %v39 = vunpack.c.l.bf16 %v37
  %v40 = vunpack.c.l.bf16 %v38
  %v41 = vld [vmem:[%s1] sm:$0xff]
  %v42 = vld [vmem:[%s1 + $0x8] sm:$0xff]
  %v43 = vld [vmem:[%s1 + $0x10] sm:$0xff]
  %v44 = vld [vmem:[%s1 + $0x18] sm:$0xff]
  %v45 = vld [vmem:[%s2] sm:$0x1]
  %v47 = vlaneseq
  %v48 = vshrl.u32 %v47, 7
  %v49 = vsub.s32 0, %v48
  %v50 = vrot.slane %v45, %v49
  %vm52 = vcmask 261120
  %v54 = vsel %vm52, %v39, 0
  %v57 = vsel %vm52, %v40, 0
  %59 = vmatprep.subr.mxu0 0.0
  %60 = vmatpush1.msra.mxu0 %v41
  %61 = vmatprep.subr.mxu0 0.0
  %62 = vmatpush1.msra.mxu0 %v42
  %63 = vmatprep.subr.mxu0 0.0
  %64 = vmatpush1.msra.mxu0 %v43
  %65 = vmatprep.subr.mxu0 0.0
  %66 = vmatpush1.msra.mxu0 %v44
  %67 = vmatprep.subr.mxu0 0.0
  %68 = vmatpush1.msra.mxu0 0.0
  %69 = vmatprep.subr.mxu0 0.0
  %70 = vmatpush1.msra.mxu0 0.0
  %71 = vmatprep.subr.mxu0 0.0
  %72 = vmatpush1.msra.mxu0 0.0
  %73 = vmatprep.subr.mxu0 0.0
  %74 = vmatpush1.msra.mxu0 0.0
  %75 = vmatprep.subr.mxu0 0.0
  %76 = vmatpush1.msra.mxu0 0.0
  %77 = vmatprep.subr.mxu0 0.0
  %78 = vmatpush1.msra.mxu0 0.0
  %79 = vmatprep.subr.mxu0 0.0
  %80 = vmatpush1.msra.mxu0 0.0
  %81 = vmatprep.subr.mxu0 0.0
  %82 = vmatpush1.msra.mxu0 0.0
  %83 = vmatprep.subr.mxu0 0.0
  %84 = vmatpush1.msra.mxu0 0.0
  %85 = vmatprep.subr.mxu0 0.0
  %86 = vmatpush1.msra.mxu0 0.0
  %87 = vmatprep.subr.mxu0 0.0
  %88 = vmatpush1.msra.mxu0 0.0
  %89 = vmatprep.subr.mxu0 0.0
  %90 = vmatpush1.msra.mxu0 0.0
  %91 = vmatprep.subr.mxu0 0.0
  %92 = vmatpush1.msra.mxu0 0.0
  %93 = vmatprep.subr.mxu0 0.0
  %94 = vmatpush1.msra.mxu0 0.0
  %95 = vmatprep.subr.mxu0 0.0
  %96 = vmatpush1.msra.mxu0 0.0
  %97 = vmatprep.subr.mxu0 0.0
  %98 = vmatpush1.msra.mxu0 0.0
  %99 = vmatprep.subr.mxu0 0.0
  %100 = vmatpush1.msra.mxu0 0.0
  %101 = vmatprep.subr.mxu0 0.0
  %102 = vmatpush1.msra.mxu0 0.0
  %103 = vmatprep.subr.mxu0 0.0
  %104 = vmatpush1.msra.mxu0 0.0
  %105 = vmatprep.subr.mxu0 0.0
  %106 = vmatpush1.msra.mxu0 0.0
  %107 = vmatprep.subr.mxu0 0.0
  %108 = vmatpush1.msra.mxu0 0.0
  %109 = vmatprep.subr.mxu0 0.0
  %110 = vmatpush1.msra.mxu0 0.0
  %111 = vmatprep.subr.mxu0 0.0
  %112 = vmatpush1.msra.mxu0 0.0
  %113 = vmatprep.subr.mxu0 0.0
  %114 = vmatpush1.msra.mxu0 0.0
  %115 = vmatprep.subr.mxu0 0.0
  %116 = vmatpush1.msra.mxu0 0.0
  %117 = vmatprep.subr.mxu0 0.0
  %118 = vmatpush1.msra.mxu0 0.0
  %119 = vmatprep.subr.mxu0 0.0
  %120 = vmatpush1.msra.mxu0 0.0
  %121 = vmatprep.subr.mxu0 0.0
  %122 = vmatpush1.msra.mxu0 0.0
  %123 = vmatprep.mubr.f32.mxu0 0.0
  %124 = vmatmul.mubr.f32.gmra.mrb[0].mxu0 %v54
  %v125 = vpop.f32.mrb[0].mxu0
  %v126 = vadd.f32 %v50, %v125
  %v127 = vpop.f32.mrb[0].mxu0
  %128 = vmatprep.mubr.f32.mxu0 0.0
  %129 = vmatmul.mubr.f32.gmra.mrb[0].mxu0 %v57
  %v130 = vpop.f32.mrb[0].mxu0
  %v131 = vadd.f32 %v50, %v130
  %v132 = vpop.f32.mrb[0].mxu0
  %133 = vdwg.mxu0
  %v134 = vmax.f32 %v126, 0.0
  %v135 = vmax.f32 %v131, 0.0
  %v136 = vld [vmem:[%s3] sm:$0xff]
  %v137 = vld [vmem:[%s3 + $0x8] sm:$0xff]
  %v138 = vld [vmem:[%s3 + $0x10] sm:$0xff]
  %v139 = vld [vmem:[%s3 + $0x18] sm:$0xff]
  %v140 = vld [vmem:[%s4] sm:$0x1]
  %v142 = vlaneseq
  %v143 = vshrl.u32 %v142, 7
  %v144 = vsub.s32 0, %v143
  %v145 = vrot.slane %v140, %v144
  %147 = vmatprep.subr.mxu0 0.0
  %148 = vmatpush1.msra.mxu0 %v136
  %149 = vmatprep.subr.mxu0 0.0
  %150 = vmatpush1.msra.mxu0 %v137
  %151 = vmatprep.subr.mxu0 0.0
  %152 = vmatpush1.msra.mxu0 %v138
  %153 = vmatprep.subr.mxu0 0.0
  %154 = vmatpush1.msra.mxu0 %v139
  %155 = vmatprep.subr.mxu0 0.0
  %156 = vmatpush1.msra.mxu0 0.0
  %157 = vmatprep.subr.mxu0 0.0
  %158 = vmatpush1.msra.mxu0 0.0
  %159 = vmatprep.subr.mxu0 0.0
  %160 = vmatpush1.msra.mxu0 0.0
  %161 = vmatprep.subr.mxu0 0.0
  %162 = vmatpush1.msra.mxu0 0.0
  %163 = vmatprep.subr.mxu0 0.0
  %164 = vmatpush1.msra.mxu0 0.0
  %165 = vmatprep.subr.mxu0 0.0
  %166 = vmatpush1.msra.mxu0 0.0
  %167 = vmatprep.subr.mxu0 0.0
  %168 = vmatpush1.msra.mxu0 0.0
  %169 = vmatprep.subr.mxu0 0.0
  %170 = vmatpush1.msra.mxu0 0.0
  %171 = vmatprep.subr.mxu0 0.0
  %172 = vmatpush1.msra.mxu0 0.0
  %173 = vmatprep.subr.mxu0 0.0
  %174 = vmatpush1.msra.mxu0 0.0
  %175 = vmatprep.subr.mxu0 0.0
  %176 = vmatpush1.msra.mxu0 0.0
  %177 = vmatprep.subr.mxu0 0.0
  %178 = vmatpush1.msra.mxu0 0.0
  %179 = vmatprep.subr.mxu0 0.0
  %180 = vmatpush1.msra.mxu0 0.0
  %181 = vmatprep.subr.mxu0 0.0
  %182 = vmatpush1.msra.mxu0 0.0
  %183 = vmatprep.subr.mxu0 0.0
  %184 = vmatpush1.msra.mxu0 0.0
  %185 = vmatprep.subr.mxu0 0.0
  %186 = vmatpush1.msra.mxu0 0.0
  %187 = vmatprep.subr.mxu0 0.0
  %188 = vmatpush1.msra.mxu0 0.0
  %189 = vmatprep.subr.mxu0 0.0
  %190 = vmatpush1.msra.mxu0 0.0
  %191 = vmatprep.subr.mxu0 0.0
  %192 = vmatpush1.msra.mxu0 0.0
  %193 = vmatprep.subr.mxu0 0.0
  %194 = vmatpush1.msra.mxu0 0.0
  %195 = vmatprep.subr.mxu0 0.0
  %196 = vmatpush1.msra.mxu0 0.0
  %197 = vmatprep.subr.mxu0 0.0
  %198 = vmatpush1.msra.mxu0 0.0
  %199 = vmatprep.subr.mxu0 0.0
  %200 = vmatpush1.msra.mxu0 0.0
  %201 = vmatprep.subr.mxu0 0.0
  %202 = vmatpush1.msra.mxu0 0.0
  %203 = vmatprep.subr.mxu0 0.0
  %204 = vmatpush1.msra.mxu0 0.0
  %205 = vmatprep.subr.mxu0 0.0
  %206 = vmatpush1.msra.mxu0 0.0
  %207 = vmatprep.subr.mxu0 0.0
  %208 = vmatpush1.msra.mxu0 0.0
  %209 = vmatprep.subr.mxu0 0.0
  %210 = vmatpush1.msra.mxu0 0.0
  %211 = vmatprep.mubr.f32.mxu0 0.0
  %212 = vmatmul.mubr.f32.gmra.mrb[0].mxu0 %v54
  %v213 = vpop.f32.mrb[0].mxu0
  %v214 = vadd.f32 %v145, %v213
  %v215 = vpop.f32.mrb[0].mxu0
  %216 = vmatprep.mubr.f32.mxu0 0.0
  %217 = vmatmul.mubr.f32.gmra.mrb[0].mxu0 %v57
  %v218 = vpop.f32.mrb[0].mxu0
  %v219 = vadd.f32 %v145, %v218
  %v220 = vpop.f32.mrb[0].mxu0
  %221 = vdwg.mxu0
  %v222 = vmax.f32 %v214, 0.0
  %v223 = vmax.f32 %v219, 0.0
  %v224 = vld [vmem:[%s5] sm:$0xff]
  %v225 = vld [vmem:[%s5 + $0x8] sm:$0xff]
  %v226 = vld [vmem:[%s5 + $0x10] sm:$0xff]
  %v227 = vld [vmem:[%s5 + $0x18] sm:$0xff]
  %v228 = vld [vmem:[#allocation2] sm:$0x1]
  %v230 = vlaneseq
  %v231 = vshrl.u32 %v230, 7
  %v232 = vsub.s32 0, %v231
  %v233 = vrot.slane %v228, %v232
  %235 = vmatprep.subr.mxu0 0.0
  %236 = vmatpush1.msra.mxu0 %v224
  %237 = vmatprep.subr.mxu0 0.0
  %238 = vmatpush1.msra.mxu0 %v225
  %239 = vmatprep.subr.mxu0 0.0
  %240 = vmatpush1.msra.mxu0 %v226
  %241 = vmatprep.subr.mxu0 0.0
  %242 = vmatpush1.msra.mxu0 %v227
  %243 = vmatprep.subr.mxu0 0.0
  %244 = vmatpush1.msra.mxu0 0.0
  %245 = vmatprep.subr.mxu0 0.0
  %246 = vmatpush1.msra.mxu0 0.0
  %247 = vmatprep.subr.mxu0 0.0
  %248 = vmatpush1.msra.mxu0 0.0
  %249 = vmatprep.subr.mxu0 0.0
  %250 = vmatpush1.msra.mxu0 0.0
  %251 = vmatprep.subr.mxu0 0.0
  %252 = vmatpush1.msra.mxu0 0.0
  %253 = vmatprep.subr.mxu0 0.0
  %254 = vmatpush1.msra.mxu0 0.0
  %255 = vmatprep.subr.mxu0 0.0
  %256 = vmatpush1.msra.mxu0 0.0
  %257 = vmatprep.subr.mxu0 0.0
  %258 = vmatpush1.msra.mxu0 0.0
  %259 = vmatprep.subr.mxu0 0.0
  %260 = vmatpush1.msra.mxu0 0.0
  %261 = vmatprep.subr.mxu0 0.0
  %262 = vmatpush1.msra.mxu0 0.0
  %263 = vmatprep.subr.mxu0 0.0
  %264 = vmatpush1.msra.mxu0 0.0
  %265 = vmatprep.subr.mxu0 0.0
  %266 = vmatpush1.msra.mxu0 0.0
  %267 = vmatprep.subr.mxu0 0.0
  %268 = vmatpush1.msra.mxu0 0.0
  %269 = vmatprep.subr.mxu0 0.0
  %270 = vmatpush1.msra.mxu0 0.0
  %271 = vmatprep.subr.mxu0 0.0
  %272 = vmatpush1.msra.mxu0 0.0
  %273 = vmatprep.subr.mxu0 0.0
  %274 = vmatpush1.msra.mxu0 0.0
  %275 = vmatprep.subr.mxu0 0.0
  %276 = vmatpush1.msra.mxu0 0.0
  %277 = vmatprep.subr.mxu0 0.0
  %278 = vmatpush1.msra.mxu0 0.0
  %279 = vmatprep.subr.mxu0 0.0
  %280 = vmatpush1.msra.mxu0 0.0
  %281 = vmatprep.subr.mxu0 0.0
  %282 = vmatpush1.msra.mxu0 0.0
  %283 = vmatprep.subr.mxu0 0.0
  %284 = vmatpush1.msra.mxu0 0.0
  %285 = vmatprep.subr.mxu0 0.0
  %286 = vmatpush1.msra.mxu0 0.0
  %287 = vmatprep.subr.mxu0 0.0
  %288 = vmatpush1.msra.mxu0 0.0
  %289 = vmatprep.subr.mxu0 0.0
  %290 = vmatpush1.msra.mxu0 0.0
  %291 = vmatprep.subr.mxu0 0.0
  %292 = vmatpush1.msra.mxu0 0.0
  %293 = vmatprep.subr.mxu0 0.0
  %294 = vmatpush1.msra.mxu0 0.0
  %295 = vmatprep.subr.mxu0 0.0
  %296 = vmatpush1.msra.mxu0 0.0
  %297 = vmatprep.subr.mxu0 0.0
  %298 = vmatpush1.msra.mxu0 0.0
  %299 = vmatprep.mubr.f32.mxu0 0.0
  %300 = vmatmul.mubr.f32.gmra.mrb[0].mxu0 %v54
  %v301 = vpop.f32.mrb[0].mxu0
  %v302 = vadd.f32 %v233, %v301
  %v303 = vpop.f32.mrb[0].mxu0
  %304 = vmatprep.mubr.f32.mxu0 0.0
  %305 = vmatmul.mubr.f32.gmra.mrb[0].mxu0 %v57
  %v306 = vpop.f32.mrb[0].mxu0
  %v307 = vadd.f32 %v233, %v306
  %v308 = vpop.f32.mrb[0].mxu0
  %309 = vdwg.mxu0
  %v310 = vxor.u32 %v302, 2147483648
  %v311 = vxor.u32 %v307, 2147483648
  %v312 = vmul.f32 %v310, 1.442695
  %v313 = vpow.pop %v312
  %v314 = vmul.f32 %v311, 1.442695
  %v315 = vpow.pop %v314
  %v316 = vadd.f32 %v313, 1.0
  %v317 = vadd.f32 %v315, 1.0
  %v318 = vrcp.pop %v316
  %v319 = vmul.f32 1.0, %v318
  %v320 = vrcp.pop %v317
  %v321 = vmul.f32 1.0, %v320
  %323 = vset.pattern.permute.xlu0 0
  %324 = vperm.xlu0 %323, %v319
  %v325 = vpop.permute.xlu0 %324
  %328 = vset.pattern.permute.xlu0 0
  %329 = vperm.xlu0 %328, %v321
  %v330 = vpop.permute.xlu0 %329
  %v332 = vmul.f32 %v222, %v325
  %v333 = vmul.f32 %v223, %v330
  %v334 = vld [vmem:[%s7] sm:$0xff]
  %v335 = vld [vmem:[%s7 + $0x8] sm:$0xff]
  %v336 = vld [vmem:[%s7 + $0x10] sm:$0xff]
  %v337 = vld [vmem:[%s7 + $0x18] sm:$0xff]
  %v338 = vld [vmem:[%s8] sm:$0xff]
  %v339 = vld [vmem:[%s8 + $0x8] sm:$0xff]
  %v340 = vld [vmem:[%s8 + $0x10] sm:$0xff]
  %v341 = vld [vmem:[%s8 + $0x18] sm:$0xff]
  %v343 = vsel %vm52, %v332, 0
  %v346 = vsel %vm52, %v333, 0
  %348 = vmatprep.subr.mxu0 0.0
  %349 = vmatpush1.msra.mxu0 %v338
  %350 = vmatprep.subr.mxu0 0.0
  %351 = vmatpush1.msra.mxu0 %v339
  %352 = vmatprep.subr.mxu0 0.0
  %353 = vmatpush1.msra.mxu0 %v340
  %354 = vmatprep.subr.mxu0 0.0
  %355 = vmatpush1.msra.mxu0 %v341
  %356 = vmatprep.subr.mxu0 0.0
  %357 = vmatpush1.msra.mxu0 0.0
  %358 = vmatprep.subr.mxu0 0.0
  %359 = vmatpush1.msra.mxu0 0.0
  %360 = vmatprep.subr.mxu0 0.0
  %361 = vmatpush1.msra.mxu0 0.0
  %362 = vmatprep.subr.mxu0 0.0
  %363 = vmatpush1.msra.mxu0 0.0
  %364 = vmatprep.subr.mxu0 0.0
  %365 = vmatpush1.msra.mxu0 0.0
  %366 = vmatprep.subr.mxu0 0.0
  %367 = vmatpush1.msra.mxu0 0.0
  %368 = vmatprep.subr.mxu0 0.0
  %369 = vmatpush1.msra.mxu0 0.0
  %370 = vmatprep.subr.mxu0 0.0
  %371 = vmatpush1.msra.mxu0 0.0
  %372 = vmatprep.subr.mxu0 0.0
  %373 = vmatpush1.msra.mxu0 0.0
  %374 = vmatprep.subr.mxu0 0.0
  %375 = vmatpush1.msra.mxu0 0.0
  %376 = vmatprep.subr.mxu0 0.0
  %377 = vmatpush1.msra.mxu0 0.0
  %378 = vmatprep.subr.mxu0 0.0
  %379 = vmatpush1.msra.mxu0 0.0
  %380 = vmatprep.subr.mxu0 0.0
  %381 = vmatpush1.msra.mxu0 0.0
  %382 = vmatprep.subr.mxu0 0.0
  %383 = vmatpush1.msra.mxu0 0.0
  %384 = vmatprep.subr.mxu0 0.0
  %385 = vmatpush1.msra.mxu0 0.0
  %386 = vmatprep.subr.mxu0 0.0
  %387 = vmatpush1.msra.mxu0 0.0
  %388 = vmatprep.subr.mxu0 0.0
  %389 = vmatpush1.msra.mxu0 0.0
  %390 = vmatprep.subr.mxu0 0.0
  %391 = vmatpush1.msra.mxu0 0.0
  %392 = vmatprep.subr.mxu0 0.0
  %393 = vmatpush1.msra.mxu0 0.0
  %394 = vmatprep.subr.mxu0 0.0
  %395 = vmatpush1.msra.mxu0 0.0
  %396 = vmatprep.subr.mxu0 0.0
  %397 = vmatpush1.msra.mxu0 0.0
  %398 = vmatprep.subr.mxu0 0.0
  %399 = vmatpush1.msra.mxu0 0.0
  %400 = vmatprep.subr.mxu0 0.0
  %401 = vmatpush1.msra.mxu0 0.0
  %402 = vmatprep.subr.mxu0 0.0
  %403 = vmatpush1.msra.mxu0 0.0
  %404 = vmatprep.subr.mxu0 0.0
  %405 = vmatpush1.msra.mxu0 0.0
  %406 = vmatprep.subr.mxu0 0.0
  %407 = vmatpush1.msra.mxu0 0.0
  %408 = vmatprep.subr.mxu0 0.0
  %409 = vmatpush1.msra.mxu0 0.0
  %410 = vmatprep.subr.mxu0 0.0
  %411 = vmatpush1.msra.mxu0 0.0
  %412 = vmatprep.mubr.f32.mxu0 0.0
  %413 = vmatmul.mubr.f32.gmra.mrb[0].mxu0 %v343
  %v414 = vpop.f32.mrb[0].mxu0
  %v415 = vadd.f32 0.0, %v414
  %v416 = vpop.f32.mrb[0].mxu0
  %417 = vmatprep.mubr.f32.mxu0 0.0
  %418 = vmatmul.mubr.f32.gmra.mrb[0].mxu0 %v346
  %v419 = vpop.f32.mrb[0].mxu0
  %v420 = vadd.f32 0.0, %v419
  %v421 = vpop.f32.mrb[0].mxu0
  %422 = vdwg.mxu0
  %v424 = vsel %vm52, %v134, 0
  %v427 = vsel %vm52, %v135, 0
  %429 = vmatprep.subr.mxu0 0.0
  %430 = vmatpush1.msra.mxu0 %v334
  %431 = vmatprep.subr.mxu0 0.0
  %432 = vmatpush1.msra.mxu0 %v335
  %433 = vmatprep.subr.mxu0 0.0
  %434 = vmatpush1.msra.mxu0 %v336
  %435 = vmatprep.subr.mxu0 0.0
  %436 = vmatpush1.msra.mxu0 %v337
  %437 = vmatprep.subr.mxu0 0.0
  %438 = vmatpush1.msra.mxu0 0.0
  %439 = vmatprep.subr.mxu0 0.0
  %440 = vmatpush1.msra.mxu0 0.0
  %441 = vmatprep.subr.mxu0 0.0
  %442 = vmatpush1.msra.mxu0 0.0
  %443 = vmatprep.subr.mxu0 0.0
  %444 = vmatpush1.msra.mxu0 0.0
  %445 = vmatprep.subr.mxu0 0.0
  %446 = vmatpush1.msra.mxu0 0.0
  %447 = vmatprep.subr.mxu0 0.0
  %448 = vmatpush1.msra.mxu0 0.0
  %449 = vmatprep.subr.mxu0 0.0
  %450 = vmatpush1.msra.mxu0 0.0
  %451 = vmatprep.subr.mxu0 0.0
  %452 = vmatpush1.msra.mxu0 0.0
  %453 = vmatprep.subr.mxu0 0.0
  %454 = vmatpush1.msra.mxu0 0.0
  %455 = vmatprep.subr.mxu0 0.0
  %456 = vmatpush1.msra.mxu0 0.0
  %457 = vmatprep.subr.mxu0 0.0
  %458 = vmatpush1.msra.mxu0 0.0
  %459 = vmatprep.subr.mxu0 0.0
  %460 = vmatpush1.msra.mxu0 0.0
  %461 = vmatprep.subr.mxu0 0.0
  %462 = vmatpush1.msra.mxu0 0.0
  %463 = vmatprep.subr.mxu0 0.0
  %464 = vmatpush1.msra.mxu0 0.0
  %465 = vmatprep.subr.mxu0 0.0
  %466 = vmatpush1.msra.mxu0 0.0
  %467 = vmatprep.subr.mxu0 0.0
  %468 = vmatpush1.msra.mxu0 0.0
  %469 = vmatprep.subr.mxu0 0.0
  %470 = vmatpush1.msra.mxu0 0.0
  %471 = vmatprep.subr.mxu0 0.0
  %472 = vmatpush1.msra.mxu0 0.0
  %473 = vmatprep.subr.mxu0 0.0
  %474 = vmatpush1.msra.mxu0 0.0
  %475 = vmatprep.subr.mxu0 0.0
  %476 = vmatpush1.msra.mxu0 0.0
  %477 = vmatprep.subr.mxu0 0.0
  %478 = vmatpush1.msra.mxu0 0.0
  %479 = vmatprep.subr.mxu0 0.0
  %480 = vmatpush1.msra.mxu0 0.0
  %481 = vmatprep.subr.mxu0 0.0
  %482 = vmatpush1.msra.mxu0 0.0
  %483 = vmatprep.subr.mxu0 0.0
  %484 = vmatpush1.msra.mxu0 0.0
  %485 = vmatprep.subr.mxu0 0.0
  %486 = vmatpush1.msra.mxu0 0.0
  %487 = vmatprep.subr.mxu0 0.0
  %488 = vmatpush1.msra.mxu0 0.0
  %489 = vmatprep.subr.mxu0 0.0
  %490 = vmatpush1.msra.mxu0 0.0
  %491 = vmatprep.subr.mxu0 0.0
  %492 = vmatpush1.msra.mxu0 0.0
  %493 = vmatprep.mubr.f32.mxu0 0.0
  %494 = vmatmul.mubr.f32.gmra.mrb[0].mxu0 %v424
  %v495 = vpop.f32.mrb[0].mxu0
  %v496 = vadd.f32 %v415, %v495
  %v497 = vpop.f32.mrb[0].mxu0
  %498 = vmatprep.mubr.f32.mxu0 0.0
  %499 = vmatmul.mubr.f32.gmra.mrb[0].mxu0 %v427
  %v500 = vpop.f32.mrb[0].mxu0
  %v501 = vadd.f32 %v420, %v500
  %v502 = vpop.f32.mrb[0].mxu0
  %503 = vdwg.mxu0
  %v504 = vld [vmem:[%s9] sm:$0x1]
  %v506 = vlaneseq
  %v507 = vshrl.u32 %v506, 7
  %v508 = vsub.s32 0, %v507
  %v509 = vrot.slane %v504, %v508
  %v511 = vadd.f32 %v496, %v509
  %v512 = vadd.f32 %v501, %v509
  %v513 = vlaneseq
  %v514 = vand.u32 %v513, 127
  %vm515 = vcmp.eq.s32.totalorder %v514, 2
  %v516 = vxor.u32 %v511, 2147483648
  %v517 = vxor.u32 %v512, 2147483648
  %v518 = vmul.f32 %v516, 1.442695
  %v519 = vpow.pop %v518
  %v520 = vmul.f32 %v517, 1.442695
  %v521 = vpow.pop %v520
  %v522 = vadd.f32 %v519, 1.0
  %v523 = vadd.f32 %v521, 1.0
  %v524 = vrcp.pop %v522
  %v525 = vmul.f32 1.0, %v524
  %v526 = vrcp.pop %v523
  %v527 = vmul.f32 1.0, %v526
  %v528 = vsel %vm515, %v525, %v511
  %v529 = vsel %vm515, %v527, %v512
  %530 = vst [vmem:[%s10] sm:$0xff] %v528
  %531 = vst [vmem:[%s10 + $0x8] sm:$0xff] %v529
  // Predicated region
  $region42: #{seg_net_forward.13} parent=0 // pred_check
    _
  $region43: #{seg_net_forward.13} parent=0 // pred_check_branch
    %533 = sbr.rel (0) target = $region45
  $region44: #{seg_net_forward.13} parent=0 // pred_region
    _
  $region45: #{seg_net_forward.13} parent=0 // pred_fallthru
    _
  // Predicated region
  $region46: #{seg_net_forward.13} parent=0 // pred_check
    _
  $region47: #{seg_net_forward.13} parent=0 // pred_check_branch
    %535 = sbr.rel (0) target = $region49
  $region48: #{seg_net_forward.13} parent=0 // pred_region
    _
  $region49: #{seg_net_forward.13} parent=0 // pred_fallthru
    _

// kernel: seg_net_forward.12
$region0: #{seg_net_forward.12}
  #allocation0 [shape = 'u32[]', space=smem, size = 0x4, offset = 0x4, fixed_abs, tag = 'smem constant byte address 0x4 - core index']
  #allocation1 [shape = 'u32[144,128]{1,0:T(1,128)}', space=vmem, size = 0x12000, scoped, tag = 'internal scratch']
  %s0 = inlined_call_operand.vmem [shape: bf16[64,32], index: 0, kind: input, shape index: {}]
  %s1 = inlined_call_operand.vmem [shape: f32[32,32], index: 1, kind: input, shape index: {}]
  %s2 = inlined_call_operand.vmem [shape: f32[1,32], index: 2, kind: input, shape index: {}]
  %s3 = inlined_call_operand.vmem [shape: f32[32,128], index: 3, kind: input, shape index: {}]
  %s4 = inlined_call_operand.vmem [shape: f32[1,128], index: 4, kind: input, shape index: {}]
  %s5 = inlined_call_operand.vmem [shape: f32[64,128], index: 5, kind: output, shape index: {}]
  %s6 = sld [smem:[#allocation0]]
  $region30: #{seg_net_forward.12} parent=0
    _
  %s8 = ssub.s32 1, %s6
  %s9 = scalar_select 0, %s8, %s6
  // Predicated region
  $region2: #{seg_net_forward.12} parent=0 // pred_check
    _
  $region3: #{seg_net_forward.12} parent=0 // pred_check_branch
    %11 = sbr.rel (0) target = $region5
  $region4: #{seg_net_forward.12} parent=0 // pred_region
    _
  $region5: #{seg_net_forward.12} parent=0 // pred_fallthru
    _
  // Predicated region
  $region6: #{seg_net_forward.12} parent=0 // pred_check
    _
  $region7: #{seg_net_forward.12} parent=0 // pred_check_branch
    %13 = sbr.rel (0) target = $region9
  $region8: #{seg_net_forward.12} parent=0 // pred_region
    _
  $region9: #{seg_net_forward.12} parent=0 // pred_fallthru
    _
  // Predicated region
  $region10: #{seg_net_forward.12} parent=0 // pred_check
    _
  $region11: #{seg_net_forward.12} parent=0 // pred_check_branch
    %15 = sbr.rel (0) target = $region13
  $region12: #{seg_net_forward.12} parent=0 // pred_region
    _
  $region13: #{seg_net_forward.12} parent=0 // pred_fallthru
    _
  // Predicated region
  $region14: #{seg_net_forward.12} parent=0 // pred_check
    _
  $region15: #{seg_net_forward.12} parent=0 // pred_check_branch
    %17 = sbr.rel (0) target = $region17
  $region16: #{seg_net_forward.12} parent=0 // pred_region
    _
  $region17: #{seg_net_forward.12} parent=0 // pred_fallthru
    _
  // Predicated region
  $region18: #{seg_net_forward.12} parent=0 // pred_check
    _
  $region19: #{seg_net_forward.12} parent=0 // pred_check_branch
    %19 = sbr.rel (0) target = $region21
  $region20: #{seg_net_forward.12} parent=0 // pred_region
    _
  $region21: #{seg_net_forward.12} parent=0 // pred_fallthru
    _
  %v20 = vld [vmem:[%s0] sm:$0xf]
  %v21 = vld [vmem:[%s0 + $0x4] sm:$0xf]
  %v22 = vld [vmem:[%s0 + $0x8] sm:$0xf]
  %v23 = vld [vmem:[%s0 + $0xc] sm:$0xf]
  %v24 = vld [vmem:[%s0 + $0x10] sm:$0xf]
  %v25 = vld [vmem:[%s0 + $0x14] sm:$0xf]
  %v26 = vld [vmem:[%s0 + $0x18] sm:$0xf]
  %v27 = vld [vmem:[%s0 + $0x1c] sm:$0xf]
  %v28 = vunpack.c.l.bf16 %v20
  %v29 = vunpack.c.l.bf16 %v21
  %v30 = vunpack.c.l.bf16 %v22
  %v31 = vunpack.c.l.bf16 %v23
  %v32 = vunpack.c.l.bf16 %v24
  %v33 = vunpack.c.l.bf16 %v25
  %v34 = vunpack.c.l.bf16 %v26
  %v35 = vunpack.c.l.bf16 %v27
  %v36 = vld [vmem:[%s1] sm:$0xff]
  %v37 = vld [vmem:[%s1 + $0x8] sm:$0xff]
  %v38 = vld [vmem:[%s1 + $0x10] sm:$0xff]
  %v39 = vld [vmem:[%s1 + $0x18] sm:$0xff]
  %v40 = vld [vmem:[%s2] sm:$0x1]
  %v42 = vlaneseq
  %v43 = vshrl.u32 %v42, 7
  %v44 = vsub.s32 0, %v43
  %v45 = vrot.slane %v40, %v44
  %vm47 = vcmask 261120
  %v49 = vsel %vm47, %v28, 0
  %v52 = vsel %vm47, %v29, 0
  %v55 = vsel %vm47, %v30, 0
  %v58 = vsel %vm47, %v31, 0
  %v61 = vsel %vm47, %v32, 0
  %v64 = vsel %vm47, %v33, 0
  %v67 = vsel %vm47, %v34, 0
  %v70 = vsel %vm47, %v35, 0
  %72 = vmatprep.subr.mxu0 0.0
  %73 = vmatpush1.msra.mxu0 %v36
  %74 = vmatprep.subr.mxu0 0.0
  %75 = vmatpush1.msra.mxu0 %v37
  %76 = vmatprep.subr.mxu0 0.0
  %77 = vmatpush1.msra.mxu0 %v38
  %78 = vmatprep.subr.mxu0 0.0
  %79 = vmatpush1.msra.mxu0 %v39
  %80 = vmatprep.subr.mxu0 0.0
  %81 = vmatpush1.msra.mxu0 0.0
  %82 = vmatprep.subr.mxu0 0.0
  %83 = vmatpush1.msra.mxu0 0.0
  %84 = vmatprep.subr.mxu0 0.0
  %85 = vmatpush1.msra.mxu0 0.0
  %86 = vmatprep.subr.mxu0 0.0
  %87 = vmatpush1.msra.mxu0 0.0
  %88 = vmatprep.subr.mxu0 0.0
  %89 = vmatpush1.msra.mxu0 0.0
  %90 = vmatprep.subr.mxu0 0.0
  %91 = vmatpush1.msra.mxu0 0.0
  %92 = vmatprep.subr.mxu0 0.0
  %93 = vmatpush1.msra.mxu0 0.0
  %94 = vmatprep.subr.mxu0 0.0
  %95 = vmatpush1.msra.mxu0 0.0
  %96 = vmatprep.subr.mxu0 0.0
  %97 = vmatpush1.msra.mxu0 0.0
  %98 = vmatprep.subr.mxu0 0.0
  %99 = vmatpush1.msra.mxu0 0.0
  %100 = vmatprep.subr.mxu0 0.0
  %101 = vmatpush1.msra.mxu0 0.0
  %102 = vmatprep.subr.mxu0 0.0
  %103 = vmatpush1.msra.mxu0 0.0
  %104 = vmatprep.subr.mxu0 0.0
  %105 = vmatpush1.msra.mxu0 0.0
  %106 = vmatprep.subr.mxu0 0.0
  %107 = vmatpush1.msra.mxu0 0.0
  %108 = vmatprep.subr.mxu0 0.0
  %109 = vmatpush1.msra.mxu0 0.0
  %110 = vmatprep.subr.mxu0 0.0
  %111 = vmatpush1.msra.mxu0 0.0
  %112 = vmatprep.subr.mxu0 0.0
  %113 = vmatpush1.msra.mxu0 0.0
  %114 = vmatprep.subr.mxu0 0.0
  %115 = vmatpush1.msra.mxu0 0.0
  %116 = vmatprep.subr.mxu0 0.0
  %117 = vmatpush1.msra.mxu0 0.0
  %118 = vmatprep.subr.mxu0 0.0
  %119 = vmatpush1.msra.mxu0 0.0
  %120 = vmatprep.subr.mxu0 0.0
  %121 = vmatpush1.msra.mxu0 0.0
  %122 = vmatprep.subr.mxu0 0.0
  %123 = vmatpush1.msra.mxu0 0.0
  %124 = vmatprep.subr.mxu0 0.0
  %125 = vmatpush1.msra.mxu0 0.0
  %126 = vmatprep.subr.mxu0 0.0
  %127 = vmatpush1.msra.mxu0 0.0
  %128 = vmatprep.subr.mxu0 0.0
  %129 = vmatpush1.msra.mxu0 0.0
  %130 = vmatprep.subr.mxu0 0.0
  %131 = vmatpush1.msra.mxu0 0.0
  %132 = vmatprep.subr.mxu0 0.0
  %133 = vmatpush1.msra.mxu0 0.0
  %134 = vmatprep.subr.mxu0 0.0
  %135 = vmatpush1.msra.mxu0 0.0
  %136 = vmatprep.mubr.f32.mxu0 0.0
  %137 = vmatmul.mubr.f32.gmra.mrb[0].mxu0 %v49
  %v138 = vpop.f32.mrb[0].mxu0
  %v139 = vadd.f32 %v45, %v138
  %v140 = vpop.f32.mrb[0].mxu0
  %141 = vmatprep.mubr.f32.mxu0 0.0
  %142 = vmatmul.mubr.f32.gmra.mrb[0].mxu0 %v52
  %v143 = vpop.f32.mrb[0].mxu0
  %v144 = vadd.f32 %v45, %v143
  %v145 = vpop.f32.mrb[0].mxu0
  %146 = vmatprep.mubr.f32.mxu0 0.0
  %147 = vmatmul.mubr.f32.gmra.mrb[0].mxu0 %v55
  %v148 = vpop.f32.mrb[0].mxu0
  %v149 = vadd.f32 %v45, %v148
  %v150 = vpop.f32.mrb[0].mxu0
  %151 = vmatprep.mubr.f32.mxu0 0.0
  %152 = vmatmul.mubr.f32.gmra.mrb[0].mxu0 %v58
  %v153 = vpop.f32.mrb[0].mxu0
  %v154 = vadd.f32 %v45, %v153
  %v155 = vpop.f32.mrb[0].mxu0
  %156 = vmatprep.mubr.f32.mxu0 0.0
  %157 = vmatmul.mubr.f32.gmra.mrb[0].mxu0 %v61
  %v158 = vpop.f32.mrb[0].mxu0
  %v159 = vadd.f32 %v45, %v158
  %v160 = vpop.f32.mrb[0].mxu0
  %161 = vmatprep.mubr.f32.mxu0 0.0
  %162 = vmatmul.mubr.f32.gmra.mrb[0].mxu0 %v64
  %v163 = vpop.f32.mrb[0].mxu0
  %v164 = vadd.f32 %v45, %v163
  %v165 = vpop.f32.mrb[0].mxu0
  %166 = vmatprep.mubr.f32.mxu0 0.0
  %167 = vmatmul.mubr.f32.gmra.mrb[0].mxu0 %v67
  %v168 = vpop.f32.mrb[0].mxu0
  %v169 = vadd.f32 %v45, %v168
  %v170 = vpop.f32.mrb[0].mxu0
  %171 = vmatprep.mubr.f32.mxu0 0.0
  %172 = vmatmul.mubr.f32.gmra.mrb[0].mxu0 %v70
  %v173 = vpop.f32.mrb[0].mxu0
  %v174 = vadd.f32 %v45, %v173
  %v175 = vpop.f32.mrb[0].mxu0
  %176 = vdwg.mxu0
  %v177 = vmax.f32 %v139, 0.0
  %v178 = vmax.f32 %v144, 0.0
  %v179 = vmax.f32 %v149, 0.0
  %v180 = vmax.f32 %v154, 0.0
  %v181 = vmax.f32 %v159, 0.0
  %v182 = vmax.f32 %v164, 0.0
  %v183 = vmax.f32 %v169, 0.0
  %v184 = vmax.f32 %v174, 0.0
  %v185 = vld [vmem:[%s3] sm:$0xff]
  %v186 = vld [vmem:[%s3 + $0x8] sm:$0xff]
  %v187 = vld [vmem:[%s3 + $0x10] sm:$0xff]
  %v188 = vld [vmem:[%s3 + $0x18] sm:$0xff]
  %v189 = vld [vmem:[%s4] sm:$0x1]
  %v191 = vlaneseq
  %v192 = vshrl.u32 %v191, 7
  %v193 = vsub.s32 0, %v192
  %v194 = vrot.slane %v189, %v193
  %v197 = vsel %vm47, %v177, 0
  %v200 = vsel %vm47, %v178, 0
  %v203 = vsel %vm47, %v179, 0
  %v206 = vsel %vm47, %v180, 0
  %v209 = vsel %vm47, %v181, 0
  %v212 = vsel %vm47, %v182, 0
  %v215 = vsel %vm47, %v183, 0
  %v218 = vsel %vm47, %v184, 0
  %220 = vmatprep.subr.mxu0 0.0
  %221 = vmatpush1.msra.mxu0 %v185
  %222 = vmatprep.subr.mxu0 0.0
  %223 = vmatpush1.msra.mxu0 %v186
  %224 = vmatprep.subr.mxu0 0.0
  %225 = vmatpush1.msra.mxu0 %v187
  %226 = vmatprep.subr.mxu0 0.0
  %227 = vmatpush1.msra.mxu0 %v188
  %228 = vmatprep.subr.mxu0 0.0
  %229 = vmatpush1.msra.mxu0 0.0
  %230 = vmatprep.subr.mxu0 0.0
  %231 = vmatpush1.msra.mxu0 0.0
  %232 = vmatprep.subr.mxu0 0.0
  %233 = vmatpush1.msra.mxu0 0.0
  %234 = vmatprep.subr.mxu0 0.0
  %235 = vmatpush1.msra.mxu0 0.0
  %236 = vmatprep.subr.mxu0 0.0
  %237 = vmatpush1.msra.mxu0 0.0
  %238 = vmatprep.subr.mxu0 0.0
  %239 = vmatpush1.msra.mxu0 0.0
  %240 = vmatprep.subr.mxu0 0.0
  %241 = vmatpush1.msra.mxu0 0.0
  %242 = vmatprep.subr.mxu0 0.0
  %243 = vmatpush1.msra.mxu0 0.0
  %244 = vmatprep.subr.mxu0 0.0
  %245 = vmatpush1.msra.mxu0 0.0
  %246 = vmatprep.subr.mxu0 0.0
  %247 = vmatpush1.msra.mxu0 0.0
  %248 = vmatprep.subr.mxu0 0.0
  %249 = vmatpush1.msra.mxu0 0.0
  %250 = vmatprep.subr.mxu0 0.0
  %251 = vmatpush1.msra.mxu0 0.0
  %252 = vmatprep.subr.mxu0 0.0
  %253 = vmatpush1.msra.mxu0 0.0
  %254 = vmatprep.subr.mxu0 0.0
  %255 = vmatpush1.msra.mxu0 0.0
  %256 = vmatprep.subr.mxu0 0.0
  %257 = vmatpush1.msra.mxu0 0.0
  %258 = vmatprep.subr.mxu0 0.0
  %259 = vmatpush1.msra.mxu0 0.0
  %260 = vmatprep.subr.mxu0 0.0
  %261 = vmatpush1.msra.mxu0 0.0
  %262 = vmatprep.subr.mxu0 0.0
  %263 = vmatpush1.msra.mxu0 0.0
  %264 = vmatprep.subr.mxu0 0.0
  %265 = vmatpush1.msra.mxu0 0.0
  %266 = vmatprep.subr.mxu0 0.0
  %267 = vmatpush1.msra.mxu0 0.0
  %268 = vmatprep.subr.mxu0 0.0
  %269 = vmatpush1.msra.mxu0 0.0
  %270 = vmatprep.subr.mxu0 0.0
  %271 = vmatpush1.msra.mxu0 0.0
  %272 = vmatprep.subr.mxu0 0.0
  %273 = vmatpush1.msra.mxu0 0.0
  %274 = vmatprep.subr.mxu0 0.0
  %275 = vmatpush1.msra.mxu0 0.0
  %276 = vmatprep.subr.mxu0 0.0
  %277 = vmatpush1.msra.mxu0 0.0
  %278 = vmatprep.subr.mxu0 0.0
  %279 = vmatpush1.msra.mxu0 0.0
  %280 = vmatprep.subr.mxu0 0.0
  %281 = vmatpush1.msra.mxu0 0.0
  %282 = vmatprep.subr.mxu0 0.0
  %283 = vmatpush1.msra.mxu0 0.0
  %284 = vmatprep.mubr.f32.mxu0 0.0
  %285 = vmatmul.mubr.f32.gmra.mrb[0].mxu0 %v197
  %v286 = vpop.f32.mrb[0].mxu0
  %v287 = vadd.f32 %v194, %v286
  %v288 = vpop.f32.mrb[0].mxu0
  %289 = vmatprep.mubr.f32.mxu0 0.0
  %290 = vmatmul.mubr.f32.gmra.mrb[0].mxu0 %v200
  %v291 = vpop.f32.mrb[0].mxu0
  %v292 = vadd.f32 %v194, %v291
  %v293 = vpop.f32.mrb[0].mxu0
  %294 = vmatprep.mubr.f32.mxu0 0.0
  %295 = vmatmul.mubr.f32.gmra.mrb[0].mxu0 %v203
  %v296 = vpop.f32.mrb[0].mxu0
  %v297 = vadd.f32 %v194, %v296
  %v298 = vpop.f32.mrb[0].mxu0
  %299 = vmatprep.mubr.f32.mxu0 0.0
  %300 = vmatmul.mubr.f32.gmra.mrb[0].mxu0 %v206
  %v301 = vpop.f32.mrb[0].mxu0
  %v302 = vadd.f32 %v194, %v301
  %v303 = vpop.f32.mrb[0].mxu0
  %304 = vmatprep.mubr.f32.mxu0 0.0
  %305 = vmatmul.mubr.f32.gmra.mrb[0].mxu0 %v209
  %v306 = vpop.f32.mrb[0].mxu0
  %v307 = vadd.f32 %v194, %v306
  %v308 = vpop.f32.mrb[0].mxu0
  %309 = vmatprep.mubr.f32.mxu0 0.0
  %310 = vmatmul.mubr.f32.gmra.mrb[0].mxu0 %v212
  %v311 = vpop.f32.mrb[0].mxu0
  %v312 = vadd.f32 %v194, %v311
  %v313 = vpop.f32.mrb[0].mxu0
  %314 = vmatprep.mubr.f32.mxu0 0.0
  %315 = vmatmul.mubr.f32.gmra.mrb[0].mxu0 %v215
  %v316 = vpop.f32.mrb[0].mxu0
  %v317 = vadd.f32 %v194, %v316
  %v318 = vpop.f32.mrb[0].mxu0
  %319 = vmatprep.mubr.f32.mxu0 0.0
  %320 = vmatmul.mubr.f32.gmra.mrb[0].mxu0 %v218
  %v321 = vpop.f32.mrb[0].mxu0
  %v322 = vadd.f32 %v194, %v321
  %v323 = vpop.f32.mrb[0].mxu0
  %324 = vdwg.mxu0
  %v325 = vlaneseq
  %v326 = vand.u32 %v325, 127
  %vm327 = vcmp.eq.s32.totalorder %v326, 1
  %v328 = vxor.u32 %v287, 2147483648
  %v329 = vxor.u32 %v292, 2147483648
  %v330 = vxor.u32 %v297, 2147483648
  %v331 = vxor.u32 %v302, 2147483648
  %v332 = vxor.u32 %v307, 2147483648
  %v333 = vxor.u32 %v312, 2147483648
  %v334 = vxor.u32 %v317, 2147483648
  %v335 = vxor.u32 %v322, 2147483648
  %v336 = vmul.f32 %v328, 1.442695
  %v337 = vpow.pop %v336
  %v338 = vmul.f32 %v329, 1.442695
  %v339 = vpow.pop %v338
  %v340 = vmul.f32 %v330, 1.442695
  %v341 = vpow.pop %v340
  %v342 = vmul.f32 %v331, 1.442695
  %v343 = vpow.pop %v342
  %v344 = vmul.f32 %v332, 1.442695
  %v345 = vpow.pop %v344
  %v346 = vmul.f32 %v333, 1.442695
  %v347 = vpow.pop %v346
  %v348 = vmul.f32 %v334, 1.442695
  %v349 = vpow.pop %v348
  %v350 = vmul.f32 %v335, 1.442695
  %v351 = vpow.pop %v350
  %v352 = vadd.f32 %v337, 1.0
  %v353 = vadd.f32 %v339, 1.0
  %v354 = vadd.f32 %v341, 1.0
  %v355 = vadd.f32 %v343, 1.0
  %v356 = vadd.f32 %v345, 1.0
  %v357 = vadd.f32 %v347, 1.0
  %v358 = vadd.f32 %v349, 1.0
  %v359 = vadd.f32 %v351, 1.0
  %v360 = vrcp.pop %v352
  %v361 = vmul.f32 1.0, %v360
  %v362 = vrcp.pop %v353
  %v363 = vmul.f32 1.0, %v362
  %v364 = vrcp.pop %v354
  %v365 = vmul.f32 1.0, %v364
  %v366 = vrcp.pop %v355
  %v367 = vmul.f32 1.0, %v366
  %v368 = vrcp.pop %v356
  %v369 = vmul.f32 1.0, %v368
  %v370 = vrcp.pop %v357
  %v371 = vmul.f32 1.0, %v370
  %v372 = vrcp.pop %v358
  %v373 = vmul.f32 1.0, %v372
  %v374 = vrcp.pop %v359
  %v375 = vmul.f32 1.0, %v374
  %v376 = vsel %vm327, %v361, %v287
  %v377 = vsel %vm327, %v363, %v292
  %v378 = vsel %vm327, %v365, %v297
  %v379 = vsel %vm327, %v367, %v302
  %v380 = vsel %vm327, %v369, %v307
  %v381 = vsel %vm327, %v371, %v312
  %v382 = vsel %vm327, %v373, %v317
  %v383 = vsel %vm327, %v375, %v322
  %384 = vst [vmem:[%s5] sm:$0xff] %v376
  %385 = vst [vmem:[%s5 + $0x8] sm:$0xff] %v377
  %386 = vst [vmem:[%s5 + $0x10] sm:$0xff] %v378
  %387 = vst [vmem:[%s5 + $0x18] sm:$0xff] %v379
  %388 = vst [vmem:[%s5 + $0x20] sm:$0xff] %v380
  %389 = vst [vmem:[%s5 + $0x28] sm:$0xff] %v381
  %390 = vst [vmem:[%s5 + $0x30] sm:$0xff] %v382
  %391 = vst [vmem:[%s5 + $0x38] sm:$0xff] %v383
  // Predicated region
  $region22: #{seg_net_forward.12} parent=0 // pred_check
    _
  $region23: #{seg_net_forward.12} parent=0 // pred_check_branch
    %393 = sbr.rel (0) target = $region25
  $region24: #{seg_net_forward.12} parent=0 // pred_region
    _
  $region25: #{seg_net_forward.12} parent=0 // pred_fallthru
    _
  // Predicated region
  $region26: #{seg_net_forward.12} parent=0 // pred_check
    _
  $region27: #{seg_net_forward.12} parent=0 // pred_check_branch
    %395 = sbr.rel (0) target = $region29
  $region28: #{seg_net_forward.12} parent=0 // pred_region
    _
  $region29: #{seg_net_forward.12} parent=0 // pred_fallthru
    _

// kernel: seg_net_forward.11
$region0: #{seg_net_forward.11}
  #allocation0 [shape = 'u32[]', space=smem, size = 0x4, offset = 0x4, fixed_abs, tag = 'smem constant byte address 0x4 - core index']
  #allocation1 [shape = 'u32[144,128]{1,0:T(1,128)}', space=vmem, size = 0x12000, scoped, tag = 'internal scratch']
  %s0 = inlined_call_operand.vmem [shape: bf16[256,16], index: 0, kind: input, shape index: {}]
  %s1 = inlined_call_operand.vmem [shape: f32[16,16], index: 1, kind: input, shape index: {}]
  %s2 = inlined_call_operand.vmem [shape: f32[1,16], index: 2, kind: input, shape index: {}]
  %s3 = inlined_call_operand.vmem [shape: f32[16,128], index: 3, kind: input, shape index: {}]
  %s4 = inlined_call_operand.vmem [shape: f32[1,128], index: 4, kind: input, shape index: {}]
  %s5 = inlined_call_operand.vmem [shape: f32[256,128], index: 5, kind: output, shape index: {}]
  %s6 = sld [smem:[#allocation0]]
  $region30: #{seg_net_forward.11} parent=0
    _
  %s8 = ssub.s32 1, %s6
  %s9 = scalar_select 0, %s8, %s6
  // Predicated region
  $region2: #{seg_net_forward.11} parent=0 // pred_check
    _
  $region3: #{seg_net_forward.11} parent=0 // pred_check_branch
    %11 = sbr.rel (0) target = $region5
  $region4: #{seg_net_forward.11} parent=0 // pred_region
    _
  $region5: #{seg_net_forward.11} parent=0 // pred_fallthru
    _
  // Predicated region
  $region6: #{seg_net_forward.11} parent=0 // pred_check
    _
  $region7: #{seg_net_forward.11} parent=0 // pred_check_branch
    %13 = sbr.rel (0) target = $region9
  $region8: #{seg_net_forward.11} parent=0 // pred_region
    _
  $region9: #{seg_net_forward.11} parent=0 // pred_fallthru
    _
  // Predicated region
  $region10: #{seg_net_forward.11} parent=0 // pred_check
    _
  $region11: #{seg_net_forward.11} parent=0 // pred_check_branch
    %15 = sbr.rel (0) target = $region13
  $region12: #{seg_net_forward.11} parent=0 // pred_region
    _
  $region13: #{seg_net_forward.11} parent=0 // pred_fallthru
    _
  // Predicated region
  $region14: #{seg_net_forward.11} parent=0 // pred_check
    _
  $region15: #{seg_net_forward.11} parent=0 // pred_check_branch
    %17 = sbr.rel (0) target = $region17
  $region16: #{seg_net_forward.11} parent=0 // pred_region
    _
  $region17: #{seg_net_forward.11} parent=0 // pred_fallthru
    _
  // Predicated region
  $region18: #{seg_net_forward.11} parent=0 // pred_check
    _
  $region19: #{seg_net_forward.11} parent=0 // pred_check_branch
    %19 = sbr.rel (0) target = $region21
  $region20: #{seg_net_forward.11} parent=0 // pred_region
    _
  $region21: #{seg_net_forward.11} parent=0 // pred_fallthru
    _
  %v20 = vld [vmem:[%s0] sm:$0xf]
  %v21 = vld [vmem:[%s0 + $0x4] sm:$0xf]
  %v22 = vld [vmem:[%s0 + $0x8] sm:$0xf]
  %v23 = vld [vmem:[%s0 + $0xc] sm:$0xf]
  %v24 = vld [vmem:[%s0 + $0x10] sm:$0xf]
  %v25 = vld [vmem:[%s0 + $0x14] sm:$0xf]
  %v26 = vld [vmem:[%s0 + $0x18] sm:$0xf]
  %v27 = vld [vmem:[%s0 + $0x1c] sm:$0xf]
  %v28 = vld [vmem:[%s0 + $0x20] sm:$0xf]
  %v29 = vld [vmem:[%s0 + $0x24] sm:$0xf]
  %v30 = vld [vmem:[%s0 + $0x28] sm:$0xf]
  %v31 = vld [vmem:[%s0 + $0x2c] sm:$0xf]
  %v32 = vld [vmem:[%s0 + $0x30] sm:$0xf]
  %v33 = vld [vmem:[%s0 + $0x34] sm:$0xf]
  %v34 = vld [vmem:[%s0 + $0x38] sm:$0xf]
  %v35 = vld [vmem:[%s0 + $0x3c] sm:$0xf]
  %v36 = vld [vmem:[%s0 + $0x40] sm:$0xf]
  %v37 = vld [vmem:[%s0 + $0x44] sm:$0xf]
  %v38 = vld [vmem:[%s0 + $0x48] sm:$0xf]
  %v39 = vld [vmem:[%s0 + $0x4c] sm:$0xf]
  %v40 = vld [vmem:[%s0 + $0x50] sm:$0xf]
  %v41 = vld [vmem:[%s0 + $0x54] sm:$0xf]
  %v42 = vld [vmem:[%s0 + $0x58] sm:$0xf]
  %v43 = vld [vmem:[%s0 + $0x5c] sm:$0xf]
  %v44 = vld [vmem:[%s0 + $0x60] sm:$0xf]
  %v45 = vld [vmem:[%s0 + $0x64] sm:$0xf]
  %v46 = vld [vmem:[%s0 + $0x68] sm:$0xf]
  %v47 = vld [vmem:[%s0 + $0x6c] sm:$0xf]
  %v48 = vld [vmem:[%s0 + $0x70] sm:$0xf]
  %v49 = vld [vmem:[%s0 + $0x74] sm:$0xf]
  %v50 = vld [vmem:[%s0 + $0x78] sm:$0xf]
  %v51 = vld [vmem:[%s0 + $0x7c] sm:$0xf]
  %v52 = vunpack.c.l.bf16 %v20
  %v53 = vunpack.c.l.bf16 %v21
  %v54 = vunpack.c.l.bf16 %v22
  %v55 = vunpack.c.l.bf16 %v23
  %v56 = vunpack.c.l.bf16 %v24
  %v57 = vunpack.c.l.bf16 %v25
  %v58 = vunpack.c.l.bf16 %v26
  %v59 = vunpack.c.l.bf16 %v27
  %v60 = vunpack.c.l.bf16 %v28
  %v61 = vunpack.c.l.bf16 %v29
  %v62 = vunpack.c.l.bf16 %v30
  %v63 = vunpack.c.l.bf16 %v31
  %v64 = vunpack.c.l.bf16 %v32
  %v65 = vunpack.c.l.bf16 %v33
  %v66 = vunpack.c.l.bf16 %v34
  %v67 = vunpack.c.l.bf16 %v35
  %v68 = vunpack.c.l.bf16 %v36
  %v69 = vunpack.c.l.bf16 %v37
  %v70 = vunpack.c.l.bf16 %v38
  %v71 = vunpack.c.l.bf16 %v39
  %v72 = vunpack.c.l.bf16 %v40
  %v73 = vunpack.c.l.bf16 %v41
  %v74 = vunpack.c.l.bf16 %v42
  %v75 = vunpack.c.l.bf16 %v43
  %v76 = vunpack.c.l.bf16 %v44
  %v77 = vunpack.c.l.bf16 %v45
  %v78 = vunpack.c.l.bf16 %v46
  %v79 = vunpack.c.l.bf16 %v47
  %v80 = vunpack.c.l.bf16 %v48
  %v81 = vunpack.c.l.bf16 %v49
  %v82 = vunpack.c.l.bf16 %v50
  %v83 = vunpack.c.l.bf16 %v51
  %v84 = vld [vmem:[%s1] sm:$0xff]
  %v85 = vld [vmem:[%s1 + $0x8] sm:$0xff]
  %v86 = vld [vmem:[%s2] sm:$0x1]
  %v88 = vlaneseq
  %v89 = vshrl.u32 %v88, 7
  %v90 = vsub.s32 0, %v89
  %v91 = vrot.slane %v86, %v90
  %vm93 = vcmask 130048
  %v95 = vsel %vm93, %v52, 0
  %v98 = vsel %vm93, %v53, 0
  %v101 = vsel %vm93, %v54, 0
  %v104 = vsel %vm93, %v55, 0
  %v107 = vsel %vm93, %v56, 0
  %v110 = vsel %vm93, %v57, 0
  %v113 = vsel %vm93, %v58, 0
  %v116 = vsel %vm93, %v59, 0
  %v119 = vsel %vm93, %v60, 0
  %v122 = vsel %vm93, %v61, 0
  %v125 = vsel %vm93, %v62, 0
  %v128 = vsel %vm93, %v63, 0
  %v131 = vsel %vm93, %v64, 0
  %v134 = vsel %vm93, %v65, 0
  %v137 = vsel %vm93, %v66, 0
  %v140 = vsel %vm93, %v67, 0
  %v143 = vsel %vm93, %v68, 0
  %v146 = vsel %vm93, %v69, 0
  %v149 = vsel %vm93, %v70, 0
  %v152 = vsel %vm93, %v71, 0
  %v155 = vsel %vm93, %v72, 0
  %v158 = vsel %vm93, %v73, 0
  %v161 = vsel %vm93, %v74, 0
  %v164 = vsel %vm93, %v75, 0
  %v167 = vsel %vm93, %v76, 0
  %v170 = vsel %vm93, %v77, 0
  %v173 = vsel %vm93, %v78, 0
  %v176 = vsel %vm93, %v79, 0
  %v179 = vsel %vm93, %v80, 0
  %v182 = vsel %vm93, %v81, 0
  %v185 = vsel %vm93, %v82, 0
  %v188 = vsel %vm93, %v83, 0
  %190 = vmatprep.subr.mxu0 0.0
  %191 = vmatpush1.msra.mxu0 %v84
  %192 = vmatprep.subr.mxu0 0.0
  %193 = vmatpush1.msra.mxu0 %v85
  %194 = vmatprep.subr.mxu0 0.0
  %195 = vmatpush1.msra.mxu0 0.0
  %196 = vmatprep.subr.mxu0 0.0
  %197 = vmatpush1.msra.mxu0 0.0
  %198 = vmatprep.subr.mxu0 0.0
  %199 = vmatpush1.msra.mxu0 0.0
  %200 = vmatprep.subr.mxu0 0.0
  %201 = vmatpush1.msra.mxu0 0.0
  %202 = vmatprep.subr.mxu0 0.0
  %203 = vmatpush1.msra.mxu0 0.0
  %204 = vmatprep.subr.mxu0 0.0
  %205 = vmatpush1.msra.mxu0 0.0
  %206 = vmatprep.subr.mxu0 0.0
  %207 = vmatpush1.msra.mxu0 0.0
  %208 = vmatprep.subr.mxu0 0.0
  %209 = vmatpush1.msra.mxu0 0.0
  %210 = vmatprep.subr.mxu0 0.0
  %211 = vmatpush1.msra.mxu0 0.0
  %212 = vmatprep.subr.mxu0 0.0
  %213 = vmatpush1.msra.mxu0 0.0
  %214 = vmatprep.subr.mxu0 0.0
  %215 = vmatpush1.msra.mxu0 0.0
  %216 = vmatprep.subr.mxu0 0.0
  %217 = vmatpush1.msra.mxu0 0.0
  %218 = vmatprep.subr.mxu0 0.0
  %219 = vmatpush1.msra.mxu0 0.0
  %220 = vmatprep.subr.mxu0 0.0
  %221 = vmatpush1.msra.mxu0 0.0
  %222 = vmatprep.subr.mxu0 0.0
  %223 = vmatpush1.msra.mxu0 0.0
  %224 = vmatprep.subr.mxu0 0.0
  %225 = vmatpush1.msra.mxu0 0.0
  %226 = vmatprep.subr.mxu0 0.0
  %227 = vmatpush1.msra.mxu0 0.0
  %228 = vmatprep.subr.mxu0 0.0
  %229 = vmatpush1.msra.mxu0 0.0
  %230 = vmatprep.subr.mxu0 0.0
  %231 = vmatpush1.msra.mxu0 0.0
  %232 = vmatprep.subr.mxu0 0.0
  %233 = vmatpush1.msra.mxu0 0.0
  %234 = vmatprep.subr.mxu0 0.0
  %235 = vmatpush1.msra.mxu0 0.0
  %236 = vmatprep.subr.mxu0 0.0
  %237 = vmatpush1.msra.mxu0 0.0
  %238 = vmatprep.subr.mxu0 0.0
  %239 = vmatpush1.msra.mxu0 0.0
  %240 = vmatprep.subr.mxu0 0.0
  %241 = vmatpush1.msra.mxu0 0.0
  %242 = vmatprep.subr.mxu0 0.0
  %243 = vmatpush1.msra.mxu0 0.0
  %244 = vmatprep.subr.mxu0 0.0
  %245 = vmatpush1.msra.mxu0 0.0
  %246 = vmatprep.subr.mxu0 0.0
  %247 = vmatpush1.msra.mxu0 0.0
  %248 = vmatprep.subr.mxu0 0.0
  %249 = vmatpush1.msra.mxu0 0.0
  %250 = vmatprep.subr.mxu0 0.0
  %251 = vmatpush1.msra.mxu0 0.0
  %252 = vmatprep.subr.mxu0 0.0
  %253 = vmatpush1.msra.mxu0 0.0
  %254 = vmatprep.mubr.f32.mxu0 0.0
  %255 = vmatmul.mubr.f32.gmra.mrb[0].mxu0 %v95
  %v256 = vpop.f32.mrb[0].mxu0
  %v257 = vadd.f32 %v91, %v256
  %v258 = vpop.f32.mrb[0].mxu0
  %259 = vmatprep.mubr.f32.mxu0 0.0
  %260 = vmatmul.mubr.f32.gmra.mrb[0].mxu0 %v98
  %v261 = vpop.f32.mrb[0].mxu0
  %v262 = vadd.f32 %v91, %v261
  %v263 = vpop.f32.mrb[0].mxu0
  %264 = vmatprep.mubr.f32.mxu0 0.0
  %265 = vmatmul.mubr.f32.gmra.mrb[0].mxu0 %v101
  %v266 = vpop.f32.mrb[0].mxu0
  %v267 = vadd.f32 %v91, %v266
  %v268 = vpop.f32.mrb[0].mxu0
  %269 = vmatprep.mubr.f32.mxu0 0.0
  %270 = vmatmul.mubr.f32.gmra.mrb[0].mxu0 %v104
  %v271 = vpop.f32.mrb[0].mxu0
  %v272 = vadd.f32 %v91, %v271
  %v273 = vpop.f32.mrb[0].mxu0
  %274 = vmatprep.mubr.f32.mxu0 0.0
  %275 = vmatmul.mubr.f32.gmra.mrb[0].mxu0 %v107
  %v276 = vpop.f32.mrb[0].mxu0
  %v277 = vadd.f32 %v91, %v276
  %v278 = vpop.f32.mrb[0].mxu0
  %279 = vmatprep.mubr.f32.mxu0 0.0
  %280 = vmatmul.mubr.f32.gmra.mrb[0].mxu0 %v110
  %v281 = vpop.f32.mrb[0].mxu0
  %v282 = vadd.f32 %v91, %v281
  %v283 = vpop.f32.mrb[0].mxu0
  %284 = vmatprep.mubr.f32.mxu0 0.0
  %285 = vmatmul.mubr.f32.gmra.mrb[0].mxu0 %v113
  %v286 = vpop.f32.mrb[0].mxu0
  %v287 = vadd.f32 %v91, %v286
  %v288 = vpop.f32.mrb[0].mxu0
  %289 = vmatprep.mubr.f32.mxu0 0.0
  %290 = vmatmul.mubr.f32.gmra.mrb[0].mxu0 %v116
  %v291 = vpop.f32.mrb[0].mxu0
  %v292 = vadd.f32 %v91, %v291
  %v293 = vpop.f32.mrb[0].mxu0
  %294 = vmatprep.mubr.f32.mxu0 0.0
  %295 = vmatmul.mubr.f32.gmra.mrb[0].mxu0 %v119
  %v296 = vpop.f32.mrb[0].mxu0
  %v297 = vadd.f32 %v91, %v296
  %v298 = vpop.f32.mrb[0].mxu0
  %299 = vmatprep.mubr.f32.mxu0 0.0
  %300 = vmatmul.mubr.f32.gmra.mrb[0].mxu0 %v122
  %v301 = vpop.f32.mrb[0].mxu0
  %v302 = vadd.f32 %v91, %v301
  %v303 = vpop.f32.mrb[0].mxu0
  %304 = vmatprep.mubr.f32.mxu0 0.0
  %305 = vmatmul.mubr.f32.gmra.mrb[0].mxu0 %v125
  %v306 = vpop.f32.mrb[0].mxu0
  %v307 = vadd.f32 %v91, %v306
  %v308 = vpop.f32.mrb[0].mxu0
  %309 = vmatprep.mubr.f32.mxu0 0.0
  %310 = vmatmul.mubr.f32.gmra.mrb[0].mxu0 %v128
  %v311 = vpop.f32.mrb[0].mxu0
  %v312 = vadd.f32 %v91, %v311
  %v313 = vpop.f32.mrb[0].mxu0
  %314 = vmatprep.mubr.f32.mxu0 0.0
  %315 = vmatmul.mubr.f32.gmra.mrb[0].mxu0 %v131
  %v316 = vpop.f32.mrb[0].mxu0
  %v317 = vadd.f32 %v91, %v316
  %v318 = vpop.f32.mrb[0].mxu0
  %319 = vmatprep.mubr.f32.mxu0 0.0
  %320 = vmatmul.mubr.f32.gmra.mrb[0].mxu0 %v134
  %v321 = vpop.f32.mrb[0].mxu0
  %v322 = vadd.f32 %v91, %v321
  %v323 = vpop.f32.mrb[0].mxu0
  %324 = vmatprep.mubr.f32.mxu0 0.0
  %325 = vmatmul.mubr.f32.gmra.mrb[0].mxu0 %v137
  %v326 = vpop.f32.mrb[0].mxu0
  %v327 = vadd.f32 %v91, %v326
  %v328 = vpop.f32.mrb[0].mxu0
  %329 = vmatprep.mubr.f32.mxu0 0.0
  %330 = vmatmul.mubr.f32.gmra.mrb[0].mxu0 %v140
  %v331 = vpop.f32.mrb[0].mxu0
  %v332 = vadd.f32 %v91, %v331
  %v333 = vpop.f32.mrb[0].mxu0
  %334 = vmatprep.mubr.f32.mxu0 0.0
  %335 = vmatmul.mubr.f32.gmra.mrb[0].mxu0 %v143
  %v336 = vpop.f32.mrb[0].mxu0
  %v337 = vadd.f32 %v91, %v336
  %v338 = vpop.f32.mrb[0].mxu0
  %339 = vmatprep.mubr.f32.mxu0 0.0
  %340 = vmatmul.mubr.f32.gmra.mrb[0].mxu0 %v146
  %v341 = vpop.f32.mrb[0].mxu0
  %v342 = vadd.f32 %v91, %v341
  %v343 = vpop.f32.mrb[0].mxu0
  %344 = vmatprep.mubr.f32.mxu0 0.0
  %345 = vmatmul.mubr.f32.gmra.mrb[0].mxu0 %v149
  %v346 = vpop.f32.mrb[0].mxu0
  %v347 = vadd.f32 %v91, %v346
  %v348 = vpop.f32.mrb[0].mxu0
  %349 = vmatprep.mubr.f32.mxu0 0.0
  %350 = vmatmul.mubr.f32.gmra.mrb[0].mxu0 %v152
  %v351 = vpop.f32.mrb[0].mxu0
  %v352 = vadd.f32 %v91, %v351
  %v353 = vpop.f32.mrb[0].mxu0
  %354 = vmatprep.mubr.f32.mxu0 0.0
  %355 = vmatmul.mubr.f32.gmra.mrb[0].mxu0 %v155
  %v356 = vpop.f32.mrb[0].mxu0
  %v357 = vadd.f32 %v91, %v356
  %v358 = vpop.f32.mrb[0].mxu0
  %359 = vmatprep.mubr.f32.mxu0 0.0
  %360 = vmatmul.mubr.f32.gmra.mrb[0].mxu0 %v158
  %v361 = vpop.f32.mrb[0].mxu0
  %v362 = vadd.f32 %v91, %v361
  %v363 = vpop.f32.mrb[0].mxu0
  %364 = vmatprep.mubr.f32.mxu0 0.0
  %365 = vmatmul.mubr.f32.gmra.mrb[0].mxu0 %v161
  %v366 = vpop.f32.mrb[0].mxu0
  %v367 = vadd.f32 %v91, %v366
  %v368 = vpop.f32.mrb[0].mxu0
  %369 = vmatprep.mubr.f32.mxu0 0.0
  %370 = vmatmul.mubr.f32.gmra.mrb[0].mxu0 %v164
  %v371 = vpop.f32.mrb[0].mxu0
  %v372 = vadd.f32 %v91, %v371
  %v373 = vpop.f32.mrb[0].mxu0
  %374 = vmatprep.mubr.f32.mxu0 0.0
  %375 = vmatmul.mubr.f32.gmra.mrb[0].mxu0 %v167
  %v376 = vpop.f32.mrb[0].mxu0
  %v377 = vadd.f32 %v91, %v376
  %v378 = vpop.f32.mrb[0].mxu0
  %379 = vmatprep.mubr.f32.mxu0 0.0
  %380 = vmatmul.mubr.f32.gmra.mrb[0].mxu0 %v170
  %v381 = vpop.f32.mrb[0].mxu0
  %v382 = vadd.f32 %v91, %v381
  %v383 = vpop.f32.mrb[0].mxu0
  %384 = vmatprep.mubr.f32.mxu0 0.0
  %385 = vmatmul.mubr.f32.gmra.mrb[0].mxu0 %v173
  %v386 = vpop.f32.mrb[0].mxu0
  %v387 = vadd.f32 %v91, %v386
  %v388 = vpop.f32.mrb[0].mxu0
  %389 = vmatprep.mubr.f32.mxu0 0.0
  %390 = vmatmul.mubr.f32.gmra.mrb[0].mxu0 %v176
  %v391 = vpop.f32.mrb[0].mxu0
  %v392 = vadd.f32 %v91, %v391
  %v393 = vpop.f32.mrb[0].mxu0
  %394 = vmatprep.mubr.f32.mxu0 0.0
  %395 = vmatmul.mubr.f32.gmra.mrb[0].mxu0 %v179
  %v396 = vpop.f32.mrb[0].mxu0
  %v397 = vadd.f32 %v91, %v396
  %v398 = vpop.f32.mrb[0].mxu0
  %399 = vmatprep.mubr.f32.mxu0 0.0
  %400 = vmatmul.mubr.f32.gmra.mrb[0].mxu0 %v182
  %v401 = vpop.f32.mrb[0].mxu0
  %v402 = vadd.f32 %v91, %v401
  %v403 = vpop.f32.mrb[0].mxu0
  %404 = vmatprep.mubr.f32.mxu0 0.0
  %405 = vmatmul.mubr.f32.gmra.mrb[0].mxu0 %v185
  %v406 = vpop.f32.mrb[0].mxu0
  %v407 = vadd.f32 %v91, %v406
  %v408 = vpop.f32.mrb[0].mxu0
  %409 = vmatprep.mubr.f32.mxu0 0.0
  %410 = vmatmul.mubr.f32.gmra.mrb[0].mxu0 %v188
  %v411 = vpop.f32.mrb[0].mxu0
  %v412 = vadd.f32 %v91, %v411
  %v413 = vpop.f32.mrb[0].mxu0
  %414 = vdwg.mxu0
  %v415 = vmax.f32 %v257, 0.0
  %v416 = vmax.f32 %v262, 0.0
  %v417 = vmax.f32 %v267, 0.0
  %v418 = vmax.f32 %v272, 0.0
  %v419 = vmax.f32 %v277, 0.0
  %v420 = vmax.f32 %v282, 0.0
  %v421 = vmax.f32 %v287, 0.0
  %v422 = vmax.f32 %v292, 0.0
  %v423 = vmax.f32 %v297, 0.0
  %v424 = vmax.f32 %v302, 0.0
  %v425 = vmax.f32 %v307, 0.0
  %v426 = vmax.f32 %v312, 0.0
  %v427 = vmax.f32 %v317, 0.0
  %v428 = vmax.f32 %v322, 0.0
  %v429 = vmax.f32 %v327, 0.0
  %v430 = vmax.f32 %v332, 0.0
  %v431 = vmax.f32 %v337, 0.0
  %v432 = vmax.f32 %v342, 0.0
  %v433 = vmax.f32 %v347, 0.0
  %v434 = vmax.f32 %v352, 0.0
  %v435 = vmax.f32 %v357, 0.0
  %v436 = vmax.f32 %v362, 0.0
  %v437 = vmax.f32 %v367, 0.0
  %v438 = vmax.f32 %v372, 0.0
  %v439 = vmax.f32 %v377, 0.0
  %v440 = vmax.f32 %v382, 0.0
  %v441 = vmax.f32 %v387, 0.0
  %v442 = vmax.f32 %v392, 0.0
  %v443 = vmax.f32 %v397, 0.0
  %v444 = vmax.f32 %v402, 0.0
  %v445 = vmax.f32 %v407, 0.0
  %v446 = vmax.f32 %v412, 0.0
  %v447 = vld [vmem:[%s3] sm:$0xff]
  %v448 = vld [vmem:[%s3 + $0x8] sm:$0xff]
  %v449 = vld [vmem:[%s4] sm:$0x1]
  %v451 = vlaneseq
  %v452 = vshrl.u32 %v451, 7
  %v453 = vsub.s32 0, %v452
  %v454 = vrot.slane %v449, %v453
  %v457 = vsel %vm93, %v415, 0
  %v460 = vsel %vm93, %v416, 0
  %v463 = vsel %vm93, %v417, 0
  %v466 = vsel %vm93, %v418, 0
  %v469 = vsel %vm93, %v419, 0
  %v472 = vsel %vm93, %v420, 0
  %v475 = vsel %vm93, %v421, 0
  %v478 = vsel %vm93, %v422, 0
  %v481 = vsel %vm93, %v423, 0
  %v484 = vsel %vm93, %v424, 0
  %v487 = vsel %vm93, %v425, 0
  %v490 = vsel %vm93, %v426, 0
  %v493 = vsel %vm93, %v427, 0
  %v496 = vsel %vm93, %v428, 0
  %v499 = vsel %vm93, %v429, 0
  %v502 = vsel %vm93, %v430, 0
  %v505 = vsel %vm93, %v431, 0
  %v508 = vsel %vm93, %v432, 0
  %v511 = vsel %vm93, %v433, 0
  %v514 = vsel %vm93, %v434, 0
  %v517 = vsel %vm93, %v435, 0
  %v520 = vsel %vm93, %v436, 0
  %v523 = vsel %vm93, %v437, 0
  %v526 = vsel %vm93, %v438, 0
  %v529 = vsel %vm93, %v439, 0
  %v532 = vsel %vm93, %v440, 0
  %v535 = vsel %vm93, %v441, 0
  %v538 = vsel %vm93, %v442, 0
  %v541 = vsel %vm93, %v443, 0
  %v544 = vsel %vm93, %v444, 0
  %v547 = vsel %vm93, %v445, 0
  %v550 = vsel %vm93, %v446, 0
  %552 = vmatprep.subr.mxu0 0.0
  %553 = vmatpush1.msra.mxu0 %v447
  %554 = vmatprep.subr.mxu0 0.0
  %555 = vmatpush1.msra.mxu0 %v448
  %556 = vmatprep.subr.mxu0 0.0
  %557 = vmatpush1.msra.mxu0 0.0
  %558 = vmatprep.subr.mxu0 0.0
  %559 = vmatpush1.msra.mxu0 0.0
  %560 = vmatprep.subr.mxu0 0.0
  %561 = vmatpush1.msra.mxu0 0.0
  %562 = vmatprep.subr.mxu0 0.0
  %563 = vmatpush1.msra.mxu0 0.0
  %564 = vmatprep.subr.mxu0 0.0
  %565 = vmatpush1.msra.mxu0 0.0
  %566 = vmatprep.subr.mxu0 0.0
  %567 = vmatpush1.msra.mxu0 0.0
  %568 = vmatprep.subr.mxu0 0.0
  %569 = vmatpush1.msra.mxu0 0.0
  %570 = vmatprep.subr.mxu0 0.0
  %571 = vmatpush1.msra.mxu0 0.0
  %572 = vmatprep.subr.mxu0 0.0
  %573 = vmatpush1.msra.mxu0 0.0
  %574 = vmatprep.subr.mxu0 0.0
  %575 = vmatpush1.msra.mxu0 0.0
  %576 = vmatprep.subr.mxu0 0.0
  %577 = vmatpush1.msra.mxu0 0.0
  %578 = vmatprep.subr.mxu0 0.0
  %579 = vmatpush1.msra.mxu0 0.0
  %580 = vmatprep.subr.mxu0 0.0
  %581 = vmatpush1.msra.mxu0 0.0
  %582 = vmatprep.subr.mxu0 0.0
  %583 = vmatpush1.msra.mxu0 0.0
  %584 = vmatprep.subr.mxu0 0.0
  %585 = vmatpush1.msra.mxu0 0.0
  %586 = vmatprep.subr.mxu0 0.0
  %587 = vmatpush1.msra.mxu0 0.0
  %588 = vmatprep.subr.mxu0 0.0
  %589 = vmatpush1.msra.mxu0 0.0
  %590 = vmatprep.subr.mxu0 0.0
  %591 = vmatpush1.msra.mxu0 0.0
  %592 = vmatprep.subr.mxu0 0.0
  %593 = vmatpush1.msra.mxu0 0.0
  %594 = vmatprep.subr.mxu0 0.0
  %595 = vmatpush1.msra.mxu0 0.0
  %596 = vmatprep.subr.mxu0 0.0
  %597 = vmatpush1.msra.mxu0 0.0
  %598 = vmatprep.subr.mxu0 0.0
  %599 = vmatpush1.msra.mxu0 0.0
  %600 = vmatprep.subr.mxu0 0.0
  %601 = vmatpush1.msra.mxu0 0.0
  %602 = vmatprep.subr.mxu0 0.0
  %603 = vmatpush1.msra.mxu0 0.0
  %604 = vmatprep.subr.mxu0 0.0
  %605 = vmatpush1.msra.mxu0 0.0
  %606 = vmatprep.subr.mxu0 0.0
  %607 = vmatpush1.msra.mxu0 0.0
  %608 = vmatprep.subr.mxu0 0.0
  %609 = vmatpush1.msra.mxu0 0.0
  %610 = vmatprep.subr.mxu0 0.0
  %611 = vmatpush1.msra.mxu0 0.0
  %612 = vmatprep.subr.mxu0 0.0
  %613 = vmatpush1.msra.mxu0 0.0
  %614 = vmatprep.subr.mxu0 0.0
  %615 = vmatpush1.msra.mxu0 0.0
  %616 = vmatprep.mubr.f32.mxu0 0.0
  %617 = vmatmul.mubr.f32.gmra.mrb[0].mxu0 %v457
  %v618 = vpop.f32.mrb[0].mxu0
  %v619 = vadd.f32 %v454, %v618
  %v620 = vpop.f32.mrb[0].mxu0
  %621 = vmatprep.mubr.f32.mxu0 0.0
  %622 = vmatmul.mubr.f32.gmra.mrb[0].mxu0 %v460
  %v623 = vpop.f32.mrb[0].mxu0
  %v624 = vadd.f32 %v454, %v623
  %v625 = vpop.f32.mrb[0].mxu0
  %626 = vmatprep.mubr.f32.mxu0 0.0
  %627 = vmatmul.mubr.f32.gmra.mrb[0].mxu0 %v463
  %v628 = vpop.f32.mrb[0].mxu0
  %v629 = vadd.f32 %v454, %v628
  %v630 = vpop.f32.mrb[0].mxu0
  %631 = vmatprep.mubr.f32.mxu0 0.0
  %632 = vmatmul.mubr.f32.gmra.mrb[0].mxu0 %v466
  %v633 = vpop.f32.mrb[0].mxu0
  %v634 = vadd.f32 %v454, %v633
  %v635 = vpop.f32.mrb[0].mxu0
  %636 = vmatprep.mubr.f32.mxu0 0.0
  %637 = vmatmul.mubr.f32.gmra.mrb[0].mxu0 %v469
  %v638 = vpop.f32.mrb[0].mxu0
  %v639 = vadd.f32 %v454, %v638
  %v640 = vpop.f32.mrb[0].mxu0
  %641 = vmatprep.mubr.f32.mxu0 0.0
  %642 = vmatmul.mubr.f32.gmra.mrb[0].mxu0 %v472
  %v643 = vpop.f32.mrb[0].mxu0
  %v644 = vadd.f32 %v454, %v643
  %v645 = vpop.f32.mrb[0].mxu0
  %646 = vmatprep.mubr.f32.mxu0 0.0
  %647 = vmatmul.mubr.f32.gmra.mrb[0].mxu0 %v475
  %v648 = vpop.f32.mrb[0].mxu0
  %v649 = vadd.f32 %v454, %v648
  %v650 = vpop.f32.mrb[0].mxu0
  %651 = vmatprep.mubr.f32.mxu0 0.0
  %652 = vmatmul.mubr.f32.gmra.mrb[0].mxu0 %v478
  %v653 = vpop.f32.mrb[0].mxu0
  %v654 = vadd.f32 %v454, %v653
  %v655 = vpop.f32.mrb[0].mxu0
  %656 = vmatprep.mubr.f32.mxu0 0.0
  %657 = vmatmul.mubr.f32.gmra.mrb[0].mxu0 %v481
  %v658 = vpop.f32.mrb[0].mxu0
  %v659 = vadd.f32 %v454, %v658
  %v660 = vpop.f32.mrb[0].mxu0
  %661 = vmatprep.mubr.f32.mxu0 0.0
  %662 = vmatmul.mubr.f32.gmra.mrb[0].mxu0 %v484
  %v663 = vpop.f32.mrb[0].mxu0
  %v664 = vadd.f32 %v454, %v663
  %v665 = vpop.f32.mrb[0].mxu0
  %666 = vmatprep.mubr.f32.mxu0 0.0
  %667 = vmatmul.mubr.f32.gmra.mrb[0].mxu0 %v487
  %v668 = vpop.f32.mrb[0].mxu0
  %v669 = vadd.f32 %v454, %v668
  %v670 = vpop.f32.mrb[0].mxu0
  %671 = vmatprep.mubr.f32.mxu0 0.0
  %672 = vmatmul.mubr.f32.gmra.mrb[0].mxu0 %v490
  %v673 = vpop.f32.mrb[0].mxu0
  %v674 = vadd.f32 %v454, %v673
  %v675 = vpop.f32.mrb[0].mxu0
  %676 = vmatprep.mubr.f32.mxu0 0.0
  %677 = vmatmul.mubr.f32.gmra.mrb[0].mxu0 %v493
  %v678 = vpop.f32.mrb[0].mxu0
  %v679 = vadd.f32 %v454, %v678
  %v680 = vpop.f32.mrb[0].mxu0
  %681 = vmatprep.mubr.f32.mxu0 0.0
  %682 = vmatmul.mubr.f32.gmra.mrb[0].mxu0 %v496
  %v683 = vpop.f32.mrb[0].mxu0
  %v684 = vadd.f32 %v454, %v683
  %v685 = vpop.f32.mrb[0].mxu0
  %686 = vmatprep.mubr.f32.mxu0 0.0
  %687 = vmatmul.mubr.f32.gmra.mrb[0].mxu0 %v499
  %v688 = vpop.f32.mrb[0].mxu0
  %v689 = vadd.f32 %v454, %v688
  %v690 = vpop.f32.mrb[0].mxu0
  %691 = vmatprep.mubr.f32.mxu0 0.0
  %692 = vmatmul.mubr.f32.gmra.mrb[0].mxu0 %v502
  %v693 = vpop.f32.mrb[0].mxu0
  %v694 = vadd.f32 %v454, %v693
  %v695 = vpop.f32.mrb[0].mxu0
  %696 = vmatprep.mubr.f32.mxu0 0.0
  %697 = vmatmul.mubr.f32.gmra.mrb[0].mxu0 %v505
  %v698 = vpop.f32.mrb[0].mxu0
  %v699 = vadd.f32 %v454, %v698
  %v700 = vpop.f32.mrb[0].mxu0
  %701 = vmatprep.mubr.f32.mxu0 0.0
  %702 = vmatmul.mubr.f32.gmra.mrb[0].mxu0 %v508
  %v703 = vpop.f32.mrb[0].mxu0
  %v704 = vadd.f32 %v454, %v703
  %v705 = vpop.f32.mrb[0].mxu0
  %706 = vmatprep.mubr.f32.mxu0 0.0
  %707 = vmatmul.mubr.f32.gmra.mrb[0].mxu0 %v511
  %v708 = vpop.f32.mrb[0].mxu0
  %v709 = vadd.f32 %v454, %v708
  %v710 = vpop.f32.mrb[0].mxu0
  %711 = vmatprep.mubr.f32.mxu0 0.0
  %712 = vmatmul.mubr.f32.gmra.mrb[0].mxu0 %v514
  %v713 = vpop.f32.mrb[0].mxu0
  %v714 = vadd.f32 %v454, %v713
  %v715 = vpop.f32.mrb[0].mxu0
  %716 = vmatprep.mubr.f32.mxu0 0.0
  %717 = vmatmul.mubr.f32.gmra.mrb[0].mxu0 %v517
  %v718 = vpop.f32.mrb[0].mxu0
  %v719 = vadd.f32 %v454, %v718
  %v720 = vpop.f32.mrb[0].mxu0
  %721 = vmatprep.mubr.f32.mxu0 0.0
  %722 = vmatmul.mubr.f32.gmra.mrb[0].mxu0 %v520
  %v723 = vpop.f32.mrb[0].mxu0
  %v724 = vadd.f32 %v454, %v723
  %v725 = vpop.f32.mrb[0].mxu0
  %726 = vmatprep.mubr.f32.mxu0 0.0
  %727 = vmatmul.mubr.f32.gmra.mrb[0].mxu0 %v523
  %v728 = vpop.f32.mrb[0].mxu0
  %v729 = vadd.f32 %v454, %v728
  %v730 = vpop.f32.mrb[0].mxu0
  %731 = vmatprep.mubr.f32.mxu0 0.0
  %732 = vmatmul.mubr.f32.gmra.mrb[0].mxu0 %v526
  %v733 = vpop.f32.mrb[0].mxu0
  %v734 = vadd.f32 %v454, %v733
  %v735 = vpop.f32.mrb[0].mxu0
  %736 = vmatprep.mubr.f32.mxu0 0.0
  %737 = vmatmul.mubr.f32.gmra.mrb[0].mxu0 %v529
  %v738 = vpop.f32.mrb[0].mxu0
  %v739 = vadd.f32 %v454, %v738
  %v740 = vpop.f32.mrb[0].mxu0
  %741 = vmatprep.mubr.f32.mxu0 0.0
  %742 = vmatmul.mubr.f32.gmra.mrb[0].mxu0 %v532
  %v743 = vpop.f32.mrb[0].mxu0
  %v744 = vadd.f32 %v454, %v743
  %v745 = vpop.f32.mrb[0].mxu0
  %746 = vmatprep.mubr.f32.mxu0 0.0
  %747 = vmatmul.mubr.f32.gmra.mrb[0].mxu0 %v535
  %v748 = vpop.f32.mrb[0].mxu0
  %v749 = vadd.f32 %v454, %v748
  %v750 = vpop.f32.mrb[0].mxu0
  %751 = vmatprep.mubr.f32.mxu0 0.0
  %752 = vmatmul.mubr.f32.gmra.mrb[0].mxu0 %v538
  %v753 = vpop.f32.mrb[0].mxu0
  %v754 = vadd.f32 %v454, %v753
  %v755 = vpop.f32.mrb[0].mxu0
  %756 = vmatprep.mubr.f32.mxu0 0.0
  %757 = vmatmul.mubr.f32.gmra.mrb[0].mxu0 %v541
  %v758 = vpop.f32.mrb[0].mxu0
  %v759 = vadd.f32 %v454, %v758
  %v760 = vpop.f32.mrb[0].mxu0
  %761 = vmatprep.mubr.f32.mxu0 0.0
  %762 = vmatmul.mubr.f32.gmra.mrb[0].mxu0 %v544
  %v763 = vpop.f32.mrb[0].mxu0
  %v764 = vadd.f32 %v454, %v763
  %v765 = vpop.f32.mrb[0].mxu0
  %766 = vmatprep.mubr.f32.mxu0 0.0
  %767 = vmatmul.mubr.f32.gmra.mrb[0].mxu0 %v547
  %v768 = vpop.f32.mrb[0].mxu0
  %v769 = vadd.f32 %v454, %v768
  %v770 = vpop.f32.mrb[0].mxu0
  %771 = vmatprep.mubr.f32.mxu0 0.0
  %772 = vmatmul.mubr.f32.gmra.mrb[0].mxu0 %v550
  %v773 = vpop.f32.mrb[0].mxu0
  %v774 = vadd.f32 %v454, %v773
  %v775 = vpop.f32.mrb[0].mxu0
  %776 = vdwg.mxu0
  %v777 = vlaneseq
  %v778 = vand.u32 %v777, 127
  %vm779 = vcmp.eq.s32.totalorder %v778, 1
  %v780 = vxor.u32 %v619, 2147483648
  %v781 = vxor.u32 %v624, 2147483648
  %v782 = vxor.u32 %v629, 2147483648
  %v783 = vxor.u32 %v634, 2147483648
  %v784 = vxor.u32 %v639, 2147483648
  %v785 = vxor.u32 %v644, 2147483648
  %v786 = vxor.u32 %v649, 2147483648
  %v787 = vxor.u32 %v654, 2147483648
  %v788 = vxor.u32 %v659, 2147483648
  %v789 = vxor.u32 %v664, 2147483648
  %v790 = vxor.u32 %v669, 2147483648
  %v791 = vxor.u32 %v674, 2147483648
  %v792 = vxor.u32 %v679, 2147483648
  %v793 = vxor.u32 %v684, 2147483648
  %v794 = vxor.u32 %v689, 2147483648
  %v795 = vxor.u32 %v694, 2147483648
  %v796 = vxor.u32 %v699, 2147483648
  %v797 = vxor.u32 %v704, 2147483648
  %v798 = vxor.u32 %v709, 2147483648
  %v799 = vxor.u32 %v714, 2147483648
  %v800 = vxor.u32 %v719, 2147483648
  %v801 = vxor.u32 %v724, 2147483648
  %v802 = vxor.u32 %v729, 2147483648
  %v803 = vxor.u32 %v734, 2147483648
  %v804 = vxor.u32 %v739, 2147483648
  %v805 = vxor.u32 %v744, 2147483648
  %v806 = vxor.u32 %v749, 2147483648
  %v807 = vxor.u32 %v754, 2147483648
  %v808 = vxor.u32 %v759, 2147483648
  %v809 = vxor.u32 %v764, 2147483648
  %v810 = vxor.u32 %v769, 2147483648
  %v811 = vxor.u32 %v774, 2147483648
  %v812 = vmul.f32 %v780, 1.442695
  %v813 = vpow.pop %v812
  %v814 = vmul.f32 %v781, 1.442695
  %v815 = vpow.pop %v814
  %v816 = vmul.f32 %v782, 1.442695
  %v817 = vpow.pop %v816
  %v818 = vmul.f32 %v783, 1.442695
  %v819 = vpow.pop %v818
  %v820 = vmul.f32 %v784, 1.442695
  %v821 = vpow.pop %v820
  %v822 = vmul.f32 %v785, 1.442695
  %v823 = vpow.pop %v822
  %v824 = vmul.f32 %v786, 1.442695
  %v825 = vpow.pop %v824
  %v826 = vmul.f32 %v787, 1.442695
  %v827 = vpow.pop %v826
  %v828 = vmul.f32 %v788, 1.442695
  %v829 = vpow.pop %v828
  %v830 = vmul.f32 %v789, 1.442695
  %v831 = vpow.pop %v830
  %v832 = vmul.f32 %v790, 1.442695
  %v833 = vpow.pop %v832
  %v834 = vmul.f32 %v791, 1.442695
  %v835 = vpow.pop %v834
  %v836 = vmul.f32 %v792, 1.442695
  %v837 = vpow.pop %v836
  %v838 = vmul.f32 %v793, 1.442695
  %v839 = vpow.pop %v838
  %v840 = vmul.f32 %v794, 1.442695
  %v841 = vpow.pop %v840
  %v842 = vmul.f32 %v795, 1.442695
  %v843 = vpow.pop %v842
  %v844 = vmul.f32 %v796, 1.442695
  %v845 = vpow.pop %v844
  %v846 = vmul.f32 %v797, 1.442695
  %v847 = vpow.pop %v846
  %v848 = vmul.f32 %v798, 1.442695
  %v849 = vpow.pop %v848
  %v850 = vmul.f32 %v799, 1.442695
  %v851 = vpow.pop %v850
  %v852 = vmul.f32 %v800, 1.442695
  %v853 = vpow.pop %v852
  %v854 = vmul.f32 %v801, 1.442695
  %v855 = vpow.pop %v854
  %v856 = vmul.f32 %v802, 1.442695
  %v857 = vpow.pop %v856
  %v858 = vmul.f32 %v803, 1.442695
  %v859 = vpow.pop %v858
  %v860 = vmul.f32 %v804, 1.442695
  %v861 = vpow.pop %v860
  %v862 = vmul.f32 %v805, 1.442695
  %v863 = vpow.pop %v862
  %v864 = vmul.f32 %v806, 1.442695
  %v865 = vpow.pop %v864
  %v866 = vmul.f32 %v807, 1.442695
  %v867 = vpow.pop %v866
  %v868 = vmul.f32 %v808, 1.442695
  %v869 = vpow.pop %v868
  %v870 = vmul.f32 %v809, 1.442695
  %v871 = vpow.pop %v870
  %v872 = vmul.f32 %v810, 1.442695
  %v873 = vpow.pop %v872
  %v874 = vmul.f32 %v811, 1.442695
  %v875 = vpow.pop %v874
  %v876 = vadd.f32 %v813, 1.0
  %v877 = vadd.f32 %v815, 1.0
  %v878 = vadd.f32 %v817, 1.0
  %v879 = vadd.f32 %v819, 1.0
  %v880 = vadd.f32 %v821, 1.0
  %v881 = vadd.f32 %v823, 1.0
  %v882 = vadd.f32 %v825, 1.0
  %v883 = vadd.f32 %v827, 1.0
  %v884 = vadd.f32 %v829, 1.0
  %v885 = vadd.f32 %v831, 1.0
  %v886 = vadd.f32 %v833, 1.0
  %v887 = vadd.f32 %v835, 1.0
  %v888 = vadd.f32 %v837, 1.0
  %v889 = vadd.f32 %v839, 1.0
  %v890 = vadd.f32 %v841, 1.0
  %v891 = vadd.f32 %v843, 1.0
  %v892 = vadd.f32 %v845, 1.0
  %v893 = vadd.f32 %v847, 1.0
  %v894 = vadd.f32 %v849, 1.0
  %v895 = vadd.f32 %v851, 1.0
  %v896 = vadd.f32 %v853, 1.0
  %v897 = vadd.f32 %v855, 1.0
  %v898 = vadd.f32 %v857, 1.0
  %v899 = vadd.f32 %v859, 1.0
  %v900 = vadd.f32 %v861, 1.0
  %v901 = vadd.f32 %v863, 1.0
  %v902 = vadd.f32 %v865, 1.0
  %v903 = vadd.f32 %v867, 1.0
  %v904 = vadd.f32 %v869, 1.0
  %v905 = vadd.f32 %v871, 1.0
  %v906 = vadd.f32 %v873, 1.0
  %v907 = vadd.f32 %v875, 1.0
  %v908 = vrcp.pop %v876
  %v909 = vmul.f32 1.0, %v908
  %v910 = vrcp.pop %v877
  %v911 = vmul.f32 1.0, %v910
  %v912 = vrcp.pop %v878
  %v913 = vmul.f32 1.0, %v912
  %v914 = vrcp.pop %v879
  %v915 = vmul.f32 1.0, %v914
  %v916 = vrcp.pop %v880
  %v917 = vmul.f32 1.0, %v916
  %v918 = vrcp.pop %v881
  %v919 = vmul.f32 1.0, %v918
  %v920 = vrcp.pop %v882
  %v921 = vmul.f32 1.0, %v920
  %v922 = vrcp.pop %v883
  %v923 = vmul.f32 1.0, %v922
  %v924 = vrcp.pop %v884
  %v925 = vmul.f32 1.0, %v924
  %v926 = vrcp.pop %v885
  %v927 = vmul.f32 1.0, %v926
  %v928 = vrcp.pop %v886
  %v929 = vmul.f32 1.0, %v928
  %v930 = vrcp.pop %v887
  %v931 = vmul.f32 1.0, %v930
  %v932 = vrcp.pop %v888
  %v933 = vmul.f32 1.0, %v932
  %v934 = vrcp.pop %v889
  %v935 = vmul.f32 1.0, %v934
  %v936 = vrcp.pop %v890
  %v937 = vmul.f32 1.0, %v936
  %v938 = vrcp.pop %v891
  %v939 = vmul.f32 1.0, %v938
  %v940 = vrcp.pop %v892
  %v941 = vmul.f32 1.0, %v940
  %v942 = vrcp.pop %v893
  %v943 = vmul.f32 1.0, %v942
  %v944 = vrcp.pop %v894
  %v945 = vmul.f32 1.0, %v944
  %v946 = vrcp.pop %v895
  %v947 = vmul.f32 1.0, %v946
  %v948 = vrcp.pop %v896
  %v949 = vmul.f32 1.0, %v948
  %v950 = vrcp.pop %v897
  %v951 = vmul.f32 1.0, %v950
  %v952 = vrcp.pop %v898
  %v953 = vmul.f32 1.0, %v952
  %v954 = vrcp.pop %v899
  %v955 = vmul.f32 1.0, %v954
  %v956 = vrcp.pop %v900
  %v957 = vmul.f32 1.0, %v956
  %v958 = vrcp.pop %v901
  %v959 = vmul.f32 1.0, %v958
  %v960 = vrcp.pop %v902
  %v961 = vmul.f32 1.0, %v960
  %v962 = vrcp.pop %v903
  %v963 = vmul.f32 1.0, %v962
  %v964 = vrcp.pop %v904
  %v965 = vmul.f32 1.0, %v964
  %v966 = vrcp.pop %v905
  %v967 = vmul.f32 1.0, %v966
  %v968 = vrcp.pop %v906
  %v969 = vmul.f32 1.0, %v968
  %v970 = vrcp.pop %v907
  %v971 = vmul.f32 1.0, %v970
  %v972 = vsel %vm779, %v909, %v619
  %v973 = vsel %vm779, %v911, %v624
  %v974 = vsel %vm779, %v913, %v629
  %v975 = vsel %vm779, %v915, %v634
  %v976 = vsel %vm779, %v917, %v639
  %v977 = vsel %vm779, %v919, %v644
  %v978 = vsel %vm779, %v921, %v649
  %v979 = vsel %vm779, %v923, %v654
  %v980 = vsel %vm779, %v925, %v659
  %v981 = vsel %vm779, %v927, %v664
  %v982 = vsel %vm779, %v929, %v669
  %v983 = vsel %vm779, %v931, %v674
  %v984 = vsel %vm779, %v933, %v679
  %v985 = vsel %vm779, %v935, %v684
  %v986 = vsel %vm779, %v937, %v689
  %v987 = vsel %vm779, %v939, %v694
  %v988 = vsel %vm779, %v941, %v699
  %v989 = vsel %vm779, %v943, %v704
  %v990 = vsel %vm779, %v945, %v709
  %v991 = vsel %vm779, %v947, %v714
  %v992 = vsel %vm779, %v949, %v719
  %v993 = vsel %vm779, %v951, %v724
  %v994 = vsel %vm779, %v953, %v729
  %v995 = vsel %vm779, %v955, %v734
  %v996 = vsel %vm779, %v957, %v739
  %v997 = vsel %vm779, %v959, %v744
  %v998 = vsel %vm779, %v961, %v749
  %v999 = vsel %vm779, %v963, %v754
  %v1000 = vsel %vm779, %v965, %v759
  %v1001 = vsel %vm779, %v967, %v764
  %v1002 = vsel %vm779, %v969, %v769
  %v1003 = vsel %vm779, %v971, %v774
  %1004 = vst [vmem:[%s5] sm:$0xff] %v972
  %1005 = vst [vmem:[%s5 + $0x8] sm:$0xff] %v973
  %1006 = vst [vmem:[%s5 + $0x10] sm:$0xff] %v974
  %1007 = vst [vmem:[%s5 + $0x18] sm:$0xff] %v975
  %1008 = vst [vmem:[%s5 + $0x20] sm:$0xff] %v976
  %1009 = vst [vmem:[%s5 + $0x28] sm:$0xff] %v977
  %1010 = vst [vmem:[%s5 + $0x30] sm:$0xff] %v978
  %1011 = vst [vmem:[%s5 + $0x38] sm:$0xff] %v979
  %1012 = vst [vmem:[%s5 + $0x40] sm:$0xff] %v980
  %1013 = vst [vmem:[%s5 + $0x48] sm:$0xff] %v981
  %1014 = vst [vmem:[%s5 + $0x50] sm:$0xff] %v982
  %1015 = vst [vmem:[%s5 + $0x58] sm:$0xff] %v983
  %1016 = vst [vmem:[%s5 + $0x60] sm:$0xff] %v984
  %1017 = vst [vmem:[%s5 + $0x68] sm:$0xff] %v985
  %1018 = vst [vmem:[%s5 + $0x70] sm:$0xff] %v986
  %1019 = vst [vmem:[%s5 + $0x78] sm:$0xff] %v987
  %1020 = vst [vmem:[%s5 + $0x80] sm:$0xff] %v988
  %1021 = vst [vmem:[%s5 + $0x88] sm:$0xff] %v989
  %1022 = vst [vmem:[%s5 + $0x90] sm:$0xff] %v990
  %1023 = vst [vmem:[%s5 + $0x98] sm:$0xff] %v991
  %1024 = vst [vmem:[%s5 + $0xa0] sm:$0xff] %v992
  %1025 = vst [vmem:[%s5 + $0xa8] sm:$0xff] %v993
  %1026 = vst [vmem:[%s5 + $0xb0] sm:$0xff] %v994
  %1027 = vst [vmem:[%s5 + $0xb8] sm:$0xff] %v995
  %1028 = vst [vmem:[%s5 + $0xc0] sm:$0xff] %v996
  %1029 = vst [vmem:[%s5 + $0xc8] sm:$0xff] %v997
  %1030 = vst [vmem:[%s5 + $0xd0] sm:$0xff] %v998
  %1031 = vst [vmem:[%s5 + $0xd8] sm:$0xff] %v999
  %1032 = vst [vmem:[%s5 + $0xe0] sm:$0xff] %v1000
  %1033 = vst [vmem:[%s5 + $0xe8] sm:$0xff] %v1001
  %1034 = vst [vmem:[%s5 + $0xf0] sm:$0xff] %v1002
  %1035 = vst [vmem:[%s5 + $0xf8] sm:$0xff] %v1003
  // Predicated region
  $region22: #{seg_net_forward.11} parent=0 // pred_check
    _
  $region23: #{seg_net_forward.11} parent=0 // pred_check_branch
    %1037 = sbr.rel (0) target = $region25
  $region24: #{seg_net_forward.11} parent=0 // pred_region
    _
  $region25: #{seg_net_forward.11} parent=0 // pred_fallthru
    _
  // Predicated region
  $region26: #{seg_net_forward.11} parent=0 // pred_check
    _
  $region27: #{seg_net_forward.11} parent=0 // pred_check_branch
    %1039 = sbr.rel (0) target = $region29
  $region28: #{seg_net_forward.11} parent=0 // pred_region
    _
  $region29: #{seg_net_forward.11} parent=0 // pred_fallthru
    _

</llo_original>
